<compile_context>
chip_gen: v7x
topology: tpu7x:2x2x1
jax: 0.10.0
libtpu: 0.0.40
codegen_flags: <defaults>
</compile_context>

<pallas_src>
import functools

import jax
import jax.numpy as jnp
from jax.experimental import pallas as pl
from jax.experimental.pallas import tpu as pltpu

NEG_SLOPE = 0.01  # F.leaky_relu default


def _round_up(x, m):
    return ((x + m - 1) // m) * m


# ----------------------------------------------------------------------------
# Pallas kernel: space-to-depth conv (+bias, +leaky_relu), one image per step.
#
#   out[o, i*wb + j] = sum_{a,e in {0,1}} W4[(a*2+e)*oc + o, :] @ x[:, (i+a)*wb + (j+e)]
#
# i.e. one stacked matmul (4*oc, K) @ (K, Lp) followed by four shifted adds.
# Columns j >= ow of the output are padding; they are either consumed only by
# zero-padded weights of the next conv or zeroed in fc1's repacked weights.
# ----------------------------------------------------------------------------
def _conv_s2d_kernel(x_ref, w_ref, b_ref, o_ref, *, oc, wb, l_out, negative_slope):
    # x_ref: (1, K, Lp) bf16 ; w_ref: (4*oc, K) bf16 ; b_ref: (oc, 1) f32
    # o_ref: (1, oc, l_out) bf16
    big = jnp.dot(w_ref[...], x_ref[0], preferred_element_type=jnp.float32)  # (4*oc, Lp)
    acc = (big[0 * oc:1 * oc, 0:l_out]
           + big[1 * oc:2 * oc, 1:1 + l_out]
           + big[2 * oc:3 * oc, wb:wb + l_out]
           + big[3 * oc:4 * oc, wb + 1:wb + 1 + l_out])
    acc = acc + b_ref[...]                                   # (oc, 1) broadcast over lanes
    acc = jnp.where(acc > 0, acc, acc * negative_slope)
    o_ref[0] = acc.astype(o_ref.dtype)


def conv_s2d(xs2d, w4, bias, *, wb, oh):
    """xs2d: (B, K, Lp) bf16; w4: (4*oc, K) bf16; bias: (oc, 1) f32 -> (B, oc, oh*wb) bf16."""
    B, K, Lp = xs2d.shape
    oc = w4.shape[0] // 4
    l_out = oh * wb
    kernel = functools.partial(
        _conv_s2d_kernel, oc=oc, wb=wb, l_out=l_out, negative_slope=NEG_SLOPE
    )
    return pl.pallas_call(
        kernel,
        out_shape=jax.ShapeDtypeStruct((B, oc, l_out), jnp.bfloat16),
        grid=(B,),
        in_specs=[
            pl.BlockSpec((1, K, Lp), lambda b: (b, 0, 0)),
            pl.BlockSpec((4 * oc, K), lambda b: (0, 0)),
            pl.BlockSpec((oc, 1), lambda b: (0, 0)),
        ],
        out_specs=pl.BlockSpec((1, oc, l_out), lambda b: (b, 0, 0)),
        compiler_params=pltpu.CompilerParams(dimension_semantics=("parallel",)),
    )(xs2d, w4, bias)


# ----------------------------------------------------------------------------
# Pallas kernel: fused fc1 (leaky_relu) + fc2, whole batch in one step.
# ----------------------------------------------------------------------------
def _fc_tail_kernel(z_ref, w1_ref, b1_ref, w2_ref, b2_ref, o_ref, *, negative_slope):
    h = jnp.dot(z_ref[...], w1_ref[...], preferred_element_type=jnp.float32)  # (B, 100)
    h = h + b1_ref[...]
    h = jnp.where(h > 0, h, h * negative_slope)
    out = jnp.dot(h.astype(w2_ref.dtype), w2_ref[...], preferred_element_type=jnp.float32)
    o_ref[...] = out + b2_ref[...]


def fc_tail(z, w1, b1, w2, b2):
    B, K1 = z.shape
    N1 = w1.shape[1]
    N2 = w2.shape[1]
    kernel = functools.partial(_fc_tail_kernel, negative_slope=NEG_SLOPE)
    return pl.pallas_call(
        kernel,
        out_shape=jax.ShapeDtypeStruct((B, N2), jnp.float32),
        grid=(1,),
        in_specs=[
            pl.BlockSpec((B, K1), lambda i: (0, 0)),
            pl.BlockSpec((K1, N1), lambda i: (0, 0)),
            pl.BlockSpec((1, N1), lambda i: (0, 0)),
            pl.BlockSpec((N1, N2), lambda i: (0, 0)),
            pl.BlockSpec((1, N2), lambda i: (0, 0)),
        ],
        out_specs=pl.BlockSpec((B, N2), lambda i: (0, 0)),
    )(z, w1, b1, w2, b2)


# ----------------------------------------------------------------------------
# XLA glue: space-to-depth relayout feeding a conv with output (oh, ow), stride s.
# Produces (B, C*s*s, Lp) with channel order (c, p, q) and flat spatial ib*wb+jb.
# ----------------------------------------------------------------------------
def _space_to_depth(x, s, oh, ow):
    B, C, H, W = x.shape
    hb, wb = oh + 1, ow + 1
    hp, wp = hb * s, wb * s
    if (hp, wp) != (H, W):
        x = jnp.pad(x, ((0, 0), (0, 0), (0, hp - H), (0, wp - W)))
    x = x.reshape(B, C, hb, s, wb, s)
    x = x.transpose(0, 1, 3, 5, 2, 4)                 # (B, C, p, q, hb, wb)
    x = x.reshape(B, C * s * s, hb * wb)
    lp = _round_up(hb * wb + 1, 128)                  # +1: shift wb+1 reads one past hb*wb-1
    return jnp.pad(x, ((0, 0), (0, 0), (0, lp - hb * wb)))


# ----------------------------------------------------------------------------
# Parameters: torch-like init, then one-time repack into kernel-ready layout.
# ----------------------------------------------------------------------------
def init_dqn_params(key, n_channels, action_size):
    ks = jax.random.split(key, 10)

    def _u(k, shape, fan_in):
        bound = 1.0 / jnp.sqrt(fan_in)
        return jax.random.uniform(k, shape, jnp.float32, -bound, bound)

    return {
        "conv1_w": _u(ks[0], (32, n_channels, 10, 10), n_channels * 100),
        "conv1_b": _u(ks[1], (32,), n_channels * 100),
        "conv2_w": _u(ks[2], (64, 32, 7, 7), 32 * 49),
        "conv2_b": _u(ks[3], (64,), 32 * 49),
        "conv3_w": _u(ks[4], (32, 64, 3, 3), 64 * 9),
        "conv3_b": _u(ks[5], (32,), 64 * 9),
        "fc1_w": _u(ks[6], (100, 1120), 1120),
        "fc1_b": _u(ks[7], (100,), 1120),
        "fc2_w": _u(ks[8], (action_size, 100), 100),
        "fc2_b": _u(ks[9], (action_size,), 100),
    }


def _prep_conv(w, b, s):
    """(O,C,k,k) torch conv weight -> stacked shift weight (4*O, C*s*s) bf16 + (O,1) f32 bias."""
    O, C, k, _ = w.shape
    kp = 2 * s                                                  # pad kernel to 2 stride blocks
    wp = jnp.zeros((O, C, kp, kp), jnp.float32).at[:, :, :k, :k].set(w)
    wp = wp.reshape(O, C, 2, s, 2, s)                           # (o, c, a, p, e, q)
    wp = wp.transpose(2, 4, 0, 1, 3, 5)                         # (a, e, o, c, p, q)
    w4 = wp.reshape(4 * O, C * s * s).astype(jnp.bfloat16)      # row = (a*2+e)*O + o
    return w4, b.reshape(O, 1).astype(jnp.float32)


def prepare_dqn_params(p):
    c1w, c1b = _prep_conv(p["conv1_w"], p["conv1_b"], 5)
    c2w, c2b = _prep_conv(p["conv2_w"], p["conv2_b"], 4)
    c3w, c3b = _prep_conv(p["conv3_w"], p["conv3_b"], 2)
    # conv3 kernel output layout is (c, h*8 + w) with w == 7 a padding column;
    # absorb torch's view(B, 1120) flatten (c*35 + h*7 + w) into fc1's weight.
    n1 = p["fc1_w"].shape[0]
    w1 = p["fc1_w"].reshape(n1, 32, 5, 7)
    w1 = jnp.pad(w1, ((0, 0), (0, 0), (0, 0), (0, 1)))          # zero the padding column
    w1 = w1.reshape(n1, 32 * 5 * 8).T.astype(jnp.bfloat16)      # (1280, 100)
    return {
        "conv1_w4": c1w, "conv1_b": c1b,
        "conv2_w4": c2w, "conv2_b": c2b,
        "conv3_w4": c3w, "conv3_b": c3b,
        "fc1_wt": w1,
        "fc1_b": p["fc1_b"].reshape(1, -1).astype(jnp.float32),
        "fc2_wt": p["fc2_w"].T.astype(jnp.bfloat16),
        "fc2_b": p["fc2_b"].reshape(1, -1).astype(jnp.float32),
    }


# ----------------------------------------------------------------------------
# DQN forward
# ----------------------------------------------------------------------------
def dqn_forward(params, x):
    """x: (B, n_channels, 240, 320) NCHW f32 -> (B, action_size) f32."""
    B = x.shape[0]
    x = x.astype(jnp.bfloat16)

    xs = _space_to_depth(x, 5, 47, 63)                                  # (B, 100, 3200)
    y = conv_s2d(xs, params["conv1_w4"], params["conv1_b"], wb=64, oh=47)  # (B, 32, 3008)
    y = y.reshape(B, 32, 47, 64)                                        # col 63 = pad col

    xs = _space_to_depth(y, 4, 11, 15)                                  # (B, 512, 256)
    y = conv_s2d(xs, params["conv2_w4"], params["conv2_b"], wb=16, oh=11)  # (B, 64, 176)
    y = y.reshape(B, 64, 11, 16)

    xs = _space_to_depth(y, 2, 5, 7)                                    # (B, 256, 128)
    y = conv_s2d(xs, params["conv3_w4"], params["conv3_b"], wb=8, oh=5)    # (B, 32, 40)

    z = y.reshape(B, 32 * 40)                                           # free reshape; fc1_wt
    return fc_tail(z, params["fc1_wt"], params["fc1_b"],                # absorbs flatten+mask
                   params["fc2_wt"], params["fc2_b"])


if __name__ == "__main__":
    key = jax.random.PRNGKey(0)
    k_param, k_x = jax.random.split(key)

    n_channels = 4
    action_size = 6
    batch = 2
    # Spatial size dictated by intermediate_size=1120 -> conv chain needs 240x320.
    x = jax.random.normal(k_x, (batch, n_channels, 240, 320), jnp.float32)

    raw_params = init_dqn_params(k_param, n_channels, action_size)
    params = prepare_dqn_params(raw_params)   # one-time weight repack (outside jit)

    out = jax.jit(dqn_forward)(params, x)
    out = jax.block_until_ready(out)
    assert out.shape == (batch, action_size), out.shape
    assert bool(jnp.all(jnp.isfinite(out)))
    print("KERNEL_OK")
</pallas_src>

<mosaic_0001>
module attributes {stable_mosaic.version = 11 : i64} {
  func.func @_conv_s2d_kernel(%arg0: i32, %arg1: memref<1x100x3200xbf16, #tpu.memory_space<vmem>>, %arg2: memref<128x100xbf16, #tpu.memory_space<vmem>>, %arg3: memref<32x1xf32, #tpu.memory_space<vmem>>, %arg4: memref<1x32x3008xbf16, #tpu.memory_space<vmem>>) attributes {dimension_semantics = [#tpu.dimension_semantics<parallel>], iteration_bounds = array<i64: 2>, scalar_prefetch = 0 : i64, scratch_operands = 0 : i64, tpu.core_type = #tpu.core_type<tc>, window_params = [{transform_indices = @transform_0, window_bounds = array<i64: 1, 100, 3200>}, {pipeline_mode = #tpu.pipeline_mode<synchronous>, transform_indices = @transform_1, window_bounds = array<i64: 128, 100>}, {pipeline_mode = #tpu.pipeline_mode<synchronous>, transform_indices = @transform_2, window_bounds = array<i64: 32, 1>}, {transform_indices = @transform_3, window_bounds = array<i64: 1, 32, 3008>}]} {
    %c0 = arith.constant 0 : index
    %c0_0 = arith.constant 0 : index
    %0 = vector.load %arg2[%c0, %c0_0] : memref<128x100xbf16, #tpu.memory_space<vmem>>, vector<128x100xbf16>
    %c0_1 = arith.constant 0 : index
    %c0_2 = arith.constant 0 : index
    %c0_3 = arith.constant 0 : index
    %1 = vector.load %arg1[%c0_1, %c0_2, %c0_3] : memref<1x100x3200xbf16, #tpu.memory_space<vmem>>, vector<1x100x3200xbf16>
    %2 = vector.shape_cast %1 : vector<1x100x3200xbf16> to vector<100x3200xbf16>
    %cst = arith.constant dense<0.000000e+00> : vector<128x3200xf32>
    %3 = tpu.matmul %0, %2, %cst {dimension_numbers = #tpu.dot_dimension_numbers<[1], [0], [0], [1], [0, 0, 1, 1], [], []>} : vector<128x100xbf16>, vector<100x3200xbf16>, vector<128x3200xf32> -> vector<128x3200xf32>
    %4 = vector.extract_strided_slice %3 {offsets = [0, 0], sizes = [32, 3008], strides = [1, 1]} : vector<128x3200xf32> to vector<32x3008xf32>
    %5 = vector.extract_strided_slice %3 {offsets = [32, 1], sizes = [32, 3008], strides = [1, 1]} : vector<128x3200xf32> to vector<32x3008xf32>
    %6 = arith.addf %4, %5 : vector<32x3008xf32>
    %7 = vector.extract_strided_slice %3 {offsets = [64, 64], sizes = [32, 3008], strides = [1, 1]} : vector<128x3200xf32> to vector<32x3008xf32>
    %8 = arith.addf %6, %7 : vector<32x3008xf32>
    %9 = vector.extract_strided_slice %3 {offsets = [96, 65], sizes = [32, 3008], strides = [1, 1]} : vector<128x3200xf32> to vector<32x3008xf32>
    %10 = arith.addf %8, %9 : vector<32x3008xf32>
    %c0_4 = arith.constant 0 : index
    %c0_5 = arith.constant 0 : index
    %11 = vector.load %arg3[%c0_4, %c0_5] : memref<32x1xf32, #tpu.memory_space<vmem>>, vector<32x1xf32>
    %12 = vector.broadcast %11 : vector<32x1xf32> to vector<32x3008xf32>
    %13 = arith.addf %10, %12 : vector<32x3008xf32>
    %cst_6 = arith.constant 0.000000e+00 : f32
    %14 = vector.broadcast %cst_6 : f32 to vector<32x3008xf32>
    %15 = arith.cmpf ogt, %13, %14 : vector<32x3008xf32>
    %cst_7 = arith.constant 0.00999999977 : f32
    %16 = vector.broadcast %cst_7 : f32 to vector<32x3008xf32>
    %17 = arith.mulf %13, %16 : vector<32x3008xf32>
    %18 = arith.select %15, %13, %17 : vector<32x3008xi1>, vector<32x3008xf32>
    %19 = arith.truncf %18 : vector<32x3008xf32> to vector<32x3008xbf16>
    %c0_8 = arith.constant 0 : index
    %c0_9 = arith.constant 0 : index
    %c0_10 = arith.constant 0 : index
    %20 = vector.load %arg4[%c0_8, %c0_9, %c0_10] : memref<1x32x3008xbf16, #tpu.memory_space<vmem>>, vector<1x32x3008xbf16>
    %21 = vector.shape_cast %20 : vector<1x32x3008xbf16> to vector<32x3008xbf16>
    %22 = vector.shape_cast %19 : vector<32x3008xbf16> to vector<1x32x3008xbf16>
    tpu.vector_store %arg4[%c0_8, %c0_9, %c0_10], %22 {strides = array<i32>} : memref<1x32x3008xbf16, #tpu.memory_space<vmem>>, vector<1x32x3008xbf16>,
    return
  }
  func.func @transform_0(%arg0: i32) -> (i32, i32, i32) {
    %c0_i32 = arith.constant 0 : i32
    %c0_i32_0 = arith.constant 0 : i32
    %c0_i32_1 = arith.constant 0 : i32
    return %arg0, %c0_i32, %c0_i32_0 : i32, i32, i32
  }
  func.func @transform_1(%arg0: i32) -> (i32, i32) {
    %c0_i32 = arith.constant 0 : i32
    %c0_i32_0 = arith.constant 0 : i32
    %c0_i32_1 = arith.constant 0 : i32
    return %c0_i32, %c0_i32_0 : i32, i32
  }
  func.func @transform_2(%arg0: i32) -> (i32, i32) {
    %c0_i32 = arith.constant 0 : i32
    %c0_i32_0 = arith.constant 0 : i32
    %c0_i32_1 = arith.constant 0 : i32
    return %c0_i32, %c0_i32_0 : i32, i32
  }
  func.func @transform_3(%arg0: i32) -> (i32, i32, i32) {
    %c0_i32 = arith.constant 0 : i32
    %c0_i32_0 = arith.constant 0 : i32
    %c0_i32_1 = arith.constant 0 : i32
    return %arg0, %c0_i32, %c0_i32_0 : i32, i32, i32
  }
}

module attributes {stable_mosaic.version = 11 : i64} {
  func.func @_conv_s2d_kernel(%arg0: i32, %arg1: memref<1x512x256xbf16, #tpu.memory_space<vmem>>, %arg2: memref<256x512xbf16, #tpu.memory_space<vmem>>, %arg3: memref<64x1xf32, #tpu.memory_space<vmem>>, %arg4: memref<1x64x176xbf16, #tpu.memory_space<vmem>>) attributes {dimension_semantics = [#tpu.dimension_semantics<parallel>], iteration_bounds = array<i64: 2>, scalar_prefetch = 0 : i64, scratch_operands = 0 : i64, tpu.core_type = #tpu.core_type<tc>, window_params = [{transform_indices = @transform_0, window_bounds = array<i64: 1, 512, 256>}, {pipeline_mode = #tpu.pipeline_mode<synchronous>, transform_indices = @transform_1, window_bounds = array<i64: 256, 512>}, {pipeline_mode = #tpu.pipeline_mode<synchronous>, transform_indices = @transform_2, window_bounds = array<i64: 64, 1>}, {transform_indices = @transform_3, window_bounds = array<i64: 1, 64, 176>}]} {
    %c0 = arith.constant 0 : index
    %c0_0 = arith.constant 0 : index
    %0 = vector.load %arg2[%c0, %c0_0] : memref<256x512xbf16, #tpu.memory_space<vmem>>, vector<256x512xbf16>
    %c0_1 = arith.constant 0 : index
    %c0_2 = arith.constant 0 : index
    %c0_3 = arith.constant 0 : index
    %1 = vector.load %arg1[%c0_1, %c0_2, %c0_3] : memref<1x512x256xbf16, #tpu.memory_space<vmem>>, vector<1x512x256xbf16>
    %2 = vector.shape_cast %1 : vector<1x512x256xbf16> to vector<512x256xbf16>
    %cst = arith.constant dense<0.000000e+00> : vector<256x256xf32>
    %3 = tpu.matmul %0, %2, %cst {dimension_numbers = #tpu.dot_dimension_numbers<[1], [0], [0], [1], [0, 0, 1, 1], [], []>} : vector<256x512xbf16>, vector<512x256xbf16>, vector<256x256xf32> -> vector<256x256xf32>
    %4 = vector.extract_strided_slice %3 {offsets = [0, 0], sizes = [64, 176], strides = [1, 1]} : vector<256x256xf32> to vector<64x176xf32>
    %5 = vector.extract_strided_slice %3 {offsets = [64, 1], sizes = [64, 176], strides = [1, 1]} : vector<256x256xf32> to vector<64x176xf32>
    %6 = arith.addf %4, %5 : vector<64x176xf32>
    %7 = vector.extract_strided_slice %3 {offsets = [128, 16], sizes = [64, 176], strides = [1, 1]} : vector<256x256xf32> to vector<64x176xf32>
    %8 = arith.addf %6, %7 : vector<64x176xf32>
    %9 = vector.extract_strided_slice %3 {offsets = [192, 17], sizes = [64, 176], strides = [1, 1]} : vector<256x256xf32> to vector<64x176xf32>
    %10 = arith.addf %8, %9 : vector<64x176xf32>
    %c0_4 = arith.constant 0 : index
    %c0_5 = arith.constant 0 : index
    %11 = vector.load %arg3[%c0_4, %c0_5] : memref<64x1xf32, #tpu.memory_space<vmem>>, vector<64x1xf32>
    %12 = vector.broadcast %11 : vector<64x1xf32> to vector<64x176xf32>
    %13 = arith.addf %10, %12 : vector<64x176xf32>
    %cst_6 = arith.constant 0.000000e+00 : f32
    %14 = vector.broadcast %cst_6 : f32 to vector<64x176xf32>
    %15 = arith.cmpf ogt, %13, %14 : vector<64x176xf32>
    %cst_7 = arith.constant 0.00999999977 : f32
    %16 = vector.broadcast %cst_7 : f32 to vector<64x176xf32>
    %17 = arith.mulf %13, %16 : vector<64x176xf32>
    %18 = arith.select %15, %13, %17 : vector<64x176xi1>, vector<64x176xf32>
    %19 = arith.truncf %18 : vector<64x176xf32> to vector<64x176xbf16>
    %c0_8 = arith.constant 0 : index
    %c0_9 = arith.constant 0 : index
    %c0_10 = arith.constant 0 : index
    %20 = vector.load %arg4[%c0_8, %c0_9, %c0_10] : memref<1x64x176xbf16, #tpu.memory_space<vmem>>, vector<1x64x176xbf16>
    %21 = vector.shape_cast %20 : vector<1x64x176xbf16> to vector<64x176xbf16>
    %22 = vector.shape_cast %19 : vector<64x176xbf16> to vector<1x64x176xbf16>
    tpu.vector_store %arg4[%c0_8, %c0_9, %c0_10], %22 {strides = array<i32>} : memref<1x64x176xbf16, #tpu.memory_space<vmem>>, vector<1x64x176xbf16>,
    return
  }
  func.func @transform_0(%arg0: i32) -> (i32, i32, i32) {
    %c0_i32 = arith.constant 0 : i32
    %c0_i32_0 = arith.constant 0 : i32
    %c0_i32_1 = arith.constant 0 : i32
    return %arg0, %c0_i32, %c0_i32_0 : i32, i32, i32
  }
  func.func @transform_1(%arg0: i32) -> (i32, i32) {
    %c0_i32 = arith.constant 0 : i32
    %c0_i32_0 = arith.constant 0 : i32
    %c0_i32_1 = arith.constant 0 : i32
    return %c0_i32, %c0_i32_0 : i32, i32
  }
  func.func @transform_2(%arg0: i32) -> (i32, i32) {
    %c0_i32 = arith.constant 0 : i32
    %c0_i32_0 = arith.constant 0 : i32
    %c0_i32_1 = arith.constant 0 : i32
    return %c0_i32, %c0_i32_0 : i32, i32
  }
  func.func @transform_3(%arg0: i32) -> (i32, i32, i32) {
    %c0_i32 = arith.constant 0 : i32
    %c0_i32_0 = arith.constant 0 : i32
    %c0_i32_1 = arith.constant 0 : i32
    return %arg0, %c0_i32, %c0_i32_0 : i32, i32, i32
  }
}

module attributes {stable_mosaic.version = 11 : i64} {
  func.func @_conv_s2d_kernel(%arg0: i32, %arg1: memref<1x256x128xbf16, #tpu.memory_space<vmem>>, %arg2: memref<128x256xbf16, #tpu.memory_space<vmem>>, %arg3: memref<32x1xf32, #tpu.memory_space<vmem>>, %arg4: memref<1x32x40xbf16, #tpu.memory_space<vmem>>) attributes {dimension_semantics = [#tpu.dimension_semantics<parallel>], iteration_bounds = array<i64: 2>, scalar_prefetch = 0 : i64, scratch_operands = 0 : i64, tpu.core_type = #tpu.core_type<tc>, window_params = [{transform_indices = @transform_0, window_bounds = array<i64: 1, 256, 128>}, {pipeline_mode = #tpu.pipeline_mode<synchronous>, transform_indices = @transform_1, window_bounds = array<i64: 128, 256>}, {pipeline_mode = #tpu.pipeline_mode<synchronous>, transform_indices = @transform_2, window_bounds = array<i64: 32, 1>}, {transform_indices = @transform_3, window_bounds = array<i64: 1, 32, 40>}]} {
    %c0 = arith.constant 0 : index
    %c0_0 = arith.constant 0 : index
    %0 = vector.load %arg2[%c0, %c0_0] : memref<128x256xbf16, #tpu.memory_space<vmem>>, vector<128x256xbf16>
    %c0_1 = arith.constant 0 : index
    %c0_2 = arith.constant 0 : index
    %c0_3 = arith.constant 0 : index
    %1 = vector.load %arg1[%c0_1, %c0_2, %c0_3] : memref<1x256x128xbf16, #tpu.memory_space<vmem>>, vector<1x256x128xbf16>
    %2 = vector.shape_cast %1 : vector<1x256x128xbf16> to vector<256x128xbf16>
    %cst = arith.constant dense<0.000000e+00> : vector<128x128xf32>
    %3 = tpu.matmul %0, %2, %cst {dimension_numbers = #tpu.dot_dimension_numbers<[1], [0], [0], [1], [0, 0, 1, 1], [], []>} : vector<128x256xbf16>, vector<256x128xbf16>, vector<128x128xf32> -> vector<128x128xf32>
    %4 = vector.extract_strided_slice %3 {offsets = [0, 0], sizes = [32, 40], strides = [1, 1]} : vector<128x128xf32> to vector<32x40xf32>
    %5 = vector.extract_strided_slice %3 {offsets = [32, 1], sizes = [32, 40], strides = [1, 1]} : vector<128x128xf32> to vector<32x40xf32>
    %6 = arith.addf %4, %5 : vector<32x40xf32>
    %7 = vector.extract_strided_slice %3 {offsets = [64, 8], sizes = [32, 40], strides = [1, 1]} : vector<128x128xf32> to vector<32x40xf32>
    %8 = arith.addf %6, %7 : vector<32x40xf32>
    %9 = vector.extract_strided_slice %3 {offsets = [96, 9], sizes = [32, 40], strides = [1, 1]} : vector<128x128xf32> to vector<32x40xf32>
    %10 = arith.addf %8, %9 : vector<32x40xf32>
    %c0_4 = arith.constant 0 : index
    %c0_5 = arith.constant 0 : index
    %11 = vector.load %arg3[%c0_4, %c0_5] : memref<32x1xf32, #tpu.memory_space<vmem>>, vector<32x1xf32>
    %12 = vector.broadcast %11 : vector<32x1xf32> to vector<32x40xf32>
    %13 = arith.addf %10, %12 : vector<32x40xf32>
    %cst_6 = arith.constant 0.000000e+00 : f32
    %14 = vector.broadcast %cst_6 : f32 to vector<32x40xf32>
    %15 = arith.cmpf ogt, %13, %14 : vector<32x40xf32>
    %cst_7 = arith.constant 0.00999999977 : f32
    %16 = vector.broadcast %cst_7 : f32 to vector<32x40xf32>
    %17 = arith.mulf %13, %16 : vector<32x40xf32>
    %18 = arith.select %15, %13, %17 : vector<32x40xi1>, vector<32x40xf32>
    %19 = arith.truncf %18 : vector<32x40xf32> to vector<32x40xbf16>
    %c0_8 = arith.constant 0 : index
    %c0_9 = arith.constant 0 : index
    %c0_10 = arith.constant 0 : index
    %20 = vector.load %arg4[%c0_8, %c0_9, %c0_10] : memref<1x32x40xbf16, #tpu.memory_space<vmem>>, vector<1x32x40xbf16>
    %21 = vector.shape_cast %20 : vector<1x32x40xbf16> to vector<32x40xbf16>
    %22 = vector.shape_cast %19 : vector<32x40xbf16> to vector<1x32x40xbf16>
    tpu.vector_store %arg4[%c0_8, %c0_9, %c0_10], %22 {strides = array<i32>} : memref<1x32x40xbf16, #tpu.memory_space<vmem>>, vector<1x32x40xbf16>,
    return
  }
  func.func @transform_0(%arg0: i32) -> (i32, i32, i32) {
    %c0_i32 = arith.constant 0 : i32
    %c0_i32_0 = arith.constant 0 : i32
    %c0_i32_1 = arith.constant 0 : i32
    return %arg0, %c0_i32, %c0_i32_0 : i32, i32, i32
  }
  func.func @transform_1(%arg0: i32) -> (i32, i32) {
    %c0_i32 = arith.constant 0 : i32
    %c0_i32_0 = arith.constant 0 : i32
    %c0_i32_1 = arith.constant 0 : i32
    return %c0_i32, %c0_i32_0 : i32, i32
  }
  func.func @transform_2(%arg0: i32) -> (i32, i32) {
    %c0_i32 = arith.constant 0 : i32
    %c0_i32_0 = arith.constant 0 : i32
    %c0_i32_1 = arith.constant 0 : i32
    return %c0_i32, %c0_i32_0 : i32, i32
  }
  func.func @transform_3(%arg0: i32) -> (i32, i32, i32) {
    %c0_i32 = arith.constant 0 : i32
    %c0_i32_0 = arith.constant 0 : i32
    %c0_i32_1 = arith.constant 0 : i32
    return %arg0, %c0_i32, %c0_i32_0 : i32, i32, i32
  }
}

module attributes {stable_mosaic.version = 11 : i64} {
  func.func @_fc_tail_kernel(%arg0: i32, %arg1: memref<2x1280xbf16, #tpu.memory_space<vmem>>, %arg2: memref<1280x100xbf16, #tpu.memory_space<vmem>>, %arg3: memref<1x100xf32, #tpu.memory_space<vmem>>, %arg4: memref<100x6xbf16, #tpu.memory_space<vmem>>, %arg5: memref<1x6xf32, #tpu.memory_space<vmem>>, %arg6: memref<2x6xf32, #tpu.memory_space<vmem>>) attributes {dimension_semantics = [#tpu.dimension_semantics<arbitrary>], iteration_bounds = array<i64: 1>, scalar_prefetch = 0 : i64, scratch_operands = 0 : i64, tpu.core_type = #tpu.core_type<tc>, window_params = [{pipeline_mode = #tpu.pipeline_mode<synchronous>, transform_indices = @transform_0, window_bounds = array<i64: 2, 1280>}, {pipeline_mode = #tpu.pipeline_mode<synchronous>, transform_indices = @transform_1, window_bounds = array<i64: 1280, 100>}, {pipeline_mode = #tpu.pipeline_mode<synchronous>, transform_indices = @transform_2, window_bounds = array<i64: 1, 100>}, {pipeline_mode = #tpu.pipeline_mode<synchronous>, transform_indices = @transform_3, window_bounds = array<i64: 100, 6>}, {pipeline_mode = #tpu.pipeline_mode<synchronous>, transform_indices = @transform_4, window_bounds = array<i64: 1, 6>}, {pipeline_mode = #tpu.pipeline_mode<synchronous>, transform_indices = @transform_5, window_bounds = array<i64: 2, 6>}]} {
    %c0 = arith.constant 0 : index
    %c0_0 = arith.constant 0 : index
    %0 = vector.load %arg1[%c0, %c0_0] : memref<2x1280xbf16, #tpu.memory_space<vmem>>, vector<2x1280xbf16>
    %c0_1 = arith.constant 0 : index
    %c0_2 = arith.constant 0 : index
    %1 = vector.load %arg2[%c0_1, %c0_2] : memref<1280x100xbf16, #tpu.memory_space<vmem>>, vector<1280x100xbf16>
    %cst = arith.constant dense<0.000000e+00> : vector<2x100xf32>
    %2 = tpu.matmul %0, %1, %cst {dimension_numbers = #tpu.dot_dimension_numbers<[1], [0], [0], [1], [0, 0, 1, 1], [], []>} : vector<2x1280xbf16>, vector<1280x100xbf16>, vector<2x100xf32> -> vector<2x100xf32>
    %c0_3 = arith.constant 0 : index
    %c0_4 = arith.constant 0 : index
    %3 = vector.load %arg3[%c0_3, %c0_4] : memref<1x100xf32, #tpu.memory_space<vmem>>, vector<1x100xf32>
    %4 = vector.broadcast %3 : vector<1x100xf32> to vector<2x100xf32>
    %5 = arith.addf %2, %4 : vector<2x100xf32>
    %cst_5 = arith.constant 0.000000e+00 : f32
    %6 = vector.broadcast %cst_5 : f32 to vector<2x100xf32>
    %7 = arith.cmpf ogt, %5, %6 : vector<2x100xf32>
    %cst_6 = arith.constant 0.00999999977 : f32
    %8 = vector.broadcast %cst_6 : f32 to vector<2x100xf32>
    %9 = arith.mulf %5, %8 : vector<2x100xf32>
    %10 = arith.select %7, %5, %9 : vector<2x100xi1>, vector<2x100xf32>
    %11 = arith.truncf %10 : vector<2x100xf32> to vector<2x100xbf16>
    %c0_7 = arith.constant 0 : index
    %c0_8 = arith.constant 0 : index
    %12 = vector.load %arg4[%c0_7, %c0_8] : memref<100x6xbf16, #tpu.memory_space<vmem>>, vector<100x6xbf16>
    %cst_9 = arith.constant dense<0.000000e+00> : vector<2x6xf32>
    %13 = tpu.matmul %11, %12, %cst_9 {dimension_numbers = #tpu.dot_dimension_numbers<[1], [0], [0], [1], [0, 0, 1, 1], [], []>} : vector<2x100xbf16>, vector<100x6xbf16>, vector<2x6xf32> -> vector<2x6xf32>
    %c0_10 = arith.constant 0 : index
    %c0_11 = arith.constant 0 : index
    %14 = vector.load %arg5[%c0_10, %c0_11] : memref<1x6xf32, #tpu.memory_space<vmem>>, vector<1x6xf32>
    %15 = vector.broadcast %14 : vector<1x6xf32> to vector<2x6xf32>
    %16 = arith.addf %13, %15 : vector<2x6xf32>
    %c0_12 = arith.constant 0 : index
    %c0_13 = arith.constant 0 : index
    %17 = vector.load %arg6[%c0_12, %c0_13] : memref<2x6xf32, #tpu.memory_space<vmem>>, vector<2x6xf32>
    tpu.vector_store %arg6[%c0_12, %c0_13], %16 {strides = array<i32>} : memref<2x6xf32, #tpu.memory_space<vmem>>, vector<2x6xf32>,
    return
  }
  func.func @transform_0(%arg0: i32) -> (i32, i32) {
    %c0_i32 = arith.constant 0 : i32
    %c0_i32_0 = arith.constant 0 : i32
    %c0_i32_1 = arith.constant 0 : i32
    return %c0_i32, %c0_i32_0 : i32, i32
  }
  func.func @transform_1(%arg0: i32) -> (i32, i32) {
    %c0_i32 = arith.constant 0 : i32
    %c0_i32_0 = arith.constant 0 : i32
    %c0_i32_1 = arith.constant 0 : i32
    return %c0_i32, %c0_i32_0 : i32, i32
  }
  func.func @transform_2(%arg0: i32) -> (i32, i32) {
    %c0_i32 = arith.constant 0 : i32
    %c0_i32_0 = arith.constant 0 : i32
    %c0_i32_1 = arith.constant 0 : i32
    return %c0_i32, %c0_i32_0 : i32, i32
  }
  func.func @transform_3(%arg0: i32) -> (i32, i32) {
    %c0_i32 = arith.constant 0 : i32
    %c0_i32_0 = arith.constant 0 : i32
    %c0_i32_1 = arith.constant 0 : i32
    return %c0_i32, %c0_i32_0 : i32, i32
  }
  func.func @transform_4(%arg0: i32) -> (i32, i32) {
    %c0_i32 = arith.constant 0 : i32
    %c0_i32_0 = arith.constant 0 : i32
    %c0_i32_1 = arith.constant 0 : i32
    return %c0_i32, %c0_i32_0 : i32, i32
  }
  func.func @transform_5(%arg0: i32) -> (i32, i32) {
    %c0_i32 = arith.constant 0 : i32
    %c0_i32_0 = arith.constant 0 : i32
    %c0_i32_1 = arith.constant 0 : i32
    return %c0_i32, %c0_i32_0 : i32, i32
  }
}

</mosaic_0001>

<llo_original>
// kernel: dqn_forward.4
$region0: #{dqn_forward.4}
  #allocation0 [shape = 'u32[]', space=smem, size = 0x4, offset = 0x4, fixed_abs, tag = 'smem constant byte address 0x4 - core index']
  #allocation1 [shape = 'u32[144,128]{1,0:T(1,128)}', space=vmem, size = 0x12000, scoped, tag = 'internal scratch']
  %s0 = inlined_call_operand.vmem [shape: bf16[2,100,3200], index: 0, kind: input, shape index: {}]
  %s1 = inlined_call_operand.vmem [shape: bf16[128,100], index: 1, kind: input, shape index: {}]
  %s2 = inlined_call_operand.vmem [shape: f32[32,1], index: 2, kind: input, shape index: {}]
  %s3 = inlined_call_operand.vmem [shape: bf16[2,32,3008], index: 3, kind: output, shape index: {}]
  %s4 = sld [smem:[#allocation0]]
  $region45: #{dqn_forward.4} parent=0
    _
  %s6 = ssub.s32 1, %s4
  %s7 = scalar_select 0, %s6, %s4
  loop: start=0, step=1, limit=4
  $region2: #{dqn_forward.4} parent=0 // loop_pre_header
    _
  $region3: #{dqn_forward.4} parent=0 // loop_header
    %s9 = sphi 0, %s13
    %p10 = scmp.ge.s32.totalorder %s9, 4
    %s19 = sphi 0, %s21
    %s22 = sphi 0, %s19
    %s23 = sphi 0, %s22
    %s39 = sphi 0, %s23
    %s43 = sphi 0, %s43
    %s45 = sphi 0, %s43
    %s46 = sphi 0, %s45
    %s60 = sphi 0, %s46
    %s64 = sphi 0, %s64
    %s66 = sphi 0, %s64
    %s67 = sphi 0, %s66
    %s81 = sphi 0, %s67
    %s87 = sphi 0, %s89
    %s90 = sphi 0, %s87
    %s91 = sphi 0, %s90
    %s107 = sphi 0, %s91
  $region4: #{dqn_forward.4} parent=0 // loop_header_branch
    %12 = sbr.rel (%p10) target = $region8
  $region5: #{dqn_forward.4} parent=0 // loop_body
    %s14 = ssub.s32 %s9, 1
    %s15 = ssub.s32 %s9, 2
    %s16 = sadd.s32 %s9, 1
    %s17 = ssub.s32 %s9, %s16
    %p18 = scmp.eq.s32.totalorder %s17, 0
    %s20 = sadd.s32 %s19, 1
    %s21 = scalar_select %p18, %s19, %s20
    %p24 = pneg %p18
    %p25 = scmp.eq.s32.totalorder %s9, 1
    %p26 = por %p24, %p25
    %p27 = scmp.ne.s32.totalorder %s19, %s22
    %p28 = scmp.eq.s32.totalorder %s9, 0
    %p29 = por %p27, %p28
    %p30 = scmp.ne.s32.totalorder %s19, %s22
    %p31 = scmp.eq.s32.totalorder %s14, 1
    %p32 = por %p30, %p31
    %p33 = scmp.ne.s32.totalorder %s22, %s23
    %p34 = scmp.eq.s32.totalorder %s14, 0
    %p35 = por %p33, %p34
    %p36 = scmp.ne.s32.totalorder %s22, %s23
    %p37 = scmp.eq.s32.totalorder %s15, 1
    %p38 = por %p36, %p37
    %p40 = scmp.ne.s32.totalorder %s23, %s39
    %p41 = scmp.eq.s32.totalorder %s15, 0
    %p42 = por %p40, %p41
    %s44 = sadd.s32 %s43, 1
    %p47 = scmp.eq.s32.totalorder %s9, 1
    %p48 = scmp.ne.s32.totalorder %s43, %s45
    %p49 = scmp.eq.s32.totalorder %s9, 0
    %p50 = por %p48, %p49
    %p51 = scmp.ne.s32.totalorder %s43, %s45
    %p52 = scmp.eq.s32.totalorder %s14, 1
    %p53 = por %p51, %p52
    %p54 = scmp.ne.s32.totalorder %s45, %s46
    %p55 = scmp.eq.s32.totalorder %s14, 0
    %p56 = por %p54, %p55
    %p57 = scmp.ne.s32.totalorder %s45, %s46
    %p58 = scmp.eq.s32.totalorder %s15, 1
    %p59 = por %p57, %p58
    %p61 = scmp.ne.s32.totalorder %s46, %s60
    %p62 = scmp.eq.s32.totalorder %s15, 0
    %p63 = por %p61, %p62
    %s65 = sadd.s32 %s64, 1
    %p68 = scmp.eq.s32.totalorder %s9, 1
    %p69 = scmp.ne.s32.totalorder %s64, %s66
    %p70 = scmp.eq.s32.totalorder %s9, 0
    %p71 = por %p69, %p70
    %p72 = scmp.ne.s32.totalorder %s64, %s66
    %p73 = scmp.eq.s32.totalorder %s14, 1
    %p74 = por %p72, %p73
    %p75 = scmp.ne.s32.totalorder %s66, %s67
    %p76 = scmp.eq.s32.totalorder %s14, 0
    %p77 = por %p75, %p76
    %p78 = scmp.ne.s32.totalorder %s66, %s67
    %p79 = scmp.eq.s32.totalorder %s15, 1
    %p80 = por %p78, %p79
    %p82 = scmp.ne.s32.totalorder %s67, %s81
    %p83 = scmp.eq.s32.totalorder %s15, 0
    %p84 = por %p82, %p83
    %s85 = ssub.s32 %s9, %s16
    %p86 = scmp.eq.s32.totalorder %s85, 0
    %s88 = sadd.s32 %s87, 1
    %s89 = scalar_select %p86, %s87, %s88
    %p92 = pneg %p86
    %p93 = scmp.eq.s32.totalorder %s9, 1
    %p94 = por %p92, %p93
    %p95 = scmp.ne.s32.totalorder %s87, %s90
    %p96 = scmp.eq.s32.totalorder %s9, 0
    %p97 = por %p95, %p96
    %p98 = scmp.ne.s32.totalorder %s87, %s90
    %p99 = scmp.eq.s32.totalorder %s14, 1
    %p100 = por %p98, %p99
    %p101 = scmp.ne.s32.totalorder %s90, %s91
    %p102 = scmp.eq.s32.totalorder %s14, 0
    %p103 = por %p101, %p102
    %p104 = scmp.ne.s32.totalorder %s90, %s91
    %p105 = scmp.eq.s32.totalorder %s15, 1
    %p106 = por %p104, %p105
    %p108 = scmp.ne.s32.totalorder %s91, %s107
    %p109 = scmp.eq.s32.totalorder %s15, 0
    %p110 = por %p108, %p109
    %p111 = scmp.le.s32.totalorder 1, %s9
    %p112 = scmp.lt.s32.totalorder %s9, 3
    %p113 = pnand %p111, %p112
    %p114 = pneg %p113
    // Predicated region
    $region9: #{dqn_forward.4} parent=5 // pred_check
      _
    $region10: #{dqn_forward.4} parent=5 // pred_check_branch
      %116 = sbr.rel (%p113) target = $region12
    $region11: #{dqn_forward.4} parent=5 // pred_region
      %s117 = ssub.s32 %s9, 1
      // Predicated region
      $region13: #{dqn_forward.4} parent=11 // pred_check
        %p118 = pneg %p56
      $region14: #{dqn_forward.4} parent=11 // pred_check_branch
        %120 = sbr.rel (%p118) target = $region16
      $region15: #{dqn_forward.4} parent=11 // pred_region
        _
      $region16: #{dqn_forward.4} parent=11 // pred_fallthru
        _
      // Predicated region
      $region17: #{dqn_forward.4} parent=11 // pred_check
        %p121 = pneg %p77
      $region18: #{dqn_forward.4} parent=11 // pred_check_branch
        %123 = sbr.rel (%p121) target = $region20
      $region19: #{dqn_forward.4} parent=11 // pred_region
        _
      $region20: #{dqn_forward.4} parent=11 // pred_fallthru
        _
    $region12: #{dqn_forward.4} parent=5 // pred_fallthru
      _
    %p124 = scmp.lt.s32.totalorder %s9, 2
    // Predicated region
    $region21: #{dqn_forward.4} parent=5 // pred_check
      %p125 = pneg %p124
    $region22: #{dqn_forward.4} parent=5 // pred_check_branch
      %127 = sbr.rel (%p125) target = $region24
    $region23: #{dqn_forward.4} parent=5 // pred_region
      // Predicated region
      $region25: #{dqn_forward.4} parent=23 // pred_check
        %p128 = pneg %p29
      $region26: #{dqn_forward.4} parent=23 // pred_check_branch
        %130 = sbr.rel (%p128) target = $region28
      $region27: #{dqn_forward.4} parent=23 // pred_region
        %p131 = scmp.lt.s32.totalorder %s9, 1
        %s132 = scalar_select %p131, %s9, 1
        %s133 = smul.addr %s132, 325
        %s134 = smul.addr %s133, 4
        %s135 = scalar_lea.vmem %s0, %s134
      $region28: #{dqn_forward.4} parent=23 // pred_fallthru
        _
    $region24: #{dqn_forward.4} parent=5 // pred_fallthru
      _
    %p136 = scmp.le.s32.totalorder 1, %s9
    %p137 = scmp.lt.s32.totalorder %s9, 3
    %p138 = pnand %p136, %p137
    %p139 = pneg %p138
    // Predicated region
    $region29: #{dqn_forward.4} parent=5 // pred_check
      _
    $region30: #{dqn_forward.4} parent=5 // pred_check_branch
      %141 = sbr.rel (%p138) target = $region32
    $region31: #{dqn_forward.4} parent=5 // pred_region
      %s142 = ssub.s32 %s9, 1
      %p143 = scmp.lt.s32.totalorder %s14, 1
      %s144 = scalar_select %p143, %s14, 1
      %s145 = smul.addr %s144, 325
      %s146 = smul.addr %s145, 4
      %s147 = scalar_lea.vmem %s0, %s146
      %p148 = pneg %p35
      %p149 = pneg %p32
      %p150 = pneg %p56
      %p151 = pneg %p53
      %p152 = pneg %p77
      %p153 = pneg %p74
      %p154 = pneg %p103
      %p155 = pneg %p100
      %p156 = scmp.lt.s32.totalorder %s14, 1
      %s157 = scalar_select %p156, %s14, 1
      %s158 = smul.addr %s157, 96
      %s159 = smul.addr %s158, 4
      %s160 = scalar_lea.vmem %s3, %s159
      %p161 = scmp.lt.s32.totalorder %s14, 1
      %s162 = scalar_select %p161, %s14, 1
      %s163 = smul.addr %s162, 325
      %s164 = smul.addr %s163, 4
      %s165 = scalar_lea.vmem %s0, %s164
      %p166 = scmp.lt.s32.totalorder %s14, 1
      %s167 = scalar_select %p166, %s14, 1
      %s168 = smul.addr %s167, 96
      %s169 = smul.addr %s168, 4
      %s170 = scalar_lea.vmem %s3, %s169
      %v172 = vld [vmem:[%s1] sm:$0xf]
      %v173 = vld [vmem:[%s1 + $0x4] sm:$0xf]
      %v174 = vld [vmem:[%s1 + $0x8] sm:$0xf]
      %v175 = vld [vmem:[%s1 + $0xc] sm:$0xf]
      %v176 = vld [vmem:[%s1 + $0x10] sm:$0xf]
      %v177 = vld [vmem:[%s1 + $0x14] sm:$0xf]
      %v178 = vld [vmem:[%s1 + $0x18] sm:$0xf]
      %v179 = vld [vmem:[%s1 + $0x1c] sm:$0xf]
      %v180 = vld [vmem:[%s1 + $0x20] sm:$0xf]
      %v181 = vld [vmem:[%s1 + $0x24] sm:$0xf]
      %v182 = vld [vmem:[%s1 + $0x28] sm:$0xf]
      %v183 = vld [vmem:[%s1 + $0x2c] sm:$0xf]
      %v184 = vld [vmem:[%s1 + $0x30] sm:$0xf]
      %v185 = vld [vmem:[%s1 + $0x34] sm:$0xf]
      %v186 = vld [vmem:[%s1 + $0x38] sm:$0xf]
      %v187 = vld [vmem:[%s1 + $0x3c] sm:$0xf]
      %v188 = vld [vmem:[%s165] sm:$0xff]
      %v189 = vld [vmem:[%s165 + $0x8] sm:$0xff]
      %v190 = vld [vmem:[%s165 + $0x10] sm:$0xff]
      %v191 = vld [vmem:[%s165 + $0x18] sm:$0xff]
      %v192 = vld [vmem:[%s165 + $0x20] sm:$0xff]
      %v193 = vld [vmem:[%s165 + $0x28] sm:$0xff]
      %v194 = vld [vmem:[%s165 + $0x30] sm:$0xff]
      %v195 = vld [vmem:[%s165 + $0x38] sm:$0xff]
      %v196 = vld [vmem:[%s165 + $0x40] sm:$0xff]
      %v197 = vld [vmem:[%s165 + $0x48] sm:$0xff]
      %v198 = vld [vmem:[%s165 + $0x50] sm:$0xff]
      %v199 = vld [vmem:[%s165 + $0x58] sm:$0xff]
      %v200 = vld [vmem:[%s165 + $0x60] sm:$0xf]
      %v201 = vld [vmem:[%s165 + $0x64] sm:$0xff]
      %v202 = vld [vmem:[%s165 + $0x6c] sm:$0xff]
      %v203 = vld [vmem:[%s165 + $0x74] sm:$0xff]
      %v204 = vld [vmem:[%s165 + $0x7c] sm:$0xff]
      %v205 = vld [vmem:[%s165 + $0x84] sm:$0xff]
      %v206 = vld [vmem:[%s165 + $0x8c] sm:$0xff]
      %v207 = vld [vmem:[%s165 + $0x94] sm:$0xff]
      %v208 = vld [vmem:[%s165 + $0x9c] sm:$0xff]
      %v209 = vld [vmem:[%s165 + $0xa4] sm:$0xff]
      %v210 = vld [vmem:[%s165 + $0xac] sm:$0xff]
      %v211 = vld [vmem:[%s165 + $0xb4] sm:$0xff]
      %v212 = vld [vmem:[%s165 + $0xbc] sm:$0xff]
      %v213 = vld [vmem:[%s165 + $0xc4] sm:$0xf]
      %v214 = vld [vmem:[%s165 + $0xc8] sm:$0xff]
      %v215 = vld [vmem:[%s165 + $0xd0] sm:$0xff]
      %v216 = vld [vmem:[%s165 + $0xd8] sm:$0xff]
      %v217 = vld [vmem:[%s165 + $0xe0] sm:$0xff]
      %v218 = vld [vmem:[%s165 + $0xe8] sm:$0xff]
      %v219 = vld [vmem:[%s165 + $0xf0] sm:$0xff]
      %v220 = vld [vmem:[%s165 + $0xf8] sm:$0xff]
      %v221 = vld [vmem:[%s165 + $0x100] sm:$0xff]
      %v222 = vld [vmem:[%s165 + $0x108] sm:$0xff]
      %v223 = vld [vmem:[%s165 + $0x110] sm:$0xff]
      %v224 = vld [vmem:[%s165 + $0x118] sm:$0xff]
      %v225 = vld [vmem:[%s165 + $0x120] sm:$0xff]
      %v226 = vld [vmem:[%s165 + $0x128] sm:$0xf]
      %v227 = vld [vmem:[%s165 + $0x12c] sm:$0xff]
      %v228 = vld [vmem:[%s165 + $0x134] sm:$0xff]
      %v229 = vld [vmem:[%s165 + $0x13c] sm:$0xff]
      %v230 = vld [vmem:[%s165 + $0x144] sm:$0xff]
      %v231 = vld [vmem:[%s165 + $0x14c] sm:$0xff]
      %v232 = vld [vmem:[%s165 + $0x154] sm:$0xff]
      %v233 = vld [vmem:[%s165 + $0x15c] sm:$0xff]
      %v234 = vld [vmem:[%s165 + $0x164] sm:$0xff]
      %v235 = vld [vmem:[%s165 + $0x16c] sm:$0xff]
      %v236 = vld [vmem:[%s165 + $0x174] sm:$0xff]
      %v237 = vld [vmem:[%s165 + $0x17c] sm:$0xff]
      %v238 = vld [vmem:[%s165 + $0x184] sm:$0xff]
      %v239 = vld [vmem:[%s165 + $0x18c] sm:$0xf]
      %v240 = vld [vmem:[%s165 + $0x190] sm:$0xff]
      %v241 = vld [vmem:[%s165 + $0x198] sm:$0xff]
      %v242 = vld [vmem:[%s165 + $0x1a0] sm:$0xff]
      %v243 = vld [vmem:[%s165 + $0x1a8] sm:$0xff]
      %v244 = vld [vmem:[%s165 + $0x1b0] sm:$0xff]
      %v245 = vld [vmem:[%s165 + $0x1b8] sm:$0xff]
      %v246 = vld [vmem:[%s165 + $0x1c0] sm:$0xff]
      %v247 = vld [vmem:[%s165 + $0x1c8] sm:$0xff]
      %v248 = vld [vmem:[%s165 + $0x1d0] sm:$0xff]
      %v249 = vld [vmem:[%s165 + $0x1d8] sm:$0xff]
      %v250 = vld [vmem:[%s165 + $0x1e0] sm:$0xff]
      %v251 = vld [vmem:[%s165 + $0x1e8] sm:$0xff]
      %v252 = vld [vmem:[%s165 + $0x1f0] sm:$0xf]
      %v253 = vld [vmem:[%s165 + $0x1f4] sm:$0xff]
      %v254 = vld [vmem:[%s165 + $0x1fc] sm:$0xff]
      %v255 = vld [vmem:[%s165 + $0x204] sm:$0xff]
      %v256 = vld [vmem:[%s165 + $0x20c] sm:$0xff]
      %v257 = vld [vmem:[%s165 + $0x214] sm:$0xff]
      %v258 = vld [vmem:[%s165 + $0x21c] sm:$0xff]
      %v259 = vld [vmem:[%s165 + $0x224] sm:$0xff]
      %v260 = vld [vmem:[%s165 + $0x22c] sm:$0xff]
      %v261 = vld [vmem:[%s165 + $0x234] sm:$0xff]
      %v262 = vld [vmem:[%s165 + $0x23c] sm:$0xff]
      %v263 = vld [vmem:[%s165 + $0x244] sm:$0xff]
      %v264 = vld [vmem:[%s165 + $0x24c] sm:$0xff]
      %v265 = vld [vmem:[%s165 + $0x254] sm:$0xf]
      %v266 = vld [vmem:[%s165 + $0x258] sm:$0xff]
      %v267 = vld [vmem:[%s165 + $0x260] sm:$0xff]
      %v268 = vld [vmem:[%s165 + $0x268] sm:$0xff]
      %v269 = vld [vmem:[%s165 + $0x270] sm:$0xff]
      %v270 = vld [vmem:[%s165 + $0x278] sm:$0xff]
      %v271 = vld [vmem:[%s165 + $0x280] sm:$0xff]
      %v272 = vld [vmem:[%s165 + $0x288] sm:$0xff]
      %v273 = vld [vmem:[%s165 + $0x290] sm:$0xff]
      %v274 = vld [vmem:[%s165 + $0x298] sm:$0xff]
      %v275 = vld [vmem:[%s165 + $0x2a0] sm:$0xff]
      %v276 = vld [vmem:[%s165 + $0x2a8] sm:$0xff]
      %v277 = vld [vmem:[%s165 + $0x2b0] sm:$0xff]
      %v278 = vld [vmem:[%s165 + $0x2b8] sm:$0xf]
      %v279 = vld [vmem:[%s165 + $0x2bc] sm:$0xff]
      %v280 = vld [vmem:[%s165 + $0x2c4] sm:$0xff]
      %v281 = vld [vmem:[%s165 + $0x2cc] sm:$0xff]
      %v282 = vld [vmem:[%s165 + $0x2d4] sm:$0xff]
      %v283 = vld [vmem:[%s165 + $0x2dc] sm:$0xff]
      %v284 = vld [vmem:[%s165 + $0x2e4] sm:$0xff]
      %v285 = vld [vmem:[%s165 + $0x2ec] sm:$0xff]
      %v286 = vld [vmem:[%s165 + $0x2f4] sm:$0xff]
      %v287 = vld [vmem:[%s165 + $0x2fc] sm:$0xff]
      %v288 = vld [vmem:[%s165 + $0x304] sm:$0xff]
      %v289 = vld [vmem:[%s165 + $0x30c] sm:$0xff]
      %v290 = vld [vmem:[%s165 + $0x314] sm:$0xff]
      %v291 = vld [vmem:[%s165 + $0x31c] sm:$0xf]
      %v292 = vld [vmem:[%s165 + $0x320] sm:$0xff]
      %v293 = vld [vmem:[%s165 + $0x328] sm:$0xff]
      %v294 = vld [vmem:[%s165 + $0x330] sm:$0xff]
      %v295 = vld [vmem:[%s165 + $0x338] sm:$0xff]
      %v296 = vld [vmem:[%s165 + $0x340] sm:$0xff]
      %v297 = vld [vmem:[%s165 + $0x348] sm:$0xff]
      %v298 = vld [vmem:[%s165 + $0x350] sm:$0xff]
      %v299 = vld [vmem:[%s165 + $0x358] sm:$0xff]
      %v300 = vld [vmem:[%s165 + $0x360] sm:$0xff]
      %v301 = vld [vmem:[%s165 + $0x368] sm:$0xff]
      %v302 = vld [vmem:[%s165 + $0x370] sm:$0xff]
      %v303 = vld [vmem:[%s165 + $0x378] sm:$0xff]
      %v304 = vld [vmem:[%s165 + $0x380] sm:$0xf]
      %v305 = vld [vmem:[%s165 + $0x384] sm:$0xff]
      %v306 = vld [vmem:[%s165 + $0x38c] sm:$0xff]
      %v307 = vld [vmem:[%s165 + $0x394] sm:$0xff]
      %v308 = vld [vmem:[%s165 + $0x39c] sm:$0xff]
      %v309 = vld [vmem:[%s165 + $0x3a4] sm:$0xff]
      %v310 = vld [vmem:[%s165 + $0x3ac] sm:$0xff]
      %v311 = vld [vmem:[%s165 + $0x3b4] sm:$0xff]
      %v312 = vld [vmem:[%s165 + $0x3bc] sm:$0xff]
      %v313 = vld [vmem:[%s165 + $0x3c4] sm:$0xff]
      %v314 = vld [vmem:[%s165 + $0x3cc] sm:$0xff]
      %v315 = vld [vmem:[%s165 + $0x3d4] sm:$0xff]
      %v316 = vld [vmem:[%s165 + $0x3dc] sm:$0xff]
      %v317 = vld [vmem:[%s165 + $0x3e4] sm:$0xf]
      %v318 = vld [vmem:[%s165 + $0x3e8] sm:$0xff]
      %v319 = vld [vmem:[%s165 + $0x3f0] sm:$0xff]
      %v320 = vld [vmem:[%s165 + $0x3f8] sm:$0xff]
      %v321 = vld [vmem:[%s165 + $0x400] sm:$0xff]
      %v322 = vld [vmem:[%s165 + $0x408] sm:$0xff]
      %v323 = vld [vmem:[%s165 + $0x410] sm:$0xff]
      %v324 = vld [vmem:[%s165 + $0x418] sm:$0xff]
      %v325 = vld [vmem:[%s165 + $0x420] sm:$0xff]
      %v326 = vld [vmem:[%s165 + $0x428] sm:$0xff]
      %v327 = vld [vmem:[%s165 + $0x430] sm:$0xff]
      %v328 = vld [vmem:[%s165 + $0x438] sm:$0xff]
      %v329 = vld [vmem:[%s165 + $0x440] sm:$0xff]
      %v330 = vld [vmem:[%s165 + $0x448] sm:$0xf]
      %v331 = vld [vmem:[%s165 + $0x44c] sm:$0xff]
      %v332 = vld [vmem:[%s165 + $0x454] sm:$0xff]
      %v333 = vld [vmem:[%s165 + $0x45c] sm:$0xff]
      %v334 = vld [vmem:[%s165 + $0x464] sm:$0xff]
      %v335 = vld [vmem:[%s165 + $0x46c] sm:$0xff]
      %v336 = vld [vmem:[%s165 + $0x474] sm:$0xff]
      %v337 = vld [vmem:[%s165 + $0x47c] sm:$0xff]
      %v338 = vld [vmem:[%s165 + $0x484] sm:$0xff]
      %v339 = vld [vmem:[%s165 + $0x48c] sm:$0xff]
      %v340 = vld [vmem:[%s165 + $0x494] sm:$0xff]
      %v341 = vld [vmem:[%s165 + $0x49c] sm:$0xff]
      %v342 = vld [vmem:[%s165 + $0x4a4] sm:$0xff]
      %v343 = vld [vmem:[%s165 + $0x4ac] sm:$0xf]
      %v344 = vld [vmem:[%s165 + $0x4b0] sm:$0x33]
      %v345 = vld [vmem:[%s165 + $0x4b8] sm:$0x33]
      %v346 = vld [vmem:[%s165 + $0x4c0] sm:$0x33]
      %v347 = vld [vmem:[%s165 + $0x4c8] sm:$0x33]
      %v348 = vld [vmem:[%s165 + $0x4d0] sm:$0x33]
      %v349 = vld [vmem:[%s165 + $0x4d8] sm:$0x33]
      %v350 = vld [vmem:[%s165 + $0x4e0] sm:$0x33]
      %v351 = vld [vmem:[%s165 + $0x4e8] sm:$0x33]
      %v352 = vld [vmem:[%s165 + $0x4f0] sm:$0x33]
      %v353 = vld [vmem:[%s165 + $0x4f8] sm:$0x33]
      %v354 = vld [vmem:[%s165 + $0x500] sm:$0x33]
      %v355 = vld [vmem:[%s165 + $0x508] sm:$0x33]
      %v356 = vld [vmem:[%s165 + $0x510] sm:$0x3]
      %v373 = vunpack.c.l.b16 %v172
      %v374 = vunpack.c.l.b16 %v173
      %v375 = vunpack.c.l.b16 %v174
      %v376 = vunpack.c.l.b16 %v175
      %v377 = vunpack.c.l.b16 %v176
      %v378 = vunpack.c.l.b16 %v177
      %v379 = vunpack.c.l.b16 %v178
      %v380 = vunpack.c.l.b16 %v179
      %v381 = vunpack.c.l.b16 %v180
      %v382 = vunpack.c.l.b16 %v181
      %v383 = vunpack.c.l.b16 %v182
      %v384 = vunpack.c.l.b16 %v183
      %v385 = vunpack.c.l.b16 %v184
      %v386 = vunpack.c.l.b16 %v185
      %v387 = vunpack.c.l.b16 %v186
      %v388 = vunpack.c.l.b16 %v187
      %v389 = vpack.c.b16 %v374, %v373
      %v390 = vpack.c.b16 %v376, %v375
      %v391 = vpack.c.b16 %v378, %v377
      %v392 = vpack.c.b16 %v380, %v379
      %v393 = vpack.c.b16 %v382, %v381
      %v394 = vpack.c.b16 %v384, %v383
      %v395 = vpack.c.b16 %v386, %v385
      %v396 = vpack.c.b16 %v388, %v387
      %v566 = vunpack.c.l.b16 %v188
      %v567 = vunpack.c.h.b16 %v188
      %v568 = vunpack.c.l.b16 %v189
      %v569 = vunpack.c.h.b16 %v189
      %v570 = vunpack.c.l.b16 %v190
      %v571 = vunpack.c.h.b16 %v190
      %v572 = vunpack.c.l.b16 %v191
      %v573 = vunpack.c.h.b16 %v191
      %v574 = vunpack.c.l.b16 %v192
      %v575 = vunpack.c.h.b16 %v192
      %v576 = vunpack.c.l.b16 %v193
      %v577 = vunpack.c.h.b16 %v193
      %v578 = vunpack.c.l.b16 %v194
      %v579 = vunpack.c.h.b16 %v194
      %v580 = vunpack.c.l.b16 %v195
      %v581 = vunpack.c.h.b16 %v195
      %v582 = vunpack.c.l.b16 %v196
      %v583 = vunpack.c.h.b16 %v196
      %v584 = vunpack.c.l.b16 %v197
      %v585 = vunpack.c.h.b16 %v197
      %v586 = vunpack.c.l.b16 %v198
      %v587 = vunpack.c.h.b16 %v198
      %v588 = vunpack.c.l.b16 %v199
      %v589 = vunpack.c.h.b16 %v199
      %v590 = vunpack.c.l.b16 %v200
      %v591 = vunpack.c.l.b16 %v201
      %v592 = vunpack.c.h.b16 %v201
      %v593 = vunpack.c.l.b16 %v202
      %v594 = vunpack.c.h.b16 %v202
      %v595 = vunpack.c.l.b16 %v203
      %v596 = vunpack.c.h.b16 %v203
      %v597 = vunpack.c.l.b16 %v204
      %v598 = vunpack.c.h.b16 %v204
      %v599 = vunpack.c.l.b16 %v205
      %v600 = vunpack.c.h.b16 %v205
      %v601 = vunpack.c.l.b16 %v206
      %v602 = vunpack.c.h.b16 %v206
      %v603 = vunpack.c.l.b16 %v207
      %v604 = vunpack.c.h.b16 %v207
      %v605 = vunpack.c.l.b16 %v208
      %v606 = vunpack.c.h.b16 %v208
      %v607 = vunpack.c.l.b16 %v209
      %v608 = vunpack.c.h.b16 %v209
      %v609 = vunpack.c.l.b16 %v210
      %v610 = vunpack.c.h.b16 %v210
      %v611 = vunpack.c.l.b16 %v211
      %v612 = vunpack.c.h.b16 %v211
      %v613 = vunpack.c.l.b16 %v212
      %v614 = vunpack.c.h.b16 %v212
      %v615 = vunpack.c.l.b16 %v213
      %v616 = vunpack.c.l.b16 %v214
      %v617 = vunpack.c.h.b16 %v214
      %v618 = vunpack.c.l.b16 %v215
      %v619 = vunpack.c.h.b16 %v215
      %v620 = vunpack.c.l.b16 %v216
      %v621 = vunpack.c.h.b16 %v216
      %v622 = vunpack.c.l.b16 %v217
      %v623 = vunpack.c.h.b16 %v217
      %v624 = vunpack.c.l.b16 %v218
      %v625 = vunpack.c.h.b16 %v218
      %v626 = vunpack.c.l.b16 %v219
      %v627 = vunpack.c.h.b16 %v219
      %v628 = vunpack.c.l.b16 %v220
      %v629 = vunpack.c.h.b16 %v220
      %v630 = vunpack.c.l.b16 %v221
      %v631 = vunpack.c.h.b16 %v221
      %v632 = vunpack.c.l.b16 %v222
      %v633 = vunpack.c.h.b16 %v222
      %v634 = vunpack.c.l.b16 %v223
      %v635 = vunpack.c.h.b16 %v223
      %v636 = vunpack.c.l.b16 %v224
      %v637 = vunpack.c.h.b16 %v224
      %v638 = vunpack.c.l.b16 %v225
      %v639 = vunpack.c.h.b16 %v225
      %v640 = vunpack.c.l.b16 %v226
      %v641 = vunpack.c.l.b16 %v227
      %v642 = vunpack.c.h.b16 %v227
      %v643 = vunpack.c.l.b16 %v228
      %v644 = vunpack.c.h.b16 %v228
      %v645 = vunpack.c.l.b16 %v229
      %v646 = vunpack.c.h.b16 %v229
      %v647 = vunpack.c.l.b16 %v230
      %v648 = vunpack.c.h.b16 %v230
      %v649 = vunpack.c.l.b16 %v231
      %v650 = vunpack.c.h.b16 %v231
      %v651 = vunpack.c.l.b16 %v232
      %v652 = vunpack.c.h.b16 %v232
      %v653 = vunpack.c.l.b16 %v233
      %v654 = vunpack.c.h.b16 %v233
      %v655 = vunpack.c.l.b16 %v234
      %v656 = vunpack.c.h.b16 %v234
      %v657 = vunpack.c.l.b16 %v235
      %v658 = vunpack.c.h.b16 %v235
      %v659 = vunpack.c.l.b16 %v236
      %v660 = vunpack.c.h.b16 %v236
      %v661 = vunpack.c.l.b16 %v237
      %v662 = vunpack.c.h.b16 %v237
      %v663 = vunpack.c.l.b16 %v238
      %v664 = vunpack.c.h.b16 %v238
      %v665 = vunpack.c.l.b16 %v239
      %v666 = vunpack.c.l.b16 %v240
      %v667 = vunpack.c.h.b16 %v240
      %v668 = vunpack.c.l.b16 %v241
      %v669 = vunpack.c.h.b16 %v241
      %v670 = vunpack.c.l.b16 %v242
      %v671 = vunpack.c.h.b16 %v242
      %v672 = vunpack.c.l.b16 %v243
      %v673 = vunpack.c.h.b16 %v243
      %v674 = vunpack.c.l.b16 %v244
      %v675 = vunpack.c.h.b16 %v244
      %v676 = vunpack.c.l.b16 %v245
      %v677 = vunpack.c.h.b16 %v245
      %v678 = vunpack.c.l.b16 %v246
      %v679 = vunpack.c.h.b16 %v246
      %v680 = vunpack.c.l.b16 %v247
      %v681 = vunpack.c.h.b16 %v247
      %v682 = vunpack.c.l.b16 %v248
      %v683 = vunpack.c.h.b16 %v248
      %v684 = vunpack.c.l.b16 %v249
      %v685 = vunpack.c.h.b16 %v249
      %v686 = vunpack.c.l.b16 %v250
      %v687 = vunpack.c.h.b16 %v250
      %v688 = vunpack.c.l.b16 %v251
      %v689 = vunpack.c.h.b16 %v251
      %v690 = vunpack.c.l.b16 %v252
      %v691 = vunpack.c.l.b16 %v253
      %v692 = vunpack.c.h.b16 %v253
      %v693 = vunpack.c.l.b16 %v254
      %v694 = vunpack.c.h.b16 %v254
      %v695 = vunpack.c.l.b16 %v255
      %v696 = vunpack.c.h.b16 %v255
      %v697 = vunpack.c.l.b16 %v256
      %v698 = vunpack.c.h.b16 %v256
      %v699 = vunpack.c.l.b16 %v257
      %v700 = vunpack.c.h.b16 %v257
      %v701 = vunpack.c.l.b16 %v258
      %v702 = vunpack.c.h.b16 %v258
      %v703 = vunpack.c.l.b16 %v259
      %v704 = vunpack.c.h.b16 %v259
      %v705 = vunpack.c.l.b16 %v260
      %v706 = vunpack.c.h.b16 %v260
      %v707 = vunpack.c.l.b16 %v261
      %v708 = vunpack.c.h.b16 %v261
      %v709 = vunpack.c.l.b16 %v262
      %v710 = vunpack.c.h.b16 %v262
      %v711 = vunpack.c.l.b16 %v263
      %v712 = vunpack.c.h.b16 %v263
      %v713 = vunpack.c.l.b16 %v264
      %v714 = vunpack.c.h.b16 %v264
      %v715 = vunpack.c.l.b16 %v265
      %v716 = vunpack.c.l.b16 %v266
      %v717 = vunpack.c.h.b16 %v266
      %v718 = vunpack.c.l.b16 %v267
      %v719 = vunpack.c.h.b16 %v267
      %v720 = vunpack.c.l.b16 %v268
      %v721 = vunpack.c.h.b16 %v268
      %v722 = vunpack.c.l.b16 %v269
      %v723 = vunpack.c.h.b16 %v269
      %v724 = vunpack.c.l.b16 %v270
      %v725 = vunpack.c.h.b16 %v270
      %v726 = vunpack.c.l.b16 %v271
      %v727 = vunpack.c.h.b16 %v271
      %v728 = vunpack.c.l.b16 %v272
      %v729 = vunpack.c.h.b16 %v272
      %v730 = vunpack.c.l.b16 %v273
      %v731 = vunpack.c.h.b16 %v273
      %v732 = vunpack.c.l.b16 %v274
      %v733 = vunpack.c.h.b16 %v274
      %v734 = vunpack.c.l.b16 %v275
      %v735 = vunpack.c.h.b16 %v275
      %v736 = vunpack.c.l.b16 %v276
      %v737 = vunpack.c.h.b16 %v276
      %v738 = vunpack.c.l.b16 %v277
      %v739 = vunpack.c.h.b16 %v277
      %v740 = vunpack.c.l.b16 %v278
      %v741 = vunpack.c.l.b16 %v279
      %v742 = vunpack.c.h.b16 %v279
      %v743 = vunpack.c.l.b16 %v280
      %v744 = vunpack.c.h.b16 %v280
      %v745 = vunpack.c.l.b16 %v281
      %v746 = vunpack.c.h.b16 %v281
      %v747 = vunpack.c.l.b16 %v282
      %v748 = vunpack.c.h.b16 %v282
      %v749 = vunpack.c.l.b16 %v283
      %v750 = vunpack.c.h.b16 %v283
      %v751 = vunpack.c.l.b16 %v284
      %v752 = vunpack.c.h.b16 %v284
      %v753 = vunpack.c.l.b16 %v285
      %v754 = vunpack.c.h.b16 %v285
      %v755 = vunpack.c.l.b16 %v286
      %v756 = vunpack.c.h.b16 %v286
      %v757 = vunpack.c.l.b16 %v287
      %v758 = vunpack.c.h.b16 %v287
      %v759 = vunpack.c.l.b16 %v288
      %v760 = vunpack.c.h.b16 %v288
      %v761 = vunpack.c.l.b16 %v289
      %v762 = vunpack.c.h.b16 %v289
      %v763 = vunpack.c.l.b16 %v290
      %v764 = vunpack.c.h.b16 %v290
      %v765 = vunpack.c.l.b16 %v291
      %v766 = vunpack.c.l.b16 %v292
      %v767 = vunpack.c.h.b16 %v292
      %v768 = vunpack.c.l.b16 %v293
      %v769 = vunpack.c.h.b16 %v293
      %v770 = vunpack.c.l.b16 %v294
      %v771 = vunpack.c.h.b16 %v294
      %v772 = vunpack.c.l.b16 %v295
      %v773 = vunpack.c.h.b16 %v295
      %v774 = vunpack.c.l.b16 %v296
      %v775 = vunpack.c.h.b16 %v296
      %v776 = vunpack.c.l.b16 %v297
      %v777 = vunpack.c.h.b16 %v297
      %v778 = vunpack.c.l.b16 %v298
      %v779 = vunpack.c.h.b16 %v298
      %v780 = vunpack.c.l.b16 %v299
      %v781 = vunpack.c.h.b16 %v299
      %v782 = vunpack.c.l.b16 %v300
      %v783 = vunpack.c.h.b16 %v300
      %v784 = vunpack.c.l.b16 %v301
      %v785 = vunpack.c.h.b16 %v301
      %v786 = vunpack.c.l.b16 %v302
      %v787 = vunpack.c.h.b16 %v302
      %v788 = vunpack.c.l.b16 %v303
      %v789 = vunpack.c.h.b16 %v303
      %v790 = vunpack.c.l.b16 %v304
      %v791 = vunpack.c.l.b16 %v305
      %v792 = vunpack.c.h.b16 %v305
      %v793 = vunpack.c.l.b16 %v306
      %v794 = vunpack.c.h.b16 %v306
      %v795 = vunpack.c.l.b16 %v307
      %v796 = vunpack.c.h.b16 %v307
      %v797 = vunpack.c.l.b16 %v308
      %v798 = vunpack.c.h.b16 %v308
      %v799 = vunpack.c.l.b16 %v309
      %v800 = vunpack.c.h.b16 %v309
      %v801 = vunpack.c.l.b16 %v310
      %v802 = vunpack.c.h.b16 %v310
      %v803 = vunpack.c.l.b16 %v311
      %v804 = vunpack.c.h.b16 %v311
      %v805 = vunpack.c.l.b16 %v312
      %v806 = vunpack.c.h.b16 %v312
      %v807 = vunpack.c.l.b16 %v313
      %v808 = vunpack.c.h.b16 %v313
      %v809 = vunpack.c.l.b16 %v314
      %v810 = vunpack.c.h.b16 %v314
      %v811 = vunpack.c.l.b16 %v315
      %v812 = vunpack.c.h.b16 %v315
      %v813 = vunpack.c.l.b16 %v316
      %v814 = vunpack.c.h.b16 %v316
      %v815 = vunpack.c.l.b16 %v317
      %v816 = vunpack.c.l.b16 %v318
      %v817 = vunpack.c.h.b16 %v318
      %v818 = vunpack.c.l.b16 %v319
      %v819 = vunpack.c.h.b16 %v319
      %v820 = vunpack.c.l.b16 %v320
      %v821 = vunpack.c.h.b16 %v320
      %v822 = vunpack.c.l.b16 %v321
      %v823 = vunpack.c.h.b16 %v321
      %v824 = vunpack.c.l.b16 %v322
      %v825 = vunpack.c.h.b16 %v322
      %v826 = vunpack.c.l.b16 %v323
      %v827 = vunpack.c.h.b16 %v323
      %v828 = vunpack.c.l.b16 %v324
      %v829 = vunpack.c.h.b16 %v324
      %v830 = vunpack.c.l.b16 %v325
      %v831 = vunpack.c.h.b16 %v325
      %v832 = vunpack.c.l.b16 %v326
      %v833 = vunpack.c.h.b16 %v326
      %v834 = vunpack.c.l.b16 %v327
      %v835 = vunpack.c.h.b16 %v327
      %v836 = vunpack.c.l.b16 %v328
      %v837 = vunpack.c.h.b16 %v328
      %v838 = vunpack.c.l.b16 %v329
      %v839 = vunpack.c.h.b16 %v329
      %v840 = vunpack.c.l.b16 %v330
      %v841 = vunpack.c.l.b16 %v331
      %v842 = vunpack.c.h.b16 %v331
      %v843 = vunpack.c.l.b16 %v332
      %v844 = vunpack.c.h.b16 %v332
      %v845 = vunpack.c.l.b16 %v333
      %v846 = vunpack.c.h.b16 %v333
      %v847 = vunpack.c.l.b16 %v334
      %v848 = vunpack.c.h.b16 %v334
      %v849 = vunpack.c.l.b16 %v335
      %v850 = vunpack.c.h.b16 %v335
      %v851 = vunpack.c.l.b16 %v336
      %v852 = vunpack.c.h.b16 %v336
      %v853 = vunpack.c.l.b16 %v337
      %v854 = vunpack.c.h.b16 %v337
      %v855 = vunpack.c.l.b16 %v338
      %v856 = vunpack.c.h.b16 %v338
      %v857 = vunpack.c.l.b16 %v339
      %v858 = vunpack.c.h.b16 %v339
      %v859 = vunpack.c.l.b16 %v340
      %v860 = vunpack.c.h.b16 %v340
      %v861 = vunpack.c.l.b16 %v341
      %v862 = vunpack.c.h.b16 %v341
      %v863 = vunpack.c.l.b16 %v342
      %v864 = vunpack.c.h.b16 %v342
      %v865 = vunpack.c.l.b16 %v343
      %v866 = vunpack.c.l.b16 %v344
      %v867 = vunpack.c.h.b16 %v344
      %v868 = vunpack.c.l.b16 %v345
      %v869 = vunpack.c.h.b16 %v345
      %v870 = vunpack.c.l.b16 %v346
      %v871 = vunpack.c.h.b16 %v346
      %v872 = vunpack.c.l.b16 %v347
      %v873 = vunpack.c.h.b16 %v347
      %v874 = vunpack.c.l.b16 %v348
      %v875 = vunpack.c.h.b16 %v348
      %v876 = vunpack.c.l.b16 %v349
      %v877 = vunpack.c.h.b16 %v349
      %v878 = vunpack.c.l.b16 %v350
      %v879 = vunpack.c.h.b16 %v350
      %v880 = vunpack.c.l.b16 %v351
      %v881 = vunpack.c.h.b16 %v351
      %v882 = vunpack.c.l.b16 %v352
      %v883 = vunpack.c.h.b16 %v352
      %v884 = vunpack.c.l.b16 %v353
      %v885 = vunpack.c.h.b16 %v353
      %v886 = vunpack.c.l.b16 %v354
      %v887 = vunpack.c.h.b16 %v354
      %v888 = vunpack.c.l.b16 %v355
      %v889 = vunpack.c.h.b16 %v355
      %v890 = vunpack.c.l.b16 %v356
      %v891 = vpack.c.b16 %v591, %v566
      %v892 = vpack.c.b16 %v592, %v567
      %v893 = vpack.c.b16 %v593, %v568
      %v894 = vpack.c.b16 %v594, %v569
      %v895 = vpack.c.b16 %v595, %v570
      %v896 = vpack.c.b16 %v596, %v571
      %v897 = vpack.c.b16 %v597, %v572
      %v898 = vpack.c.b16 %v598, %v573
      %v899 = vpack.c.b16 %v599, %v574
      %v900 = vpack.c.b16 %v600, %v575
      %v901 = vpack.c.b16 %v601, %v576
      %v902 = vpack.c.b16 %v602, %v577
      %v903 = vpack.c.b16 %v603, %v578
      %v904 = vpack.c.b16 %v604, %v579
      %v905 = vpack.c.b16 %v605, %v580
      %v906 = vpack.c.b16 %v606, %v581
      %v907 = vpack.c.b16 %v607, %v582
      %v908 = vpack.c.b16 %v608, %v583
      %v909 = vpack.c.b16 %v609, %v584
      %v910 = vpack.c.b16 %v610, %v585
      %v911 = vpack.c.b16 %v611, %v586
      %v912 = vpack.c.b16 %v612, %v587
      %v913 = vpack.c.b16 %v613, %v588
      %v914 = vpack.c.b16 %v614, %v589
      %v915 = vpack.c.b16 %v615, %v590
      %v916 = vpack.c.b16 %v641, %v616
      %v917 = vpack.c.b16 %v642, %v617
      %v918 = vpack.c.b16 %v643, %v618
      %v919 = vpack.c.b16 %v644, %v619
      %v920 = vpack.c.b16 %v645, %v620
      %v921 = vpack.c.b16 %v646, %v621
      %v922 = vpack.c.b16 %v647, %v622
      %v923 = vpack.c.b16 %v648, %v623
      %v924 = vpack.c.b16 %v649, %v624
      %v925 = vpack.c.b16 %v650, %v625
      %v926 = vpack.c.b16 %v651, %v626
      %v927 = vpack.c.b16 %v652, %v627
      %v928 = vpack.c.b16 %v653, %v628
      %v929 = vpack.c.b16 %v654, %v629
      %v930 = vpack.c.b16 %v655, %v630
      %v931 = vpack.c.b16 %v656, %v631
      %v932 = vpack.c.b16 %v657, %v632
      %v933 = vpack.c.b16 %v658, %v633
      %v934 = vpack.c.b16 %v659, %v634
      %v935 = vpack.c.b16 %v660, %v635
      %v936 = vpack.c.b16 %v661, %v636
      %v937 = vpack.c.b16 %v662, %v637
      %v938 = vpack.c.b16 %v663, %v638
      %v939 = vpack.c.b16 %v664, %v639
      %v940 = vpack.c.b16 %v665, %v640
      %v941 = vpack.c.b16 %v691, %v666
      %v942 = vpack.c.b16 %v692, %v667
      %v943 = vpack.c.b16 %v693, %v668
      %v944 = vpack.c.b16 %v694, %v669
      %v945 = vpack.c.b16 %v695, %v670
      %v946 = vpack.c.b16 %v696, %v671
      %v947 = vpack.c.b16 %v697, %v672
      %v948 = vpack.c.b16 %v698, %v673
      %v949 = vpack.c.b16 %v699, %v674
      %v950 = vpack.c.b16 %v700, %v675
      %v951 = vpack.c.b16 %v701, %v676
      %v952 = vpack.c.b16 %v702, %v677
      %v953 = vpack.c.b16 %v703, %v678
      %v954 = vpack.c.b16 %v704, %v679
      %v955 = vpack.c.b16 %v705, %v680
      %v956 = vpack.c.b16 %v706, %v681
      %v957 = vpack.c.b16 %v707, %v682
      %v958 = vpack.c.b16 %v708, %v683
      %v959 = vpack.c.b16 %v709, %v684
      %v960 = vpack.c.b16 %v710, %v685
      %v961 = vpack.c.b16 %v711, %v686
      %v962 = vpack.c.b16 %v712, %v687
      %v963 = vpack.c.b16 %v713, %v688
      %v964 = vpack.c.b16 %v714, %v689
      %v965 = vpack.c.b16 %v715, %v690
      %v966 = vpack.c.b16 %v741, %v716
      %v967 = vpack.c.b16 %v742, %v717
      %v968 = vpack.c.b16 %v743, %v718
      %v969 = vpack.c.b16 %v744, %v719
      %v970 = vpack.c.b16 %v745, %v720
      %v971 = vpack.c.b16 %v746, %v721
      %v972 = vpack.c.b16 %v747, %v722
      %v973 = vpack.c.b16 %v748, %v723
      %v974 = vpack.c.b16 %v749, %v724
      %v975 = vpack.c.b16 %v750, %v725
      %v976 = vpack.c.b16 %v751, %v726
      %v977 = vpack.c.b16 %v752, %v727
      %v978 = vpack.c.b16 %v753, %v728
      %v979 = vpack.c.b16 %v754, %v729
      %v980 = vpack.c.b16 %v755, %v730
      %v981 = vpack.c.b16 %v756, %v731
      %v982 = vpack.c.b16 %v757, %v732
      %v983 = vpack.c.b16 %v758, %v733
      %v984 = vpack.c.b16 %v759, %v734
      %v985 = vpack.c.b16 %v760, %v735
      %v986 = vpack.c.b16 %v761, %v736
      %v987 = vpack.c.b16 %v762, %v737
      %v988 = vpack.c.b16 %v763, %v738
      %v989 = vpack.c.b16 %v764, %v739
      %v990 = vpack.c.b16 %v765, %v740
      %v991 = vpack.c.b16 %v791, %v766
      %v992 = vpack.c.b16 %v792, %v767
      %v993 = vpack.c.b16 %v793, %v768
      %v994 = vpack.c.b16 %v794, %v769
      %v995 = vpack.c.b16 %v795, %v770
      %v996 = vpack.c.b16 %v796, %v771
      %v997 = vpack.c.b16 %v797, %v772
      %v998 = vpack.c.b16 %v798, %v773
      %v999 = vpack.c.b16 %v799, %v774
      %v1000 = vpack.c.b16 %v800, %v775
      %v1001 = vpack.c.b16 %v801, %v776
      %v1002 = vpack.c.b16 %v802, %v777
      %v1003 = vpack.c.b16 %v803, %v778
      %v1004 = vpack.c.b16 %v804, %v779
      %v1005 = vpack.c.b16 %v805, %v780
      %v1006 = vpack.c.b16 %v806, %v781
      %v1007 = vpack.c.b16 %v807, %v782
      %v1008 = vpack.c.b16 %v808, %v783
      %v1009 = vpack.c.b16 %v809, %v784
      %v1010 = vpack.c.b16 %v810, %v785
      %v1011 = vpack.c.b16 %v811, %v786
      %v1012 = vpack.c.b16 %v812, %v787
      %v1013 = vpack.c.b16 %v813, %v788
      %v1014 = vpack.c.b16 %v814, %v789
      %v1015 = vpack.c.b16 %v815, %v790
      %v1016 = vpack.c.b16 %v841, %v816
      %v1017 = vpack.c.b16 %v842, %v817
      %v1018 = vpack.c.b16 %v843, %v818
      %v1019 = vpack.c.b16 %v844, %v819
      %v1020 = vpack.c.b16 %v845, %v820
      %v1021 = vpack.c.b16 %v846, %v821
      %v1022 = vpack.c.b16 %v847, %v822
      %v1023 = vpack.c.b16 %v848, %v823
      %v1024 = vpack.c.b16 %v849, %v824
      %v1025 = vpack.c.b16 %v850, %v825
      %v1026 = vpack.c.b16 %v851, %v826
      %v1027 = vpack.c.b16 %v852, %v827
      %v1028 = vpack.c.b16 %v853, %v828
      %v1029 = vpack.c.b16 %v854, %v829
      %v1030 = vpack.c.b16 %v855, %v830
      %v1031 = vpack.c.b16 %v856, %v831
      %v1032 = vpack.c.b16 %v857, %v832
      %v1033 = vpack.c.b16 %v858, %v833
      %v1034 = vpack.c.b16 %v859, %v834
      %v1035 = vpack.c.b16 %v860, %v835
      %v1036 = vpack.c.b16 %v861, %v836
      %v1037 = vpack.c.b16 %v862, %v837
      %v1038 = vpack.c.b16 %v863, %v838
      %v1039 = vpack.c.b16 %v864, %v839
      %v1040 = vpack.c.b16 %v865, %v840
      %v1041 = vpack.c.b16 %v866, %v866
      %v1042 = vpack.c.b16 %v867, %v867
      %v1043 = vpack.c.b16 %v868, %v868
      %v1044 = vpack.c.b16 %v869, %v869
      %v1045 = vpack.c.b16 %v870, %v870
      %v1046 = vpack.c.b16 %v871, %v871
      %v1047 = vpack.c.b16 %v872, %v872
      %v1048 = vpack.c.b16 %v873, %v873
      %v1049 = vpack.c.b16 %v874, %v874
      %v1050 = vpack.c.b16 %v875, %v875
      %v1051 = vpack.c.b16 %v876, %v876
      %v1052 = vpack.c.b16 %v877, %v877
      %v1053 = vpack.c.b16 %v878, %v878
      %v1054 = vpack.c.b16 %v879, %v879
      %v1055 = vpack.c.b16 %v880, %v880
      %v1056 = vpack.c.b16 %v881, %v881
      %v1057 = vpack.c.b16 %v882, %v882
      %v1058 = vpack.c.b16 %v883, %v883
      %v1059 = vpack.c.b16 %v884, %v884
      %v1060 = vpack.c.b16 %v885, %v885
      %v1061 = vpack.c.b16 %v886, %v886
      %v1062 = vpack.c.b16 %v887, %v887
      %v1063 = vpack.c.b16 %v888, %v888
      %v1064 = vpack.c.b16 %v889, %v889
      %v1065 = vpack.c.b16 %v890, %v890
      %vm1216 = vcmask 818176
      %v1218 = vsel %vm1216, %v389, 0
      %v1221 = vsel %vm1216, %v390, 0
      %v1224 = vsel %vm1216, %v391, 0
      %v1227 = vsel %vm1216, %v392, 0
      %v1230 = vsel %vm1216, %v393, 0
      %v1233 = vsel %vm1216, %v394, 0
      %v1236 = vsel %vm1216, %v395, 0
      %v1239 = vsel %vm1216, %v396, 0
      %vm1241 = vcmask 1041408
      %v1243 = vsel %vm1241, %v1041, 0
      %v1246 = vsel %vm1241, %v1042, 0
      %v1249 = vsel %vm1241, %v1043, 0
      %v1252 = vsel %vm1241, %v1044, 0
      %v1255 = vsel %vm1241, %v1045, 0
      %v1258 = vsel %vm1241, %v1046, 0
      %v1261 = vsel %vm1241, %v1047, 0
      %v1264 = vsel %vm1241, %v1048, 0
      %v1267 = vsel %vm1241, %v1049, 0
      %v1270 = vsel %vm1241, %v1050, 0
      %v1273 = vsel %vm1241, %v1051, 0
      %v1276 = vsel %vm1241, %v1052, 0
      %v1279 = vsel %vm1241, %v1053, 0
      %v1282 = vsel %vm1241, %v1054, 0
      %v1285 = vsel %vm1241, %v1055, 0
      %v1288 = vsel %vm1241, %v1056, 0
      %v1291 = vsel %vm1241, %v1057, 0
      %v1294 = vsel %vm1241, %v1058, 0
      %v1297 = vsel %vm1241, %v1059, 0
      %v1300 = vsel %vm1241, %v1060, 0
      %v1303 = vsel %vm1241, %v1061, 0
      %v1306 = vsel %vm1241, %v1062, 0
      %v1309 = vsel %vm1241, %v1063, 0
      %v1312 = vsel %vm1241, %v1064, 0
      %v1315 = vsel %vm1241, %v1065, 0
      %1317 = vmatprep.subr.bf16.mxu0 %v892
      %1318 = vmatpush1.bf16.msra.mxu0 %v891
      %1319 = vmatprep.subr.bf16.mxu0 %v917
      %1320 = vmatpush1.bf16.msra.mxu0 %v916
      %1321 = vmatprep.subr.bf16.mxu0 %v942
      %1322 = vmatpush1.bf16.msra.mxu0 %v941
      %1323 = vmatprep.subr.bf16.mxu0 %v967
      %1324 = vmatpush1.bf16.msra.mxu0 %v966
      %1325 = vmatprep.subr.bf16.mxu0 %v992
      %1326 = vmatpush1.bf16.msra.mxu0 %v991
      %1327 = vmatprep.subr.bf16.mxu0 %v1017
      %1328 = vmatpush1.bf16.msra.mxu0 %v1016
      %1329 = vmatprep.subr.bf16.mxu0 %v1246
      %1330 = vmatpush1.bf16.msra.mxu0 %v1243
      %1331 = vmatprep.subr.bf16.mxu0 0
      %1332 = vmatpush1.bf16.msra.mxu0 0
      %1333 = vmatprep.subr.bf16.mxu0 0
      %1334 = vmatpush1.bf16.msra.mxu0 0
      %1335 = vmatprep.subr.bf16.mxu0 0
      %1336 = vmatpush1.bf16.msra.mxu0 0
      %1337 = vmatprep.subr.bf16.mxu0 0
      %1338 = vmatpush1.bf16.msra.mxu0 0
      %1339 = vmatprep.subr.bf16.mxu0 0
      %1340 = vmatpush1.bf16.msra.mxu0 0
      %1341 = vmatprep.subr.bf16.mxu0 0
      %1342 = vmatpush1.bf16.msra.mxu0 0
      %1343 = vmatprep.subr.bf16.mxu0 0
      %1344 = vmatpush1.bf16.msra.mxu0 0
      %1345 = vmatprep.subr.bf16.mxu0 0
      %1346 = vmatpush1.bf16.msra.mxu0 0
      %1347 = vmatprep.subr.bf16.mxu0 0
      %1348 = vmatpush1.bf16.msra.mxu0 0
      %1349 = vmatprep.mubr.bf16.mxu0 0
      %1350 = vmatmul.mubr.bf16.gmra.mrb[0].mxu0 %v1218
      %v1351 = vpop.f32.mrb[0].mxu0
      %v1352 = vadd.f32 0.0, %v1351
      %v1353 = vpop.f32.mrb[0].mxu0
      %v1354 = vadd.f32 0.0, %v1353
      %v1355 = vpop.f32.mrb[0].mxu0
      %v1356 = vadd.f32 0.0, %v1355
      %v1357 = vpop.f32.mrb[0].mxu0
      %v1358 = vadd.f32 0.0, %v1357
      %1359 = vmatprep.mubr.bf16.mxu0 0
      %1360 = vmatmul.mubr.bf16.gmra.mrb[0].mxu0 %v1221
      %v1361 = vpop.f32.mrb[0].mxu0
      %v1362 = vadd.f32 0.0, %v1361
      %v1363 = vpop.f32.mrb[0].mxu0
      %v1364 = vadd.f32 0.0, %v1363
      %v1365 = vpop.f32.mrb[0].mxu0
      %v1366 = vadd.f32 0.0, %v1365
      %v1367 = vpop.f32.mrb[0].mxu0
      %v1368 = vadd.f32 0.0, %v1367
      %1369 = vmatprep.mubr.bf16.mxu0 0
      %1370 = vmatmul.mubr.bf16.gmra.mrb[0].mxu0 %v1224
      %v1371 = vpop.f32.mrb[0].mxu0
      %v1372 = vadd.f32 0.0, %v1371
      %v1373 = vpop.f32.mrb[0].mxu0
      %v1374 = vadd.f32 0.0, %v1373
      %v1375 = vpop.f32.mrb[0].mxu0
      %v1376 = vadd.f32 0.0, %v1375
      %v1377 = vpop.f32.mrb[0].mxu0
      %v1378 = vadd.f32 0.0, %v1377
      %1379 = vmatprep.mubr.bf16.mxu0 0
      %1380 = vmatmul.mubr.bf16.gmra.mrb[0].mxu0 %v1227
      %v1381 = vpop.f32.mrb[0].mxu0
      %v1382 = vadd.f32 0.0, %v1381
      %v1383 = vpop.f32.mrb[0].mxu0
      %v1384 = vadd.f32 0.0, %v1383
      %v1385 = vpop.f32.mrb[0].mxu0
      %v1386 = vadd.f32 0.0, %v1385
      %v1387 = vpop.f32.mrb[0].mxu0
      %v1388 = vadd.f32 0.0, %v1387
      %1389 = vmatprep.mubr.bf16.mxu0 0
      %1390 = vmatmul.mubr.bf16.gmra.mrb[0].mxu0 %v1230
      %v1391 = vpop.f32.mrb[0].mxu0
      %v1392 = vadd.f32 0.0, %v1391
      %v1393 = vpop.f32.mrb[0].mxu0
      %v1394 = vadd.f32 0.0, %v1393
      %v1395 = vpop.f32.mrb[0].mxu0
      %v1396 = vadd.f32 0.0, %v1395
      %v1397 = vpop.f32.mrb[0].mxu0
      %v1398 = vadd.f32 0.0, %v1397
      %1399 = vmatprep.mubr.bf16.mxu0 0
      %1400 = vmatmul.mubr.bf16.gmra.mrb[0].mxu0 %v1233
      %v1401 = vpop.f32.mrb[0].mxu0
      %v1402 = vadd.f32 0.0, %v1401
      %v1403 = vpop.f32.mrb[0].mxu0
      %v1404 = vadd.f32 0.0, %v1403
      %v1405 = vpop.f32.mrb[0].mxu0
      %v1406 = vadd.f32 0.0, %v1405
      %v1407 = vpop.f32.mrb[0].mxu0
      %v1408 = vadd.f32 0.0, %v1407
      %1409 = vmatprep.mubr.bf16.mxu0 0
      %1410 = vmatmul.mubr.bf16.gmra.mrb[0].mxu0 %v1236
      %v1411 = vpop.f32.mrb[0].mxu0
      %v1412 = vadd.f32 0.0, %v1411
      %v1413 = vpop.f32.mrb[0].mxu0
      %v1414 = vadd.f32 0.0, %v1413
      %v1415 = vpop.f32.mrb[0].mxu0
      %v1416 = vadd.f32 0.0, %v1415
      %v1417 = vpop.f32.mrb[0].mxu0
      %v1418 = vadd.f32 0.0, %v1417
      %1419 = vmatprep.mubr.bf16.mxu0 0
      %1420 = vmatmul.mubr.bf16.gmra.mrb[0].mxu0 %v1239
      %v1421 = vpop.f32.mrb[0].mxu0
      %v1422 = vadd.f32 0.0, %v1421
      %v1423 = vpop.f32.mrb[0].mxu0
      %v1424 = vadd.f32 0.0, %v1423
      %v1425 = vpop.f32.mrb[0].mxu0
      %v1426 = vadd.f32 0.0, %v1425
      %v1427 = vpop.f32.mrb[0].mxu0
      %v1428 = vadd.f32 0.0, %v1427
      %1429 = vdwg.mxu0
      %1430 = vmatprep.subr.bf16.mxu0 %v894
      %1431 = vmatpush1.bf16.msra.mxu0 %v893
      %1432 = vmatprep.subr.bf16.mxu0 %v919
      %1433 = vmatpush1.bf16.msra.mxu0 %v918
      %1434 = vmatprep.subr.bf16.mxu0 %v944
      %1435 = vmatpush1.bf16.msra.mxu0 %v943
      %1436 = vmatprep.subr.bf16.mxu0 %v969
      %1437 = vmatpush1.bf16.msra.mxu0 %v968
      %1438 = vmatprep.subr.bf16.mxu0 %v994
      %1439 = vmatpush1.bf16.msra.mxu0 %v993
      %1440 = vmatprep.subr.bf16.mxu0 %v1019
      %1441 = vmatpush1.bf16.msra.mxu0 %v1018
      %1442 = vmatprep.subr.bf16.mxu0 %v1252
      %1443 = vmatpush1.bf16.msra.mxu0 %v1249
      %1444 = vmatprep.subr.bf16.mxu0 0
      %1445 = vmatpush1.bf16.msra.mxu0 0
      %1446 = vmatprep.subr.bf16.mxu0 0
      %1447 = vmatpush1.bf16.msra.mxu0 0
      %1448 = vmatprep.subr.bf16.mxu0 0
      %1449 = vmatpush1.bf16.msra.mxu0 0
      %1450 = vmatprep.subr.bf16.mxu0 0
      %1451 = vmatpush1.bf16.msra.mxu0 0
      %1452 = vmatprep.subr.bf16.mxu0 0
      %1453 = vmatpush1.bf16.msra.mxu0 0
      %1454 = vmatprep.subr.bf16.mxu0 0
      %1455 = vmatpush1.bf16.msra.mxu0 0
      %1456 = vmatprep.subr.bf16.mxu0 0
      %1457 = vmatpush1.bf16.msra.mxu0 0
      %1458 = vmatprep.subr.bf16.mxu0 0
      %1459 = vmatpush1.bf16.msra.mxu0 0
      %1460 = vmatprep.subr.bf16.mxu0 0
      %1461 = vmatpush1.bf16.msra.mxu0 0
      %1462 = vmatprep.mubr.bf16.mxu0 0
      %1463 = vmatmul.mubr.bf16.gmra.mrb[0].mxu0 %v1218
      %v1464 = vpop.f32.mrb[0].mxu0
      %v1465 = vadd.f32 0.0, %v1464
      %v1466 = vpop.f32.mrb[0].mxu0
      %v1467 = vadd.f32 0.0, %v1466
      %v1468 = vpop.f32.mrb[0].mxu0
      %v1469 = vadd.f32 0.0, %v1468
      %v1470 = vpop.f32.mrb[0].mxu0
      %v1471 = vadd.f32 0.0, %v1470
      %1472 = vmatprep.mubr.bf16.mxu0 0
      %1473 = vmatmul.mubr.bf16.gmra.mrb[0].mxu0 %v1221
      %v1474 = vpop.f32.mrb[0].mxu0
      %v1475 = vadd.f32 0.0, %v1474
      %v1476 = vpop.f32.mrb[0].mxu0
      %v1477 = vadd.f32 0.0, %v1476
      %v1478 = vpop.f32.mrb[0].mxu0
      %v1479 = vadd.f32 0.0, %v1478
      %v1480 = vpop.f32.mrb[0].mxu0
      %v1481 = vadd.f32 0.0, %v1480
      %1482 = vmatprep.mubr.bf16.mxu0 0
      %1483 = vmatmul.mubr.bf16.gmra.mrb[0].mxu0 %v1224
      %v1484 = vpop.f32.mrb[0].mxu0
      %v1485 = vadd.f32 0.0, %v1484
      %v1486 = vpop.f32.mrb[0].mxu0
      %v1487 = vadd.f32 0.0, %v1486
      %v1488 = vpop.f32.mrb[0].mxu0
      %v1489 = vadd.f32 0.0, %v1488
      %v1490 = vpop.f32.mrb[0].mxu0
      %v1491 = vadd.f32 0.0, %v1490
      %1492 = vmatprep.mubr.bf16.mxu0 0
      %1493 = vmatmul.mubr.bf16.gmra.mrb[0].mxu0 %v1227
      %v1494 = vpop.f32.mrb[0].mxu0
      %v1495 = vadd.f32 0.0, %v1494
      %v1496 = vpop.f32.mrb[0].mxu0
      %v1497 = vadd.f32 0.0, %v1496
      %v1498 = vpop.f32.mrb[0].mxu0
      %v1499 = vadd.f32 0.0, %v1498
      %v1500 = vpop.f32.mrb[0].mxu0
      %v1501 = vadd.f32 0.0, %v1500
      %1502 = vmatprep.mubr.bf16.mxu0 0
      %1503 = vmatmul.mubr.bf16.gmra.mrb[0].mxu0 %v1230
      %v1504 = vpop.f32.mrb[0].mxu0
      %v1505 = vadd.f32 0.0, %v1504
      %v1506 = vpop.f32.mrb[0].mxu0
      %v1507 = vadd.f32 0.0, %v1506
      %v1508 = vpop.f32.mrb[0].mxu0
      %v1509 = vadd.f32 0.0, %v1508
      %v1510 = vpop.f32.mrb[0].mxu0
      %v1511 = vadd.f32 0.0, %v1510
      %1512 = vmatprep.mubr.bf16.mxu0 0
      %1513 = vmatmul.mubr.bf16.gmra.mrb[0].mxu0 %v1233
      %v1514 = vpop.f32.mrb[0].mxu0
      %v1515 = vadd.f32 0.0, %v1514
      %v1516 = vpop.f32.mrb[0].mxu0
      %v1517 = vadd.f32 0.0, %v1516
      %v1518 = vpop.f32.mrb[0].mxu0
      %v1519 = vadd.f32 0.0, %v1518
      %v1520 = vpop.f32.mrb[0].mxu0
      %v1521 = vadd.f32 0.0, %v1520
      %1522 = vmatprep.mubr.bf16.mxu0 0
      %1523 = vmatmul.mubr.bf16.gmra.mrb[0].mxu0 %v1236
      %v1524 = vpop.f32.mrb[0].mxu0
      %v1525 = vadd.f32 0.0, %v1524
      %v1526 = vpop.f32.mrb[0].mxu0
      %v1527 = vadd.f32 0.0, %v1526
      %v1528 = vpop.f32.mrb[0].mxu0
      %v1529 = vadd.f32 0.0, %v1528
      %v1530 = vpop.f32.mrb[0].mxu0
      %v1531 = vadd.f32 0.0, %v1530
      %1532 = vmatprep.mubr.bf16.mxu0 0
      %1533 = vmatmul.mubr.bf16.gmra.mrb[0].mxu0 %v1239
      %v1534 = vpop.f32.mrb[0].mxu0
      %v1535 = vadd.f32 0.0, %v1534
      %v1536 = vpop.f32.mrb[0].mxu0
      %v1537 = vadd.f32 0.0, %v1536
      %v1538 = vpop.f32.mrb[0].mxu0
      %v1539 = vadd.f32 0.0, %v1538
      %v1540 = vpop.f32.mrb[0].mxu0
      %v1541 = vadd.f32 0.0, %v1540
      %1542 = vdwg.mxu0
      %1543 = vmatprep.subr.bf16.mxu0 %v896
      %1544 = vmatpush1.bf16.msra.mxu0 %v895
      %1545 = vmatprep.subr.bf16.mxu0 %v921
      %1546 = vmatpush1.bf16.msra.mxu0 %v920
      %1547 = vmatprep.subr.bf16.mxu0 %v946
      %1548 = vmatpush1.bf16.msra.mxu0 %v945
      %1549 = vmatprep.subr.bf16.mxu0 %v971
      %1550 = vmatpush1.bf16.msra.mxu0 %v970
      %1551 = vmatprep.subr.bf16.mxu0 %v996
      %1552 = vmatpush1.bf16.msra.mxu0 %v995
      %1553 = vmatprep.subr.bf16.mxu0 %v1021
      %1554 = vmatpush1.bf16.msra.mxu0 %v1020
      %1555 = vmatprep.subr.bf16.mxu0 %v1258
      %1556 = vmatpush1.bf16.msra.mxu0 %v1255
      %1557 = vmatprep.subr.bf16.mxu0 0
      %1558 = vmatpush1.bf16.msra.mxu0 0
      %1559 = vmatprep.subr.bf16.mxu0 0
      %1560 = vmatpush1.bf16.msra.mxu0 0
      %1561 = vmatprep.subr.bf16.mxu0 0
      %1562 = vmatpush1.bf16.msra.mxu0 0
      %1563 = vmatprep.subr.bf16.mxu0 0
      %1564 = vmatpush1.bf16.msra.mxu0 0
      %1565 = vmatprep.subr.bf16.mxu0 0
      %1566 = vmatpush1.bf16.msra.mxu0 0
      %1567 = vmatprep.subr.bf16.mxu0 0
      %1568 = vmatpush1.bf16.msra.mxu0 0
      %1569 = vmatprep.subr.bf16.mxu0 0
      %1570 = vmatpush1.bf16.msra.mxu0 0
      %1571 = vmatprep.subr.bf16.mxu0 0
      %1572 = vmatpush1.bf16.msra.mxu0 0
      %1573 = vmatprep.subr.bf16.mxu0 0
      %1574 = vmatpush1.bf16.msra.mxu0 0
      %1575 = vmatprep.mubr.bf16.mxu0 0
      %1576 = vmatmul.mubr.bf16.gmra.mrb[0].mxu0 %v1218
      %v1577 = vpop.f32.mrb[0].mxu0
      %v1578 = vadd.f32 0.0, %v1577
      %v1579 = vpop.f32.mrb[0].mxu0
      %v1580 = vadd.f32 0.0, %v1579
      %v1581 = vpop.f32.mrb[0].mxu0
      %v1582 = vadd.f32 0.0, %v1581
      %v1583 = vpop.f32.mrb[0].mxu0
      %v1584 = vadd.f32 0.0, %v1583
      %1585 = vmatprep.mubr.bf16.mxu0 0
      %1586 = vmatmul.mubr.bf16.gmra.mrb[0].mxu0 %v1221
      %v1587 = vpop.f32.mrb[0].mxu0
      %v1588 = vadd.f32 0.0, %v1587
      %v1589 = vpop.f32.mrb[0].mxu0
      %v1590 = vadd.f32 0.0, %v1589
      %v1591 = vpop.f32.mrb[0].mxu0
      %v1592 = vadd.f32 0.0, %v1591
      %v1593 = vpop.f32.mrb[0].mxu0
      %v1594 = vadd.f32 0.0, %v1593
      %1595 = vmatprep.mubr.bf16.mxu0 0
      %1596 = vmatmul.mubr.bf16.gmra.mrb[0].mxu0 %v1224
      %v1597 = vpop.f32.mrb[0].mxu0
      %v1598 = vadd.f32 0.0, %v1597
      %v1599 = vpop.f32.mrb[0].mxu0
      %v1600 = vadd.f32 0.0, %v1599
      %v1601 = vpop.f32.mrb[0].mxu0
      %v1602 = vadd.f32 0.0, %v1601
      %v1603 = vpop.f32.mrb[0].mxu0
      %v1604 = vadd.f32 0.0, %v1603
      %1605 = vmatprep.mubr.bf16.mxu0 0
      %1606 = vmatmul.mubr.bf16.gmra.mrb[0].mxu0 %v1227
      %v1607 = vpop.f32.mrb[0].mxu0
      %v1608 = vadd.f32 0.0, %v1607
      %v1609 = vpop.f32.mrb[0].mxu0
      %v1610 = vadd.f32 0.0, %v1609
      %v1611 = vpop.f32.mrb[0].mxu0
      %v1612 = vadd.f32 0.0, %v1611
      %v1613 = vpop.f32.mrb[0].mxu0
      %v1614 = vadd.f32 0.0, %v1613
      %1615 = vmatprep.mubr.bf16.mxu0 0
      %1616 = vmatmul.mubr.bf16.gmra.mrb[0].mxu0 %v1230
      %v1617 = vpop.f32.mrb[0].mxu0
      %v1618 = vadd.f32 0.0, %v1617
      %v1619 = vpop.f32.mrb[0].mxu0
      %v1620 = vadd.f32 0.0, %v1619
      %v1621 = vpop.f32.mrb[0].mxu0
      %v1622 = vadd.f32 0.0, %v1621
      %v1623 = vpop.f32.mrb[0].mxu0
      %v1624 = vadd.f32 0.0, %v1623
      %1625 = vmatprep.mubr.bf16.mxu0 0
      %1626 = vmatmul.mubr.bf16.gmra.mrb[0].mxu0 %v1233
      %v1627 = vpop.f32.mrb[0].mxu0
      %v1628 = vadd.f32 0.0, %v1627
      %v1629 = vpop.f32.mrb[0].mxu0
      %v1630 = vadd.f32 0.0, %v1629
      %v1631 = vpop.f32.mrb[0].mxu0
      %v1632 = vadd.f32 0.0, %v1631
      %v1633 = vpop.f32.mrb[0].mxu0
      %v1634 = vadd.f32 0.0, %v1633
      %1635 = vmatprep.mubr.bf16.mxu0 0
      %1636 = vmatmul.mubr.bf16.gmra.mrb[0].mxu0 %v1236
      %v1637 = vpop.f32.mrb[0].mxu0
      %v1638 = vadd.f32 0.0, %v1637
      %v1639 = vpop.f32.mrb[0].mxu0
      %v1640 = vadd.f32 0.0, %v1639
      %v1641 = vpop.f32.mrb[0].mxu0
      %v1642 = vadd.f32 0.0, %v1641
      %v1643 = vpop.f32.mrb[0].mxu0
      %v1644 = vadd.f32 0.0, %v1643
      %1645 = vmatprep.mubr.bf16.mxu0 0
      %1646 = vmatmul.mubr.bf16.gmra.mrb[0].mxu0 %v1239
      %v1647 = vpop.f32.mrb[0].mxu0
      %v1648 = vadd.f32 0.0, %v1647
      %v1649 = vpop.f32.mrb[0].mxu0
      %v1650 = vadd.f32 0.0, %v1649
      %v1651 = vpop.f32.mrb[0].mxu0
      %v1652 = vadd.f32 0.0, %v1651
      %v1653 = vpop.f32.mrb[0].mxu0
      %v1654 = vadd.f32 0.0, %v1653
      %1655 = vdwg.mxu0
      %1656 = vmatprep.subr.bf16.mxu0 %v898
      %1657 = vmatpush1.bf16.msra.mxu0 %v897
      %1658 = vmatprep.subr.bf16.mxu0 %v923
      %1659 = vmatpush1.bf16.msra.mxu0 %v922
      %1660 = vmatprep.subr.bf16.mxu0 %v948
      %1661 = vmatpush1.bf16.msra.mxu0 %v947
      %1662 = vmatprep.subr.bf16.mxu0 %v973
      %1663 = vmatpush1.bf16.msra.mxu0 %v972
      %1664 = vmatprep.subr.bf16.mxu0 %v998
      %1665 = vmatpush1.bf16.msra.mxu0 %v997
      %1666 = vmatprep.subr.bf16.mxu0 %v1023
      %1667 = vmatpush1.bf16.msra.mxu0 %v1022
      %1668 = vmatprep.subr.bf16.mxu0 %v1264
      %1669 = vmatpush1.bf16.msra.mxu0 %v1261
      %1670 = vmatprep.subr.bf16.mxu0 0
      %1671 = vmatpush1.bf16.msra.mxu0 0
      %1672 = vmatprep.subr.bf16.mxu0 0
      %1673 = vmatpush1.bf16.msra.mxu0 0
      %1674 = vmatprep.subr.bf16.mxu0 0
      %1675 = vmatpush1.bf16.msra.mxu0 0
      %1676 = vmatprep.subr.bf16.mxu0 0
      %1677 = vmatpush1.bf16.msra.mxu0 0
      %1678 = vmatprep.subr.bf16.mxu0 0
      %1679 = vmatpush1.bf16.msra.mxu0 0
      %1680 = vmatprep.subr.bf16.mxu0 0
      %1681 = vmatpush1.bf16.msra.mxu0 0
      %1682 = vmatprep.subr.bf16.mxu0 0
      %1683 = vmatpush1.bf16.msra.mxu0 0
      %1684 = vmatprep.subr.bf16.mxu0 0
      %1685 = vmatpush1.bf16.msra.mxu0 0
      %1686 = vmatprep.subr.bf16.mxu0 0
      %1687 = vmatpush1.bf16.msra.mxu0 0
      %1688 = vmatprep.mubr.bf16.mxu0 0
      %1689 = vmatmul.mubr.bf16.gmra.mrb[0].mxu0 %v1218
      %v1690 = vpop.f32.mrb[0].mxu0
      %v1691 = vadd.f32 0.0, %v1690
      %v1692 = vpop.f32.mrb[0].mxu0
      %v1693 = vadd.f32 0.0, %v1692
      %v1694 = vpop.f32.mrb[0].mxu0
      %v1695 = vadd.f32 0.0, %v1694
      %v1696 = vpop.f32.mrb[0].mxu0
      %v1697 = vadd.f32 0.0, %v1696
      %1698 = vmatprep.mubr.bf16.mxu0 0
      %1699 = vmatmul.mubr.bf16.gmra.mrb[0].mxu0 %v1221
      %v1700 = vpop.f32.mrb[0].mxu0
      %v1701 = vadd.f32 0.0, %v1700
      %v1702 = vpop.f32.mrb[0].mxu0
      %v1703 = vadd.f32 0.0, %v1702
      %v1704 = vpop.f32.mrb[0].mxu0
      %v1705 = vadd.f32 0.0, %v1704
      %v1706 = vpop.f32.mrb[0].mxu0
      %v1707 = vadd.f32 0.0, %v1706
      %1708 = vmatprep.mubr.bf16.mxu0 0
      %1709 = vmatmul.mubr.bf16.gmra.mrb[0].mxu0 %v1224
      %v1710 = vpop.f32.mrb[0].mxu0
      %v1711 = vadd.f32 0.0, %v1710
      %v1712 = vpop.f32.mrb[0].mxu0
      %v1713 = vadd.f32 0.0, %v1712
      %v1714 = vpop.f32.mrb[0].mxu0
      %v1715 = vadd.f32 0.0, %v1714
      %v1716 = vpop.f32.mrb[0].mxu0
      %v1717 = vadd.f32 0.0, %v1716
      %1718 = vmatprep.mubr.bf16.mxu0 0
      %1719 = vmatmul.mubr.bf16.gmra.mrb[0].mxu0 %v1227
      %v1720 = vpop.f32.mrb[0].mxu0
      %v1721 = vadd.f32 0.0, %v1720
      %v1722 = vpop.f32.mrb[0].mxu0
      %v1723 = vadd.f32 0.0, %v1722
      %v1724 = vpop.f32.mrb[0].mxu0
      %v1725 = vadd.f32 0.0, %v1724
      %v1726 = vpop.f32.mrb[0].mxu0
      %v1727 = vadd.f32 0.0, %v1726
      %1728 = vmatprep.mubr.bf16.mxu0 0
      %1729 = vmatmul.mubr.bf16.gmra.mrb[0].mxu0 %v1230
      %v1730 = vpop.f32.mrb[0].mxu0
      %v1731 = vadd.f32 0.0, %v1730
      %v1732 = vpop.f32.mrb[0].mxu0
      %v1733 = vadd.f32 0.0, %v1732
      %v1734 = vpop.f32.mrb[0].mxu0
      %v1735 = vadd.f32 0.0, %v1734
      %v1736 = vpop.f32.mrb[0].mxu0
      %v1737 = vadd.f32 0.0, %v1736
      %1738 = vmatprep.mubr.bf16.mxu0 0
      %1739 = vmatmul.mubr.bf16.gmra.mrb[0].mxu0 %v1233
      %v1740 = vpop.f32.mrb[0].mxu0
      %v1741 = vadd.f32 0.0, %v1740
      %v1742 = vpop.f32.mrb[0].mxu0
      %v1743 = vadd.f32 0.0, %v1742
      %v1744 = vpop.f32.mrb[0].mxu0
      %v1745 = vadd.f32 0.0, %v1744
      %v1746 = vpop.f32.mrb[0].mxu0
      %v1747 = vadd.f32 0.0, %v1746
      %1748 = vmatprep.mubr.bf16.mxu0 0
      %1749 = vmatmul.mubr.bf16.gmra.mrb[0].mxu0 %v1236
      %v1750 = vpop.f32.mrb[0].mxu0
      %v1751 = vadd.f32 0.0, %v1750
      %v1752 = vpop.f32.mrb[0].mxu0
      %v1753 = vadd.f32 0.0, %v1752
      %v1754 = vpop.f32.mrb[0].mxu0
      %v1755 = vadd.f32 0.0, %v1754
      %v1756 = vpop.f32.mrb[0].mxu0
      %v1757 = vadd.f32 0.0, %v1756
      %1758 = vmatprep.mubr.bf16.mxu0 0
      %1759 = vmatmul.mubr.bf16.gmra.mrb[0].mxu0 %v1239
      %v1760 = vpop.f32.mrb[0].mxu0
      %v1761 = vadd.f32 0.0, %v1760
      %v1762 = vpop.f32.mrb[0].mxu0
      %v1763 = vadd.f32 0.0, %v1762
      %v1764 = vpop.f32.mrb[0].mxu0
      %v1765 = vadd.f32 0.0, %v1764
      %v1766 = vpop.f32.mrb[0].mxu0
      %v1767 = vadd.f32 0.0, %v1766
      %1768 = vdwg.mxu0
      %1769 = vmatprep.subr.bf16.mxu0 %v900
      %1770 = vmatpush1.bf16.msra.mxu0 %v899
      %1771 = vmatprep.subr.bf16.mxu0 %v925
      %1772 = vmatpush1.bf16.msra.mxu0 %v924
      %1773 = vmatprep.subr.bf16.mxu0 %v950
      %1774 = vmatpush1.bf16.msra.mxu0 %v949
      %1775 = vmatprep.subr.bf16.mxu0 %v975
      %1776 = vmatpush1.bf16.msra.mxu0 %v974
      %1777 = vmatprep.subr.bf16.mxu0 %v1000
      %1778 = vmatpush1.bf16.msra.mxu0 %v999
      %1779 = vmatprep.subr.bf16.mxu0 %v1025
      %1780 = vmatpush1.bf16.msra.mxu0 %v1024
      %1781 = vmatprep.subr.bf16.mxu0 %v1270
      %1782 = vmatpush1.bf16.msra.mxu0 %v1267
      %1783 = vmatprep.subr.bf16.mxu0 0
      %1784 = vmatpush1.bf16.msra.mxu0 0
      %1785 = vmatprep.subr.bf16.mxu0 0
      %1786 = vmatpush1.bf16.msra.mxu0 0
      %1787 = vmatprep.subr.bf16.mxu0 0
      %1788 = vmatpush1.bf16.msra.mxu0 0
      %1789 = vmatprep.subr.bf16.mxu0 0
      %1790 = vmatpush1.bf16.msra.mxu0 0
      %1791 = vmatprep.subr.bf16.mxu0 0
      %1792 = vmatpush1.bf16.msra.mxu0 0
      %1793 = vmatprep.subr.bf16.mxu0 0
      %1794 = vmatpush1.bf16.msra.mxu0 0
      %1795 = vmatprep.subr.bf16.mxu0 0
      %1796 = vmatpush1.bf16.msra.mxu0 0
      %1797 = vmatprep.subr.bf16.mxu0 0
      %1798 = vmatpush1.bf16.msra.mxu0 0
      %1799 = vmatprep.subr.bf16.mxu0 0
      %1800 = vmatpush1.bf16.msra.mxu0 0
      %1801 = vmatprep.mubr.bf16.mxu0 0
      %1802 = vmatmul.mubr.bf16.gmra.mrb[0].mxu0 %v1218
      %v1803 = vpop.f32.mrb[0].mxu0
      %v1804 = vadd.f32 0.0, %v1803
      %v1805 = vpop.f32.mrb[0].mxu0
      %v1806 = vadd.f32 0.0, %v1805
      %v1807 = vpop.f32.mrb[0].mxu0
      %v1808 = vadd.f32 0.0, %v1807
      %v1809 = vpop.f32.mrb[0].mxu0
      %v1810 = vadd.f32 0.0, %v1809
      %1811 = vmatprep.mubr.bf16.mxu0 0
      %1812 = vmatmul.mubr.bf16.gmra.mrb[0].mxu0 %v1221
      %v1813 = vpop.f32.mrb[0].mxu0
      %v1814 = vadd.f32 0.0, %v1813
      %v1815 = vpop.f32.mrb[0].mxu0
      %v1816 = vadd.f32 0.0, %v1815
      %v1817 = vpop.f32.mrb[0].mxu0
      %v1818 = vadd.f32 0.0, %v1817
      %v1819 = vpop.f32.mrb[0].mxu0
      %v1820 = vadd.f32 0.0, %v1819
      %1821 = vmatprep.mubr.bf16.mxu0 0
      %1822 = vmatmul.mubr.bf16.gmra.mrb[0].mxu0 %v1224
      %v1823 = vpop.f32.mrb[0].mxu0
      %v1824 = vadd.f32 0.0, %v1823
      %v1825 = vpop.f32.mrb[0].mxu0
      %v1826 = vadd.f32 0.0, %v1825
      %v1827 = vpop.f32.mrb[0].mxu0
      %v1828 = vadd.f32 0.0, %v1827
      %v1829 = vpop.f32.mrb[0].mxu0
      %v1830 = vadd.f32 0.0, %v1829
      %1831 = vmatprep.mubr.bf16.mxu0 0
      %1832 = vmatmul.mubr.bf16.gmra.mrb[0].mxu0 %v1227
      %v1833 = vpop.f32.mrb[0].mxu0
      %v1834 = vadd.f32 0.0, %v1833
      %v1835 = vpop.f32.mrb[0].mxu0
      %v1836 = vadd.f32 0.0, %v1835
      %v1837 = vpop.f32.mrb[0].mxu0
      %v1838 = vadd.f32 0.0, %v1837
      %v1839 = vpop.f32.mrb[0].mxu0
      %v1840 = vadd.f32 0.0, %v1839
      %1841 = vmatprep.mubr.bf16.mxu0 0
      %1842 = vmatmul.mubr.bf16.gmra.mrb[0].mxu0 %v1230
      %v1843 = vpop.f32.mrb[0].mxu0
      %v1844 = vadd.f32 0.0, %v1843
      %v1845 = vpop.f32.mrb[0].mxu0
      %v1846 = vadd.f32 0.0, %v1845
      %v1847 = vpop.f32.mrb[0].mxu0
      %v1848 = vadd.f32 0.0, %v1847
      %v1849 = vpop.f32.mrb[0].mxu0
      %v1850 = vadd.f32 0.0, %v1849
      %1851 = vmatprep.mubr.bf16.mxu0 0
      %1852 = vmatmul.mubr.bf16.gmra.mrb[0].mxu0 %v1233
      %v1853 = vpop.f32.mrb[0].mxu0
      %v1854 = vadd.f32 0.0, %v1853
      %v1855 = vpop.f32.mrb[0].mxu0
      %v1856 = vadd.f32 0.0, %v1855
      %v1857 = vpop.f32.mrb[0].mxu0
      %v1858 = vadd.f32 0.0, %v1857
      %v1859 = vpop.f32.mrb[0].mxu0
      %v1860 = vadd.f32 0.0, %v1859
      %1861 = vmatprep.mubr.bf16.mxu0 0
      %1862 = vmatmul.mubr.bf16.gmra.mrb[0].mxu0 %v1236
      %v1863 = vpop.f32.mrb[0].mxu0
      %v1864 = vadd.f32 0.0, %v1863
      %v1865 = vpop.f32.mrb[0].mxu0
      %v1866 = vadd.f32 0.0, %v1865
      %v1867 = vpop.f32.mrb[0].mxu0
      %v1868 = vadd.f32 0.0, %v1867
      %v1869 = vpop.f32.mrb[0].mxu0
      %v1870 = vadd.f32 0.0, %v1869
      %1871 = vmatprep.mubr.bf16.mxu0 0
      %1872 = vmatmul.mubr.bf16.gmra.mrb[0].mxu0 %v1239
      %v1873 = vpop.f32.mrb[0].mxu0
      %v1874 = vadd.f32 0.0, %v1873
      %v1875 = vpop.f32.mrb[0].mxu0
      %v1876 = vadd.f32 0.0, %v1875
      %v1877 = vpop.f32.mrb[0].mxu0
      %v1878 = vadd.f32 0.0, %v1877
      %v1879 = vpop.f32.mrb[0].mxu0
      %v1880 = vadd.f32 0.0, %v1879
      %1881 = vdwg.mxu0
      %1882 = vmatprep.subr.bf16.mxu0 %v902
      %1883 = vmatpush1.bf16.msra.mxu0 %v901
      %1884 = vmatprep.subr.bf16.mxu0 %v927
      %1885 = vmatpush1.bf16.msra.mxu0 %v926
      %1886 = vmatprep.subr.bf16.mxu0 %v952
      %1887 = vmatpush1.bf16.msra.mxu0 %v951
      %1888 = vmatprep.subr.bf16.mxu0 %v977
      %1889 = vmatpush1.bf16.msra.mxu0 %v976
      %1890 = vmatprep.subr.bf16.mxu0 %v1002
      %1891 = vmatpush1.bf16.msra.mxu0 %v1001
      %1892 = vmatprep.subr.bf16.mxu0 %v1027
      %1893 = vmatpush1.bf16.msra.mxu0 %v1026
      %1894 = vmatprep.subr.bf16.mxu0 %v1276
      %1895 = vmatpush1.bf16.msra.mxu0 %v1273
      %1896 = vmatprep.subr.bf16.mxu0 0
      %1897 = vmatpush1.bf16.msra.mxu0 0
      %1898 = vmatprep.subr.bf16.mxu0 0
      %1899 = vmatpush1.bf16.msra.mxu0 0
      %1900 = vmatprep.subr.bf16.mxu0 0
      %1901 = vmatpush1.bf16.msra.mxu0 0
      %1902 = vmatprep.subr.bf16.mxu0 0
      %1903 = vmatpush1.bf16.msra.mxu0 0
      %1904 = vmatprep.subr.bf16.mxu0 0
      %1905 = vmatpush1.bf16.msra.mxu0 0
      %1906 = vmatprep.subr.bf16.mxu0 0
      %1907 = vmatpush1.bf16.msra.mxu0 0
      %1908 = vmatprep.subr.bf16.mxu0 0
      %1909 = vmatpush1.bf16.msra.mxu0 0
      %1910 = vmatprep.subr.bf16.mxu0 0
      %1911 = vmatpush1.bf16.msra.mxu0 0
      %1912 = vmatprep.subr.bf16.mxu0 0
      %1913 = vmatpush1.bf16.msra.mxu0 0
      %1914 = vmatprep.mubr.bf16.mxu0 0
      %1915 = vmatmul.mubr.bf16.gmra.mrb[0].mxu0 %v1218
      %v1916 = vpop.f32.mrb[0].mxu0
      %v1917 = vadd.f32 0.0, %v1916
      %v1918 = vpop.f32.mrb[0].mxu0
      %v1919 = vadd.f32 0.0, %v1918
      %v1920 = vpop.f32.mrb[0].mxu0
      %v1921 = vadd.f32 0.0, %v1920
      %v1922 = vpop.f32.mrb[0].mxu0
      %v1923 = vadd.f32 0.0, %v1922
      %1924 = vmatprep.mubr.bf16.mxu0 0
      %1925 = vmatmul.mubr.bf16.gmra.mrb[0].mxu0 %v1221
      %v1926 = vpop.f32.mrb[0].mxu0
      %v1927 = vadd.f32 0.0, %v1926
      %v1928 = vpop.f32.mrb[0].mxu0
      %v1929 = vadd.f32 0.0, %v1928
      %v1930 = vpop.f32.mrb[0].mxu0
      %v1931 = vadd.f32 0.0, %v1930
      %v1932 = vpop.f32.mrb[0].mxu0
      %v1933 = vadd.f32 0.0, %v1932
      %1934 = vmatprep.mubr.bf16.mxu0 0
      %1935 = vmatmul.mubr.bf16.gmra.mrb[0].mxu0 %v1224
      %v1936 = vpop.f32.mrb[0].mxu0
      %v1937 = vadd.f32 0.0, %v1936
      %v1938 = vpop.f32.mrb[0].mxu0
      %v1939 = vadd.f32 0.0, %v1938
      %v1940 = vpop.f32.mrb[0].mxu0
      %v1941 = vadd.f32 0.0, %v1940
      %v1942 = vpop.f32.mrb[0].mxu0
      %v1943 = vadd.f32 0.0, %v1942
      %1944 = vmatprep.mubr.bf16.mxu0 0
      %1945 = vmatmul.mubr.bf16.gmra.mrb[0].mxu0 %v1227
      %v1946 = vpop.f32.mrb[0].mxu0
      %v1947 = vadd.f32 0.0, %v1946
      %v1948 = vpop.f32.mrb[0].mxu0
      %v1949 = vadd.f32 0.0, %v1948
      %v1950 = vpop.f32.mrb[0].mxu0
      %v1951 = vadd.f32 0.0, %v1950
      %v1952 = vpop.f32.mrb[0].mxu0
      %v1953 = vadd.f32 0.0, %v1952
      %1954 = vmatprep.mubr.bf16.mxu0 0
      %1955 = vmatmul.mubr.bf16.gmra.mrb[0].mxu0 %v1230
      %v1956 = vpop.f32.mrb[0].mxu0
      %v1957 = vadd.f32 0.0, %v1956
      %v1958 = vpop.f32.mrb[0].mxu0
      %v1959 = vadd.f32 0.0, %v1958
      %v1960 = vpop.f32.mrb[0].mxu0
      %v1961 = vadd.f32 0.0, %v1960
      %v1962 = vpop.f32.mrb[0].mxu0
      %v1963 = vadd.f32 0.0, %v1962
      %1964 = vmatprep.mubr.bf16.mxu0 0
      %1965 = vmatmul.mubr.bf16.gmra.mrb[0].mxu0 %v1233
      %v1966 = vpop.f32.mrb[0].mxu0
      %v1967 = vadd.f32 0.0, %v1966
      %v1968 = vpop.f32.mrb[0].mxu0
      %v1969 = vadd.f32 0.0, %v1968
      %v1970 = vpop.f32.mrb[0].mxu0
      %v1971 = vadd.f32 0.0, %v1970
      %v1972 = vpop.f32.mrb[0].mxu0
      %v1973 = vadd.f32 0.0, %v1972
      %1974 = vmatprep.mubr.bf16.mxu0 0
      %1975 = vmatmul.mubr.bf16.gmra.mrb[0].mxu0 %v1236
      %v1976 = vpop.f32.mrb[0].mxu0
      %v1977 = vadd.f32 0.0, %v1976
      %v1978 = vpop.f32.mrb[0].mxu0
      %v1979 = vadd.f32 0.0, %v1978
      %v1980 = vpop.f32.mrb[0].mxu0
      %v1981 = vadd.f32 0.0, %v1980
      %v1982 = vpop.f32.mrb[0].mxu0
      %v1983 = vadd.f32 0.0, %v1982
      %1984 = vmatprep.mubr.bf16.mxu0 0
      %1985 = vmatmul.mubr.bf16.gmra.mrb[0].mxu0 %v1239
      %v1986 = vpop.f32.mrb[0].mxu0
      %v1987 = vadd.f32 0.0, %v1986
      %v1988 = vpop.f32.mrb[0].mxu0
      %v1989 = vadd.f32 0.0, %v1988
      %v1990 = vpop.f32.mrb[0].mxu0
      %v1991 = vadd.f32 0.0, %v1990
      %v1992 = vpop.f32.mrb[0].mxu0
      %v1993 = vadd.f32 0.0, %v1992
      %1994 = vdwg.mxu0
      %1995 = vmatprep.subr.bf16.mxu0 %v904
      %1996 = vmatpush1.bf16.msra.mxu0 %v903
      %1997 = vmatprep.subr.bf16.mxu0 %v929
      %1998 = vmatpush1.bf16.msra.mxu0 %v928
      %1999 = vmatprep.subr.bf16.mxu0 %v954
      %2000 = vmatpush1.bf16.msra.mxu0 %v953
      %2001 = vmatprep.subr.bf16.mxu0 %v979
      %2002 = vmatpush1.bf16.msra.mxu0 %v978
      %2003 = vmatprep.subr.bf16.mxu0 %v1004
      %2004 = vmatpush1.bf16.msra.mxu0 %v1003
      %2005 = vmatprep.subr.bf16.mxu0 %v1029
      %2006 = vmatpush1.bf16.msra.mxu0 %v1028
      %2007 = vmatprep.subr.bf16.mxu0 %v1282
      %2008 = vmatpush1.bf16.msra.mxu0 %v1279
      %2009 = vmatprep.subr.bf16.mxu0 0
      %2010 = vmatpush1.bf16.msra.mxu0 0
      %2011 = vmatprep.subr.bf16.mxu0 0
      %2012 = vmatpush1.bf16.msra.mxu0 0
      %2013 = vmatprep.subr.bf16.mxu0 0
      %2014 = vmatpush1.bf16.msra.mxu0 0
      %2015 = vmatprep.subr.bf16.mxu0 0
      %2016 = vmatpush1.bf16.msra.mxu0 0
      %2017 = vmatprep.subr.bf16.mxu0 0
      %2018 = vmatpush1.bf16.msra.mxu0 0
      %2019 = vmatprep.subr.bf16.mxu0 0
      %2020 = vmatpush1.bf16.msra.mxu0 0
      %2021 = vmatprep.subr.bf16.mxu0 0
      %2022 = vmatpush1.bf16.msra.mxu0 0
      %2023 = vmatprep.subr.bf16.mxu0 0
      %2024 = vmatpush1.bf16.msra.mxu0 0
      %2025 = vmatprep.subr.bf16.mxu0 0
      %2026 = vmatpush1.bf16.msra.mxu0 0
      %2027 = vmatprep.mubr.bf16.mxu0 0
      %2028 = vmatmul.mubr.bf16.gmra.mrb[0].mxu0 %v1218
      %v2029 = vpop.f32.mrb[0].mxu0
      %v2030 = vadd.f32 0.0, %v2029
      %v2031 = vpop.f32.mrb[0].mxu0
      %v2032 = vadd.f32 0.0, %v2031
      %v2033 = vpop.f32.mrb[0].mxu0
      %v2034 = vadd.f32 0.0, %v2033
      %v2035 = vpop.f32.mrb[0].mxu0
      %v2036 = vadd.f32 0.0, %v2035
      %2037 = vmatprep.mubr.bf16.mxu0 0
      %2038 = vmatmul.mubr.bf16.gmra.mrb[0].mxu0 %v1221
      %v2039 = vpop.f32.mrb[0].mxu0
      %v2040 = vadd.f32 0.0, %v2039
      %v2041 = vpop.f32.mrb[0].mxu0
      %v2042 = vadd.f32 0.0, %v2041
      %v2043 = vpop.f32.mrb[0].mxu0
      %v2044 = vadd.f32 0.0, %v2043
      %v2045 = vpop.f32.mrb[0].mxu0
      %v2046 = vadd.f32 0.0, %v2045
      %2047 = vmatprep.mubr.bf16.mxu0 0
      %2048 = vmatmul.mubr.bf16.gmra.mrb[0].mxu0 %v1224
      %v2049 = vpop.f32.mrb[0].mxu0
      %v2050 = vadd.f32 0.0, %v2049
      %v2051 = vpop.f32.mrb[0].mxu0
      %v2052 = vadd.f32 0.0, %v2051
      %v2053 = vpop.f32.mrb[0].mxu0
      %v2054 = vadd.f32 0.0, %v2053
      %v2055 = vpop.f32.mrb[0].mxu0
      %v2056 = vadd.f32 0.0, %v2055
      %2057 = vmatprep.mubr.bf16.mxu0 0
      %2058 = vmatmul.mubr.bf16.gmra.mrb[0].mxu0 %v1227
      %v2059 = vpop.f32.mrb[0].mxu0
      %v2060 = vadd.f32 0.0, %v2059
      %v2061 = vpop.f32.mrb[0].mxu0
      %v2062 = vadd.f32 0.0, %v2061
      %v2063 = vpop.f32.mrb[0].mxu0
      %v2064 = vadd.f32 0.0, %v2063
      %v2065 = vpop.f32.mrb[0].mxu0
      %v2066 = vadd.f32 0.0, %v2065
      %2067 = vmatprep.mubr.bf16.mxu0 0
      %2068 = vmatmul.mubr.bf16.gmra.mrb[0].mxu0 %v1230
      %v2069 = vpop.f32.mrb[0].mxu0
      %v2070 = vadd.f32 0.0, %v2069
      %v2071 = vpop.f32.mrb[0].mxu0
      %v2072 = vadd.f32 0.0, %v2071
      %v2073 = vpop.f32.mrb[0].mxu0
      %v2074 = vadd.f32 0.0, %v2073
      %v2075 = vpop.f32.mrb[0].mxu0
      %v2076 = vadd.f32 0.0, %v2075
      %2077 = vmatprep.mubr.bf16.mxu0 0
      %2078 = vmatmul.mubr.bf16.gmra.mrb[0].mxu0 %v1233
      %v2079 = vpop.f32.mrb[0].mxu0
      %v2080 = vadd.f32 0.0, %v2079
      %v2081 = vpop.f32.mrb[0].mxu0
      %v2082 = vadd.f32 0.0, %v2081
      %v2083 = vpop.f32.mrb[0].mxu0
      %v2084 = vadd.f32 0.0, %v2083
      %v2085 = vpop.f32.mrb[0].mxu0
      %v2086 = vadd.f32 0.0, %v2085
      %2087 = vmatprep.mubr.bf16.mxu0 0
      %2088 = vmatmul.mubr.bf16.gmra.mrb[0].mxu0 %v1236
      %v2089 = vpop.f32.mrb[0].mxu0
      %v2090 = vadd.f32 0.0, %v2089
      %v2091 = vpop.f32.mrb[0].mxu0
      %v2092 = vadd.f32 0.0, %v2091
      %v2093 = vpop.f32.mrb[0].mxu0
      %v2094 = vadd.f32 0.0, %v2093
      %v2095 = vpop.f32.mrb[0].mxu0
      %v2096 = vadd.f32 0.0, %v2095
      %2097 = vmatprep.mubr.bf16.mxu0 0
      %2098 = vmatmul.mubr.bf16.gmra.mrb[0].mxu0 %v1239
      %v2099 = vpop.f32.mrb[0].mxu0
      %v2100 = vadd.f32 0.0, %v2099
      %v2101 = vpop.f32.mrb[0].mxu0
      %v2102 = vadd.f32 0.0, %v2101
      %v2103 = vpop.f32.mrb[0].mxu0
      %v2104 = vadd.f32 0.0, %v2103
      %v2105 = vpop.f32.mrb[0].mxu0
      %v2106 = vadd.f32 0.0, %v2105
      %2107 = vdwg.mxu0
      %2108 = vmatprep.subr.bf16.mxu0 %v906
      %2109 = vmatpush1.bf16.msra.mxu0 %v905
      %2110 = vmatprep.subr.bf16.mxu0 %v931
      %2111 = vmatpush1.bf16.msra.mxu0 %v930
      %2112 = vmatprep.subr.bf16.mxu0 %v956
      %2113 = vmatpush1.bf16.msra.mxu0 %v955
      %2114 = vmatprep.subr.bf16.mxu0 %v981
      %2115 = vmatpush1.bf16.msra.mxu0 %v980
      %2116 = vmatprep.subr.bf16.mxu0 %v1006
      %2117 = vmatpush1.bf16.msra.mxu0 %v1005
      %2118 = vmatprep.subr.bf16.mxu0 %v1031
      %2119 = vmatpush1.bf16.msra.mxu0 %v1030
      %2120 = vmatprep.subr.bf16.mxu0 %v1288
      %2121 = vmatpush1.bf16.msra.mxu0 %v1285
      %2122 = vmatprep.subr.bf16.mxu0 0
      %2123 = vmatpush1.bf16.msra.mxu0 0
      %2124 = vmatprep.subr.bf16.mxu0 0
      %2125 = vmatpush1.bf16.msra.mxu0 0
      %2126 = vmatprep.subr.bf16.mxu0 0
      %2127 = vmatpush1.bf16.msra.mxu0 0
      %2128 = vmatprep.subr.bf16.mxu0 0
      %2129 = vmatpush1.bf16.msra.mxu0 0
      %2130 = vmatprep.subr.bf16.mxu0 0
      %2131 = vmatpush1.bf16.msra.mxu0 0
      %2132 = vmatprep.subr.bf16.mxu0 0
      %2133 = vmatpush1.bf16.msra.mxu0 0
      %2134 = vmatprep.subr.bf16.mxu0 0
      %2135 = vmatpush1.bf16.msra.mxu0 0
      %2136 = vmatprep.subr.bf16.mxu0 0
      %2137 = vmatpush1.bf16.msra.mxu0 0
      %2138 = vmatprep.subr.bf16.mxu0 0
      %2139 = vmatpush1.bf16.msra.mxu0 0
      %2140 = vmatprep.mubr.bf16.mxu0 0
      %2141 = vmatmul.mubr.bf16.gmra.mrb[0].mxu0 %v1218
      %v2142 = vpop.f32.mrb[0].mxu0
      %v2143 = vadd.f32 0.0, %v2142
      %v2144 = vpop.f32.mrb[0].mxu0
      %v2145 = vadd.f32 0.0, %v2144
      %v2146 = vpop.f32.mrb[0].mxu0
      %v2147 = vadd.f32 0.0, %v2146
      %v2148 = vpop.f32.mrb[0].mxu0
      %v2149 = vadd.f32 0.0, %v2148
      %2150 = vmatprep.mubr.bf16.mxu0 0
      %2151 = vmatmul.mubr.bf16.gmra.mrb[0].mxu0 %v1221
      %v2152 = vpop.f32.mrb[0].mxu0
      %v2153 = vadd.f32 0.0, %v2152
      %v2154 = vpop.f32.mrb[0].mxu0
      %v2155 = vadd.f32 0.0, %v2154
      %v2156 = vpop.f32.mrb[0].mxu0
      %v2157 = vadd.f32 0.0, %v2156
      %v2158 = vpop.f32.mrb[0].mxu0
      %v2159 = vadd.f32 0.0, %v2158
      %2160 = vmatprep.mubr.bf16.mxu0 0
      %2161 = vmatmul.mubr.bf16.gmra.mrb[0].mxu0 %v1224
      %v2162 = vpop.f32.mrb[0].mxu0
      %v2163 = vadd.f32 0.0, %v2162
      %v2164 = vpop.f32.mrb[0].mxu0
      %v2165 = vadd.f32 0.0, %v2164
      %v2166 = vpop.f32.mrb[0].mxu0
      %v2167 = vadd.f32 0.0, %v2166
      %v2168 = vpop.f32.mrb[0].mxu0
      %v2169 = vadd.f32 0.0, %v2168
      %2170 = vmatprep.mubr.bf16.mxu0 0
      %2171 = vmatmul.mubr.bf16.gmra.mrb[0].mxu0 %v1227
      %v2172 = vpop.f32.mrb[0].mxu0
      %v2173 = vadd.f32 0.0, %v2172
      %v2174 = vpop.f32.mrb[0].mxu0
      %v2175 = vadd.f32 0.0, %v2174
      %v2176 = vpop.f32.mrb[0].mxu0
      %v2177 = vadd.f32 0.0, %v2176
      %v2178 = vpop.f32.mrb[0].mxu0
      %v2179 = vadd.f32 0.0, %v2178
      %2180 = vmatprep.mubr.bf16.mxu0 0
      %2181 = vmatmul.mubr.bf16.gmra.mrb[0].mxu0 %v1230
      %v2182 = vpop.f32.mrb[0].mxu0
      %v2183 = vadd.f32 0.0, %v2182
      %v2184 = vpop.f32.mrb[0].mxu0
      %v2185 = vadd.f32 0.0, %v2184
      %v2186 = vpop.f32.mrb[0].mxu0
      %v2187 = vadd.f32 0.0, %v2186
      %v2188 = vpop.f32.mrb[0].mxu0
      %v2189 = vadd.f32 0.0, %v2188
      %2190 = vmatprep.mubr.bf16.mxu0 0
      %2191 = vmatmul.mubr.bf16.gmra.mrb[0].mxu0 %v1233
      %v2192 = vpop.f32.mrb[0].mxu0
      %v2193 = vadd.f32 0.0, %v2192
      %v2194 = vpop.f32.mrb[0].mxu0
      %v2195 = vadd.f32 0.0, %v2194
      %v2196 = vpop.f32.mrb[0].mxu0
      %v2197 = vadd.f32 0.0, %v2196
      %v2198 = vpop.f32.mrb[0].mxu0
      %v2199 = vadd.f32 0.0, %v2198
      %2200 = vmatprep.mubr.bf16.mxu0 0
      %2201 = vmatmul.mubr.bf16.gmra.mrb[0].mxu0 %v1236
      %v2202 = vpop.f32.mrb[0].mxu0
      %v2203 = vadd.f32 0.0, %v2202
      %v2204 = vpop.f32.mrb[0].mxu0
      %v2205 = vadd.f32 0.0, %v2204
      %v2206 = vpop.f32.mrb[0].mxu0
      %v2207 = vadd.f32 0.0, %v2206
      %v2208 = vpop.f32.mrb[0].mxu0
      %v2209 = vadd.f32 0.0, %v2208
      %2210 = vmatprep.mubr.bf16.mxu0 0
      %2211 = vmatmul.mubr.bf16.gmra.mrb[0].mxu0 %v1239
      %v2212 = vpop.f32.mrb[0].mxu0
      %v2213 = vadd.f32 0.0, %v2212
      %v2214 = vpop.f32.mrb[0].mxu0
      %v2215 = vadd.f32 0.0, %v2214
      %v2216 = vpop.f32.mrb[0].mxu0
      %v2217 = vadd.f32 0.0, %v2216
      %v2218 = vpop.f32.mrb[0].mxu0
      %v2219 = vadd.f32 0.0, %v2218
      %2220 = vdwg.mxu0
      %2221 = vmatprep.subr.bf16.mxu0 %v908
      %2222 = vmatpush1.bf16.msra.mxu0 %v907
      %2223 = vmatprep.subr.bf16.mxu0 %v933
      %2224 = vmatpush1.bf16.msra.mxu0 %v932
      %2225 = vmatprep.subr.bf16.mxu0 %v958
      %2226 = vmatpush1.bf16.msra.mxu0 %v957
      %2227 = vmatprep.subr.bf16.mxu0 %v983
      %2228 = vmatpush1.bf16.msra.mxu0 %v982
      %2229 = vmatprep.subr.bf16.mxu0 %v1008
      %2230 = vmatpush1.bf16.msra.mxu0 %v1007
      %2231 = vmatprep.subr.bf16.mxu0 %v1033
      %2232 = vmatpush1.bf16.msra.mxu0 %v1032
      %2233 = vmatprep.subr.bf16.mxu0 %v1294
      %2234 = vmatpush1.bf16.msra.mxu0 %v1291
      %2235 = vmatprep.subr.bf16.mxu0 0
      %2236 = vmatpush1.bf16.msra.mxu0 0
      %2237 = vmatprep.subr.bf16.mxu0 0
      %2238 = vmatpush1.bf16.msra.mxu0 0
      %2239 = vmatprep.subr.bf16.mxu0 0
      %2240 = vmatpush1.bf16.msra.mxu0 0
      %2241 = vmatprep.subr.bf16.mxu0 0
      %2242 = vmatpush1.bf16.msra.mxu0 0
      %2243 = vmatprep.subr.bf16.mxu0 0
      %2244 = vmatpush1.bf16.msra.mxu0 0
      %2245 = vmatprep.subr.bf16.mxu0 0
      %2246 = vmatpush1.bf16.msra.mxu0 0
      %2247 = vmatprep.subr.bf16.mxu0 0
      %2248 = vmatpush1.bf16.msra.mxu0 0
      %2249 = vmatprep.subr.bf16.mxu0 0
      %2250 = vmatpush1.bf16.msra.mxu0 0
      %2251 = vmatprep.subr.bf16.mxu0 0
      %2252 = vmatpush1.bf16.msra.mxu0 0
      %2253 = vmatprep.mubr.bf16.mxu0 0
      %2254 = vmatmul.mubr.bf16.gmra.mrb[0].mxu0 %v1218
      %v2255 = vpop.f32.mrb[0].mxu0
      %v2256 = vadd.f32 0.0, %v2255
      %v2257 = vpop.f32.mrb[0].mxu0
      %v2258 = vadd.f32 0.0, %v2257
      %v2259 = vpop.f32.mrb[0].mxu0
      %v2260 = vadd.f32 0.0, %v2259
      %v2261 = vpop.f32.mrb[0].mxu0
      %v2262 = vadd.f32 0.0, %v2261
      %2263 = vmatprep.mubr.bf16.mxu0 0
      %2264 = vmatmul.mubr.bf16.gmra.mrb[0].mxu0 %v1221
      %v2265 = vpop.f32.mrb[0].mxu0
      %v2266 = vadd.f32 0.0, %v2265
      %v2267 = vpop.f32.mrb[0].mxu0
      %v2268 = vadd.f32 0.0, %v2267
      %v2269 = vpop.f32.mrb[0].mxu0
      %v2270 = vadd.f32 0.0, %v2269
      %v2271 = vpop.f32.mrb[0].mxu0
      %v2272 = vadd.f32 0.0, %v2271
      %2273 = vmatprep.mubr.bf16.mxu0 0
      %2274 = vmatmul.mubr.bf16.gmra.mrb[0].mxu0 %v1224
      %v2275 = vpop.f32.mrb[0].mxu0
      %v2276 = vadd.f32 0.0, %v2275
      %v2277 = vpop.f32.mrb[0].mxu0
      %v2278 = vadd.f32 0.0, %v2277
      %v2279 = vpop.f32.mrb[0].mxu0
      %v2280 = vadd.f32 0.0, %v2279
      %v2281 = vpop.f32.mrb[0].mxu0
      %v2282 = vadd.f32 0.0, %v2281
      %2283 = vmatprep.mubr.bf16.mxu0 0
      %2284 = vmatmul.mubr.bf16.gmra.mrb[0].mxu0 %v1227
      %v2285 = vpop.f32.mrb[0].mxu0
      %v2286 = vadd.f32 0.0, %v2285
      %v2287 = vpop.f32.mrb[0].mxu0
      %v2288 = vadd.f32 0.0, %v2287
      %v2289 = vpop.f32.mrb[0].mxu0
      %v2290 = vadd.f32 0.0, %v2289
      %v2291 = vpop.f32.mrb[0].mxu0
      %v2292 = vadd.f32 0.0, %v2291
      %2293 = vmatprep.mubr.bf16.mxu0 0
      %2294 = vmatmul.mubr.bf16.gmra.mrb[0].mxu0 %v1230
      %v2295 = vpop.f32.mrb[0].mxu0
      %v2296 = vadd.f32 0.0, %v2295
      %v2297 = vpop.f32.mrb[0].mxu0
      %v2298 = vadd.f32 0.0, %v2297
      %v2299 = vpop.f32.mrb[0].mxu0
      %v2300 = vadd.f32 0.0, %v2299
      %v2301 = vpop.f32.mrb[0].mxu0
      %v2302 = vadd.f32 0.0, %v2301
      %2303 = vmatprep.mubr.bf16.mxu0 0
      %2304 = vmatmul.mubr.bf16.gmra.mrb[0].mxu0 %v1233
      %v2305 = vpop.f32.mrb[0].mxu0
      %v2306 = vadd.f32 0.0, %v2305
      %v2307 = vpop.f32.mrb[0].mxu0
      %v2308 = vadd.f32 0.0, %v2307
      %v2309 = vpop.f32.mrb[0].mxu0
      %v2310 = vadd.f32 0.0, %v2309
      %v2311 = vpop.f32.mrb[0].mxu0
      %v2312 = vadd.f32 0.0, %v2311
      %2313 = vmatprep.mubr.bf16.mxu0 0
      %2314 = vmatmul.mubr.bf16.gmra.mrb[0].mxu0 %v1236
      %v2315 = vpop.f32.mrb[0].mxu0
      %v2316 = vadd.f32 0.0, %v2315
      %v2317 = vpop.f32.mrb[0].mxu0
      %v2318 = vadd.f32 0.0, %v2317
      %v2319 = vpop.f32.mrb[0].mxu0
      %v2320 = vadd.f32 0.0, %v2319
      %v2321 = vpop.f32.mrb[0].mxu0
      %v2322 = vadd.f32 0.0, %v2321
      %2323 = vmatprep.mubr.bf16.mxu0 0
      %2324 = vmatmul.mubr.bf16.gmra.mrb[0].mxu0 %v1239
      %v2325 = vpop.f32.mrb[0].mxu0
      %v2326 = vadd.f32 0.0, %v2325
      %v2327 = vpop.f32.mrb[0].mxu0
      %v2328 = vadd.f32 0.0, %v2327
      %v2329 = vpop.f32.mrb[0].mxu0
      %v2330 = vadd.f32 0.0, %v2329
      %v2331 = vpop.f32.mrb[0].mxu0
      %v2332 = vadd.f32 0.0, %v2331
      %2333 = vdwg.mxu0
      %2334 = vmatprep.subr.bf16.mxu0 %v910
      %2335 = vmatpush1.bf16.msra.mxu0 %v909
      %2336 = vmatprep.subr.bf16.mxu0 %v935
      %2337 = vmatpush1.bf16.msra.mxu0 %v934
      %2338 = vmatprep.subr.bf16.mxu0 %v960
      %2339 = vmatpush1.bf16.msra.mxu0 %v959
      %2340 = vmatprep.subr.bf16.mxu0 %v985
      %2341 = vmatpush1.bf16.msra.mxu0 %v984
      %2342 = vmatprep.subr.bf16.mxu0 %v1010
      %2343 = vmatpush1.bf16.msra.mxu0 %v1009
      %2344 = vmatprep.subr.bf16.mxu0 %v1035
      %2345 = vmatpush1.bf16.msra.mxu0 %v1034
      %2346 = vmatprep.subr.bf16.mxu0 %v1300
      %2347 = vmatpush1.bf16.msra.mxu0 %v1297
      %2348 = vmatprep.subr.bf16.mxu0 0
      %2349 = vmatpush1.bf16.msra.mxu0 0
      %2350 = vmatprep.subr.bf16.mxu0 0
      %2351 = vmatpush1.bf16.msra.mxu0 0
      %2352 = vmatprep.subr.bf16.mxu0 0
      %2353 = vmatpush1.bf16.msra.mxu0 0
      %2354 = vmatprep.subr.bf16.mxu0 0
      %2355 = vmatpush1.bf16.msra.mxu0 0
      %2356 = vmatprep.subr.bf16.mxu0 0
      %2357 = vmatpush1.bf16.msra.mxu0 0
      %2358 = vmatprep.subr.bf16.mxu0 0
      %2359 = vmatpush1.bf16.msra.mxu0 0
      %2360 = vmatprep.subr.bf16.mxu0 0
      %2361 = vmatpush1.bf16.msra.mxu0 0
      %2362 = vmatprep.subr.bf16.mxu0 0
      %2363 = vmatpush1.bf16.msra.mxu0 0
      %2364 = vmatprep.subr.bf16.mxu0 0
      %2365 = vmatpush1.bf16.msra.mxu0 0
      %2366 = vmatprep.mubr.bf16.mxu0 0
      %2367 = vmatmul.mubr.bf16.gmra.mrb[0].mxu0 %v1218
      %v2368 = vpop.f32.mrb[0].mxu0
      %v2369 = vadd.f32 0.0, %v2368
      %v2370 = vpop.f32.mrb[0].mxu0
      %v2371 = vadd.f32 0.0, %v2370
      %v2372 = vpop.f32.mrb[0].mxu0
      %v2373 = vadd.f32 0.0, %v2372
      %v2374 = vpop.f32.mrb[0].mxu0
      %v2375 = vadd.f32 0.0, %v2374
      %2376 = vmatprep.mubr.bf16.mxu0 0
      %2377 = vmatmul.mubr.bf16.gmra.mrb[0].mxu0 %v1221
      %v2378 = vpop.f32.mrb[0].mxu0
      %v2379 = vadd.f32 0.0, %v2378
      %v2380 = vpop.f32.mrb[0].mxu0
      %v2381 = vadd.f32 0.0, %v2380
      %v2382 = vpop.f32.mrb[0].mxu0
      %v2383 = vadd.f32 0.0, %v2382
      %v2384 = vpop.f32.mrb[0].mxu0
      %v2385 = vadd.f32 0.0, %v2384
      %2386 = vmatprep.mubr.bf16.mxu0 0
      %2387 = vmatmul.mubr.bf16.gmra.mrb[0].mxu0 %v1224
      %v2388 = vpop.f32.mrb[0].mxu0
      %v2389 = vadd.f32 0.0, %v2388
      %v2390 = vpop.f32.mrb[0].mxu0
      %v2391 = vadd.f32 0.0, %v2390
      %v2392 = vpop.f32.mrb[0].mxu0
      %v2393 = vadd.f32 0.0, %v2392
      %v2394 = vpop.f32.mrb[0].mxu0
      %v2395 = vadd.f32 0.0, %v2394
      %2396 = vmatprep.mubr.bf16.mxu0 0
      %2397 = vmatmul.mubr.bf16.gmra.mrb[0].mxu0 %v1227
      %v2398 = vpop.f32.mrb[0].mxu0
      %v2399 = vadd.f32 0.0, %v2398
      %v2400 = vpop.f32.mrb[0].mxu0
      %v2401 = vadd.f32 0.0, %v2400
      %v2402 = vpop.f32.mrb[0].mxu0
      %v2403 = vadd.f32 0.0, %v2402
      %v2404 = vpop.f32.mrb[0].mxu0
      %v2405 = vadd.f32 0.0, %v2404
      %2406 = vmatprep.mubr.bf16.mxu0 0
      %2407 = vmatmul.mubr.bf16.gmra.mrb[0].mxu0 %v1230
      %v2408 = vpop.f32.mrb[0].mxu0
      %v2409 = vadd.f32 0.0, %v2408
      %v2410 = vpop.f32.mrb[0].mxu0
      %v2411 = vadd.f32 0.0, %v2410
      %v2412 = vpop.f32.mrb[0].mxu0
      %v2413 = vadd.f32 0.0, %v2412
      %v2414 = vpop.f32.mrb[0].mxu0
      %v2415 = vadd.f32 0.0, %v2414
      %2416 = vmatprep.mubr.bf16.mxu0 0
      %2417 = vmatmul.mubr.bf16.gmra.mrb[0].mxu0 %v1233
      %v2418 = vpop.f32.mrb[0].mxu0
      %v2419 = vadd.f32 0.0, %v2418
      %v2420 = vpop.f32.mrb[0].mxu0
      %v2421 = vadd.f32 0.0, %v2420
      %v2422 = vpop.f32.mrb[0].mxu0
      %v2423 = vadd.f32 0.0, %v2422
      %v2424 = vpop.f32.mrb[0].mxu0
      %v2425 = vadd.f32 0.0, %v2424
      %2426 = vmatprep.mubr.bf16.mxu0 0
      %2427 = vmatmul.mubr.bf16.gmra.mrb[0].mxu0 %v1236
      %v2428 = vpop.f32.mrb[0].mxu0
      %v2429 = vadd.f32 0.0, %v2428
      %v2430 = vpop.f32.mrb[0].mxu0
      %v2431 = vadd.f32 0.0, %v2430
      %v2432 = vpop.f32.mrb[0].mxu0
      %v2433 = vadd.f32 0.0, %v2432
      %v2434 = vpop.f32.mrb[0].mxu0
      %v2435 = vadd.f32 0.0, %v2434
      %2436 = vmatprep.mubr.bf16.mxu0 0
      %2437 = vmatmul.mubr.bf16.gmra.mrb[0].mxu0 %v1239
      %v2438 = vpop.f32.mrb[0].mxu0
      %v2439 = vadd.f32 0.0, %v2438
      %v2440 = vpop.f32.mrb[0].mxu0
      %v2441 = vadd.f32 0.0, %v2440
      %v2442 = vpop.f32.mrb[0].mxu0
      %v2443 = vadd.f32 0.0, %v2442
      %v2444 = vpop.f32.mrb[0].mxu0
      %v2445 = vadd.f32 0.0, %v2444
      %2446 = vdwg.mxu0
      %2447 = vmatprep.subr.bf16.mxu0 %v912
      %2448 = vmatpush1.bf16.msra.mxu0 %v911
      %2449 = vmatprep.subr.bf16.mxu0 %v937
      %2450 = vmatpush1.bf16.msra.mxu0 %v936
      %2451 = vmatprep.subr.bf16.mxu0 %v962
      %2452 = vmatpush1.bf16.msra.mxu0 %v961
      %2453 = vmatprep.subr.bf16.mxu0 %v987
      %2454 = vmatpush1.bf16.msra.mxu0 %v986
      %2455 = vmatprep.subr.bf16.mxu0 %v1012
      %2456 = vmatpush1.bf16.msra.mxu0 %v1011
      %2457 = vmatprep.subr.bf16.mxu0 %v1037
      %2458 = vmatpush1.bf16.msra.mxu0 %v1036
      %2459 = vmatprep.subr.bf16.mxu0 %v1306
      %2460 = vmatpush1.bf16.msra.mxu0 %v1303
      %2461 = vmatprep.subr.bf16.mxu0 0
      %2462 = vmatpush1.bf16.msra.mxu0 0
      %2463 = vmatprep.subr.bf16.mxu0 0
      %2464 = vmatpush1.bf16.msra.mxu0 0
      %2465 = vmatprep.subr.bf16.mxu0 0
      %2466 = vmatpush1.bf16.msra.mxu0 0
      %2467 = vmatprep.subr.bf16.mxu0 0
      %2468 = vmatpush1.bf16.msra.mxu0 0
      %2469 = vmatprep.subr.bf16.mxu0 0
      %2470 = vmatpush1.bf16.msra.mxu0 0
      %2471 = vmatprep.subr.bf16.mxu0 0
      %2472 = vmatpush1.bf16.msra.mxu0 0
      %2473 = vmatprep.subr.bf16.mxu0 0
      %2474 = vmatpush1.bf16.msra.mxu0 0
      %2475 = vmatprep.subr.bf16.mxu0 0
      %2476 = vmatpush1.bf16.msra.mxu0 0
      %2477 = vmatprep.subr.bf16.mxu0 0
      %2478 = vmatpush1.bf16.msra.mxu0 0
      %2479 = vmatprep.mubr.bf16.mxu0 0
      %2480 = vmatmul.mubr.bf16.gmra.mrb[0].mxu0 %v1218
      %v2481 = vpop.f32.mrb[0].mxu0
      %v2482 = vadd.f32 0.0, %v2481
      %v2483 = vpop.f32.mrb[0].mxu0
      %v2484 = vadd.f32 0.0, %v2483
      %v2485 = vpop.f32.mrb[0].mxu0
      %v2486 = vadd.f32 0.0, %v2485
      %v2487 = vpop.f32.mrb[0].mxu0
      %v2488 = vadd.f32 0.0, %v2487
      %2489 = vmatprep.mubr.bf16.mxu0 0
      %2490 = vmatmul.mubr.bf16.gmra.mrb[0].mxu0 %v1221
      %v2491 = vpop.f32.mrb[0].mxu0
      %v2492 = vadd.f32 0.0, %v2491
      %v2493 = vpop.f32.mrb[0].mxu0
      %v2494 = vadd.f32 0.0, %v2493
      %v2495 = vpop.f32.mrb[0].mxu0
      %v2496 = vadd.f32 0.0, %v2495
      %v2497 = vpop.f32.mrb[0].mxu0
      %v2498 = vadd.f32 0.0, %v2497
      %2499 = vmatprep.mubr.bf16.mxu0 0
      %2500 = vmatmul.mubr.bf16.gmra.mrb[0].mxu0 %v1224
      %v2501 = vpop.f32.mrb[0].mxu0
      %v2502 = vadd.f32 0.0, %v2501
      %v2503 = vpop.f32.mrb[0].mxu0
      %v2504 = vadd.f32 0.0, %v2503
      %v2505 = vpop.f32.mrb[0].mxu0
      %v2506 = vadd.f32 0.0, %v2505
      %v2507 = vpop.f32.mrb[0].mxu0
      %v2508 = vadd.f32 0.0, %v2507
      %2509 = vmatprep.mubr.bf16.mxu0 0
      %2510 = vmatmul.mubr.bf16.gmra.mrb[0].mxu0 %v1227
      %v2511 = vpop.f32.mrb[0].mxu0
      %v2512 = vadd.f32 0.0, %v2511
      %v2513 = vpop.f32.mrb[0].mxu0
      %v2514 = vadd.f32 0.0, %v2513
      %v2515 = vpop.f32.mrb[0].mxu0
      %v2516 = vadd.f32 0.0, %v2515
      %v2517 = vpop.f32.mrb[0].mxu0
      %v2518 = vadd.f32 0.0, %v2517
      %2519 = vmatprep.mubr.bf16.mxu0 0
      %2520 = vmatmul.mubr.bf16.gmra.mrb[0].mxu0 %v1230
      %v2521 = vpop.f32.mrb[0].mxu0
      %v2522 = vadd.f32 0.0, %v2521
      %v2523 = vpop.f32.mrb[0].mxu0
      %v2524 = vadd.f32 0.0, %v2523
      %v2525 = vpop.f32.mrb[0].mxu0
      %v2526 = vadd.f32 0.0, %v2525
      %v2527 = vpop.f32.mrb[0].mxu0
      %v2528 = vadd.f32 0.0, %v2527
      %2529 = vmatprep.mubr.bf16.mxu0 0
      %2530 = vmatmul.mubr.bf16.gmra.mrb[0].mxu0 %v1233
      %v2531 = vpop.f32.mrb[0].mxu0
      %v2532 = vadd.f32 0.0, %v2531
      %v2533 = vpop.f32.mrb[0].mxu0
      %v2534 = vadd.f32 0.0, %v2533
      %v2535 = vpop.f32.mrb[0].mxu0
      %v2536 = vadd.f32 0.0, %v2535
      %v2537 = vpop.f32.mrb[0].mxu0
      %v2538 = vadd.f32 0.0, %v2537
      %2539 = vmatprep.mubr.bf16.mxu0 0
      %2540 = vmatmul.mubr.bf16.gmra.mrb[0].mxu0 %v1236
      %v2541 = vpop.f32.mrb[0].mxu0
      %v2542 = vadd.f32 0.0, %v2541
      %v2543 = vpop.f32.mrb[0].mxu0
      %v2544 = vadd.f32 0.0, %v2543
      %v2545 = vpop.f32.mrb[0].mxu0
      %v2546 = vadd.f32 0.0, %v2545
      %v2547 = vpop.f32.mrb[0].mxu0
      %v2548 = vadd.f32 0.0, %v2547
      %2549 = vmatprep.mubr.bf16.mxu0 0
      %2550 = vmatmul.mubr.bf16.gmra.mrb[0].mxu0 %v1239
      %v2551 = vpop.f32.mrb[0].mxu0
      %v2552 = vadd.f32 0.0, %v2551
      %v2553 = vpop.f32.mrb[0].mxu0
      %v2554 = vadd.f32 0.0, %v2553
      %v2555 = vpop.f32.mrb[0].mxu0
      %v2556 = vadd.f32 0.0, %v2555
      %v2557 = vpop.f32.mrb[0].mxu0
      %v2558 = vadd.f32 0.0, %v2557
      %2559 = vdwg.mxu0
      %2560 = vmatprep.subr.bf16.mxu0 %v914
      %2561 = vmatpush1.bf16.msra.mxu0 %v913
      %2562 = vmatprep.subr.bf16.mxu0 %v939
      %2563 = vmatpush1.bf16.msra.mxu0 %v938
      %2564 = vmatprep.subr.bf16.mxu0 %v964
      %2565 = vmatpush1.bf16.msra.mxu0 %v963
      %2566 = vmatprep.subr.bf16.mxu0 %v989
      %2567 = vmatpush1.bf16.msra.mxu0 %v988
      %2568 = vmatprep.subr.bf16.mxu0 %v1014
      %2569 = vmatpush1.bf16.msra.mxu0 %v1013
      %2570 = vmatprep.subr.bf16.mxu0 %v1039
      %2571 = vmatpush1.bf16.msra.mxu0 %v1038
      %2572 = vmatprep.subr.bf16.mxu0 %v1312
      %2573 = vmatpush1.bf16.msra.mxu0 %v1309
      %2574 = vmatprep.subr.bf16.mxu0 0
      %2575 = vmatpush1.bf16.msra.mxu0 0
      %2576 = vmatprep.subr.bf16.mxu0 0
      %2577 = vmatpush1.bf16.msra.mxu0 0
      %2578 = vmatprep.subr.bf16.mxu0 0
      %2579 = vmatpush1.bf16.msra.mxu0 0
      %2580 = vmatprep.subr.bf16.mxu0 0
      %2581 = vmatpush1.bf16.msra.mxu0 0
      %2582 = vmatprep.subr.bf16.mxu0 0
      %2583 = vmatpush1.bf16.msra.mxu0 0
      %2584 = vmatprep.subr.bf16.mxu0 0
      %2585 = vmatpush1.bf16.msra.mxu0 0
      %2586 = vmatprep.subr.bf16.mxu0 0
      %2587 = vmatpush1.bf16.msra.mxu0 0
      %2588 = vmatprep.subr.bf16.mxu0 0
      %2589 = vmatpush1.bf16.msra.mxu0 0
      %2590 = vmatprep.subr.bf16.mxu0 0
      %2591 = vmatpush1.bf16.msra.mxu0 0
      %2592 = vmatprep.mubr.bf16.mxu0 0
      %2593 = vmatmul.mubr.bf16.gmra.mrb[0].mxu0 %v1218
      %v2594 = vpop.f32.mrb[0].mxu0
      %v2595 = vadd.f32 0.0, %v2594
      %v2596 = vpop.f32.mrb[0].mxu0
      %v2597 = vadd.f32 0.0, %v2596
      %v2598 = vpop.f32.mrb[0].mxu0
      %v2599 = vadd.f32 0.0, %v2598
      %v2600 = vpop.f32.mrb[0].mxu0
      %v2601 = vadd.f32 0.0, %v2600
      %2602 = vmatprep.mubr.bf16.mxu0 0
      %2603 = vmatmul.mubr.bf16.gmra.mrb[0].mxu0 %v1221
      %v2604 = vpop.f32.mrb[0].mxu0
      %v2605 = vadd.f32 0.0, %v2604
      %v2606 = vpop.f32.mrb[0].mxu0
      %v2607 = vadd.f32 0.0, %v2606
      %v2608 = vpop.f32.mrb[0].mxu0
      %v2609 = vadd.f32 0.0, %v2608
      %v2610 = vpop.f32.mrb[0].mxu0
      %v2611 = vadd.f32 0.0, %v2610
      %2612 = vmatprep.mubr.bf16.mxu0 0
      %2613 = vmatmul.mubr.bf16.gmra.mrb[0].mxu0 %v1224
      %v2614 = vpop.f32.mrb[0].mxu0
      %v2615 = vadd.f32 0.0, %v2614
      %v2616 = vpop.f32.mrb[0].mxu0
      %v2617 = vadd.f32 0.0, %v2616
      %v2618 = vpop.f32.mrb[0].mxu0
      %v2619 = vadd.f32 0.0, %v2618
      %v2620 = vpop.f32.mrb[0].mxu0
      %v2621 = vadd.f32 0.0, %v2620
      %2622 = vmatprep.mubr.bf16.mxu0 0
      %2623 = vmatmul.mubr.bf16.gmra.mrb[0].mxu0 %v1227
      %v2624 = vpop.f32.mrb[0].mxu0
      %v2625 = vadd.f32 0.0, %v2624
      %v2626 = vpop.f32.mrb[0].mxu0
      %v2627 = vadd.f32 0.0, %v2626
      %v2628 = vpop.f32.mrb[0].mxu0
      %v2629 = vadd.f32 0.0, %v2628
      %v2630 = vpop.f32.mrb[0].mxu0
      %v2631 = vadd.f32 0.0, %v2630
      %2632 = vmatprep.mubr.bf16.mxu0 0
      %2633 = vmatmul.mubr.bf16.gmra.mrb[0].mxu0 %v1230
      %v2634 = vpop.f32.mrb[0].mxu0
      %v2635 = vadd.f32 0.0, %v2634
      %v2636 = vpop.f32.mrb[0].mxu0
      %v2637 = vadd.f32 0.0, %v2636
      %v2638 = vpop.f32.mrb[0].mxu0
      %v2639 = vadd.f32 0.0, %v2638
      %v2640 = vpop.f32.mrb[0].mxu0
      %v2641 = vadd.f32 0.0, %v2640
      %2642 = vmatprep.mubr.bf16.mxu0 0
      %2643 = vmatmul.mubr.bf16.gmra.mrb[0].mxu0 %v1233
      %v2644 = vpop.f32.mrb[0].mxu0
      %v2645 = vadd.f32 0.0, %v2644
      %v2646 = vpop.f32.mrb[0].mxu0
      %v2647 = vadd.f32 0.0, %v2646
      %v2648 = vpop.f32.mrb[0].mxu0
      %v2649 = vadd.f32 0.0, %v2648
      %v2650 = vpop.f32.mrb[0].mxu0
      %v2651 = vadd.f32 0.0, %v2650
      %2652 = vmatprep.mubr.bf16.mxu0 0
      %2653 = vmatmul.mubr.bf16.gmra.mrb[0].mxu0 %v1236
      %v2654 = vpop.f32.mrb[0].mxu0
      %v2655 = vadd.f32 0.0, %v2654
      %v2656 = vpop.f32.mrb[0].mxu0
      %v2657 = vadd.f32 0.0, %v2656
      %v2658 = vpop.f32.mrb[0].mxu0
      %v2659 = vadd.f32 0.0, %v2658
      %v2660 = vpop.f32.mrb[0].mxu0
      %v2661 = vadd.f32 0.0, %v2660
      %2662 = vmatprep.mubr.bf16.mxu0 0
      %2663 = vmatmul.mubr.bf16.gmra.mrb[0].mxu0 %v1239
      %v2664 = vpop.f32.mrb[0].mxu0
      %v2665 = vadd.f32 0.0, %v2664
      %v2666 = vpop.f32.mrb[0].mxu0
      %v2667 = vadd.f32 0.0, %v2666
      %v2668 = vpop.f32.mrb[0].mxu0
      %v2669 = vadd.f32 0.0, %v2668
      %v2670 = vpop.f32.mrb[0].mxu0
      %v2671 = vadd.f32 0.0, %v2670
      %2672 = vdwg.mxu0
      %2673 = vmatprep.subr.bf16.mxu0 0
      %2674 = vmatpush1.bf16.msra.mxu0 %v915
      %2675 = vmatprep.subr.bf16.mxu0 0
      %2676 = vmatpush1.bf16.msra.mxu0 %v940
      %2677 = vmatprep.subr.bf16.mxu0 0
      %2678 = vmatpush1.bf16.msra.mxu0 %v965
      %2679 = vmatprep.subr.bf16.mxu0 0
      %2680 = vmatpush1.bf16.msra.mxu0 %v990
      %2681 = vmatprep.subr.bf16.mxu0 0
      %2682 = vmatpush1.bf16.msra.mxu0 %v1015
      %2683 = vmatprep.subr.bf16.mxu0 0
      %2684 = vmatpush1.bf16.msra.mxu0 %v1040
      %2685 = vmatprep.subr.bf16.mxu0 0
      %2686 = vmatpush1.bf16.msra.mxu0 %v1315
      %2687 = vmatprep.subr.bf16.mxu0 0
      %2688 = vmatpush1.bf16.msra.mxu0 0
      %2689 = vmatprep.subr.bf16.mxu0 0
      %2690 = vmatpush1.bf16.msra.mxu0 0
      %2691 = vmatprep.subr.bf16.mxu0 0
      %2692 = vmatpush1.bf16.msra.mxu0 0
      %2693 = vmatprep.subr.bf16.mxu0 0
      %2694 = vmatpush1.bf16.msra.mxu0 0
      %2695 = vmatprep.subr.bf16.mxu0 0
      %2696 = vmatpush1.bf16.msra.mxu0 0
      %2697 = vmatprep.subr.bf16.mxu0 0
      %2698 = vmatpush1.bf16.msra.mxu0 0
      %2699 = vmatprep.subr.bf16.mxu0 0
      %2700 = vmatpush1.bf16.msra.mxu0 0
      %2701 = vmatprep.subr.bf16.mxu0 0
      %2702 = vmatpush1.bf16.msra.mxu0 0
      %2703 = vmatprep.subr.bf16.mxu0 0
      %2704 = vmatpush1.bf16.msra.mxu0 0
      %2705 = vmatprep.mubr.bf16.mxu0 0
      %2706 = vmatmul.mubr.bf16.gmra.mrb[0].mxu0 %v1218
      %v2707 = vpop.f32.mrb[0].mxu0
      %v2708 = vpop.f32.mrb[0].mxu0
      %v2709 = vpop.f32.mrb[0].mxu0
      %v2710 = vpop.f32.mrb[0].mxu0
      %2711 = vmatprep.mubr.bf16.mxu0 0
      %2712 = vmatmul.mubr.bf16.gmra.mrb[0].mxu0 %v1221
      %v2713 = vpop.f32.mrb[0].mxu0
      %v2714 = vpop.f32.mrb[0].mxu0
      %v2715 = vpop.f32.mrb[0].mxu0
      %v2716 = vpop.f32.mrb[0].mxu0
      %2717 = vmatprep.mubr.bf16.mxu0 0
      %2718 = vmatmul.mubr.bf16.gmra.mrb[0].mxu0 %v1224
      %v2719 = vpop.f32.mrb[0].mxu0
      %v2720 = vpop.f32.mrb[0].mxu0
      %v2721 = vpop.f32.mrb[0].mxu0
      %v2722 = vpop.f32.mrb[0].mxu0
      %2723 = vmatprep.mubr.bf16.mxu0 0
      %2724 = vmatmul.mubr.bf16.gmra.mrb[0].mxu0 %v1227
      %v2725 = vpop.f32.mrb[0].mxu0
      %v2726 = vpop.f32.mrb[0].mxu0
      %v2727 = vpop.f32.mrb[0].mxu0
      %v2728 = vpop.f32.mrb[0].mxu0
      %2729 = vmatprep.mubr.bf16.mxu0 0
      %2730 = vmatmul.mubr.bf16.gmra.mrb[0].mxu0 %v1230
      %v2731 = vpop.f32.mrb[0].mxu0
      %v2732 = vpop.f32.mrb[0].mxu0
      %v2733 = vpop.f32.mrb[0].mxu0
      %v2734 = vpop.f32.mrb[0].mxu0
      %2735 = vmatprep.mubr.bf16.mxu0 0
      %2736 = vmatmul.mubr.bf16.gmra.mrb[0].mxu0 %v1233
      %v2737 = vpop.f32.mrb[0].mxu0
      %v2738 = vpop.f32.mrb[0].mxu0
      %v2739 = vpop.f32.mrb[0].mxu0
      %v2740 = vpop.f32.mrb[0].mxu0
      %2741 = vmatprep.mubr.bf16.mxu0 0
      %2742 = vmatmul.mubr.bf16.gmra.mrb[0].mxu0 %v1236
      %v2743 = vpop.f32.mrb[0].mxu0
      %v2744 = vadd.f32 0.0, %v2743
      %v2745 = vpop.f32.mrb[0].mxu0
      %v2746 = vpop.f32.mrb[0].mxu0
      %v2747 = vadd.f32 0.0, %v2746
      %v2748 = vpop.f32.mrb[0].mxu0
      %2749 = vmatprep.mubr.bf16.mxu0 0
      %2750 = vmatmul.mubr.bf16.gmra.mrb[0].mxu0 %v1239
      %v2751 = vpop.f32.mrb[0].mxu0
      %v2752 = vadd.f32 0.0, %v2751
      %v2753 = vpop.f32.mrb[0].mxu0
      %v2754 = vpop.f32.mrb[0].mxu0
      %v2755 = vadd.f32 0.0, %v2754
      %v2756 = vpop.f32.mrb[0].mxu0
      %2757 = vdwg.mxu0
      %2854 = vrot.lane.b32.xlu0 %v1372, 127
      %v2855 = vpop.permute.xlu0 %2854
      %2856 = vrot.lane.b32.xlu0 %v1374, 127
      %v2857 = vpop.permute.xlu0 %2856
      %2858 = vrot.lane.b32.xlu0 %v1485, 127
      %v2859 = vpop.permute.xlu0 %2858
      %2860 = vrot.lane.b32.xlu0 %v1487, 127
      %v2861 = vpop.permute.xlu0 %2860
      %2862 = vrot.lane.b32.xlu0 %v1598, 127
      %v2863 = vpop.permute.xlu0 %2862
      %2864 = vrot.lane.b32.xlu0 %v1600, 127
      %v2865 = vpop.permute.xlu0 %2864
      %2866 = vrot.lane.b32.xlu0 %v1711, 127
      %v2867 = vpop.permute.xlu0 %2866
      %2868 = vrot.lane.b32.xlu0 %v1713, 127
      %v2869 = vpop.permute.xlu0 %2868
      %2870 = vrot.lane.b32.xlu0 %v1824, 127
      %v2871 = vpop.permute.xlu0 %2870
      %2872 = vrot.lane.b32.xlu0 %v1826, 127
      %v2873 = vpop.permute.xlu0 %2872
      %2874 = vrot.lane.b32.xlu0 %v1937, 127
      %v2875 = vpop.permute.xlu0 %2874
      %2876 = vrot.lane.b32.xlu0 %v1939, 127
      %v2877 = vpop.permute.xlu0 %2876
      %2878 = vrot.lane.b32.xlu0 %v2050, 127
      %v2879 = vpop.permute.xlu0 %2878
      %2880 = vrot.lane.b32.xlu0 %v2052, 127
      %v2881 = vpop.permute.xlu0 %2880
      %2882 = vrot.lane.b32.xlu0 %v2163, 127
      %v2883 = vpop.permute.xlu0 %2882
      %2884 = vrot.lane.b32.xlu0 %v2165, 127
      %v2885 = vpop.permute.xlu0 %2884
      %2886 = vrot.lane.b32.xlu0 %v2276, 127
      %v2887 = vpop.permute.xlu0 %2886
      %2888 = vrot.lane.b32.xlu0 %v2278, 127
      %v2889 = vpop.permute.xlu0 %2888
      %2890 = vrot.lane.b32.xlu0 %v2389, 127
      %v2891 = vpop.permute.xlu0 %2890
      %2892 = vrot.lane.b32.xlu0 %v2391, 127
      %v2893 = vpop.permute.xlu0 %2892
      %2894 = vrot.lane.b32.xlu0 %v2502, 127
      %v2895 = vpop.permute.xlu0 %2894
      %2896 = vrot.lane.b32.xlu0 %v2504, 127
      %v2897 = vpop.permute.xlu0 %2896
      %2898 = vrot.lane.b32.xlu0 %v2615, 127
      %v2899 = vpop.permute.xlu0 %2898
      %2900 = vrot.lane.b32.xlu0 %v2617, 127
      %v2901 = vpop.permute.xlu0 %2900
      %2902 = vrot.lane.b32.xlu0 %v1376, 127
      %v2903 = vpop.permute.xlu0 %2902
      %2904 = vrot.lane.b32.xlu0 %v1378, 127
      %v2905 = vpop.permute.xlu0 %2904
      %2906 = vrot.lane.b32.xlu0 %v1489, 127
      %v2907 = vpop.permute.xlu0 %2906
      %2908 = vrot.lane.b32.xlu0 %v1491, 127
      %v2909 = vpop.permute.xlu0 %2908
      %2910 = vrot.lane.b32.xlu0 %v1602, 127
      %v2911 = vpop.permute.xlu0 %2910
      %2912 = vrot.lane.b32.xlu0 %v1604, 127
      %v2913 = vpop.permute.xlu0 %2912
      %2914 = vrot.lane.b32.xlu0 %v1715, 127
      %v2915 = vpop.permute.xlu0 %2914
      %2916 = vrot.lane.b32.xlu0 %v1717, 127
      %v2917 = vpop.permute.xlu0 %2916
      %2918 = vrot.lane.b32.xlu0 %v1828, 127
      %v2919 = vpop.permute.xlu0 %2918
      %2920 = vrot.lane.b32.xlu0 %v1830, 127
      %v2921 = vpop.permute.xlu0 %2920
      %2922 = vrot.lane.b32.xlu0 %v1941, 127
      %v2923 = vpop.permute.xlu0 %2922
      %2924 = vrot.lane.b32.xlu0 %v1943, 127
      %v2925 = vpop.permute.xlu0 %2924
      %2926 = vrot.lane.b32.xlu0 %v2054, 127
      %v2927 = vpop.permute.xlu0 %2926
      %2928 = vrot.lane.b32.xlu0 %v2056, 127
      %v2929 = vpop.permute.xlu0 %2928
      %2930 = vrot.lane.b32.xlu0 %v2167, 127
      %v2931 = vpop.permute.xlu0 %2930
      %2932 = vrot.lane.b32.xlu0 %v2169, 127
      %v2933 = vpop.permute.xlu0 %2932
      %2934 = vrot.lane.b32.xlu0 %v2280, 127
      %v2935 = vpop.permute.xlu0 %2934
      %2936 = vrot.lane.b32.xlu0 %v2282, 127
      %v2937 = vpop.permute.xlu0 %2936
      %2938 = vrot.lane.b32.xlu0 %v2393, 127
      %v2939 = vpop.permute.xlu0 %2938
      %2940 = vrot.lane.b32.xlu0 %v2395, 127
      %v2941 = vpop.permute.xlu0 %2940
      %2942 = vrot.lane.b32.xlu0 %v2506, 127
      %v2943 = vpop.permute.xlu0 %2942
      %2944 = vrot.lane.b32.xlu0 %v2508, 127
      %v2945 = vpop.permute.xlu0 %2944
      %2946 = vrot.lane.b32.xlu0 %v2619, 127
      %v2947 = vpop.permute.xlu0 %2946
      %2948 = vrot.lane.b32.xlu0 %v2621, 127
      %v2949 = vpop.permute.xlu0 %2948
      %2950 = vrot.lane.b32.xlu0 %v1382, 127
      %v2951 = vpop.permute.xlu0 %2950
      %2952 = vrot.lane.b32.xlu0 %v1384, 127
      %v2953 = vpop.permute.xlu0 %2952
      %2954 = vrot.lane.b32.xlu0 %v1495, 127
      %v2955 = vpop.permute.xlu0 %2954
      %2956 = vrot.lane.b32.xlu0 %v1497, 127
      %v2957 = vpop.permute.xlu0 %2956
      %2958 = vrot.lane.b32.xlu0 %v1608, 127
      %v2959 = vpop.permute.xlu0 %2958
      %2960 = vrot.lane.b32.xlu0 %v1610, 127
      %v2961 = vpop.permute.xlu0 %2960
      %2962 = vrot.lane.b32.xlu0 %v1721, 127
      %v2963 = vpop.permute.xlu0 %2962
      %2964 = vrot.lane.b32.xlu0 %v1723, 127
      %v2965 = vpop.permute.xlu0 %2964
      %2966 = vrot.lane.b32.xlu0 %v1834, 127
      %v2967 = vpop.permute.xlu0 %2966
      %2968 = vrot.lane.b32.xlu0 %v1836, 127
      %v2969 = vpop.permute.xlu0 %2968
      %2970 = vrot.lane.b32.xlu0 %v1947, 127
      %v2971 = vpop.permute.xlu0 %2970
      %2972 = vrot.lane.b32.xlu0 %v1949, 127
      %v2973 = vpop.permute.xlu0 %2972
      %2974 = vrot.lane.b32.xlu0 %v2060, 127
      %v2975 = vpop.permute.xlu0 %2974
      %2976 = vrot.lane.b32.xlu0 %v2062, 127
      %v2977 = vpop.permute.xlu0 %2976
      %2978 = vrot.lane.b32.xlu0 %v2173, 127
      %v2979 = vpop.permute.xlu0 %2978
      %2980 = vrot.lane.b32.xlu0 %v2175, 127
      %v2981 = vpop.permute.xlu0 %2980
      %2982 = vrot.lane.b32.xlu0 %v2286, 127
      %v2983 = vpop.permute.xlu0 %2982
      %2984 = vrot.lane.b32.xlu0 %v2288, 127
      %v2985 = vpop.permute.xlu0 %2984
      %2986 = vrot.lane.b32.xlu0 %v2399, 127
      %v2987 = vpop.permute.xlu0 %2986
      %2988 = vrot.lane.b32.xlu0 %v2401, 127
      %v2989 = vpop.permute.xlu0 %2988
      %2990 = vrot.lane.b32.xlu0 %v2512, 127
      %v2991 = vpop.permute.xlu0 %2990
      %2992 = vrot.lane.b32.xlu0 %v2514, 127
      %v2993 = vpop.permute.xlu0 %2992
      %2994 = vrot.lane.b32.xlu0 %v2625, 127
      %v2995 = vpop.permute.xlu0 %2994
      %2996 = vrot.lane.b32.xlu0 %v2627, 127
      %v2997 = vpop.permute.xlu0 %2996
      %2998 = vrot.lane.b32.xlu0 %v1386, 127
      %v2999 = vpop.permute.xlu0 %2998
      %3000 = vrot.lane.b32.xlu0 %v1388, 127
      %v3001 = vpop.permute.xlu0 %3000
      %3002 = vrot.lane.b32.xlu0 %v1499, 127
      %v3003 = vpop.permute.xlu0 %3002
      %3004 = vrot.lane.b32.xlu0 %v1501, 127
      %v3005 = vpop.permute.xlu0 %3004
      %3006 = vrot.lane.b32.xlu0 %v1612, 127
      %v3007 = vpop.permute.xlu0 %3006
      %3008 = vrot.lane.b32.xlu0 %v1614, 127
      %v3009 = vpop.permute.xlu0 %3008
      %3010 = vrot.lane.b32.xlu0 %v1725, 127
      %v3011 = vpop.permute.xlu0 %3010
      %3012 = vrot.lane.b32.xlu0 %v1727, 127
      %v3013 = vpop.permute.xlu0 %3012
      %3014 = vrot.lane.b32.xlu0 %v1838, 127
      %v3015 = vpop.permute.xlu0 %3014
      %3016 = vrot.lane.b32.xlu0 %v1840, 127
      %v3017 = vpop.permute.xlu0 %3016
      %3018 = vrot.lane.b32.xlu0 %v1951, 127
      %v3019 = vpop.permute.xlu0 %3018
      %3020 = vrot.lane.b32.xlu0 %v1953, 127
      %v3021 = vpop.permute.xlu0 %3020
      %3022 = vrot.lane.b32.xlu0 %v2064, 127
      %v3023 = vpop.permute.xlu0 %3022
      %3024 = vrot.lane.b32.xlu0 %v2066, 127
      %v3025 = vpop.permute.xlu0 %3024
      %3026 = vrot.lane.b32.xlu0 %v2177, 127
      %v3027 = vpop.permute.xlu0 %3026
      %3028 = vrot.lane.b32.xlu0 %v2179, 127
      %v3029 = vpop.permute.xlu0 %3028
      %3030 = vrot.lane.b32.xlu0 %v2290, 127
      %v3031 = vpop.permute.xlu0 %3030
      %3032 = vrot.lane.b32.xlu0 %v2292, 127
      %v3033 = vpop.permute.xlu0 %3032
      %3034 = vrot.lane.b32.xlu0 %v2403, 127
      %v3035 = vpop.permute.xlu0 %3034
      %3036 = vrot.lane.b32.xlu0 %v2405, 127
      %v3037 = vpop.permute.xlu0 %3036
      %3038 = vrot.lane.b32.xlu0 %v2516, 127
      %v3039 = vpop.permute.xlu0 %3038
      %3040 = vrot.lane.b32.xlu0 %v2518, 127
      %v3041 = vpop.permute.xlu0 %3040
      %3042 = vrot.lane.b32.xlu0 %v2629, 127
      %v3043 = vpop.permute.xlu0 %3042
      %3044 = vrot.lane.b32.xlu0 %v2631, 127
      %v3045 = vpop.permute.xlu0 %3044
      %vm3046 = vcmask 1039360
      %v3047 = vsel %vm3046, %v2855, %v2857
      %v3048 = vsel %vm3046, %v2857, %v2859
      %v3049 = vsel %vm3046, %v2859, %v2861
      %v3050 = vsel %vm3046, %v2861, %v2863
      %v3051 = vsel %vm3046, %v2863, %v2865
      %v3052 = vsel %vm3046, %v2865, %v2867
      %v3053 = vsel %vm3046, %v2867, %v2869
      %v3054 = vsel %vm3046, %v2869, %v2871
      %v3055 = vsel %vm3046, %v2871, %v2873
      %v3056 = vsel %vm3046, %v2873, %v2875
      %v3057 = vsel %vm3046, %v2875, %v2877
      %v3058 = vsel %vm3046, %v2877, %v2879
      %v3059 = vsel %vm3046, %v2879, %v2881
      %v3060 = vsel %vm3046, %v2881, %v2883
      %v3061 = vsel %vm3046, %v2883, %v2885
      %v3062 = vsel %vm3046, %v2885, %v2887
      %v3063 = vsel %vm3046, %v2887, %v2889
      %v3064 = vsel %vm3046, %v2889, %v2891
      %v3065 = vsel %vm3046, %v2891, %v2893
      %v3066 = vsel %vm3046, %v2893, %v2895
      %v3067 = vsel %vm3046, %v2895, %v2897
      %v3068 = vsel %vm3046, %v2897, %v2899
      %v3069 = vsel %vm3046, %v2899, %v2901
      %v3070 = vsel %vm3046, %v2903, %v2905
      %v3071 = vsel %vm3046, %v2905, %v2907
      %v3072 = vsel %vm3046, %v2907, %v2909
      %v3073 = vsel %vm3046, %v2909, %v2911
      %v3074 = vsel %vm3046, %v2911, %v2913
      %v3075 = vsel %vm3046, %v2913, %v2915
      %v3076 = vsel %vm3046, %v2915, %v2917
      %v3077 = vsel %vm3046, %v2917, %v2919
      %v3078 = vsel %vm3046, %v2919, %v2921
      %v3079 = vsel %vm3046, %v2921, %v2923
      %v3080 = vsel %vm3046, %v2923, %v2925
      %v3081 = vsel %vm3046, %v2925, %v2927
      %v3082 = vsel %vm3046, %v2927, %v2929
      %v3083 = vsel %vm3046, %v2929, %v2931
      %v3084 = vsel %vm3046, %v2931, %v2933
      %v3085 = vsel %vm3046, %v2933, %v2935
      %v3086 = vsel %vm3046, %v2935, %v2937
      %v3087 = vsel %vm3046, %v2937, %v2939
      %v3088 = vsel %vm3046, %v2939, %v2941
      %v3089 = vsel %vm3046, %v2941, %v2943
      %v3090 = vsel %vm3046, %v2943, %v2945
      %v3091 = vsel %vm3046, %v2945, %v2947
      %v3092 = vsel %vm3046, %v2947, %v2949
      %v3093 = vsel %vm3046, %v2951, %v2953
      %v3094 = vsel %vm3046, %v2953, %v2955
      %v3095 = vsel %vm3046, %v2955, %v2957
      %v3096 = vsel %vm3046, %v2957, %v2959
      %v3097 = vsel %vm3046, %v2959, %v2961
      %v3098 = vsel %vm3046, %v2961, %v2963
      %v3099 = vsel %vm3046, %v2963, %v2965
      %v3100 = vsel %vm3046, %v2965, %v2967
      %v3101 = vsel %vm3046, %v2967, %v2969
      %v3102 = vsel %vm3046, %v2969, %v2971
      %v3103 = vsel %vm3046, %v2971, %v2973
      %v3104 = vsel %vm3046, %v2973, %v2975
      %v3105 = vsel %vm3046, %v2975, %v2977
      %v3106 = vsel %vm3046, %v2977, %v2979
      %v3107 = vsel %vm3046, %v2979, %v2981
      %v3108 = vsel %vm3046, %v2981, %v2983
      %v3109 = vsel %vm3046, %v2983, %v2985
      %v3110 = vsel %vm3046, %v2985, %v2987
      %v3111 = vsel %vm3046, %v2987, %v2989
      %v3112 = vsel %vm3046, %v2989, %v2991
      %v3113 = vsel %vm3046, %v2991, %v2993
      %v3114 = vsel %vm3046, %v2993, %v2995
      %v3115 = vsel %vm3046, %v2995, %v2997
      %v3116 = vsel %vm3046, %v2999, %v3001
      %v3117 = vsel %vm3046, %v3001, %v3003
      %v3118 = vsel %vm3046, %v3003, %v3005
      %v3119 = vsel %vm3046, %v3005, %v3007
      %v3120 = vsel %vm3046, %v3007, %v3009
      %v3121 = vsel %vm3046, %v3009, %v3011
      %v3122 = vsel %vm3046, %v3011, %v3013
      %v3123 = vsel %vm3046, %v3013, %v3015
      %v3124 = vsel %vm3046, %v3015, %v3017
      %v3125 = vsel %vm3046, %v3017, %v3019
      %v3126 = vsel %vm3046, %v3019, %v3021
      %v3127 = vsel %vm3046, %v3021, %v3023
      %v3128 = vsel %vm3046, %v3023, %v3025
      %v3129 = vsel %vm3046, %v3025, %v3027
      %v3130 = vsel %vm3046, %v3027, %v3029
      %v3131 = vsel %vm3046, %v3029, %v3031
      %v3132 = vsel %vm3046, %v3031, %v3033
      %v3133 = vsel %vm3046, %v3033, %v3035
      %v3134 = vsel %vm3046, %v3035, %v3037
      %v3135 = vsel %vm3046, %v3037, %v3039
      %v3136 = vsel %vm3046, %v3039, %v3041
      %v3137 = vsel %vm3046, %v3041, %v3043
      %v3138 = vsel %vm3046, %v3043, %v3045
      %v3235 = vadd.f32 %v1352, %v3047
      %v3236 = vadd.f32 %v1354, %v3048
      %v3237 = vadd.f32 %v1465, %v3049
      %v3238 = vadd.f32 %v1467, %v3050
      %v3239 = vadd.f32 %v1578, %v3051
      %v3240 = vadd.f32 %v1580, %v3052
      %v3241 = vadd.f32 %v1691, %v3053
      %v3242 = vadd.f32 %v1693, %v3054
      %v3243 = vadd.f32 %v1804, %v3055
      %v3244 = vadd.f32 %v1806, %v3056
      %v3245 = vadd.f32 %v1917, %v3057
      %v3246 = vadd.f32 %v1919, %v3058
      %v3247 = vadd.f32 %v2030, %v3059
      %v3248 = vadd.f32 %v2032, %v3060
      %v3249 = vadd.f32 %v2143, %v3061
      %v3250 = vadd.f32 %v2145, %v3062
      %v3251 = vadd.f32 %v2256, %v3063
      %v3252 = vadd.f32 %v2258, %v3064
      %v3253 = vadd.f32 %v2369, %v3065
      %v3254 = vadd.f32 %v2371, %v3066
      %v3255 = vadd.f32 %v2482, %v3067
      %v3256 = vadd.f32 %v2484, %v3068
      %v3257 = vadd.f32 %v2595, %v3069
      %v3258 = vadd.f32 %v2597, %v2901
      %v3259 = vadd.f32 %v1356, %v3070
      %v3260 = vadd.f32 %v1358, %v3071
      %v3261 = vadd.f32 %v1469, %v3072
      %v3262 = vadd.f32 %v1471, %v3073
      %v3263 = vadd.f32 %v1582, %v3074
      %v3264 = vadd.f32 %v1584, %v3075
      %v3265 = vadd.f32 %v1695, %v3076
      %v3266 = vadd.f32 %v1697, %v3077
      %v3267 = vadd.f32 %v1808, %v3078
      %v3268 = vadd.f32 %v1810, %v3079
      %v3269 = vadd.f32 %v1921, %v3080
      %v3270 = vadd.f32 %v1923, %v3081
      %v3271 = vadd.f32 %v2034, %v3082
      %v3272 = vadd.f32 %v2036, %v3083
      %v3273 = vadd.f32 %v2147, %v3084
      %v3274 = vadd.f32 %v2149, %v3085
      %v3275 = vadd.f32 %v2260, %v3086
      %v3276 = vadd.f32 %v2262, %v3087
      %v3277 = vadd.f32 %v2373, %v3088
      %v3278 = vadd.f32 %v2375, %v3089
      %v3279 = vadd.f32 %v2486, %v3090
      %v3280 = vadd.f32 %v2488, %v3091
      %v3281 = vadd.f32 %v2599, %v3092
      %v3282 = vadd.f32 %v2601, %v2949
      %v3283 = vadd.f32 %v1362, %v3093
      %v3284 = vadd.f32 %v1364, %v3094
      %v3285 = vadd.f32 %v1475, %v3095
      %v3286 = vadd.f32 %v1477, %v3096
      %v3287 = vadd.f32 %v1588, %v3097
      %v3288 = vadd.f32 %v1590, %v3098
      %v3289 = vadd.f32 %v1701, %v3099
      %v3290 = vadd.f32 %v1703, %v3100
      %v3291 = vadd.f32 %v1814, %v3101
      %v3292 = vadd.f32 %v1816, %v3102
      %v3293 = vadd.f32 %v1927, %v3103
      %v3294 = vadd.f32 %v1929, %v3104
      %v3295 = vadd.f32 %v2040, %v3105
      %v3296 = vadd.f32 %v2042, %v3106
      %v3297 = vadd.f32 %v2153, %v3107
      %v3298 = vadd.f32 %v2155, %v3108
      %v3299 = vadd.f32 %v2266, %v3109
      %v3300 = vadd.f32 %v2268, %v3110
      %v3301 = vadd.f32 %v2379, %v3111
      %v3302 = vadd.f32 %v2381, %v3112
      %v3303 = vadd.f32 %v2492, %v3113
      %v3304 = vadd.f32 %v2494, %v3114
      %v3305 = vadd.f32 %v2605, %v3115
      %v3306 = vadd.f32 %v2607, %v2997
      %v3307 = vadd.f32 %v1366, %v3116
      %v3308 = vadd.f32 %v1368, %v3117
      %v3309 = vadd.f32 %v1479, %v3118
      %v3310 = vadd.f32 %v1481, %v3119
      %v3311 = vadd.f32 %v1592, %v3120
      %v3312 = vadd.f32 %v1594, %v3121
      %v3313 = vadd.f32 %v1705, %v3122
      %v3314 = vadd.f32 %v1707, %v3123
      %v3315 = vadd.f32 %v1818, %v3124
      %v3316 = vadd.f32 %v1820, %v3125
      %v3317 = vadd.f32 %v1931, %v3126
      %v3318 = vadd.f32 %v1933, %v3127
      %v3319 = vadd.f32 %v2044, %v3128
      %v3320 = vadd.f32 %v2046, %v3129
      %v3321 = vadd.f32 %v2157, %v3130
      %v3322 = vadd.f32 %v2159, %v3131
      %v3323 = vadd.f32 %v2270, %v3132
      %v3324 = vadd.f32 %v2272, %v3133
      %v3325 = vadd.f32 %v2383, %v3134
      %v3326 = vadd.f32 %v2385, %v3135
      %v3327 = vadd.f32 %v2496, %v3136
      %v3328 = vadd.f32 %v2498, %v3137
      %v3329 = vadd.f32 %v2609, %v3138
      %v3330 = vadd.f32 %v2611, %v3045
      %3427 = vrot.lane.b32.xlu0 %v1392, 64
      %v3428 = vpop.permute.xlu0 %3427
      %3429 = vrot.lane.b32.xlu0 %v1394, 64
      %v3430 = vpop.permute.xlu0 %3429
      %3431 = vrot.lane.b32.xlu0 %v1505, 64
      %v3432 = vpop.permute.xlu0 %3431
      %3433 = vrot.lane.b32.xlu0 %v1507, 64
      %v3434 = vpop.permute.xlu0 %3433
      %3435 = vrot.lane.b32.xlu0 %v1618, 64
      %v3436 = vpop.permute.xlu0 %3435
      %3437 = vrot.lane.b32.xlu0 %v1620, 64
      %v3438 = vpop.permute.xlu0 %3437
      %3439 = vrot.lane.b32.xlu0 %v1731, 64
      %v3440 = vpop.permute.xlu0 %3439
      %3441 = vrot.lane.b32.xlu0 %v1733, 64
      %v3442 = vpop.permute.xlu0 %3441
      %3443 = vrot.lane.b32.xlu0 %v1844, 64
      %v3444 = vpop.permute.xlu0 %3443
      %3445 = vrot.lane.b32.xlu0 %v1846, 64
      %v3446 = vpop.permute.xlu0 %3445
      %3447 = vrot.lane.b32.xlu0 %v1957, 64
      %v3448 = vpop.permute.xlu0 %3447
      %3449 = vrot.lane.b32.xlu0 %v1959, 64
      %v3450 = vpop.permute.xlu0 %3449
      %3451 = vrot.lane.b32.xlu0 %v2070, 64
      %v3452 = vpop.permute.xlu0 %3451
      %3453 = vrot.lane.b32.xlu0 %v2072, 64
      %v3454 = vpop.permute.xlu0 %3453
      %3455 = vrot.lane.b32.xlu0 %v2183, 64
      %v3456 = vpop.permute.xlu0 %3455
      %3457 = vrot.lane.b32.xlu0 %v2185, 64
      %v3458 = vpop.permute.xlu0 %3457
      %3459 = vrot.lane.b32.xlu0 %v2296, 64
      %v3460 = vpop.permute.xlu0 %3459
      %3461 = vrot.lane.b32.xlu0 %v2298, 64
      %v3462 = vpop.permute.xlu0 %3461
      %3463 = vrot.lane.b32.xlu0 %v2409, 64
      %v3464 = vpop.permute.xlu0 %3463
      %3465 = vrot.lane.b32.xlu0 %v2411, 64
      %v3466 = vpop.permute.xlu0 %3465
      %3467 = vrot.lane.b32.xlu0 %v2522, 64
      %v3468 = vpop.permute.xlu0 %3467
      %3469 = vrot.lane.b32.xlu0 %v2524, 64
      %v3470 = vpop.permute.xlu0 %3469
      %3471 = vrot.lane.b32.xlu0 %v2635, 64
      %v3472 = vpop.permute.xlu0 %3471
      %3473 = vrot.lane.b32.xlu0 %v2637, 64
      %v3474 = vpop.permute.xlu0 %3473
      %3475 = vrot.lane.b32.xlu0 %v1396, 64
      %v3476 = vpop.permute.xlu0 %3475
      %3477 = vrot.lane.b32.xlu0 %v1398, 64
      %v3478 = vpop.permute.xlu0 %3477
      %3479 = vrot.lane.b32.xlu0 %v1509, 64
      %v3480 = vpop.permute.xlu0 %3479
      %3481 = vrot.lane.b32.xlu0 %v1511, 64
      %v3482 = vpop.permute.xlu0 %3481
      %3483 = vrot.lane.b32.xlu0 %v1622, 64
      %v3484 = vpop.permute.xlu0 %3483
      %3485 = vrot.lane.b32.xlu0 %v1624, 64
      %v3486 = vpop.permute.xlu0 %3485
      %3487 = vrot.lane.b32.xlu0 %v1735, 64
      %v3488 = vpop.permute.xlu0 %3487
      %3489 = vrot.lane.b32.xlu0 %v1737, 64
      %v3490 = vpop.permute.xlu0 %3489
      %3491 = vrot.lane.b32.xlu0 %v1848, 64
      %v3492 = vpop.permute.xlu0 %3491
      %3493 = vrot.lane.b32.xlu0 %v1850, 64
      %v3494 = vpop.permute.xlu0 %3493
      %3495 = vrot.lane.b32.xlu0 %v1961, 64
      %v3496 = vpop.permute.xlu0 %3495
      %3497 = vrot.lane.b32.xlu0 %v1963, 64
      %v3498 = vpop.permute.xlu0 %3497
      %3499 = vrot.lane.b32.xlu0 %v2074, 64
      %v3500 = vpop.permute.xlu0 %3499
      %3501 = vrot.lane.b32.xlu0 %v2076, 64
      %v3502 = vpop.permute.xlu0 %3501
      %3503 = vrot.lane.b32.xlu0 %v2187, 64
      %v3504 = vpop.permute.xlu0 %3503
      %3505 = vrot.lane.b32.xlu0 %v2189, 64
      %v3506 = vpop.permute.xlu0 %3505
      %3507 = vrot.lane.b32.xlu0 %v2300, 64
      %v3508 = vpop.permute.xlu0 %3507
      %3509 = vrot.lane.b32.xlu0 %v2302, 64
      %v3510 = vpop.permute.xlu0 %3509
      %3511 = vrot.lane.b32.xlu0 %v2413, 64
      %v3512 = vpop.permute.xlu0 %3511
      %3513 = vrot.lane.b32.xlu0 %v2415, 64
      %v3514 = vpop.permute.xlu0 %3513
      %3515 = vrot.lane.b32.xlu0 %v2526, 64
      %v3516 = vpop.permute.xlu0 %3515
      %3517 = vrot.lane.b32.xlu0 %v2528, 64
      %v3518 = vpop.permute.xlu0 %3517
      %3519 = vrot.lane.b32.xlu0 %v2639, 64
      %v3520 = vpop.permute.xlu0 %3519
      %3521 = vrot.lane.b32.xlu0 %v2641, 64
      %v3522 = vpop.permute.xlu0 %3521
      %3523 = vrot.lane.b32.xlu0 %v1402, 64
      %v3524 = vpop.permute.xlu0 %3523
      %3525 = vrot.lane.b32.xlu0 %v1404, 64
      %v3526 = vpop.permute.xlu0 %3525
      %3527 = vrot.lane.b32.xlu0 %v1515, 64
      %v3528 = vpop.permute.xlu0 %3527
      %3529 = vrot.lane.b32.xlu0 %v1517, 64
      %v3530 = vpop.permute.xlu0 %3529
      %3531 = vrot.lane.b32.xlu0 %v1628, 64
      %v3532 = vpop.permute.xlu0 %3531
      %3533 = vrot.lane.b32.xlu0 %v1630, 64
      %v3534 = vpop.permute.xlu0 %3533
      %3535 = vrot.lane.b32.xlu0 %v1741, 64
      %v3536 = vpop.permute.xlu0 %3535
      %3537 = vrot.lane.b32.xlu0 %v1743, 64
      %v3538 = vpop.permute.xlu0 %3537
      %3539 = vrot.lane.b32.xlu0 %v1854, 64
      %v3540 = vpop.permute.xlu0 %3539
      %3541 = vrot.lane.b32.xlu0 %v1856, 64
      %v3542 = vpop.permute.xlu0 %3541
      %3543 = vrot.lane.b32.xlu0 %v1967, 64
      %v3544 = vpop.permute.xlu0 %3543
      %3545 = vrot.lane.b32.xlu0 %v1969, 64
      %v3546 = vpop.permute.xlu0 %3545
      %3547 = vrot.lane.b32.xlu0 %v2080, 64
      %v3548 = vpop.permute.xlu0 %3547
      %3549 = vrot.lane.b32.xlu0 %v2082, 64
      %v3550 = vpop.permute.xlu0 %3549
      %3551 = vrot.lane.b32.xlu0 %v2193, 64
      %v3552 = vpop.permute.xlu0 %3551
      %3553 = vrot.lane.b32.xlu0 %v2195, 64
      %v3554 = vpop.permute.xlu0 %3553
      %3555 = vrot.lane.b32.xlu0 %v2306, 64
      %v3556 = vpop.permute.xlu0 %3555
      %3557 = vrot.lane.b32.xlu0 %v2308, 64
      %v3558 = vpop.permute.xlu0 %3557
      %3559 = vrot.lane.b32.xlu0 %v2419, 64
      %v3560 = vpop.permute.xlu0 %3559
      %3561 = vrot.lane.b32.xlu0 %v2421, 64
      %v3562 = vpop.permute.xlu0 %3561
      %3563 = vrot.lane.b32.xlu0 %v2532, 64
      %v3564 = vpop.permute.xlu0 %3563
      %3565 = vrot.lane.b32.xlu0 %v2534, 64
      %v3566 = vpop.permute.xlu0 %3565
      %3567 = vrot.lane.b32.xlu0 %v2645, 64
      %v3568 = vpop.permute.xlu0 %3567
      %3569 = vrot.lane.b32.xlu0 %v2647, 64
      %v3570 = vpop.permute.xlu0 %3569
      %3571 = vrot.lane.b32.xlu0 %v1406, 64
      %v3572 = vpop.permute.xlu0 %3571
      %3573 = vrot.lane.b32.xlu0 %v1408, 64
      %v3574 = vpop.permute.xlu0 %3573
      %3575 = vrot.lane.b32.xlu0 %v1519, 64
      %v3576 = vpop.permute.xlu0 %3575
      %3577 = vrot.lane.b32.xlu0 %v1521, 64
      %v3578 = vpop.permute.xlu0 %3577
      %3579 = vrot.lane.b32.xlu0 %v1632, 64
      %v3580 = vpop.permute.xlu0 %3579
      %3581 = vrot.lane.b32.xlu0 %v1634, 64
      %v3582 = vpop.permute.xlu0 %3581
      %3583 = vrot.lane.b32.xlu0 %v1745, 64
      %v3584 = vpop.permute.xlu0 %3583
      %3585 = vrot.lane.b32.xlu0 %v1747, 64
      %v3586 = vpop.permute.xlu0 %3585
      %3587 = vrot.lane.b32.xlu0 %v1858, 64
      %v3588 = vpop.permute.xlu0 %3587
      %3589 = vrot.lane.b32.xlu0 %v1860, 64
      %v3590 = vpop.permute.xlu0 %3589
      %3591 = vrot.lane.b32.xlu0 %v1971, 64
      %v3592 = vpop.permute.xlu0 %3591
      %3593 = vrot.lane.b32.xlu0 %v1973, 64
      %v3594 = vpop.permute.xlu0 %3593
      %3595 = vrot.lane.b32.xlu0 %v2084, 64
      %v3596 = vpop.permute.xlu0 %3595
      %3597 = vrot.lane.b32.xlu0 %v2086, 64
      %v3598 = vpop.permute.xlu0 %3597
      %3599 = vrot.lane.b32.xlu0 %v2197, 64
      %v3600 = vpop.permute.xlu0 %3599
      %3601 = vrot.lane.b32.xlu0 %v2199, 64
      %v3602 = vpop.permute.xlu0 %3601
      %3603 = vrot.lane.b32.xlu0 %v2310, 64
      %v3604 = vpop.permute.xlu0 %3603
      %3605 = vrot.lane.b32.xlu0 %v2312, 64
      %v3606 = vpop.permute.xlu0 %3605
      %3607 = vrot.lane.b32.xlu0 %v2423, 64
      %v3608 = vpop.permute.xlu0 %3607
      %3609 = vrot.lane.b32.xlu0 %v2425, 64
      %v3610 = vpop.permute.xlu0 %3609
      %3611 = vrot.lane.b32.xlu0 %v2536, 64
      %v3612 = vpop.permute.xlu0 %3611
      %3613 = vrot.lane.b32.xlu0 %v2538, 64
      %v3614 = vpop.permute.xlu0 %3613
      %3615 = vrot.lane.b32.xlu0 %v2649, 64
      %v3616 = vpop.permute.xlu0 %3615
      %3617 = vrot.lane.b32.xlu0 %v2651, 64
      %v3618 = vpop.permute.xlu0 %3617
      %vm3619 = vcmask 523264
      %v3620 = vsel %vm3619, %v3428, %v3430
      %v3621 = vsel %vm3619, %v3430, %v3432
      %v3622 = vsel %vm3619, %v3432, %v3434
      %v3623 = vsel %vm3619, %v3434, %v3436
      %v3624 = vsel %vm3619, %v3436, %v3438
      %v3625 = vsel %vm3619, %v3438, %v3440
      %v3626 = vsel %vm3619, %v3440, %v3442
      %v3627 = vsel %vm3619, %v3442, %v3444
      %v3628 = vsel %vm3619, %v3444, %v3446
      %v3629 = vsel %vm3619, %v3446, %v3448
      %v3630 = vsel %vm3619, %v3448, %v3450
      %v3631 = vsel %vm3619, %v3450, %v3452
      %v3632 = vsel %vm3619, %v3452, %v3454
      %v3633 = vsel %vm3619, %v3454, %v3456
      %v3634 = vsel %vm3619, %v3456, %v3458
      %v3635 = vsel %vm3619, %v3458, %v3460
      %v3636 = vsel %vm3619, %v3460, %v3462
      %v3637 = vsel %vm3619, %v3462, %v3464
      %v3638 = vsel %vm3619, %v3464, %v3466
      %v3639 = vsel %vm3619, %v3466, %v3468
      %v3640 = vsel %vm3619, %v3468, %v3470
      %v3641 = vsel %vm3619, %v3470, %v3472
      %v3642 = vsel %vm3619, %v3472, %v3474
      %v3643 = vsel %vm3619, %v3476, %v3478
      %v3644 = vsel %vm3619, %v3478, %v3480
      %v3645 = vsel %vm3619, %v3480, %v3482
      %v3646 = vsel %vm3619, %v3482, %v3484
      %v3647 = vsel %vm3619, %v3484, %v3486
      %v3648 = vsel %vm3619, %v3486, %v3488
      %v3649 = vsel %vm3619, %v3488, %v3490
      %v3650 = vsel %vm3619, %v3490, %v3492
      %v3651 = vsel %vm3619, %v3492, %v3494
      %v3652 = vsel %vm3619, %v3494, %v3496
      %v3653 = vsel %vm3619, %v3496, %v3498
      %v3654 = vsel %vm3619, %v3498, %v3500
      %v3655 = vsel %vm3619, %v3500, %v3502
      %v3656 = vsel %vm3619, %v3502, %v3504
      %v3657 = vsel %vm3619, %v3504, %v3506
      %v3658 = vsel %vm3619, %v3506, %v3508
      %v3659 = vsel %vm3619, %v3508, %v3510
      %v3660 = vsel %vm3619, %v3510, %v3512
      %v3661 = vsel %vm3619, %v3512, %v3514
      %v3662 = vsel %vm3619, %v3514, %v3516
      %v3663 = vsel %vm3619, %v3516, %v3518
      %v3664 = vsel %vm3619, %v3518, %v3520
      %v3665 = vsel %vm3619, %v3520, %v3522
      %v3666 = vsel %vm3619, %v3524, %v3526
      %v3667 = vsel %vm3619, %v3526, %v3528
      %v3668 = vsel %vm3619, %v3528, %v3530
      %v3669 = vsel %vm3619, %v3530, %v3532
      %v3670 = vsel %vm3619, %v3532, %v3534
      %v3671 = vsel %vm3619, %v3534, %v3536
      %v3672 = vsel %vm3619, %v3536, %v3538
      %v3673 = vsel %vm3619, %v3538, %v3540
      %v3674 = vsel %vm3619, %v3540, %v3542
      %v3675 = vsel %vm3619, %v3542, %v3544
      %v3676 = vsel %vm3619, %v3544, %v3546
      %v3677 = vsel %vm3619, %v3546, %v3548
      %v3678 = vsel %vm3619, %v3548, %v3550
      %v3679 = vsel %vm3619, %v3550, %v3552
      %v3680 = vsel %vm3619, %v3552, %v3554
      %v3681 = vsel %vm3619, %v3554, %v3556
      %v3682 = vsel %vm3619, %v3556, %v3558
      %v3683 = vsel %vm3619, %v3558, %v3560
      %v3684 = vsel %vm3619, %v3560, %v3562
      %v3685 = vsel %vm3619, %v3562, %v3564
      %v3686 = vsel %vm3619, %v3564, %v3566
      %v3687 = vsel %vm3619, %v3566, %v3568
      %v3688 = vsel %vm3619, %v3568, %v3570
      %v3689 = vsel %vm3619, %v3572, %v3574
      %v3690 = vsel %vm3619, %v3574, %v3576
      %v3691 = vsel %vm3619, %v3576, %v3578
      %v3692 = vsel %vm3619, %v3578, %v3580
      %v3693 = vsel %vm3619, %v3580, %v3582
      %v3694 = vsel %vm3619, %v3582, %v3584
      %v3695 = vsel %vm3619, %v3584, %v3586
      %v3696 = vsel %vm3619, %v3586, %v3588
      %v3697 = vsel %vm3619, %v3588, %v3590
      %v3698 = vsel %vm3619, %v3590, %v3592
      %v3699 = vsel %vm3619, %v3592, %v3594
      %v3700 = vsel %vm3619, %v3594, %v3596
      %v3701 = vsel %vm3619, %v3596, %v3598
      %v3702 = vsel %vm3619, %v3598, %v3600
      %v3703 = vsel %vm3619, %v3600, %v3602
      %v3704 = vsel %vm3619, %v3602, %v3604
      %v3705 = vsel %vm3619, %v3604, %v3606
      %v3706 = vsel %vm3619, %v3606, %v3608
      %v3707 = vsel %vm3619, %v3608, %v3610
      %v3708 = vsel %vm3619, %v3610, %v3612
      %v3709 = vsel %vm3619, %v3612, %v3614
      %v3710 = vsel %vm3619, %v3614, %v3616
      %v3711 = vsel %vm3619, %v3616, %v3618
      %v3808 = vadd.f32 %v3235, %v3620
      %v3809 = vadd.f32 %v3236, %v3621
      %v3810 = vadd.f32 %v3237, %v3622
      %v3811 = vadd.f32 %v3238, %v3623
      %v3812 = vadd.f32 %v3239, %v3624
      %v3813 = vadd.f32 %v3240, %v3625
      %v3814 = vadd.f32 %v3241, %v3626
      %v3815 = vadd.f32 %v3242, %v3627
      %v3816 = vadd.f32 %v3243, %v3628
      %v3817 = vadd.f32 %v3244, %v3629
      %v3818 = vadd.f32 %v3245, %v3630
      %v3819 = vadd.f32 %v3246, %v3631
      %v3820 = vadd.f32 %v3247, %v3632
      %v3821 = vadd.f32 %v3248, %v3633
      %v3822 = vadd.f32 %v3249, %v3634
      %v3823 = vadd.f32 %v3250, %v3635
      %v3824 = vadd.f32 %v3251, %v3636
      %v3825 = vadd.f32 %v3252, %v3637
      %v3826 = vadd.f32 %v3253, %v3638
      %v3827 = vadd.f32 %v3254, %v3639
      %v3828 = vadd.f32 %v3255, %v3640
      %v3829 = vadd.f32 %v3256, %v3641
      %v3830 = vadd.f32 %v3257, %v3642
      %v3831 = vadd.f32 %v3258, %v3474
      %v3832 = vadd.f32 %v3259, %v3643
      %v3833 = vadd.f32 %v3260, %v3644
      %v3834 = vadd.f32 %v3261, %v3645
      %v3835 = vadd.f32 %v3262, %v3646
      %v3836 = vadd.f32 %v3263, %v3647
      %v3837 = vadd.f32 %v3264, %v3648
      %v3838 = vadd.f32 %v3265, %v3649
      %v3839 = vadd.f32 %v3266, %v3650
      %v3840 = vadd.f32 %v3267, %v3651
      %v3841 = vadd.f32 %v3268, %v3652
      %v3842 = vadd.f32 %v3269, %v3653
      %v3843 = vadd.f32 %v3270, %v3654
      %v3844 = vadd.f32 %v3271, %v3655
      %v3845 = vadd.f32 %v3272, %v3656
      %v3846 = vadd.f32 %v3273, %v3657
      %v3847 = vadd.f32 %v3274, %v3658
      %v3848 = vadd.f32 %v3275, %v3659
      %v3849 = vadd.f32 %v3276, %v3660
      %v3850 = vadd.f32 %v3277, %v3661
      %v3851 = vadd.f32 %v3278, %v3662
      %v3852 = vadd.f32 %v3279, %v3663
      %v3853 = vadd.f32 %v3280, %v3664
      %v3854 = vadd.f32 %v3281, %v3665
      %v3855 = vadd.f32 %v3282, %v3522
      %v3856 = vadd.f32 %v3283, %v3666
      %v3857 = vadd.f32 %v3284, %v3667
      %v3858 = vadd.f32 %v3285, %v3668
      %v3859 = vadd.f32 %v3286, %v3669
      %v3860 = vadd.f32 %v3287, %v3670
      %v3861 = vadd.f32 %v3288, %v3671
      %v3862 = vadd.f32 %v3289, %v3672
      %v3863 = vadd.f32 %v3290, %v3673
      %v3864 = vadd.f32 %v3291, %v3674
      %v3865 = vadd.f32 %v3292, %v3675
      %v3866 = vadd.f32 %v3293, %v3676
      %v3867 = vadd.f32 %v3294, %v3677
      %v3868 = vadd.f32 %v3295, %v3678
      %v3869 = vadd.f32 %v3296, %v3679
      %v3870 = vadd.f32 %v3297, %v3680
      %v3871 = vadd.f32 %v3298, %v3681
      %v3872 = vadd.f32 %v3299, %v3682
      %v3873 = vadd.f32 %v3300, %v3683
      %v3874 = vadd.f32 %v3301, %v3684
      %v3875 = vadd.f32 %v3302, %v3685
      %v3876 = vadd.f32 %v3303, %v3686
      %v3877 = vadd.f32 %v3304, %v3687
      %v3878 = vadd.f32 %v3305, %v3688
      %v3879 = vadd.f32 %v3306, %v3570
      %v3880 = vadd.f32 %v3307, %v3689
      %v3881 = vadd.f32 %v3308, %v3690
      %v3882 = vadd.f32 %v3309, %v3691
      %v3883 = vadd.f32 %v3310, %v3692
      %v3884 = vadd.f32 %v3311, %v3693
      %v3885 = vadd.f32 %v3312, %v3694
      %v3886 = vadd.f32 %v3313, %v3695
      %v3887 = vadd.f32 %v3314, %v3696
      %v3888 = vadd.f32 %v3315, %v3697
      %v3889 = vadd.f32 %v3316, %v3698
      %v3890 = vadd.f32 %v3317, %v3699
      %v3891 = vadd.f32 %v3318, %v3700
      %v3892 = vadd.f32 %v3319, %v3701
      %v3893 = vadd.f32 %v3320, %v3702
      %v3894 = vadd.f32 %v3321, %v3703
      %v3895 = vadd.f32 %v3322, %v3704
      %v3896 = vadd.f32 %v3323, %v3705
      %v3897 = vadd.f32 %v3324, %v3706
      %v3898 = vadd.f32 %v3325, %v3707
      %v3899 = vadd.f32 %v3326, %v3708
      %v3900 = vadd.f32 %v3327, %v3709
      %v3901 = vadd.f32 %v3328, %v3710
      %v3902 = vadd.f32 %v3329, %v3711
      %v3903 = vadd.f32 %v3330, %v3618
      %4004 = vrot.lane.b32.xlu0 %v1412, 63
      %v4005 = vpop.permute.xlu0 %4004
      %4006 = vrot.lane.b32.xlu0 %v1414, 63
      %v4007 = vpop.permute.xlu0 %4006
      %4008 = vrot.lane.b32.xlu0 %v1525, 63
      %v4009 = vpop.permute.xlu0 %4008
      %4010 = vrot.lane.b32.xlu0 %v1527, 63
      %v4011 = vpop.permute.xlu0 %4010
      %4012 = vrot.lane.b32.xlu0 %v1638, 63
      %v4013 = vpop.permute.xlu0 %4012
      %4014 = vrot.lane.b32.xlu0 %v1640, 63
      %v4015 = vpop.permute.xlu0 %4014
      %4016 = vrot.lane.b32.xlu0 %v1751, 63
      %v4017 = vpop.permute.xlu0 %4016
      %4018 = vrot.lane.b32.xlu0 %v1753, 63
      %v4019 = vpop.permute.xlu0 %4018
      %4020 = vrot.lane.b32.xlu0 %v1864, 63
      %v4021 = vpop.permute.xlu0 %4020
      %4022 = vrot.lane.b32.xlu0 %v1866, 63
      %v4023 = vpop.permute.xlu0 %4022
      %4024 = vrot.lane.b32.xlu0 %v1977, 63
      %v4025 = vpop.permute.xlu0 %4024
      %4026 = vrot.lane.b32.xlu0 %v1979, 63
      %v4027 = vpop.permute.xlu0 %4026
      %4028 = vrot.lane.b32.xlu0 %v2090, 63
      %v4029 = vpop.permute.xlu0 %4028
      %4030 = vrot.lane.b32.xlu0 %v2092, 63
      %v4031 = vpop.permute.xlu0 %4030
      %4032 = vrot.lane.b32.xlu0 %v2203, 63
      %v4033 = vpop.permute.xlu0 %4032
      %4034 = vrot.lane.b32.xlu0 %v2205, 63
      %v4035 = vpop.permute.xlu0 %4034
      %4036 = vrot.lane.b32.xlu0 %v2316, 63
      %v4037 = vpop.permute.xlu0 %4036
      %4038 = vrot.lane.b32.xlu0 %v2318, 63
      %v4039 = vpop.permute.xlu0 %4038
      %4040 = vrot.lane.b32.xlu0 %v2429, 63
      %v4041 = vpop.permute.xlu0 %4040
      %4042 = vrot.lane.b32.xlu0 %v2431, 63
      %v4043 = vpop.permute.xlu0 %4042
      %4044 = vrot.lane.b32.xlu0 %v2542, 63
      %v4045 = vpop.permute.xlu0 %4044
      %4046 = vrot.lane.b32.xlu0 %v2544, 63
      %v4047 = vpop.permute.xlu0 %4046
      %4048 = vrot.lane.b32.xlu0 %v2655, 63
      %v4049 = vpop.permute.xlu0 %4048
      %4050 = vrot.lane.b32.xlu0 %v2657, 63
      %v4051 = vpop.permute.xlu0 %4050
      %4052 = vrot.lane.b32.xlu0 %v2744, 63
      %v4053 = vpop.permute.xlu0 %4052
      %4054 = vrot.lane.b32.xlu0 %v1416, 63
      %v4055 = vpop.permute.xlu0 %4054
      %4056 = vrot.lane.b32.xlu0 %v1418, 63
      %v4057 = vpop.permute.xlu0 %4056
      %4058 = vrot.lane.b32.xlu0 %v1529, 63
      %v4059 = vpop.permute.xlu0 %4058
      %4060 = vrot.lane.b32.xlu0 %v1531, 63
      %v4061 = vpop.permute.xlu0 %4060
      %4062 = vrot.lane.b32.xlu0 %v1642, 63
      %v4063 = vpop.permute.xlu0 %4062
      %4064 = vrot.lane.b32.xlu0 %v1644, 63
      %v4065 = vpop.permute.xlu0 %4064
      %4066 = vrot.lane.b32.xlu0 %v1755, 63
      %v4067 = vpop.permute.xlu0 %4066
      %4068 = vrot.lane.b32.xlu0 %v1757, 63
      %v4069 = vpop.permute.xlu0 %4068
      %4070 = vrot.lane.b32.xlu0 %v1868, 63
      %v4071 = vpop.permute.xlu0 %4070
      %4072 = vrot.lane.b32.xlu0 %v1870, 63
      %v4073 = vpop.permute.xlu0 %4072
      %4074 = vrot.lane.b32.xlu0 %v1981, 63
      %v4075 = vpop.permute.xlu0 %4074
      %4076 = vrot.lane.b32.xlu0 %v1983, 63
      %v4077 = vpop.permute.xlu0 %4076
      %4078 = vrot.lane.b32.xlu0 %v2094, 63
      %v4079 = vpop.permute.xlu0 %4078
      %4080 = vrot.lane.b32.xlu0 %v2096, 63
      %v4081 = vpop.permute.xlu0 %4080
      %4082 = vrot.lane.b32.xlu0 %v2207, 63
      %v4083 = vpop.permute.xlu0 %4082
      %4084 = vrot.lane.b32.xlu0 %v2209, 63
      %v4085 = vpop.permute.xlu0 %4084
      %4086 = vrot.lane.b32.xlu0 %v2320, 63
      %v4087 = vpop.permute.xlu0 %4086
      %4088 = vrot.lane.b32.xlu0 %v2322, 63
      %v4089 = vpop.permute.xlu0 %4088
      %4090 = vrot.lane.b32.xlu0 %v2433, 63
      %v4091 = vpop.permute.xlu0 %4090
      %4092 = vrot.lane.b32.xlu0 %v2435, 63
      %v4093 = vpop.permute.xlu0 %4092
      %4094 = vrot.lane.b32.xlu0 %v2546, 63
      %v4095 = vpop.permute.xlu0 %4094
      %4096 = vrot.lane.b32.xlu0 %v2548, 63
      %v4097 = vpop.permute.xlu0 %4096
      %4098 = vrot.lane.b32.xlu0 %v2659, 63
      %v4099 = vpop.permute.xlu0 %4098
      %4100 = vrot.lane.b32.xlu0 %v2661, 63
      %v4101 = vpop.permute.xlu0 %4100
      %4102 = vrot.lane.b32.xlu0 %v2747, 63
      %v4103 = vpop.permute.xlu0 %4102
      %4104 = vrot.lane.b32.xlu0 %v1422, 63
      %v4105 = vpop.permute.xlu0 %4104
      %4106 = vrot.lane.b32.xlu0 %v1424, 63
      %v4107 = vpop.permute.xlu0 %4106
      %4108 = vrot.lane.b32.xlu0 %v1535, 63
      %v4109 = vpop.permute.xlu0 %4108
      %4110 = vrot.lane.b32.xlu0 %v1537, 63
      %v4111 = vpop.permute.xlu0 %4110
      %4112 = vrot.lane.b32.xlu0 %v1648, 63
      %v4113 = vpop.permute.xlu0 %4112
      %4114 = vrot.lane.b32.xlu0 %v1650, 63
      %v4115 = vpop.permute.xlu0 %4114
      %4116 = vrot.lane.b32.xlu0 %v1761, 63
      %v4117 = vpop.permute.xlu0 %4116
      %4118 = vrot.lane.b32.xlu0 %v1763, 63
      %v4119 = vpop.permute.xlu0 %4118
      %4120 = vrot.lane.b32.xlu0 %v1874, 63
      %v4121 = vpop.permute.xlu0 %4120
      %4122 = vrot.lane.b32.xlu0 %v1876, 63
      %v4123 = vpop.permute.xlu0 %4122
      %4124 = vrot.lane.b32.xlu0 %v1987, 63
      %v4125 = vpop.permute.xlu0 %4124
      %4126 = vrot.lane.b32.xlu0 %v1989, 63
      %v4127 = vpop.permute.xlu0 %4126
      %4128 = vrot.lane.b32.xlu0 %v2100, 63
      %v4129 = vpop.permute.xlu0 %4128
      %4130 = vrot.lane.b32.xlu0 %v2102, 63
      %v4131 = vpop.permute.xlu0 %4130
      %4132 = vrot.lane.b32.xlu0 %v2213, 63
      %v4133 = vpop.permute.xlu0 %4132
      %4134 = vrot.lane.b32.xlu0 %v2215, 63
      %v4135 = vpop.permute.xlu0 %4134
      %4136 = vrot.lane.b32.xlu0 %v2326, 63
      %v4137 = vpop.permute.xlu0 %4136
      %4138 = vrot.lane.b32.xlu0 %v2328, 63
      %v4139 = vpop.permute.xlu0 %4138
      %4140 = vrot.lane.b32.xlu0 %v2439, 63
      %v4141 = vpop.permute.xlu0 %4140
      %4142 = vrot.lane.b32.xlu0 %v2441, 63
      %v4143 = vpop.permute.xlu0 %4142
      %4144 = vrot.lane.b32.xlu0 %v2552, 63
      %v4145 = vpop.permute.xlu0 %4144
      %4146 = vrot.lane.b32.xlu0 %v2554, 63
      %v4147 = vpop.permute.xlu0 %4146
      %4148 = vrot.lane.b32.xlu0 %v2665, 63
      %v4149 = vpop.permute.xlu0 %4148
      %4150 = vrot.lane.b32.xlu0 %v2667, 63
      %v4151 = vpop.permute.xlu0 %4150
      %4152 = vrot.lane.b32.xlu0 %v2752, 63
      %v4153 = vpop.permute.xlu0 %4152
      %4154 = vrot.lane.b32.xlu0 %v1426, 63
      %v4155 = vpop.permute.xlu0 %4154
      %4156 = vrot.lane.b32.xlu0 %v1428, 63
      %v4157 = vpop.permute.xlu0 %4156
      %4158 = vrot.lane.b32.xlu0 %v1539, 63
      %v4159 = vpop.permute.xlu0 %4158
      %4160 = vrot.lane.b32.xlu0 %v1541, 63
      %v4161 = vpop.permute.xlu0 %4160
      %4162 = vrot.lane.b32.xlu0 %v1652, 63
      %v4163 = vpop.permute.xlu0 %4162
      %4164 = vrot.lane.b32.xlu0 %v1654, 63
      %v4165 = vpop.permute.xlu0 %4164
      %4166 = vrot.lane.b32.xlu0 %v1765, 63
      %v4167 = vpop.permute.xlu0 %4166
      %4168 = vrot.lane.b32.xlu0 %v1767, 63
      %v4169 = vpop.permute.xlu0 %4168
      %4170 = vrot.lane.b32.xlu0 %v1878, 63
      %v4171 = vpop.permute.xlu0 %4170
      %4172 = vrot.lane.b32.xlu0 %v1880, 63
      %v4173 = vpop.permute.xlu0 %4172
      %4174 = vrot.lane.b32.xlu0 %v1991, 63
      %v4175 = vpop.permute.xlu0 %4174
      %4176 = vrot.lane.b32.xlu0 %v1993, 63
      %v4177 = vpop.permute.xlu0 %4176
      %4178 = vrot.lane.b32.xlu0 %v2104, 63
      %v4179 = vpop.permute.xlu0 %4178
      %4180 = vrot.lane.b32.xlu0 %v2106, 63
      %v4181 = vpop.permute.xlu0 %4180
      %4182 = vrot.lane.b32.xlu0 %v2217, 63
      %v4183 = vpop.permute.xlu0 %4182
      %4184 = vrot.lane.b32.xlu0 %v2219, 63
      %v4185 = vpop.permute.xlu0 %4184
      %4186 = vrot.lane.b32.xlu0 %v2330, 63
      %v4187 = vpop.permute.xlu0 %4186
      %4188 = vrot.lane.b32.xlu0 %v2332, 63
      %v4189 = vpop.permute.xlu0 %4188
      %4190 = vrot.lane.b32.xlu0 %v2443, 63
      %v4191 = vpop.permute.xlu0 %4190
      %4192 = vrot.lane.b32.xlu0 %v2445, 63
      %v4193 = vpop.permute.xlu0 %4192
      %4194 = vrot.lane.b32.xlu0 %v2556, 63
      %v4195 = vpop.permute.xlu0 %4194
      %4196 = vrot.lane.b32.xlu0 %v2558, 63
      %v4197 = vpop.permute.xlu0 %4196
      %4198 = vrot.lane.b32.xlu0 %v2669, 63
      %v4199 = vpop.permute.xlu0 %4198
      %4200 = vrot.lane.b32.xlu0 %v2671, 63
      %v4201 = vpop.permute.xlu0 %4200
      %4202 = vrot.lane.b32.xlu0 %v2755, 63
      %v4203 = vpop.permute.xlu0 %4202
      %vm4204 = vcmask 515072
      %v4205 = vsel %vm4204, %v4005, %v4007
      %v4206 = vsel %vm4204, %v4007, %v4009
      %v4207 = vsel %vm4204, %v4009, %v4011
      %v4208 = vsel %vm4204, %v4011, %v4013
      %v4209 = vsel %vm4204, %v4013, %v4015
      %v4210 = vsel %vm4204, %v4015, %v4017
      %v4211 = vsel %vm4204, %v4017, %v4019
      %v4212 = vsel %vm4204, %v4019, %v4021
      %v4213 = vsel %vm4204, %v4021, %v4023
      %v4214 = vsel %vm4204, %v4023, %v4025
      %v4215 = vsel %vm4204, %v4025, %v4027
      %v4216 = vsel %vm4204, %v4027, %v4029
      %v4217 = vsel %vm4204, %v4029, %v4031
      %v4218 = vsel %vm4204, %v4031, %v4033
      %v4219 = vsel %vm4204, %v4033, %v4035
      %v4220 = vsel %vm4204, %v4035, %v4037
      %v4221 = vsel %vm4204, %v4037, %v4039
      %v4222 = vsel %vm4204, %v4039, %v4041
      %v4223 = vsel %vm4204, %v4041, %v4043
      %v4224 = vsel %vm4204, %v4043, %v4045
      %v4225 = vsel %vm4204, %v4045, %v4047
      %v4226 = vsel %vm4204, %v4047, %v4049
      %v4227 = vsel %vm4204, %v4049, %v4051
      %v4228 = vsel %vm4204, %v4051, %v4053
      %v4229 = vsel %vm4204, %v4055, %v4057
      %v4230 = vsel %vm4204, %v4057, %v4059
      %v4231 = vsel %vm4204, %v4059, %v4061
      %v4232 = vsel %vm4204, %v4061, %v4063
      %v4233 = vsel %vm4204, %v4063, %v4065
      %v4234 = vsel %vm4204, %v4065, %v4067
      %v4235 = vsel %vm4204, %v4067, %v4069
      %v4236 = vsel %vm4204, %v4069, %v4071
      %v4237 = vsel %vm4204, %v4071, %v4073
      %v4238 = vsel %vm4204, %v4073, %v4075
      %v4239 = vsel %vm4204, %v4075, %v4077
      %v4240 = vsel %vm4204, %v4077, %v4079
      %v4241 = vsel %vm4204, %v4079, %v4081
      %v4242 = vsel %vm4204, %v4081, %v4083
      %v4243 = vsel %vm4204, %v4083, %v4085
      %v4244 = vsel %vm4204, %v4085, %v4087
      %v4245 = vsel %vm4204, %v4087, %v4089
      %v4246 = vsel %vm4204, %v4089, %v4091
      %v4247 = vsel %vm4204, %v4091, %v4093
      %v4248 = vsel %vm4204, %v4093, %v4095
      %v4249 = vsel %vm4204, %v4095, %v4097
      %v4250 = vsel %vm4204, %v4097, %v4099
      %v4251 = vsel %vm4204, %v4099, %v4101
      %v4252 = vsel %vm4204, %v4101, %v4103
      %v4253 = vsel %vm4204, %v4105, %v4107
      %v4254 = vsel %vm4204, %v4107, %v4109
      %v4255 = vsel %vm4204, %v4109, %v4111
      %v4256 = vsel %vm4204, %v4111, %v4113
      %v4257 = vsel %vm4204, %v4113, %v4115
      %v4258 = vsel %vm4204, %v4115, %v4117
      %v4259 = vsel %vm4204, %v4117, %v4119
      %v4260 = vsel %vm4204, %v4119, %v4121
      %v4261 = vsel %vm4204, %v4121, %v4123
      %v4262 = vsel %vm4204, %v4123, %v4125
      %v4263 = vsel %vm4204, %v4125, %v4127
      %v4264 = vsel %vm4204, %v4127, %v4129
      %v4265 = vsel %vm4204, %v4129, %v4131
      %v4266 = vsel %vm4204, %v4131, %v4133
      %v4267 = vsel %vm4204, %v4133, %v4135
      %v4268 = vsel %vm4204, %v4135, %v4137
      %v4269 = vsel %vm4204, %v4137, %v4139
      %v4270 = vsel %vm4204, %v4139, %v4141
      %v4271 = vsel %vm4204, %v4141, %v4143
      %v4272 = vsel %vm4204, %v4143, %v4145
      %v4273 = vsel %vm4204, %v4145, %v4147
      %v4274 = vsel %vm4204, %v4147, %v4149
      %v4275 = vsel %vm4204, %v4149, %v4151
      %v4276 = vsel %vm4204, %v4151, %v4153
      %v4277 = vsel %vm4204, %v4155, %v4157
      %v4278 = vsel %vm4204, %v4157, %v4159
      %v4279 = vsel %vm4204, %v4159, %v4161
      %v4280 = vsel %vm4204, %v4161, %v4163
      %v4281 = vsel %vm4204, %v4163, %v4165
      %v4282 = vsel %vm4204, %v4165, %v4167
      %v4283 = vsel %vm4204, %v4167, %v4169
      %v4284 = vsel %vm4204, %v4169, %v4171
      %v4285 = vsel %vm4204, %v4171, %v4173
      %v4286 = vsel %vm4204, %v4173, %v4175
      %v4287 = vsel %vm4204, %v4175, %v4177
      %v4288 = vsel %vm4204, %v4177, %v4179
      %v4289 = vsel %vm4204, %v4179, %v4181
      %v4290 = vsel %vm4204, %v4181, %v4183
      %v4291 = vsel %vm4204, %v4183, %v4185
      %v4292 = vsel %vm4204, %v4185, %v4187
      %v4293 = vsel %vm4204, %v4187, %v4189
      %v4294 = vsel %vm4204, %v4189, %v4191
      %v4295 = vsel %vm4204, %v4191, %v4193
      %v4296 = vsel %vm4204, %v4193, %v4195
      %v4297 = vsel %vm4204, %v4195, %v4197
      %v4298 = vsel %vm4204, %v4197, %v4199
      %v4299 = vsel %vm4204, %v4199, %v4201
      %v4300 = vsel %vm4204, %v4201, %v4203
      %v4397 = vadd.f32 %v3808, %v4205
      %v4398 = vadd.f32 %v3809, %v4206
      %v4399 = vadd.f32 %v3810, %v4207
      %v4400 = vadd.f32 %v3811, %v4208
      %v4401 = vadd.f32 %v3812, %v4209
      %v4402 = vadd.f32 %v3813, %v4210
      %v4403 = vadd.f32 %v3814, %v4211
      %v4404 = vadd.f32 %v3815, %v4212
      %v4405 = vadd.f32 %v3816, %v4213
      %v4406 = vadd.f32 %v3817, %v4214
      %v4407 = vadd.f32 %v3818, %v4215
      %v4408 = vadd.f32 %v3819, %v4216
      %v4409 = vadd.f32 %v3820, %v4217
      %v4410 = vadd.f32 %v3821, %v4218
      %v4411 = vadd.f32 %v3822, %v4219
      %v4412 = vadd.f32 %v3823, %v4220
      %v4413 = vadd.f32 %v3824, %v4221
      %v4414 = vadd.f32 %v3825, %v4222
      %v4415 = vadd.f32 %v3826, %v4223
      %v4416 = vadd.f32 %v3827, %v4224
      %v4417 = vadd.f32 %v3828, %v4225
      %v4418 = vadd.f32 %v3829, %v4226
      %v4419 = vadd.f32 %v3830, %v4227
      %v4420 = vadd.f32 %v3831, %v4228
      %v4421 = vadd.f32 %v3832, %v4229
      %v4422 = vadd.f32 %v3833, %v4230
      %v4423 = vadd.f32 %v3834, %v4231
      %v4424 = vadd.f32 %v3835, %v4232
      %v4425 = vadd.f32 %v3836, %v4233
      %v4426 = vadd.f32 %v3837, %v4234
      %v4427 = vadd.f32 %v3838, %v4235
      %v4428 = vadd.f32 %v3839, %v4236
      %v4429 = vadd.f32 %v3840, %v4237
      %v4430 = vadd.f32 %v3841, %v4238
      %v4431 = vadd.f32 %v3842, %v4239
      %v4432 = vadd.f32 %v3843, %v4240
      %v4433 = vadd.f32 %v3844, %v4241
      %v4434 = vadd.f32 %v3845, %v4242
      %v4435 = vadd.f32 %v3846, %v4243
      %v4436 = vadd.f32 %v3847, %v4244
      %v4437 = vadd.f32 %v3848, %v4245
      %v4438 = vadd.f32 %v3849, %v4246
      %v4439 = vadd.f32 %v3850, %v4247
      %v4440 = vadd.f32 %v3851, %v4248
      %v4441 = vadd.f32 %v3852, %v4249
      %v4442 = vadd.f32 %v3853, %v4250
      %v4443 = vadd.f32 %v3854, %v4251
      %v4444 = vadd.f32 %v3855, %v4252
      %v4445 = vadd.f32 %v3856, %v4253
      %v4446 = vadd.f32 %v3857, %v4254
      %v4447 = vadd.f32 %v3858, %v4255
      %v4448 = vadd.f32 %v3859, %v4256
      %v4449 = vadd.f32 %v3860, %v4257
      %v4450 = vadd.f32 %v3861, %v4258
      %v4451 = vadd.f32 %v3862, %v4259
      %v4452 = vadd.f32 %v3863, %v4260
      %v4453 = vadd.f32 %v3864, %v4261
      %v4454 = vadd.f32 %v3865, %v4262
      %v4455 = vadd.f32 %v3866, %v4263
      %v4456 = vadd.f32 %v3867, %v4264
      %v4457 = vadd.f32 %v3868, %v4265
      %v4458 = vadd.f32 %v3869, %v4266
      %v4459 = vadd.f32 %v3870, %v4267
      %v4460 = vadd.f32 %v3871, %v4268
      %v4461 = vadd.f32 %v3872, %v4269
      %v4462 = vadd.f32 %v3873, %v4270
      %v4463 = vadd.f32 %v3874, %v4271
      %v4464 = vadd.f32 %v3875, %v4272
      %v4465 = vadd.f32 %v3876, %v4273
      %v4466 = vadd.f32 %v3877, %v4274
      %v4467 = vadd.f32 %v3878, %v4275
      %v4468 = vadd.f32 %v3879, %v4276
      %v4469 = vadd.f32 %v3880, %v4277
      %v4470 = vadd.f32 %v3881, %v4278
      %v4471 = vadd.f32 %v3882, %v4279
      %v4472 = vadd.f32 %v3883, %v4280
      %v4473 = vadd.f32 %v3884, %v4281
      %v4474 = vadd.f32 %v3885, %v4282
      %v4475 = vadd.f32 %v3886, %v4283
      %v4476 = vadd.f32 %v3887, %v4284
      %v4477 = vadd.f32 %v3888, %v4285
      %v4478 = vadd.f32 %v3889, %v4286
      %v4479 = vadd.f32 %v3890, %v4287
      %v4480 = vadd.f32 %v3891, %v4288
      %v4481 = vadd.f32 %v3892, %v4289
      %v4482 = vadd.f32 %v3893, %v4290
      %v4483 = vadd.f32 %v3894, %v4291
      %v4484 = vadd.f32 %v3895, %v4292
      %v4485 = vadd.f32 %v3896, %v4293
      %v4486 = vadd.f32 %v3897, %v4294
      %v4487 = vadd.f32 %v3898, %v4295
      %v4488 = vadd.f32 %v3899, %v4296
      %v4489 = vadd.f32 %v3900, %v4297
      %v4490 = vadd.f32 %v3901, %v4298
      %v4491 = vadd.f32 %v3902, %v4299
      %v4492 = vadd.f32 %v3903, %v4300
      %v4493 = vld [vmem:[%s2] sm:$0xff]
      %v4494 = vld [vmem:[%s2 + $0x8] sm:$0xff]
      %v4495 = vld [vmem:[%s2 + $0x10] sm:$0xff]
      %v4496 = vld [vmem:[%s2 + $0x18] sm:$0xff]
      %4498 = vset.pattern.permute.xlu0 0
      %4499 = vperm.xlu0 %4498, %v4493
      %v4500 = vpop.permute.xlu0 %4499
      %4503 = vset.pattern.permute.xlu0 0
      %4504 = vperm.xlu0 %4503, %v4494
      %v4505 = vpop.permute.xlu0 %4504
      %4508 = vset.pattern.permute.xlu0 0
      %4509 = vperm.xlu0 %4508, %v4495
      %v4510 = vpop.permute.xlu0 %4509
      %4513 = vset.pattern.permute.xlu0 0
      %4514 = vperm.xlu0 %4513, %v4496
      %v4515 = vpop.permute.xlu0 %4514
      %v4517 = vadd.f32 %v4397, %v4500
      %v4518 = vadd.f32 %v4398, %v4500
      %v4519 = vadd.f32 %v4399, %v4500
      %v4520 = vadd.f32 %v4400, %v4500
      %v4521 = vadd.f32 %v4401, %v4500
      %v4522 = vadd.f32 %v4402, %v4500
      %v4523 = vadd.f32 %v4403, %v4500
      %v4524 = vadd.f32 %v4404, %v4500
      %v4525 = vadd.f32 %v4405, %v4500
      %v4526 = vadd.f32 %v4406, %v4500
      %v4527 = vadd.f32 %v4407, %v4500
      %v4528 = vadd.f32 %v4408, %v4500
      %v4529 = vadd.f32 %v4409, %v4500
      %v4530 = vadd.f32 %v4410, %v4500
      %v4531 = vadd.f32 %v4411, %v4500
      %v4532 = vadd.f32 %v4412, %v4500
      %v4533 = vadd.f32 %v4413, %v4500
      %v4534 = vadd.f32 %v4414, %v4500
      %v4535 = vadd.f32 %v4415, %v4500
      %v4536 = vadd.f32 %v4416, %v4500
      %v4537 = vadd.f32 %v4417, %v4500
      %v4538 = vadd.f32 %v4418, %v4500
      %v4539 = vadd.f32 %v4419, %v4500
      %v4540 = vadd.f32 %v4420, %v4500
      %v4541 = vadd.f32 %v4421, %v4505
      %v4542 = vadd.f32 %v4422, %v4505
      %v4543 = vadd.f32 %v4423, %v4505
      %v4544 = vadd.f32 %v4424, %v4505
      %v4545 = vadd.f32 %v4425, %v4505
      %v4546 = vadd.f32 %v4426, %v4505
      %v4547 = vadd.f32 %v4427, %v4505
      %v4548 = vadd.f32 %v4428, %v4505
      %v4549 = vadd.f32 %v4429, %v4505
      %v4550 = vadd.f32 %v4430, %v4505
      %v4551 = vadd.f32 %v4431, %v4505
      %v4552 = vadd.f32 %v4432, %v4505
      %v4553 = vadd.f32 %v4433, %v4505
      %v4554 = vadd.f32 %v4434, %v4505
      %v4555 = vadd.f32 %v4435, %v4505
      %v4556 = vadd.f32 %v4436, %v4505
      %v4557 = vadd.f32 %v4437, %v4505
      %v4558 = vadd.f32 %v4438, %v4505
      %v4559 = vadd.f32 %v4439, %v4505
      %v4560 = vadd.f32 %v4440, %v4505
      %v4561 = vadd.f32 %v4441, %v4505
      %v4562 = vadd.f32 %v4442, %v4505
      %v4563 = vadd.f32 %v4443, %v4505
      %v4564 = vadd.f32 %v4444, %v4505
      %v4565 = vadd.f32 %v4445, %v4510
      %v4566 = vadd.f32 %v4446, %v4510
      %v4567 = vadd.f32 %v4447, %v4510
      %v4568 = vadd.f32 %v4448, %v4510
      %v4569 = vadd.f32 %v4449, %v4510
      %v4570 = vadd.f32 %v4450, %v4510
      %v4571 = vadd.f32 %v4451, %v4510
      %v4572 = vadd.f32 %v4452, %v4510
      %v4573 = vadd.f32 %v4453, %v4510
      %v4574 = vadd.f32 %v4454, %v4510
      %v4575 = vadd.f32 %v4455, %v4510
      %v4576 = vadd.f32 %v4456, %v4510
      %v4577 = vadd.f32 %v4457, %v4510
      %v4578 = vadd.f32 %v4458, %v4510
      %v4579 = vadd.f32 %v4459, %v4510
      %v4580 = vadd.f32 %v4460, %v4510
      %v4581 = vadd.f32 %v4461, %v4510
      %v4582 = vadd.f32 %v4462, %v4510
      %v4583 = vadd.f32 %v4463, %v4510
      %v4584 = vadd.f32 %v4464, %v4510
      %v4585 = vadd.f32 %v4465, %v4510
      %v4586 = vadd.f32 %v4466, %v4510
      %v4587 = vadd.f32 %v4467, %v4510
      %v4588 = vadd.f32 %v4468, %v4510
      %v4589 = vadd.f32 %v4469, %v4515
      %v4590 = vadd.f32 %v4470, %v4515
      %v4591 = vadd.f32 %v4471, %v4515
      %v4592 = vadd.f32 %v4472, %v4515
      %v4593 = vadd.f32 %v4473, %v4515
      %v4594 = vadd.f32 %v4474, %v4515
      %v4595 = vadd.f32 %v4475, %v4515
      %v4596 = vadd.f32 %v4476, %v4515
      %v4597 = vadd.f32 %v4477, %v4515
      %v4598 = vadd.f32 %v4478, %v4515
      %v4599 = vadd.f32 %v4479, %v4515
      %v4600 = vadd.f32 %v4480, %v4515
      %v4601 = vadd.f32 %v4481, %v4515
      %v4602 = vadd.f32 %v4482, %v4515
      %v4603 = vadd.f32 %v4483, %v4515
      %v4604 = vadd.f32 %v4484, %v4515
      %v4605 = vadd.f32 %v4485, %v4515
      %v4606 = vadd.f32 %v4486, %v4515
      %v4607 = vadd.f32 %v4487, %v4515
      %v4608 = vadd.f32 %v4488, %v4515
      %v4609 = vadd.f32 %v4489, %v4515
      %v4610 = vadd.f32 %v4490, %v4515
      %v4611 = vadd.f32 %v4491, %v4515
      %v4612 = vadd.f32 %v4492, %v4515
      %vm4613 = vcmp.gt.f32.partialorder %v4517, 0.0
      %vm4614 = vcmp.gt.f32.partialorder %v4518, 0.0
      %vm4615 = vcmp.gt.f32.partialorder %v4519, 0.0
      %vm4616 = vcmp.gt.f32.partialorder %v4520, 0.0
      %vm4617 = vcmp.gt.f32.partialorder %v4521, 0.0
      %vm4618 = vcmp.gt.f32.partialorder %v4522, 0.0
      %vm4619 = vcmp.gt.f32.partialorder %v4523, 0.0
      %vm4620 = vcmp.gt.f32.partialorder %v4524, 0.0
      %vm4621 = vcmp.gt.f32.partialorder %v4525, 0.0
      %vm4622 = vcmp.gt.f32.partialorder %v4526, 0.0
      %vm4623 = vcmp.gt.f32.partialorder %v4527, 0.0
      %vm4624 = vcmp.gt.f32.partialorder %v4528, 0.0
      %vm4625 = vcmp.gt.f32.partialorder %v4529, 0.0
      %vm4626 = vcmp.gt.f32.partialorder %v4530, 0.0
      %vm4627 = vcmp.gt.f32.partialorder %v4531, 0.0
      %vm4628 = vcmp.gt.f32.partialorder %v4532, 0.0
      %vm4629 = vcmp.gt.f32.partialorder %v4533, 0.0
      %vm4630 = vcmp.gt.f32.partialorder %v4534, 0.0
      %vm4631 = vcmp.gt.f32.partialorder %v4535, 0.0
      %vm4632 = vcmp.gt.f32.partialorder %v4536, 0.0
      %vm4633 = vcmp.gt.f32.partialorder %v4537, 0.0
      %vm4634 = vcmp.gt.f32.partialorder %v4538, 0.0
      %vm4635 = vcmp.gt.f32.partialorder %v4539, 0.0
      %vm4636 = vcmp.gt.f32.partialorder %v4540, 0.0
      %vm4637 = vcmp.gt.f32.partialorder %v4541, 0.0
      %vm4638 = vcmp.gt.f32.partialorder %v4542, 0.0
      %vm4639 = vcmp.gt.f32.partialorder %v4543, 0.0
      %vm4640 = vcmp.gt.f32.partialorder %v4544, 0.0
      %vm4641 = vcmp.gt.f32.partialorder %v4545, 0.0
      %vm4642 = vcmp.gt.f32.partialorder %v4546, 0.0
      %vm4643 = vcmp.gt.f32.partialorder %v4547, 0.0
      %vm4644 = vcmp.gt.f32.partialorder %v4548, 0.0
      %vm4645 = vcmp.gt.f32.partialorder %v4549, 0.0
      %vm4646 = vcmp.gt.f32.partialorder %v4550, 0.0
      %vm4647 = vcmp.gt.f32.partialorder %v4551, 0.0
      %vm4648 = vcmp.gt.f32.partialorder %v4552, 0.0
      %vm4649 = vcmp.gt.f32.partialorder %v4553, 0.0
      %vm4650 = vcmp.gt.f32.partialorder %v4554, 0.0
      %vm4651 = vcmp.gt.f32.partialorder %v4555, 0.0
      %vm4652 = vcmp.gt.f32.partialorder %v4556, 0.0
      %vm4653 = vcmp.gt.f32.partialorder %v4557, 0.0
      %vm4654 = vcmp.gt.f32.partialorder %v4558, 0.0
      %vm4655 = vcmp.gt.f32.partialorder %v4559, 0.0
      %vm4656 = vcmp.gt.f32.partialorder %v4560, 0.0
      %vm4657 = vcmp.gt.f32.partialorder %v4561, 0.0
      %vm4658 = vcmp.gt.f32.partialorder %v4562, 0.0
      %vm4659 = vcmp.gt.f32.partialorder %v4563, 0.0
      %vm4660 = vcmp.gt.f32.partialorder %v4564, 0.0
      %vm4661 = vcmp.gt.f32.partialorder %v4565, 0.0
      %vm4662 = vcmp.gt.f32.partialorder %v4566, 0.0
      %vm4663 = vcmp.gt.f32.partialorder %v4567, 0.0
      %vm4664 = vcmp.gt.f32.partialorder %v4568, 0.0
      %vm4665 = vcmp.gt.f32.partialorder %v4569, 0.0
      %vm4666 = vcmp.gt.f32.partialorder %v4570, 0.0
      %vm4667 = vcmp.gt.f32.partialorder %v4571, 0.0
      %vm4668 = vcmp.gt.f32.partialorder %v4572, 0.0
      %vm4669 = vcmp.gt.f32.partialorder %v4573, 0.0
      %vm4670 = vcmp.gt.f32.partialorder %v4574, 0.0
      %vm4671 = vcmp.gt.f32.partialorder %v4575, 0.0
      %vm4672 = vcmp.gt.f32.partialorder %v4576, 0.0
      %vm4673 = vcmp.gt.f32.partialorder %v4577, 0.0
      %vm4674 = vcmp.gt.f32.partialorder %v4578, 0.0
      %vm4675 = vcmp.gt.f32.partialorder %v4579, 0.0
      %vm4676 = vcmp.gt.f32.partialorder %v4580, 0.0
      %vm4677 = vcmp.gt.f32.partialorder %v4581, 0.0
      %vm4678 = vcmp.gt.f32.partialorder %v4582, 0.0
      %vm4679 = vcmp.gt.f32.partialorder %v4583, 0.0
      %vm4680 = vcmp.gt.f32.partialorder %v4584, 0.0
      %vm4681 = vcmp.gt.f32.partialorder %v4585, 0.0
      %vm4682 = vcmp.gt.f32.partialorder %v4586, 0.0
      %vm4683 = vcmp.gt.f32.partialorder %v4587, 0.0
      %vm4684 = vcmp.gt.f32.partialorder %v4588, 0.0
      %vm4685 = vcmp.gt.f32.partialorder %v4589, 0.0
      %vm4686 = vcmp.gt.f32.partialorder %v4590, 0.0
      %vm4687 = vcmp.gt.f32.partialorder %v4591, 0.0
      %vm4688 = vcmp.gt.f32.partialorder %v4592, 0.0
      %vm4689 = vcmp.gt.f32.partialorder %v4593, 0.0
      %vm4690 = vcmp.gt.f32.partialorder %v4594, 0.0
      %vm4691 = vcmp.gt.f32.partialorder %v4595, 0.0
      %vm4692 = vcmp.gt.f32.partialorder %v4596, 0.0
      %vm4693 = vcmp.gt.f32.partialorder %v4597, 0.0
      %vm4694 = vcmp.gt.f32.partialorder %v4598, 0.0
      %vm4695 = vcmp.gt.f32.partialorder %v4599, 0.0
      %vm4696 = vcmp.gt.f32.partialorder %v4600, 0.0
      %vm4697 = vcmp.gt.f32.partialorder %v4601, 0.0
      %vm4698 = vcmp.gt.f32.partialorder %v4602, 0.0
      %vm4699 = vcmp.gt.f32.partialorder %v4603, 0.0
      %vm4700 = vcmp.gt.f32.partialorder %v4604, 0.0
      %vm4701 = vcmp.gt.f32.partialorder %v4605, 0.0
      %vm4702 = vcmp.gt.f32.partialorder %v4606, 0.0
      %vm4703 = vcmp.gt.f32.partialorder %v4607, 0.0
      %vm4704 = vcmp.gt.f32.partialorder %v4608, 0.0
      %vm4705 = vcmp.gt.f32.partialorder %v4609, 0.0
      %vm4706 = vcmp.gt.f32.partialorder %v4610, 0.0
      %vm4707 = vcmp.gt.f32.partialorder %v4611, 0.0
      %vm4708 = vcmp.gt.f32.partialorder %v4612, 0.0
      %v4709 = vmul.f32 %v4517, 0.01
      %v4710 = vmul.f32 %v4518, 0.01
      %v4711 = vmul.f32 %v4519, 0.01
      %v4712 = vmul.f32 %v4520, 0.01
      %v4713 = vmul.f32 %v4521, 0.01
      %v4714 = vmul.f32 %v4522, 0.01
      %v4715 = vmul.f32 %v4523, 0.01
      %v4716 = vmul.f32 %v4524, 0.01
      %v4717 = vmul.f32 %v4525, 0.01
      %v4718 = vmul.f32 %v4526, 0.01
      %v4719 = vmul.f32 %v4527, 0.01
      %v4720 = vmul.f32 %v4528, 0.01
      %v4721 = vmul.f32 %v4529, 0.01
      %v4722 = vmul.f32 %v4530, 0.01
      %v4723 = vmul.f32 %v4531, 0.01
      %v4724 = vmul.f32 %v4532, 0.01
      %v4725 = vmul.f32 %v4533, 0.01
      %v4726 = vmul.f32 %v4534, 0.01
      %v4727 = vmul.f32 %v4535, 0.01
      %v4728 = vmul.f32 %v4536, 0.01
      %v4729 = vmul.f32 %v4537, 0.01
      %v4730 = vmul.f32 %v4538, 0.01
      %v4731 = vmul.f32 %v4539, 0.01
      %v4732 = vmul.f32 %v4540, 0.01
      %v4733 = vmul.f32 %v4541, 0.01
      %v4734 = vmul.f32 %v4542, 0.01
      %v4735 = vmul.f32 %v4543, 0.01
      %v4736 = vmul.f32 %v4544, 0.01
      %v4737 = vmul.f32 %v4545, 0.01
      %v4738 = vmul.f32 %v4546, 0.01
      %v4739 = vmul.f32 %v4547, 0.01
      %v4740 = vmul.f32 %v4548, 0.01
      %v4741 = vmul.f32 %v4549, 0.01
      %v4742 = vmul.f32 %v4550, 0.01
      %v4743 = vmul.f32 %v4551, 0.01
      %v4744 = vmul.f32 %v4552, 0.01
      %v4745 = vmul.f32 %v4553, 0.01
      %v4746 = vmul.f32 %v4554, 0.01
      %v4747 = vmul.f32 %v4555, 0.01
      %v4748 = vmul.f32 %v4556, 0.01
      %v4749 = vmul.f32 %v4557, 0.01
      %v4750 = vmul.f32 %v4558, 0.01
      %v4751 = vmul.f32 %v4559, 0.01
      %v4752 = vmul.f32 %v4560, 0.01
      %v4753 = vmul.f32 %v4561, 0.01
      %v4754 = vmul.f32 %v4562, 0.01
      %v4755 = vmul.f32 %v4563, 0.01
      %v4756 = vmul.f32 %v4564, 0.01
      %v4757 = vmul.f32 %v4565, 0.01
      %v4758 = vmul.f32 %v4566, 0.01
      %v4759 = vmul.f32 %v4567, 0.01
      %v4760 = vmul.f32 %v4568, 0.01
      %v4761 = vmul.f32 %v4569, 0.01
      %v4762 = vmul.f32 %v4570, 0.01
      %v4763 = vmul.f32 %v4571, 0.01
      %v4764 = vmul.f32 %v4572, 0.01
      %v4765 = vmul.f32 %v4573, 0.01
      %v4766 = vmul.f32 %v4574, 0.01
      %v4767 = vmul.f32 %v4575, 0.01
      %v4768 = vmul.f32 %v4576, 0.01
      %v4769 = vmul.f32 %v4577, 0.01
      %v4770 = vmul.f32 %v4578, 0.01
      %v4771 = vmul.f32 %v4579, 0.01
      %v4772 = vmul.f32 %v4580, 0.01
      %v4773 = vmul.f32 %v4581, 0.01
      %v4774 = vmul.f32 %v4582, 0.01
      %v4775 = vmul.f32 %v4583, 0.01
      %v4776 = vmul.f32 %v4584, 0.01
      %v4777 = vmul.f32 %v4585, 0.01
      %v4778 = vmul.f32 %v4586, 0.01
      %v4779 = vmul.f32 %v4587, 0.01
      %v4780 = vmul.f32 %v4588, 0.01
      %v4781 = vmul.f32 %v4589, 0.01
      %v4782 = vmul.f32 %v4590, 0.01
      %v4783 = vmul.f32 %v4591, 0.01
      %v4784 = vmul.f32 %v4592, 0.01
      %v4785 = vmul.f32 %v4593, 0.01
      %v4786 = vmul.f32 %v4594, 0.01
      %v4787 = vmul.f32 %v4595, 0.01
      %v4788 = vmul.f32 %v4596, 0.01
      %v4789 = vmul.f32 %v4597, 0.01
      %v4790 = vmul.f32 %v4598, 0.01
      %v4791 = vmul.f32 %v4599, 0.01
      %v4792 = vmul.f32 %v4600, 0.01
      %v4793 = vmul.f32 %v4601, 0.01
      %v4794 = vmul.f32 %v4602, 0.01
      %v4795 = vmul.f32 %v4603, 0.01
      %v4796 = vmul.f32 %v4604, 0.01
      %v4797 = vmul.f32 %v4605, 0.01
      %v4798 = vmul.f32 %v4606, 0.01
      %v4799 = vmul.f32 %v4607, 0.01
      %v4800 = vmul.f32 %v4608, 0.01
      %v4801 = vmul.f32 %v4609, 0.01
      %v4802 = vmul.f32 %v4610, 0.01
      %v4803 = vmul.f32 %v4611, 0.01
      %v4804 = vmul.f32 %v4612, 0.01
      %v4805 = vsel %vm4613, %v4517, %v4709
      %v4806 = vsel %vm4614, %v4518, %v4710
      %v4807 = vsel %vm4615, %v4519, %v4711
      %v4808 = vsel %vm4616, %v4520, %v4712
      %v4809 = vsel %vm4617, %v4521, %v4713
      %v4810 = vsel %vm4618, %v4522, %v4714
      %v4811 = vsel %vm4619, %v4523, %v4715
      %v4812 = vsel %vm4620, %v4524, %v4716
      %v4813 = vsel %vm4621, %v4525, %v4717
      %v4814 = vsel %vm4622, %v4526, %v4718
      %v4815 = vsel %vm4623, %v4527, %v4719
      %v4816 = vsel %vm4624, %v4528, %v4720
      %v4817 = vsel %vm4625, %v4529, %v4721
      %v4818 = vsel %vm4626, %v4530, %v4722
      %v4819 = vsel %vm4627, %v4531, %v4723
      %v4820 = vsel %vm4628, %v4532, %v4724
      %v4821 = vsel %vm4629, %v4533, %v4725
      %v4822 = vsel %vm4630, %v4534, %v4726
      %v4823 = vsel %vm4631, %v4535, %v4727
      %v4824 = vsel %vm4632, %v4536, %v4728
      %v4825 = vsel %vm4633, %v4537, %v4729
      %v4826 = vsel %vm4634, %v4538, %v4730
      %v4827 = vsel %vm4635, %v4539, %v4731
      %v4828 = vsel %vm4636, %v4540, %v4732
      %v4829 = vsel %vm4637, %v4541, %v4733
      %v4830 = vsel %vm4638, %v4542, %v4734
      %v4831 = vsel %vm4639, %v4543, %v4735
      %v4832 = vsel %vm4640, %v4544, %v4736
      %v4833 = vsel %vm4641, %v4545, %v4737
      %v4834 = vsel %vm4642, %v4546, %v4738
      %v4835 = vsel %vm4643, %v4547, %v4739
      %v4836 = vsel %vm4644, %v4548, %v4740
      %v4837 = vsel %vm4645, %v4549, %v4741
      %v4838 = vsel %vm4646, %v4550, %v4742
      %v4839 = vsel %vm4647, %v4551, %v4743
      %v4840 = vsel %vm4648, %v4552, %v4744
      %v4841 = vsel %vm4649, %v4553, %v4745
      %v4842 = vsel %vm4650, %v4554, %v4746
      %v4843 = vsel %vm4651, %v4555, %v4747
      %v4844 = vsel %vm4652, %v4556, %v4748
      %v4845 = vsel %vm4653, %v4557, %v4749
      %v4846 = vsel %vm4654, %v4558, %v4750
      %v4847 = vsel %vm4655, %v4559, %v4751
      %v4848 = vsel %vm4656, %v4560, %v4752
      %v4849 = vsel %vm4657, %v4561, %v4753
      %v4850 = vsel %vm4658, %v4562, %v4754
      %v4851 = vsel %vm4659, %v4563, %v4755
      %v4852 = vsel %vm4660, %v4564, %v4756
      %v4853 = vsel %vm4661, %v4565, %v4757
      %v4854 = vsel %vm4662, %v4566, %v4758
      %v4855 = vsel %vm4663, %v4567, %v4759
      %v4856 = vsel %vm4664, %v4568, %v4760
      %v4857 = vsel %vm4665, %v4569, %v4761
      %v4858 = vsel %vm4666, %v4570, %v4762
      %v4859 = vsel %vm4667, %v4571, %v4763
      %v4860 = vsel %vm4668, %v4572, %v4764
      %v4861 = vsel %vm4669, %v4573, %v4765
      %v4862 = vsel %vm4670, %v4574, %v4766
      %v4863 = vsel %vm4671, %v4575, %v4767
      %v4864 = vsel %vm4672, %v4576, %v4768
      %v4865 = vsel %vm4673, %v4577, %v4769
      %v4866 = vsel %vm4674, %v4578, %v4770
      %v4867 = vsel %vm4675, %v4579, %v4771
      %v4868 = vsel %vm4676, %v4580, %v4772
      %v4869 = vsel %vm4677, %v4581, %v4773
      %v4870 = vsel %vm4678, %v4582, %v4774
      %v4871 = vsel %vm4679, %v4583, %v4775
      %v4872 = vsel %vm4680, %v4584, %v4776
      %v4873 = vsel %vm4681, %v4585, %v4777
      %v4874 = vsel %vm4682, %v4586, %v4778
      %v4875 = vsel %vm4683, %v4587, %v4779
      %v4876 = vsel %vm4684, %v4588, %v4780
      %v4877 = vsel %vm4685, %v4589, %v4781
      %v4878 = vsel %vm4686, %v4590, %v4782
      %v4879 = vsel %vm4687, %v4591, %v4783
      %v4880 = vsel %vm4688, %v4592, %v4784
      %v4881 = vsel %vm4689, %v4593, %v4785
      %v4882 = vsel %vm4690, %v4594, %v4786
      %v4883 = vsel %vm4691, %v4595, %v4787
      %v4884 = vsel %vm4692, %v4596, %v4788
      %v4885 = vsel %vm4693, %v4597, %v4789
      %v4886 = vsel %vm4694, %v4598, %v4790
      %v4887 = vsel %vm4695, %v4599, %v4791
      %v4888 = vsel %vm4696, %v4600, %v4792
      %v4889 = vsel %vm4697, %v4601, %v4793
      %v4890 = vsel %vm4698, %v4602, %v4794
      %v4891 = vsel %vm4699, %v4603, %v4795
      %v4892 = vsel %vm4700, %v4604, %v4796
      %v4893 = vsel %vm4701, %v4605, %v4797
      %v4894 = vsel %vm4702, %v4606, %v4798
      %v4895 = vsel %vm4703, %v4607, %v4799
      %v4896 = vsel %vm4704, %v4608, %v4800
      %v4897 = vsel %vm4705, %v4609, %v4801
      %v4898 = vsel %vm4706, %v4610, %v4802
      %v4899 = vsel %vm4707, %v4611, %v4803
      %v4900 = vsel %vm4708, %v4612, %v4804
      %v4901 = vpack.c.bf16 %v4829, %v4805
      %v4902 = vpack.c.bf16 %v4830, %v4806
      %v4903 = vpack.c.bf16 %v4831, %v4807
      %v4904 = vpack.c.bf16 %v4832, %v4808
      %v4905 = vpack.c.bf16 %v4833, %v4809
      %v4906 = vpack.c.bf16 %v4834, %v4810
      %v4907 = vpack.c.bf16 %v4835, %v4811
      %v4908 = vpack.c.bf16 %v4836, %v4812
      %v4909 = vpack.c.bf16 %v4837, %v4813
      %v4910 = vpack.c.bf16 %v4838, %v4814
      %v4911 = vpack.c.bf16 %v4839, %v4815
      %v4912 = vpack.c.bf16 %v4840, %v4816
      %v4913 = vpack.c.bf16 %v4841, %v4817
      %v4914 = vpack.c.bf16 %v4842, %v4818
      %v4915 = vpack.c.bf16 %v4843, %v4819
      %v4916 = vpack.c.bf16 %v4844, %v4820
      %v4917 = vpack.c.bf16 %v4845, %v4821
      %v4918 = vpack.c.bf16 %v4846, %v4822
      %v4919 = vpack.c.bf16 %v4847, %v4823
      %v4920 = vpack.c.bf16 %v4848, %v4824
      %v4921 = vpack.c.bf16 %v4849, %v4825
      %v4922 = vpack.c.bf16 %v4850, %v4826
      %v4923 = vpack.c.bf16 %v4851, %v4827
      %v4924 = vpack.c.bf16 %v4852, %v4828
      %v4925 = vpack.c.bf16 %v4877, %v4853
      %v4926 = vpack.c.bf16 %v4878, %v4854
      %v4927 = vpack.c.bf16 %v4879, %v4855
      %v4928 = vpack.c.bf16 %v4880, %v4856
      %v4929 = vpack.c.bf16 %v4881, %v4857
      %v4930 = vpack.c.bf16 %v4882, %v4858
      %v4931 = vpack.c.bf16 %v4883, %v4859
      %v4932 = vpack.c.bf16 %v4884, %v4860
      %v4933 = vpack.c.bf16 %v4885, %v4861
      %v4934 = vpack.c.bf16 %v4886, %v4862
      %v4935 = vpack.c.bf16 %v4887, %v4863
      %v4936 = vpack.c.bf16 %v4888, %v4864
      %v4937 = vpack.c.bf16 %v4889, %v4865
      %v4938 = vpack.c.bf16 %v4890, %v4866
      %v4939 = vpack.c.bf16 %v4891, %v4867
      %v4940 = vpack.c.bf16 %v4892, %v4868
      %v4941 = vpack.c.bf16 %v4893, %v4869
      %v4942 = vpack.c.bf16 %v4894, %v4870
      %v4943 = vpack.c.bf16 %v4895, %v4871
      %v4944 = vpack.c.bf16 %v4896, %v4872
      %v4945 = vpack.c.bf16 %v4897, %v4873
      %v4946 = vpack.c.bf16 %v4898, %v4874
      %v4947 = vpack.c.bf16 %v4899, %v4875
      %v4948 = vpack.c.bf16 %v4900, %v4876
      %v4997 = vunpack.c.l.b16 %v4901
      %v4998 = vunpack.c.l.b16 %v4902
      %v4999 = vunpack.c.l.b16 %v4903
      %v5000 = vunpack.c.l.b16 %v4904
      %v5001 = vunpack.c.l.b16 %v4905
      %v5002 = vunpack.c.l.b16 %v4906
      %v5003 = vunpack.c.l.b16 %v4907
      %v5004 = vunpack.c.l.b16 %v4908
      %v5005 = vunpack.c.l.b16 %v4909
      %v5006 = vunpack.c.l.b16 %v4910
      %v5007 = vunpack.c.l.b16 %v4911
      %v5008 = vunpack.c.l.b16 %v4912
      %v5009 = vunpack.c.l.b16 %v4913
      %v5010 = vunpack.c.l.b16 %v4914
      %v5011 = vunpack.c.l.b16 %v4915
      %v5012 = vunpack.c.l.b16 %v4916
      %v5013 = vunpack.c.l.b16 %v4917
      %v5014 = vunpack.c.l.b16 %v4918
      %v5015 = vunpack.c.l.b16 %v4919
      %v5016 = vunpack.c.l.b16 %v4920
      %v5017 = vunpack.c.l.b16 %v4921
      %v5018 = vunpack.c.l.b16 %v4922
      %v5019 = vunpack.c.l.b16 %v4923
      %v5020 = vunpack.c.l.b16 %v4924
      %v5021 = vunpack.c.h.b16 %v4901
      %v5022 = vunpack.c.h.b16 %v4902
      %v5023 = vunpack.c.h.b16 %v4903
      %v5024 = vunpack.c.h.b16 %v4904
      %v5025 = vunpack.c.h.b16 %v4905
      %v5026 = vunpack.c.h.b16 %v4906
      %v5027 = vunpack.c.h.b16 %v4907
      %v5028 = vunpack.c.h.b16 %v4908
      %v5029 = vunpack.c.h.b16 %v4909
      %v5030 = vunpack.c.h.b16 %v4910
      %v5031 = vunpack.c.h.b16 %v4911
      %v5032 = vunpack.c.h.b16 %v4912
      %v5033 = vunpack.c.h.b16 %v4913
      %v5034 = vunpack.c.h.b16 %v4914
      %v5035 = vunpack.c.h.b16 %v4915
      %v5036 = vunpack.c.h.b16 %v4916
      %v5037 = vunpack.c.h.b16 %v4917
      %v5038 = vunpack.c.h.b16 %v4918
      %v5039 = vunpack.c.h.b16 %v4919
      %v5040 = vunpack.c.h.b16 %v4920
      %v5041 = vunpack.c.h.b16 %v4921
      %v5042 = vunpack.c.h.b16 %v4922
      %v5043 = vunpack.c.h.b16 %v4923
      %v5044 = vunpack.c.h.b16 %v4924
      %v5045 = vunpack.c.l.b16 %v4925
      %v5046 = vunpack.c.l.b16 %v4926
      %v5047 = vunpack.c.l.b16 %v4927
      %v5048 = vunpack.c.l.b16 %v4928
      %v5049 = vunpack.c.l.b16 %v4929
      %v5050 = vunpack.c.l.b16 %v4930
      %v5051 = vunpack.c.l.b16 %v4931
      %v5052 = vunpack.c.l.b16 %v4932
      %v5053 = vunpack.c.l.b16 %v4933
      %v5054 = vunpack.c.l.b16 %v4934
      %v5055 = vunpack.c.l.b16 %v4935
      %v5056 = vunpack.c.l.b16 %v4936
      %v5057 = vunpack.c.l.b16 %v4937
      %v5058 = vunpack.c.l.b16 %v4938
      %v5059 = vunpack.c.l.b16 %v4939
      %v5060 = vunpack.c.l.b16 %v4940
      %v5061 = vunpack.c.l.b16 %v4941
      %v5062 = vunpack.c.l.b16 %v4942
      %v5063 = vunpack.c.l.b16 %v4943
      %v5064 = vunpack.c.l.b16 %v4944
      %v5065 = vunpack.c.l.b16 %v4945
      %v5066 = vunpack.c.l.b16 %v4946
      %v5067 = vunpack.c.l.b16 %v4947
      %v5068 = vunpack.c.l.b16 %v4948
      %v5069 = vunpack.c.h.b16 %v4925
      %v5070 = vunpack.c.h.b16 %v4926
      %v5071 = vunpack.c.h.b16 %v4927
      %v5072 = vunpack.c.h.b16 %v4928
      %v5073 = vunpack.c.h.b16 %v4929
      %v5074 = vunpack.c.h.b16 %v4930
      %v5075 = vunpack.c.h.b16 %v4931
      %v5076 = vunpack.c.h.b16 %v4932
      %v5077 = vunpack.c.h.b16 %v4933
      %v5078 = vunpack.c.h.b16 %v4934
      %v5079 = vunpack.c.h.b16 %v4935
      %v5080 = vunpack.c.h.b16 %v4936
      %v5081 = vunpack.c.h.b16 %v4937
      %v5082 = vunpack.c.h.b16 %v4938
      %v5083 = vunpack.c.h.b16 %v4939
      %v5084 = vunpack.c.h.b16 %v4940
      %v5085 = vunpack.c.h.b16 %v4941
      %v5086 = vunpack.c.h.b16 %v4942
      %v5087 = vunpack.c.h.b16 %v4943
      %v5088 = vunpack.c.h.b16 %v4944
      %v5089 = vunpack.c.h.b16 %v4945
      %v5090 = vunpack.c.h.b16 %v4946
      %v5091 = vunpack.c.h.b16 %v4947
      %v5092 = vunpack.c.h.b16 %v4948
      %v5093 = vpack.c.b16 %v4998, %v4997
      %v5094 = vpack.c.b16 %v5000, %v4999
      %v5095 = vpack.c.b16 %v5002, %v5001
      %v5096 = vpack.c.b16 %v5004, %v5003
      %v5097 = vpack.c.b16 %v5006, %v5005
      %v5098 = vpack.c.b16 %v5008, %v5007
      %v5099 = vpack.c.b16 %v5010, %v5009
      %v5100 = vpack.c.b16 %v5012, %v5011
      %v5101 = vpack.c.b16 %v5014, %v5013
      %v5102 = vpack.c.b16 %v5016, %v5015
      %v5103 = vpack.c.b16 %v5018, %v5017
      %v5104 = vpack.c.b16 %v5020, %v5019
      %v5105 = vpack.c.b16 %v5022, %v5021
      %v5106 = vpack.c.b16 %v5024, %v5023
      %v5107 = vpack.c.b16 %v5026, %v5025
      %v5108 = vpack.c.b16 %v5028, %v5027
      %v5109 = vpack.c.b16 %v5030, %v5029
      %v5110 = vpack.c.b16 %v5032, %v5031
      %v5111 = vpack.c.b16 %v5034, %v5033
      %v5112 = vpack.c.b16 %v5036, %v5035
      %v5113 = vpack.c.b16 %v5038, %v5037
      %v5114 = vpack.c.b16 %v5040, %v5039
      %v5115 = vpack.c.b16 %v5042, %v5041
      %v5116 = vpack.c.b16 %v5044, %v5043
      %v5117 = vpack.c.b16 %v5046, %v5045
      %v5118 = vpack.c.b16 %v5048, %v5047
      %v5119 = vpack.c.b16 %v5050, %v5049
      %v5120 = vpack.c.b16 %v5052, %v5051
      %v5121 = vpack.c.b16 %v5054, %v5053
      %v5122 = vpack.c.b16 %v5056, %v5055
      %v5123 = vpack.c.b16 %v5058, %v5057
      %v5124 = vpack.c.b16 %v5060, %v5059
      %v5125 = vpack.c.b16 %v5062, %v5061
      %v5126 = vpack.c.b16 %v5064, %v5063
      %v5127 = vpack.c.b16 %v5066, %v5065
      %v5128 = vpack.c.b16 %v5068, %v5067
      %v5129 = vpack.c.b16 %v5070, %v5069
      %v5130 = vpack.c.b16 %v5072, %v5071
      %v5131 = vpack.c.b16 %v5074, %v5073
      %v5132 = vpack.c.b16 %v5076, %v5075
      %v5133 = vpack.c.b16 %v5078, %v5077
      %v5134 = vpack.c.b16 %v5080, %v5079
      %v5135 = vpack.c.b16 %v5082, %v5081
      %v5136 = vpack.c.b16 %v5084, %v5083
      %v5137 = vpack.c.b16 %v5086, %v5085
      %v5138 = vpack.c.b16 %v5088, %v5087
      %v5139 = vpack.c.b16 %v5090, %v5089
      %v5140 = vpack.c.b16 %v5092, %v5091
      %5189 = vst [vmem:[%s170] sm:$0xff] %v5093
      %5190 = vst [vmem:[%s170 + $0x8] sm:$0xff] %v5094
      %5191 = vst [vmem:[%s170 + $0x10] sm:$0xff] %v5095
      %5192 = vst [vmem:[%s170 + $0x18] sm:$0xff] %v5096
      %5193 = vst [vmem:[%s170 + $0x20] sm:$0xff] %v5097
      %5194 = vst [vmem:[%s170 + $0x28] sm:$0xff] %v5098
      %5195 = vst [vmem:[%s170 + $0x30] sm:$0xff] %v5099
      %5196 = vst [vmem:[%s170 + $0x38] sm:$0xff] %v5100
      %5197 = vst [vmem:[%s170 + $0x40] sm:$0xff] %v5101
      %5198 = vst [vmem:[%s170 + $0x48] sm:$0xff] %v5102
      %5199 = vst [vmem:[%s170 + $0x50] sm:$0xff] %v5103
      %vm5200 = vcmask 1043456
      %vm5201 = vcmask 523268
      %vm5202 = vmor %vm5201, %vm5200
      %5203 = vst.msk [vmem:[%s170 + $0x58] sm:$0xff] %vm5202, %v5104
      %5204 = vst [vmem:[%s170 + $0x60] sm:$0xff] %v5105
      %5205 = vst [vmem:[%s170 + $0x68] sm:$0xff] %v5106
      %5206 = vst [vmem:[%s170 + $0x70] sm:$0xff] %v5107
      %5207 = vst [vmem:[%s170 + $0x78] sm:$0xff] %v5108
      %5208 = vst [vmem:[%s170 + $0x80] sm:$0xff] %v5109
      %5209 = vst [vmem:[%s170 + $0x88] sm:$0xff] %v5110
      %5210 = vst [vmem:[%s170 + $0x90] sm:$0xff] %v5111
      %5211 = vst [vmem:[%s170 + $0x98] sm:$0xff] %v5112
      %5212 = vst [vmem:[%s170 + $0xa0] sm:$0xff] %v5113
      %5213 = vst [vmem:[%s170 + $0xa8] sm:$0xff] %v5114
      %5214 = vst [vmem:[%s170 + $0xb0] sm:$0xff] %v5115
      %5215 = vst.msk [vmem:[%s170 + $0xb8] sm:$0xff] %vm5202, %v5116
      %5216 = vst [vmem:[%s170 + $0xc0] sm:$0xff] %v5117
      %5217 = vst [vmem:[%s170 + $0xc8] sm:$0xff] %v5118
      %5218 = vst [vmem:[%s170 + $0xd0] sm:$0xff] %v5119
      %5219 = vst [vmem:[%s170 + $0xd8] sm:$0xff] %v5120
      %5220 = vst [vmem:[%s170 + $0xe0] sm:$0xff] %v5121
      %5221 = vst [vmem:[%s170 + $0xe8] sm:$0xff] %v5122
      %5222 = vst [vmem:[%s170 + $0xf0] sm:$0xff] %v5123
      %5223 = vst [vmem:[%s170 + $0xf8] sm:$0xff] %v5124
      %5224 = vst [vmem:[%s170 + $0x100] sm:$0xff] %v5125
      %5225 = vst [vmem:[%s170 + $0x108] sm:$0xff] %v5126
      %5226 = vst [vmem:[%s170 + $0x110] sm:$0xff] %v5127
      %5227 = vst.msk [vmem:[%s170 + $0x118] sm:$0xff] %vm5202, %v5128
      %5228 = vst [vmem:[%s170 + $0x120] sm:$0xff] %v5129
      %5229 = vst [vmem:[%s170 + $0x128] sm:$0xff] %v5130
      %5230 = vst [vmem:[%s170 + $0x130] sm:$0xff] %v5131
      %5231 = vst [vmem:[%s170 + $0x138] sm:$0xff] %v5132
      %5232 = vst [vmem:[%s170 + $0x140] sm:$0xff] %v5133
      %5233 = vst [vmem:[%s170 + $0x148] sm:$0xff] %v5134
      %5234 = vst [vmem:[%s170 + $0x150] sm:$0xff] %v5135
      %5235 = vst [vmem:[%s170 + $0x158] sm:$0xff] %v5136
      %5236 = vst [vmem:[%s170 + $0x160] sm:$0xff] %v5137
      %5237 = vst [vmem:[%s170 + $0x168] sm:$0xff] %v5138
      %5238 = vst [vmem:[%s170 + $0x170] sm:$0xff] %v5139
      %5239 = vst.msk [vmem:[%s170 + $0x178] sm:$0xff] %vm5202, %v5140
      %p5240 = scmp.lt.s32.totalorder %s14, 1
      %s5241 = scalar_select %p5240, %s14, 1
      %s5242 = smul.addr %s5241, 96
      %s5243 = smul.addr %s5242, 4
      %s5244 = scalar_lea.vmem %s3, %s5243
      // Predicated region
      $region33: #{dqn_forward.4} parent=31 // pred_check
        %p5245 = pneg %p100
      $region34: #{dqn_forward.4} parent=31 // pred_check_branch
        %5247 = sbr.rel (%p5245) target = $region36
      $region35: #{dqn_forward.4} parent=31 // pred_region
        _
      $region36: #{dqn_forward.4} parent=31 // pred_fallthru
        _
    $region32: #{dqn_forward.4} parent=5 // pred_fallthru
      _
    %p5248 = scmp.le.s32.totalorder 2, %s9
    // Predicated region
    $region37: #{dqn_forward.4} parent=5 // pred_check
      %p5249 = pneg %p5248
    $region38: #{dqn_forward.4} parent=5 // pred_check_branch
      %5251 = sbr.rel (%p5249) target = $region40
    $region39: #{dqn_forward.4} parent=5 // pred_region
      %s5252 = ssub.s32 %s9, 2
      // Predicated region
      $region41: #{dqn_forward.4} parent=39 // pred_check
        %p5253 = pneg %p106
      $region42: #{dqn_forward.4} parent=39 // pred_check_branch
        %5255 = sbr.rel (%p5253) target = $region44
      $region43: #{dqn_forward.4} parent=39 // pred_region
        %p5256 = scmp.lt.s32.totalorder %s15, 1
        %s5257 = scalar_select %p5256, %s15, 1
        %s5258 = smul.addr %s5257, 96
        %s5259 = smul.addr %s5258, 4
        %s5260 = scalar_lea.vmem %s3, %s5259
      $region44: #{dqn_forward.4} parent=39 // pred_fallthru
        _
    $region40: #{dqn_forward.4} parent=5 // pred_fallthru
      _
  $region6: #{dqn_forward.4} parent=0 // loop_footer
    %s13 = sadd.s32 1, %s9
  $region7: #{dqn_forward.4} parent=0 // loop_footer_branch
    %8 = sbr.rel target = $region3
  $region8: #{dqn_forward.4} parent=0 // loop_exit
    _

// kernel: dqn_forward.5
$region0: #{dqn_forward.5}
  #allocation0 [shape = 'u32[]', space=smem, size = 0x4, offset = 0x4, fixed_abs, tag = 'smem constant byte address 0x4 - core index']
  #allocation1 [shape = 'u32[144,128]{1,0:T(1,128)}', space=vmem, size = 0x12000, scoped, tag = 'internal scratch']
  %s0 = inlined_call_operand.vmem [shape: bf16[2,512,256], index: 0, kind: input, shape index: {}]
  %s1 = inlined_call_operand.vmem [shape: bf16[256,512], index: 1, kind: input, shape index: {}]
  %s2 = inlined_call_operand.vmem [shape: f32[64,1], index: 2, kind: input, shape index: {}]
  %s3 = inlined_call_operand.vmem [shape: bf16[2,64,176], index: 3, kind: output, shape index: {}]
  %s4 = sld [smem:[#allocation0]]
  $region45: #{dqn_forward.5} parent=0
    _
  %s6 = ssub.s32 1, %s4
  %s7 = scalar_select 0, %s6, %s4
  loop: start=0, step=1, limit=4
  $region2: #{dqn_forward.5} parent=0 // loop_pre_header
    _
  $region3: #{dqn_forward.5} parent=0 // loop_header
    %s9 = sphi 0, %s13
    %p10 = scmp.ge.s32.totalorder %s9, 4
    %s19 = sphi 0, %s21
    %s22 = sphi 0, %s19
    %s23 = sphi 0, %s22
    %s39 = sphi 0, %s23
    %s43 = sphi 0, %s43
    %s45 = sphi 0, %s43
    %s46 = sphi 0, %s45
    %s60 = sphi 0, %s46
    %s64 = sphi 0, %s64
    %s66 = sphi 0, %s64
    %s67 = sphi 0, %s66
    %s81 = sphi 0, %s67
    %s87 = sphi 0, %s89
    %s90 = sphi 0, %s87
    %s91 = sphi 0, %s90
    %s107 = sphi 0, %s91
  $region4: #{dqn_forward.5} parent=0 // loop_header_branch
    %12 = sbr.rel (%p10) target = $region8
  $region5: #{dqn_forward.5} parent=0 // loop_body
    %s14 = ssub.s32 %s9, 1
    %s15 = ssub.s32 %s9, 2
    %s16 = sadd.s32 %s9, 1
    %s17 = ssub.s32 %s9, %s16
    %p18 = scmp.eq.s32.totalorder %s17, 0
    %s20 = sadd.s32 %s19, 1
    %s21 = scalar_select %p18, %s19, %s20
    %p24 = pneg %p18
    %p25 = scmp.eq.s32.totalorder %s9, 1
    %p26 = por %p24, %p25
    %p27 = scmp.ne.s32.totalorder %s19, %s22
    %p28 = scmp.eq.s32.totalorder %s9, 0
    %p29 = por %p27, %p28
    %p30 = scmp.ne.s32.totalorder %s19, %s22
    %p31 = scmp.eq.s32.totalorder %s14, 1
    %p32 = por %p30, %p31
    %p33 = scmp.ne.s32.totalorder %s22, %s23
    %p34 = scmp.eq.s32.totalorder %s14, 0
    %p35 = por %p33, %p34
    %p36 = scmp.ne.s32.totalorder %s22, %s23
    %p37 = scmp.eq.s32.totalorder %s15, 1
    %p38 = por %p36, %p37
    %p40 = scmp.ne.s32.totalorder %s23, %s39
    %p41 = scmp.eq.s32.totalorder %s15, 0
    %p42 = por %p40, %p41
    %s44 = sadd.s32 %s43, 1
    %p47 = scmp.eq.s32.totalorder %s9, 1
    %p48 = scmp.ne.s32.totalorder %s43, %s45
    %p49 = scmp.eq.s32.totalorder %s9, 0
    %p50 = por %p48, %p49
    %p51 = scmp.ne.s32.totalorder %s43, %s45
    %p52 = scmp.eq.s32.totalorder %s14, 1
    %p53 = por %p51, %p52
    %p54 = scmp.ne.s32.totalorder %s45, %s46
    %p55 = scmp.eq.s32.totalorder %s14, 0
    %p56 = por %p54, %p55
    %p57 = scmp.ne.s32.totalorder %s45, %s46
    %p58 = scmp.eq.s32.totalorder %s15, 1
    %p59 = por %p57, %p58
    %p61 = scmp.ne.s32.totalorder %s46, %s60
    %p62 = scmp.eq.s32.totalorder %s15, 0
    %p63 = por %p61, %p62
    %s65 = sadd.s32 %s64, 1
    %p68 = scmp.eq.s32.totalorder %s9, 1
    %p69 = scmp.ne.s32.totalorder %s64, %s66
    %p70 = scmp.eq.s32.totalorder %s9, 0
    %p71 = por %p69, %p70
    %p72 = scmp.ne.s32.totalorder %s64, %s66
    %p73 = scmp.eq.s32.totalorder %s14, 1
    %p74 = por %p72, %p73
    %p75 = scmp.ne.s32.totalorder %s66, %s67
    %p76 = scmp.eq.s32.totalorder %s14, 0
    %p77 = por %p75, %p76
    %p78 = scmp.ne.s32.totalorder %s66, %s67
    %p79 = scmp.eq.s32.totalorder %s15, 1
    %p80 = por %p78, %p79
    %p82 = scmp.ne.s32.totalorder %s67, %s81
    %p83 = scmp.eq.s32.totalorder %s15, 0
    %p84 = por %p82, %p83
    %s85 = ssub.s32 %s9, %s16
    %p86 = scmp.eq.s32.totalorder %s85, 0
    %s88 = sadd.s32 %s87, 1
    %s89 = scalar_select %p86, %s87, %s88
    %p92 = pneg %p86
    %p93 = scmp.eq.s32.totalorder %s9, 1
    %p94 = por %p92, %p93
    %p95 = scmp.ne.s32.totalorder %s87, %s90
    %p96 = scmp.eq.s32.totalorder %s9, 0
    %p97 = por %p95, %p96
    %p98 = scmp.ne.s32.totalorder %s87, %s90
    %p99 = scmp.eq.s32.totalorder %s14, 1
    %p100 = por %p98, %p99
    %p101 = scmp.ne.s32.totalorder %s90, %s91
    %p102 = scmp.eq.s32.totalorder %s14, 0
    %p103 = por %p101, %p102
    %p104 = scmp.ne.s32.totalorder %s90, %s91
    %p105 = scmp.eq.s32.totalorder %s15, 1
    %p106 = por %p104, %p105
    %p108 = scmp.ne.s32.totalorder %s91, %s107
    %p109 = scmp.eq.s32.totalorder %s15, 0
    %p110 = por %p108, %p109
    %p111 = scmp.le.s32.totalorder 1, %s9
    %p112 = scmp.lt.s32.totalorder %s9, 3
    %p113 = pnand %p111, %p112
    %p114 = pneg %p113
    // Predicated region
    $region9: #{dqn_forward.5} parent=5 // pred_check
      _
    $region10: #{dqn_forward.5} parent=5 // pred_check_branch
      %116 = sbr.rel (%p113) target = $region12
    $region11: #{dqn_forward.5} parent=5 // pred_region
      %s117 = ssub.s32 %s9, 1
      // Predicated region
      $region13: #{dqn_forward.5} parent=11 // pred_check
        %p118 = pneg %p56
      $region14: #{dqn_forward.5} parent=11 // pred_check_branch
        %120 = sbr.rel (%p118) target = $region16
      $region15: #{dqn_forward.5} parent=11 // pred_region
        _
      $region16: #{dqn_forward.5} parent=11 // pred_fallthru
        _
      // Predicated region
      $region17: #{dqn_forward.5} parent=11 // pred_check
        %p121 = pneg %p77
      $region18: #{dqn_forward.5} parent=11 // pred_check_branch
        %123 = sbr.rel (%p121) target = $region20
      $region19: #{dqn_forward.5} parent=11 // pred_region
        _
      $region20: #{dqn_forward.5} parent=11 // pred_fallthru
        _
    $region12: #{dqn_forward.5} parent=5 // pred_fallthru
      _
    %p124 = scmp.lt.s32.totalorder %s9, 2
    // Predicated region
    $region21: #{dqn_forward.5} parent=5 // pred_check
      %p125 = pneg %p124
    $region22: #{dqn_forward.5} parent=5 // pred_check_branch
      %127 = sbr.rel (%p125) target = $region24
    $region23: #{dqn_forward.5} parent=5 // pred_region
      // Predicated region
      $region25: #{dqn_forward.5} parent=23 // pred_check
        %p128 = pneg %p29
      $region26: #{dqn_forward.5} parent=23 // pred_check_branch
        %130 = sbr.rel (%p128) target = $region28
      $region27: #{dqn_forward.5} parent=23 // pred_region
        %p131 = scmp.lt.s32.totalorder %s9, 1
        %s132 = scalar_select %p131, %s9, 1
        %s133 = smul.addr %s132, 128
        %s134 = smul.addr %s133, 4
        %s135 = scalar_lea.vmem %s0, %s134
      $region28: #{dqn_forward.5} parent=23 // pred_fallthru
        _
    $region24: #{dqn_forward.5} parent=5 // pred_fallthru
      _
    %p136 = scmp.le.s32.totalorder 1, %s9
    %p137 = scmp.lt.s32.totalorder %s9, 3
    %p138 = pnand %p136, %p137
    %p139 = pneg %p138
    // Predicated region
    $region29: #{dqn_forward.5} parent=5 // pred_check
      _
    $region30: #{dqn_forward.5} parent=5 // pred_check_branch
      %141 = sbr.rel (%p138) target = $region32
    $region31: #{dqn_forward.5} parent=5 // pred_region
      %s142 = ssub.s32 %s9, 1
      %p143 = scmp.lt.s32.totalorder %s14, 1
      %s144 = scalar_select %p143, %s14, 1
      %s145 = smul.addr %s144, 128
      %s146 = smul.addr %s145, 4
      %s147 = scalar_lea.vmem %s0, %s146
      %p148 = pneg %p35
      %p149 = pneg %p32
      %p150 = pneg %p56
      %p151 = pneg %p53
      %p152 = pneg %p77
      %p153 = pneg %p74
      %p154 = pneg %p103
      %p155 = pneg %p100
      %p156 = scmp.lt.s32.totalorder %s14, 1
      %s157 = scalar_select %p156, %s14, 1
      %s158 = smul.addr %s157, 16
      %s159 = smul.addr %s158, 4
      %s160 = scalar_lea.vmem %s3, %s159
      %p161 = scmp.lt.s32.totalorder %s14, 1
      %s162 = scalar_select %p161, %s14, 1
      %s163 = smul.addr %s162, 128
      %s164 = smul.addr %s163, 4
      %s165 = scalar_lea.vmem %s0, %s164
      %p166 = scmp.lt.s32.totalorder %s14, 1
      %s167 = scalar_select %p166, %s14, 1
      %s168 = smul.addr %s167, 16
      %s169 = smul.addr %s168, 4
      %s170 = scalar_lea.vmem %s3, %s169
      %v171 = vld [vmem:[%s1] sm:$0xff]
      %v172 = vld [vmem:[%s1 + $0x8] sm:$0xff]
      %v173 = vld [vmem:[%s1 + $0x10] sm:$0xff]
      %v174 = vld [vmem:[%s1 + $0x18] sm:$0xff]
      %v175 = vld [vmem:[%s1 + $0x20] sm:$0xff]
      %v176 = vld [vmem:[%s1 + $0x28] sm:$0xff]
      %v177 = vld [vmem:[%s1 + $0x30] sm:$0xff]
      %v178 = vld [vmem:[%s1 + $0x38] sm:$0xff]
      %v179 = vld [vmem:[%s1 + $0x40] sm:$0xff]
      %v180 = vld [vmem:[%s1 + $0x48] sm:$0xff]
      %v181 = vld [vmem:[%s1 + $0x50] sm:$0xff]
      %v182 = vld [vmem:[%s1 + $0x58] sm:$0xff]
      %v183 = vld [vmem:[%s1 + $0x60] sm:$0xff]
      %v184 = vld [vmem:[%s1 + $0x68] sm:$0xff]
      %v185 = vld [vmem:[%s1 + $0x70] sm:$0xff]
      %v186 = vld [vmem:[%s1 + $0x78] sm:$0xff]
      %v187 = vld [vmem:[%s1 + $0x80] sm:$0xff]
      %v188 = vld [vmem:[%s1 + $0x88] sm:$0xff]
      %v189 = vld [vmem:[%s1 + $0x90] sm:$0xff]
      %v190 = vld [vmem:[%s1 + $0x98] sm:$0xff]
      %v191 = vld [vmem:[%s1 + $0xa0] sm:$0xff]
      %v192 = vld [vmem:[%s1 + $0xa8] sm:$0xff]
      %v193 = vld [vmem:[%s1 + $0xb0] sm:$0xff]
      %v194 = vld [vmem:[%s1 + $0xb8] sm:$0xff]
      %v195 = vld [vmem:[%s1 + $0xc0] sm:$0xff]
      %v196 = vld [vmem:[%s1 + $0xc8] sm:$0xff]
      %v197 = vld [vmem:[%s1 + $0xd0] sm:$0xff]
      %v198 = vld [vmem:[%s1 + $0xd8] sm:$0xff]
      %v199 = vld [vmem:[%s1 + $0xe0] sm:$0xff]
      %v200 = vld [vmem:[%s1 + $0xe8] sm:$0xff]
      %v201 = vld [vmem:[%s1 + $0xf0] sm:$0xff]
      %v202 = vld [vmem:[%s1 + $0xf8] sm:$0xff]
      %v203 = vld [vmem:[%s1 + $0x100] sm:$0xff]
      %v204 = vld [vmem:[%s1 + $0x108] sm:$0xff]
      %v205 = vld [vmem:[%s1 + $0x110] sm:$0xff]
      %v206 = vld [vmem:[%s1 + $0x118] sm:$0xff]
      %v207 = vld [vmem:[%s1 + $0x120] sm:$0xff]
      %v208 = vld [vmem:[%s1 + $0x128] sm:$0xff]
      %v209 = vld [vmem:[%s1 + $0x130] sm:$0xff]
      %v210 = vld [vmem:[%s1 + $0x138] sm:$0xff]
      %v211 = vld [vmem:[%s1 + $0x140] sm:$0xff]
      %v212 = vld [vmem:[%s1 + $0x148] sm:$0xff]
      %v213 = vld [vmem:[%s1 + $0x150] sm:$0xff]
      %v214 = vld [vmem:[%s1 + $0x158] sm:$0xff]
      %v215 = vld [vmem:[%s1 + $0x160] sm:$0xff]
      %v216 = vld [vmem:[%s1 + $0x168] sm:$0xff]
      %v217 = vld [vmem:[%s1 + $0x170] sm:$0xff]
      %v218 = vld [vmem:[%s1 + $0x178] sm:$0xff]
      %v219 = vld [vmem:[%s1 + $0x180] sm:$0xff]
      %v220 = vld [vmem:[%s1 + $0x188] sm:$0xff]
      %v221 = vld [vmem:[%s1 + $0x190] sm:$0xff]
      %v222 = vld [vmem:[%s1 + $0x198] sm:$0xff]
      %v223 = vld [vmem:[%s1 + $0x1a0] sm:$0xff]
      %v224 = vld [vmem:[%s1 + $0x1a8] sm:$0xff]
      %v225 = vld [vmem:[%s1 + $0x1b0] sm:$0xff]
      %v226 = vld [vmem:[%s1 + $0x1b8] sm:$0xff]
      %v227 = vld [vmem:[%s1 + $0x1c0] sm:$0xff]
      %v228 = vld [vmem:[%s1 + $0x1c8] sm:$0xff]
      %v229 = vld [vmem:[%s1 + $0x1d0] sm:$0xff]
      %v230 = vld [vmem:[%s1 + $0x1d8] sm:$0xff]
      %v231 = vld [vmem:[%s1 + $0x1e0] sm:$0xff]
      %v232 = vld [vmem:[%s1 + $0x1e8] sm:$0xff]
      %v233 = vld [vmem:[%s1 + $0x1f0] sm:$0xff]
      %v234 = vld [vmem:[%s1 + $0x1f8] sm:$0xff]
      %v235 = vld [vmem:[%s165] sm:$0xff]
      %v236 = vld [vmem:[%s165 + $0x8] sm:$0xff]
      %v237 = vld [vmem:[%s165 + $0x10] sm:$0xff]
      %v238 = vld [vmem:[%s165 + $0x18] sm:$0xff]
      %v239 = vld [vmem:[%s165 + $0x20] sm:$0xff]
      %v240 = vld [vmem:[%s165 + $0x28] sm:$0xff]
      %v241 = vld [vmem:[%s165 + $0x30] sm:$0xff]
      %v242 = vld [vmem:[%s165 + $0x38] sm:$0xff]
      %v243 = vld [vmem:[%s165 + $0x40] sm:$0xff]
      %v244 = vld [vmem:[%s165 + $0x48] sm:$0xff]
      %v245 = vld [vmem:[%s165 + $0x50] sm:$0xff]
      %v246 = vld [vmem:[%s165 + $0x58] sm:$0xff]
      %v247 = vld [vmem:[%s165 + $0x60] sm:$0xff]
      %v248 = vld [vmem:[%s165 + $0x68] sm:$0xff]
      %v249 = vld [vmem:[%s165 + $0x70] sm:$0xff]
      %v250 = vld [vmem:[%s165 + $0x78] sm:$0xff]
      %v251 = vld [vmem:[%s165 + $0x80] sm:$0xff]
      %v252 = vld [vmem:[%s165 + $0x88] sm:$0xff]
      %v253 = vld [vmem:[%s165 + $0x90] sm:$0xff]
      %v254 = vld [vmem:[%s165 + $0x98] sm:$0xff]
      %v255 = vld [vmem:[%s165 + $0xa0] sm:$0xff]
      %v256 = vld [vmem:[%s165 + $0xa8] sm:$0xff]
      %v257 = vld [vmem:[%s165 + $0xb0] sm:$0xff]
      %v258 = vld [vmem:[%s165 + $0xb8] sm:$0xff]
      %v259 = vld [vmem:[%s165 + $0xc0] sm:$0xff]
      %v260 = vld [vmem:[%s165 + $0xc8] sm:$0xff]
      %v261 = vld [vmem:[%s165 + $0xd0] sm:$0xff]
      %v262 = vld [vmem:[%s165 + $0xd8] sm:$0xff]
      %v263 = vld [vmem:[%s165 + $0xe0] sm:$0xff]
      %v264 = vld [vmem:[%s165 + $0xe8] sm:$0xff]
      %v265 = vld [vmem:[%s165 + $0xf0] sm:$0xff]
      %v266 = vld [vmem:[%s165 + $0xf8] sm:$0xff]
      %v267 = vld [vmem:[%s165 + $0x100] sm:$0xff]
      %v268 = vld [vmem:[%s165 + $0x108] sm:$0xff]
      %v269 = vld [vmem:[%s165 + $0x110] sm:$0xff]
      %v270 = vld [vmem:[%s165 + $0x118] sm:$0xff]
      %v271 = vld [vmem:[%s165 + $0x120] sm:$0xff]
      %v272 = vld [vmem:[%s165 + $0x128] sm:$0xff]
      %v273 = vld [vmem:[%s165 + $0x130] sm:$0xff]
      %v274 = vld [vmem:[%s165 + $0x138] sm:$0xff]
      %v275 = vld [vmem:[%s165 + $0x140] sm:$0xff]
      %v276 = vld [vmem:[%s165 + $0x148] sm:$0xff]
      %v277 = vld [vmem:[%s165 + $0x150] sm:$0xff]
      %v278 = vld [vmem:[%s165 + $0x158] sm:$0xff]
      %v279 = vld [vmem:[%s165 + $0x160] sm:$0xff]
      %v280 = vld [vmem:[%s165 + $0x168] sm:$0xff]
      %v281 = vld [vmem:[%s165 + $0x170] sm:$0xff]
      %v282 = vld [vmem:[%s165 + $0x178] sm:$0xff]
      %v283 = vld [vmem:[%s165 + $0x180] sm:$0xff]
      %v284 = vld [vmem:[%s165 + $0x188] sm:$0xff]
      %v285 = vld [vmem:[%s165 + $0x190] sm:$0xff]
      %v286 = vld [vmem:[%s165 + $0x198] sm:$0xff]
      %v287 = vld [vmem:[%s165 + $0x1a0] sm:$0xff]
      %v288 = vld [vmem:[%s165 + $0x1a8] sm:$0xff]
      %v289 = vld [vmem:[%s165 + $0x1b0] sm:$0xff]
      %v290 = vld [vmem:[%s165 + $0x1b8] sm:$0xff]
      %v291 = vld [vmem:[%s165 + $0x1c0] sm:$0xff]
      %v292 = vld [vmem:[%s165 + $0x1c8] sm:$0xff]
      %v293 = vld [vmem:[%s165 + $0x1d0] sm:$0xff]
      %v294 = vld [vmem:[%s165 + $0x1d8] sm:$0xff]
      %v295 = vld [vmem:[%s165 + $0x1e0] sm:$0xff]
      %v296 = vld [vmem:[%s165 + $0x1e8] sm:$0xff]
      %v297 = vld [vmem:[%s165 + $0x1f0] sm:$0xff]
      %v298 = vld [vmem:[%s165 + $0x1f8] sm:$0xff]
      %v363 = vunpack.c.l.b16 %v171
      %v364 = vunpack.c.h.b16 %v171
      %v365 = vunpack.c.l.b16 %v172
      %v366 = vunpack.c.h.b16 %v172
      %v367 = vunpack.c.l.b16 %v173
      %v368 = vunpack.c.h.b16 %v173
      %v369 = vunpack.c.l.b16 %v174
      %v370 = vunpack.c.h.b16 %v174
      %v371 = vunpack.c.l.b16 %v175
      %v372 = vunpack.c.h.b16 %v175
      %v373 = vunpack.c.l.b16 %v176
      %v374 = vunpack.c.h.b16 %v176
      %v375 = vunpack.c.l.b16 %v177
      %v376 = vunpack.c.h.b16 %v177
      %v377 = vunpack.c.l.b16 %v178
      %v378 = vunpack.c.h.b16 %v178
      %v379 = vunpack.c.l.b16 %v179
      %v380 = vunpack.c.h.b16 %v179
      %v381 = vunpack.c.l.b16 %v180
      %v382 = vunpack.c.h.b16 %v180
      %v383 = vunpack.c.l.b16 %v181
      %v384 = vunpack.c.h.b16 %v181
      %v385 = vunpack.c.l.b16 %v182
      %v386 = vunpack.c.h.b16 %v182
      %v387 = vunpack.c.l.b16 %v183
      %v388 = vunpack.c.h.b16 %v183
      %v389 = vunpack.c.l.b16 %v184
      %v390 = vunpack.c.h.b16 %v184
      %v391 = vunpack.c.l.b16 %v185
      %v392 = vunpack.c.h.b16 %v185
      %v393 = vunpack.c.l.b16 %v186
      %v394 = vunpack.c.h.b16 %v186
      %v395 = vunpack.c.l.b16 %v187
      %v396 = vunpack.c.h.b16 %v187
      %v397 = vunpack.c.l.b16 %v188
      %v398 = vunpack.c.h.b16 %v188
      %v399 = vunpack.c.l.b16 %v189
      %v400 = vunpack.c.h.b16 %v189
      %v401 = vunpack.c.l.b16 %v190
      %v402 = vunpack.c.h.b16 %v190
      %v403 = vunpack.c.l.b16 %v191
      %v404 = vunpack.c.h.b16 %v191
      %v405 = vunpack.c.l.b16 %v192
      %v406 = vunpack.c.h.b16 %v192
      %v407 = vunpack.c.l.b16 %v193
      %v408 = vunpack.c.h.b16 %v193
      %v409 = vunpack.c.l.b16 %v194
      %v410 = vunpack.c.h.b16 %v194
      %v411 = vunpack.c.l.b16 %v195
      %v412 = vunpack.c.h.b16 %v195
      %v413 = vunpack.c.l.b16 %v196
      %v414 = vunpack.c.h.b16 %v196
      %v415 = vunpack.c.l.b16 %v197
      %v416 = vunpack.c.h.b16 %v197
      %v417 = vunpack.c.l.b16 %v198
      %v418 = vunpack.c.h.b16 %v198
      %v419 = vunpack.c.l.b16 %v199
      %v420 = vunpack.c.h.b16 %v199
      %v421 = vunpack.c.l.b16 %v200
      %v422 = vunpack.c.h.b16 %v200
      %v423 = vunpack.c.l.b16 %v201
      %v424 = vunpack.c.h.b16 %v201
      %v425 = vunpack.c.l.b16 %v202
      %v426 = vunpack.c.h.b16 %v202
      %v427 = vunpack.c.l.b16 %v203
      %v428 = vunpack.c.h.b16 %v203
      %v429 = vunpack.c.l.b16 %v204
      %v430 = vunpack.c.h.b16 %v204
      %v431 = vunpack.c.l.b16 %v205
      %v432 = vunpack.c.h.b16 %v205
      %v433 = vunpack.c.l.b16 %v206
      %v434 = vunpack.c.h.b16 %v206
      %v435 = vunpack.c.l.b16 %v207
      %v436 = vunpack.c.h.b16 %v207
      %v437 = vunpack.c.l.b16 %v208
      %v438 = vunpack.c.h.b16 %v208
      %v439 = vunpack.c.l.b16 %v209
      %v440 = vunpack.c.h.b16 %v209
      %v441 = vunpack.c.l.b16 %v210
      %v442 = vunpack.c.h.b16 %v210
      %v443 = vunpack.c.l.b16 %v211
      %v444 = vunpack.c.h.b16 %v211
      %v445 = vunpack.c.l.b16 %v212
      %v446 = vunpack.c.h.b16 %v212
      %v447 = vunpack.c.l.b16 %v213
      %v448 = vunpack.c.h.b16 %v213
      %v449 = vunpack.c.l.b16 %v214
      %v450 = vunpack.c.h.b16 %v214
      %v451 = vunpack.c.l.b16 %v215
      %v452 = vunpack.c.h.b16 %v215
      %v453 = vunpack.c.l.b16 %v216
      %v454 = vunpack.c.h.b16 %v216
      %v455 = vunpack.c.l.b16 %v217
      %v456 = vunpack.c.h.b16 %v217
      %v457 = vunpack.c.l.b16 %v218
      %v458 = vunpack.c.h.b16 %v218
      %v459 = vunpack.c.l.b16 %v219
      %v460 = vunpack.c.h.b16 %v219
      %v461 = vunpack.c.l.b16 %v220
      %v462 = vunpack.c.h.b16 %v220
      %v463 = vunpack.c.l.b16 %v221
      %v464 = vunpack.c.h.b16 %v221
      %v465 = vunpack.c.l.b16 %v222
      %v466 = vunpack.c.h.b16 %v222
      %v467 = vunpack.c.l.b16 %v223
      %v468 = vunpack.c.h.b16 %v223
      %v469 = vunpack.c.l.b16 %v224
      %v470 = vunpack.c.h.b16 %v224
      %v471 = vunpack.c.l.b16 %v225
      %v472 = vunpack.c.h.b16 %v225
      %v473 = vunpack.c.l.b16 %v226
      %v474 = vunpack.c.h.b16 %v226
      %v475 = vunpack.c.l.b16 %v227
      %v476 = vunpack.c.h.b16 %v227
      %v477 = vunpack.c.l.b16 %v228
      %v478 = vunpack.c.h.b16 %v228
      %v479 = vunpack.c.l.b16 %v229
      %v480 = vunpack.c.h.b16 %v229
      %v481 = vunpack.c.l.b16 %v230
      %v482 = vunpack.c.h.b16 %v230
      %v483 = vunpack.c.l.b16 %v231
      %v484 = vunpack.c.h.b16 %v231
      %v485 = vunpack.c.l.b16 %v232
      %v486 = vunpack.c.h.b16 %v232
      %v487 = vunpack.c.l.b16 %v233
      %v488 = vunpack.c.h.b16 %v233
      %v489 = vunpack.c.l.b16 %v234
      %v490 = vunpack.c.h.b16 %v234
      %v491 = vpack.c.b16 %v367, %v363
      %v492 = vpack.c.b16 %v368, %v364
      %v493 = vpack.c.b16 %v369, %v365
      %v494 = vpack.c.b16 %v370, %v366
      %v495 = vpack.c.b16 %v375, %v371
      %v496 = vpack.c.b16 %v376, %v372
      %v497 = vpack.c.b16 %v377, %v373
      %v498 = vpack.c.b16 %v378, %v374
      %v499 = vpack.c.b16 %v383, %v379
      %v500 = vpack.c.b16 %v384, %v380
      %v501 = vpack.c.b16 %v385, %v381
      %v502 = vpack.c.b16 %v386, %v382
      %v503 = vpack.c.b16 %v391, %v387
      %v504 = vpack.c.b16 %v392, %v388
      %v505 = vpack.c.b16 %v393, %v389
      %v506 = vpack.c.b16 %v394, %v390
      %v507 = vpack.c.b16 %v399, %v395
      %v508 = vpack.c.b16 %v400, %v396
      %v509 = vpack.c.b16 %v401, %v397
      %v510 = vpack.c.b16 %v402, %v398
      %v511 = vpack.c.b16 %v407, %v403
      %v512 = vpack.c.b16 %v408, %v404
      %v513 = vpack.c.b16 %v409, %v405
      %v514 = vpack.c.b16 %v410, %v406
      %v515 = vpack.c.b16 %v415, %v411
      %v516 = vpack.c.b16 %v416, %v412
      %v517 = vpack.c.b16 %v417, %v413
      %v518 = vpack.c.b16 %v418, %v414
      %v519 = vpack.c.b16 %v423, %v419
      %v520 = vpack.c.b16 %v424, %v420
      %v521 = vpack.c.b16 %v425, %v421
      %v522 = vpack.c.b16 %v426, %v422
      %v523 = vpack.c.b16 %v431, %v427
      %v524 = vpack.c.b16 %v432, %v428
      %v525 = vpack.c.b16 %v433, %v429
      %v526 = vpack.c.b16 %v434, %v430
      %v527 = vpack.c.b16 %v439, %v435
      %v528 = vpack.c.b16 %v440, %v436
      %v529 = vpack.c.b16 %v441, %v437
      %v530 = vpack.c.b16 %v442, %v438
      %v531 = vpack.c.b16 %v447, %v443
      %v532 = vpack.c.b16 %v448, %v444
      %v533 = vpack.c.b16 %v449, %v445
      %v534 = vpack.c.b16 %v450, %v446
      %v535 = vpack.c.b16 %v455, %v451
      %v536 = vpack.c.b16 %v456, %v452
      %v537 = vpack.c.b16 %v457, %v453
      %v538 = vpack.c.b16 %v458, %v454
      %v539 = vpack.c.b16 %v463, %v459
      %v540 = vpack.c.b16 %v464, %v460
      %v541 = vpack.c.b16 %v465, %v461
      %v542 = vpack.c.b16 %v466, %v462
      %v543 = vpack.c.b16 %v471, %v467
      %v544 = vpack.c.b16 %v472, %v468
      %v545 = vpack.c.b16 %v473, %v469
      %v546 = vpack.c.b16 %v474, %v470
      %v547 = vpack.c.b16 %v479, %v475
      %v548 = vpack.c.b16 %v480, %v476
      %v549 = vpack.c.b16 %v481, %v477
      %v550 = vpack.c.b16 %v482, %v478
      %v551 = vpack.c.b16 %v487, %v483
      %v552 = vpack.c.b16 %v488, %v484
      %v553 = vpack.c.b16 %v489, %v485
      %v554 = vpack.c.b16 %v490, %v486
      %v683 = vunpack.c.l.b16 %v235
      %v684 = vunpack.c.h.b16 %v235
      %v685 = vunpack.c.l.b16 %v236
      %v686 = vunpack.c.h.b16 %v236
      %v687 = vunpack.c.l.b16 %v237
      %v688 = vunpack.c.h.b16 %v237
      %v689 = vunpack.c.l.b16 %v238
      %v690 = vunpack.c.h.b16 %v238
      %v691 = vunpack.c.l.b16 %v239
      %v692 = vunpack.c.h.b16 %v239
      %v693 = vunpack.c.l.b16 %v240
      %v694 = vunpack.c.h.b16 %v240
      %v695 = vunpack.c.l.b16 %v241
      %v696 = vunpack.c.h.b16 %v241
      %v697 = vunpack.c.l.b16 %v242
      %v698 = vunpack.c.h.b16 %v242
      %v699 = vunpack.c.l.b16 %v243
      %v700 = vunpack.c.h.b16 %v243
      %v701 = vunpack.c.l.b16 %v244
      %v702 = vunpack.c.h.b16 %v244
      %v703 = vunpack.c.l.b16 %v245
      %v704 = vunpack.c.h.b16 %v245
      %v705 = vunpack.c.l.b16 %v246
      %v706 = vunpack.c.h.b16 %v246
      %v707 = vunpack.c.l.b16 %v247
      %v708 = vunpack.c.h.b16 %v247
      %v709 = vunpack.c.l.b16 %v248
      %v710 = vunpack.c.h.b16 %v248
      %v711 = vunpack.c.l.b16 %v249
      %v712 = vunpack.c.h.b16 %v249
      %v713 = vunpack.c.l.b16 %v250
      %v714 = vunpack.c.h.b16 %v250
      %v715 = vunpack.c.l.b16 %v251
      %v716 = vunpack.c.h.b16 %v251
      %v717 = vunpack.c.l.b16 %v252
      %v718 = vunpack.c.h.b16 %v252
      %v719 = vunpack.c.l.b16 %v253
      %v720 = vunpack.c.h.b16 %v253
      %v721 = vunpack.c.l.b16 %v254
      %v722 = vunpack.c.h.b16 %v254
      %v723 = vunpack.c.l.b16 %v255
      %v724 = vunpack.c.h.b16 %v255
      %v725 = vunpack.c.l.b16 %v256
      %v726 = vunpack.c.h.b16 %v256
      %v727 = vunpack.c.l.b16 %v257
      %v728 = vunpack.c.h.b16 %v257
      %v729 = vunpack.c.l.b16 %v258
      %v730 = vunpack.c.h.b16 %v258
      %v731 = vunpack.c.l.b16 %v259
      %v732 = vunpack.c.h.b16 %v259
      %v733 = vunpack.c.l.b16 %v260
      %v734 = vunpack.c.h.b16 %v260
      %v735 = vunpack.c.l.b16 %v261
      %v736 = vunpack.c.h.b16 %v261
      %v737 = vunpack.c.l.b16 %v262
      %v738 = vunpack.c.h.b16 %v262
      %v739 = vunpack.c.l.b16 %v263
      %v740 = vunpack.c.h.b16 %v263
      %v741 = vunpack.c.l.b16 %v264
      %v742 = vunpack.c.h.b16 %v264
      %v743 = vunpack.c.l.b16 %v265
      %v744 = vunpack.c.h.b16 %v265
      %v745 = vunpack.c.l.b16 %v266
      %v746 = vunpack.c.h.b16 %v266
      %v747 = vunpack.c.l.b16 %v267
      %v748 = vunpack.c.h.b16 %v267
      %v749 = vunpack.c.l.b16 %v268
      %v750 = vunpack.c.h.b16 %v268
      %v751 = vunpack.c.l.b16 %v269
      %v752 = vunpack.c.h.b16 %v269
      %v753 = vunpack.c.l.b16 %v270
      %v754 = vunpack.c.h.b16 %v270
      %v755 = vunpack.c.l.b16 %v271
      %v756 = vunpack.c.h.b16 %v271
      %v757 = vunpack.c.l.b16 %v272
      %v758 = vunpack.c.h.b16 %v272
      %v759 = vunpack.c.l.b16 %v273
      %v760 = vunpack.c.h.b16 %v273
      %v761 = vunpack.c.l.b16 %v274
      %v762 = vunpack.c.h.b16 %v274
      %v763 = vunpack.c.l.b16 %v275
      %v764 = vunpack.c.h.b16 %v275
      %v765 = vunpack.c.l.b16 %v276
      %v766 = vunpack.c.h.b16 %v276
      %v767 = vunpack.c.l.b16 %v277
      %v768 = vunpack.c.h.b16 %v277
      %v769 = vunpack.c.l.b16 %v278
      %v770 = vunpack.c.h.b16 %v278
      %v771 = vunpack.c.l.b16 %v279
      %v772 = vunpack.c.h.b16 %v279
      %v773 = vunpack.c.l.b16 %v280
      %v774 = vunpack.c.h.b16 %v280
      %v775 = vunpack.c.l.b16 %v281
      %v776 = vunpack.c.h.b16 %v281
      %v777 = vunpack.c.l.b16 %v282
      %v778 = vunpack.c.h.b16 %v282
      %v779 = vunpack.c.l.b16 %v283
      %v780 = vunpack.c.h.b16 %v283
      %v781 = vunpack.c.l.b16 %v284
      %v782 = vunpack.c.h.b16 %v284
      %v783 = vunpack.c.l.b16 %v285
      %v784 = vunpack.c.h.b16 %v285
      %v785 = vunpack.c.l.b16 %v286
      %v786 = vunpack.c.h.b16 %v286
      %v787 = vunpack.c.l.b16 %v287
      %v788 = vunpack.c.h.b16 %v287
      %v789 = vunpack.c.l.b16 %v288
      %v790 = vunpack.c.h.b16 %v288
      %v791 = vunpack.c.l.b16 %v289
      %v792 = vunpack.c.h.b16 %v289
      %v793 = vunpack.c.l.b16 %v290
      %v794 = vunpack.c.h.b16 %v290
      %v795 = vunpack.c.l.b16 %v291
      %v796 = vunpack.c.h.b16 %v291
      %v797 = vunpack.c.l.b16 %v292
      %v798 = vunpack.c.h.b16 %v292
      %v799 = vunpack.c.l.b16 %v293
      %v800 = vunpack.c.h.b16 %v293
      %v801 = vunpack.c.l.b16 %v294
      %v802 = vunpack.c.h.b16 %v294
      %v803 = vunpack.c.l.b16 %v295
      %v804 = vunpack.c.h.b16 %v295
      %v805 = vunpack.c.l.b16 %v296
      %v806 = vunpack.c.h.b16 %v296
      %v807 = vunpack.c.l.b16 %v297
      %v808 = vunpack.c.h.b16 %v297
      %v809 = vunpack.c.l.b16 %v298
      %v810 = vunpack.c.h.b16 %v298
      %v811 = vpack.c.b16 %v685, %v683
      %v812 = vpack.c.b16 %v686, %v684
      %v813 = vpack.c.b16 %v689, %v687
      %v814 = vpack.c.b16 %v690, %v688
      %v815 = vpack.c.b16 %v693, %v691
      %v816 = vpack.c.b16 %v694, %v692
      %v817 = vpack.c.b16 %v697, %v695
      %v818 = vpack.c.b16 %v698, %v696
      %v819 = vpack.c.b16 %v701, %v699
      %v820 = vpack.c.b16 %v702, %v700
      %v821 = vpack.c.b16 %v705, %v703
      %v822 = vpack.c.b16 %v706, %v704
      %v823 = vpack.c.b16 %v709, %v707
      %v824 = vpack.c.b16 %v710, %v708
      %v825 = vpack.c.b16 %v713, %v711
      %v826 = vpack.c.b16 %v714, %v712
      %v827 = vpack.c.b16 %v717, %v715
      %v828 = vpack.c.b16 %v718, %v716
      %v829 = vpack.c.b16 %v721, %v719
      %v830 = vpack.c.b16 %v722, %v720
      %v831 = vpack.c.b16 %v725, %v723
      %v832 = vpack.c.b16 %v726, %v724
      %v833 = vpack.c.b16 %v729, %v727
      %v834 = vpack.c.b16 %v730, %v728
      %v835 = vpack.c.b16 %v733, %v731
      %v836 = vpack.c.b16 %v734, %v732
      %v837 = vpack.c.b16 %v737, %v735
      %v838 = vpack.c.b16 %v738, %v736
      %v839 = vpack.c.b16 %v741, %v739
      %v840 = vpack.c.b16 %v742, %v740
      %v841 = vpack.c.b16 %v745, %v743
      %v842 = vpack.c.b16 %v746, %v744
      %v843 = vpack.c.b16 %v749, %v747
      %v844 = vpack.c.b16 %v750, %v748
      %v845 = vpack.c.b16 %v753, %v751
      %v846 = vpack.c.b16 %v754, %v752
      %v847 = vpack.c.b16 %v757, %v755
      %v848 = vpack.c.b16 %v758, %v756
      %v849 = vpack.c.b16 %v761, %v759
      %v850 = vpack.c.b16 %v762, %v760
      %v851 = vpack.c.b16 %v765, %v763
      %v852 = vpack.c.b16 %v766, %v764
      %v853 = vpack.c.b16 %v769, %v767
      %v854 = vpack.c.b16 %v770, %v768
      %v855 = vpack.c.b16 %v773, %v771
      %v856 = vpack.c.b16 %v774, %v772
      %v857 = vpack.c.b16 %v777, %v775
      %v858 = vpack.c.b16 %v778, %v776
      %v859 = vpack.c.b16 %v781, %v779
      %v860 = vpack.c.b16 %v782, %v780
      %v861 = vpack.c.b16 %v785, %v783
      %v862 = vpack.c.b16 %v786, %v784
      %v863 = vpack.c.b16 %v789, %v787
      %v864 = vpack.c.b16 %v790, %v788
      %v865 = vpack.c.b16 %v793, %v791
      %v866 = vpack.c.b16 %v794, %v792
      %v867 = vpack.c.b16 %v797, %v795
      %v868 = vpack.c.b16 %v798, %v796
      %v869 = vpack.c.b16 %v801, %v799
      %v870 = vpack.c.b16 %v802, %v800
      %v871 = vpack.c.b16 %v805, %v803
      %v872 = vpack.c.b16 %v806, %v804
      %v873 = vpack.c.b16 %v809, %v807
      %v874 = vpack.c.b16 %v810, %v808
      %939 = vmatprep.subr.bf16.mxu0 %v812
      %940 = vmatpush1.bf16.msra.mxu0 %v811
      %941 = vmatprep.subr.bf16.mxu0 %v814
      %942 = vmatpush1.bf16.msra.mxu0 %v813
      %943 = vmatprep.subr.bf16.mxu0 %v816
      %944 = vmatpush1.bf16.msra.mxu0 %v815
      %945 = vmatprep.subr.bf16.mxu0 %v818
      %946 = vmatpush1.bf16.msra.mxu0 %v817
      %947 = vmatprep.subr.bf16.mxu0 %v820
      %948 = vmatpush1.bf16.msra.mxu0 %v819
      %949 = vmatprep.subr.bf16.mxu0 %v822
      %950 = vmatpush1.bf16.msra.mxu0 %v821
      %951 = vmatprep.subr.bf16.mxu0 %v824
      %952 = vmatpush1.bf16.msra.mxu0 %v823
      %953 = vmatprep.subr.bf16.mxu0 %v826
      %954 = vmatpush1.bf16.msra.mxu0 %v825
      %955 = vmatprep.subr.bf16.mxu0 %v828
      %956 = vmatpush1.bf16.msra.mxu0 %v827
      %957 = vmatprep.subr.bf16.mxu0 %v830
      %958 = vmatpush1.bf16.msra.mxu0 %v829
      %959 = vmatprep.subr.bf16.mxu0 %v832
      %960 = vmatpush1.bf16.msra.mxu0 %v831
      %961 = vmatprep.subr.bf16.mxu0 %v834
      %962 = vmatpush1.bf16.msra.mxu0 %v833
      %963 = vmatprep.subr.bf16.mxu0 %v836
      %964 = vmatpush1.bf16.msra.mxu0 %v835
      %965 = vmatprep.subr.bf16.mxu0 %v838
      %966 = vmatpush1.bf16.msra.mxu0 %v837
      %967 = vmatprep.subr.bf16.mxu0 %v840
      %968 = vmatpush1.bf16.msra.mxu0 %v839
      %969 = vmatprep.subr.bf16.mxu0 %v842
      %970 = vmatpush1.bf16.msra.mxu0 %v841
      %971 = vmatprep.mubr.bf16.mxu0 %v492
      %972 = vmatmul.mubr.bf16.gmra.mrb[0].mxu0 %v491
      %v973 = vpop.f32.mrb[0].mxu0
      %v974 = vadd.f32 0.0, %v973
      %v975 = vpop.f32.mrb[0].mxu0
      %v976 = vadd.f32 0.0, %v975
      %v977 = vpop.f32.mrb[0].mxu0
      %v978 = vadd.f32 0.0, %v977
      %v979 = vpop.f32.mrb[0].mxu0
      %v980 = vadd.f32 0.0, %v979
      %981 = vmatprep.mubr.bf16.mxu0 %v496
      %982 = vmatmul.mubr.bf16.gmra.mrb[0].mxu0 %v495
      %v983 = vpop.f32.mrb[0].mxu0
      %v984 = vadd.f32 0.0, %v983
      %v985 = vpop.f32.mrb[0].mxu0
      %v986 = vadd.f32 0.0, %v985
      %v987 = vpop.f32.mrb[0].mxu0
      %v988 = vadd.f32 0.0, %v987
      %v989 = vpop.f32.mrb[0].mxu0
      %v990 = vadd.f32 0.0, %v989
      %991 = vmatprep.mubr.bf16.mxu0 %v500
      %992 = vmatmul.mubr.bf16.gmra.mrb[0].mxu0 %v499
      %v993 = vpop.f32.mrb[0].mxu0
      %v994 = vadd.f32 0.0, %v993
      %v995 = vpop.f32.mrb[0].mxu0
      %v996 = vadd.f32 0.0, %v995
      %v997 = vpop.f32.mrb[0].mxu0
      %v998 = vadd.f32 0.0, %v997
      %v999 = vpop.f32.mrb[0].mxu0
      %v1000 = vadd.f32 0.0, %v999
      %1001 = vmatprep.mubr.bf16.mxu0 %v504
      %1002 = vmatmul.mubr.bf16.gmra.mrb[0].mxu0 %v503
      %v1003 = vpop.f32.mrb[0].mxu0
      %v1004 = vadd.f32 0.0, %v1003
      %v1005 = vpop.f32.mrb[0].mxu0
      %v1006 = vadd.f32 0.0, %v1005
      %v1007 = vpop.f32.mrb[0].mxu0
      %v1008 = vadd.f32 0.0, %v1007
      %v1009 = vpop.f32.mrb[0].mxu0
      %v1010 = vadd.f32 0.0, %v1009
      %1011 = vmatprep.mubr.bf16.mxu0 %v508
      %1012 = vmatmul.mubr.bf16.gmra.mrb[0].mxu0 %v507
      %v1013 = vpop.f32.mrb[0].mxu0
      %v1014 = vadd.f32 0.0, %v1013
      %v1015 = vpop.f32.mrb[0].mxu0
      %v1016 = vadd.f32 0.0, %v1015
      %v1017 = vpop.f32.mrb[0].mxu0
      %v1018 = vadd.f32 0.0, %v1017
      %v1019 = vpop.f32.mrb[0].mxu0
      %v1020 = vadd.f32 0.0, %v1019
      %1021 = vmatprep.mubr.bf16.mxu0 %v512
      %1022 = vmatmul.mubr.bf16.gmra.mrb[0].mxu0 %v511
      %v1023 = vpop.f32.mrb[0].mxu0
      %v1024 = vadd.f32 0.0, %v1023
      %v1025 = vpop.f32.mrb[0].mxu0
      %v1026 = vadd.f32 0.0, %v1025
      %v1027 = vpop.f32.mrb[0].mxu0
      %v1028 = vadd.f32 0.0, %v1027
      %v1029 = vpop.f32.mrb[0].mxu0
      %v1030 = vadd.f32 0.0, %v1029
      %1031 = vmatprep.mubr.bf16.mxu0 %v516
      %1032 = vmatmul.mubr.bf16.gmra.mrb[0].mxu0 %v515
      %v1033 = vpop.f32.mrb[0].mxu0
      %v1034 = vadd.f32 0.0, %v1033
      %v1035 = vpop.f32.mrb[0].mxu0
      %v1036 = vadd.f32 0.0, %v1035
      %v1037 = vpop.f32.mrb[0].mxu0
      %v1038 = vadd.f32 0.0, %v1037
      %v1039 = vpop.f32.mrb[0].mxu0
      %v1040 = vadd.f32 0.0, %v1039
      %1041 = vmatprep.mubr.bf16.mxu0 %v520
      %1042 = vmatmul.mubr.bf16.gmra.mrb[0].mxu0 %v519
      %v1043 = vpop.f32.mrb[0].mxu0
      %v1044 = vadd.f32 0.0, %v1043
      %v1045 = vpop.f32.mrb[0].mxu0
      %v1046 = vadd.f32 0.0, %v1045
      %v1047 = vpop.f32.mrb[0].mxu0
      %v1048 = vadd.f32 0.0, %v1047
      %v1049 = vpop.f32.mrb[0].mxu0
      %v1050 = vadd.f32 0.0, %v1049
      %1051 = vmatprep.mubr.bf16.mxu0 %v524
      %1052 = vmatmul.mubr.bf16.gmra.mrb[0].mxu0 %v523
      %v1053 = vpop.f32.mrb[0].mxu0
      %v1054 = vadd.f32 0.0, %v1053
      %v1055 = vpop.f32.mrb[0].mxu0
      %v1056 = vadd.f32 0.0, %v1055
      %v1057 = vpop.f32.mrb[0].mxu0
      %v1058 = vadd.f32 0.0, %v1057
      %v1059 = vpop.f32.mrb[0].mxu0
      %v1060 = vadd.f32 0.0, %v1059
      %1061 = vmatprep.mubr.bf16.mxu0 %v528
      %1062 = vmatmul.mubr.bf16.gmra.mrb[0].mxu0 %v527
      %v1063 = vpop.f32.mrb[0].mxu0
      %v1064 = vadd.f32 0.0, %v1063
      %v1065 = vpop.f32.mrb[0].mxu0
      %v1066 = vadd.f32 0.0, %v1065
      %v1067 = vpop.f32.mrb[0].mxu0
      %v1068 = vadd.f32 0.0, %v1067
      %v1069 = vpop.f32.mrb[0].mxu0
      %v1070 = vadd.f32 0.0, %v1069
      %1071 = vmatprep.mubr.bf16.mxu0 %v532
      %1072 = vmatmul.mubr.bf16.gmra.mrb[0].mxu0 %v531
      %v1073 = vpop.f32.mrb[0].mxu0
      %v1074 = vadd.f32 0.0, %v1073
      %v1075 = vpop.f32.mrb[0].mxu0
      %v1076 = vadd.f32 0.0, %v1075
      %v1077 = vpop.f32.mrb[0].mxu0
      %v1078 = vadd.f32 0.0, %v1077
      %v1079 = vpop.f32.mrb[0].mxu0
      %v1080 = vadd.f32 0.0, %v1079
      %1081 = vmatprep.mubr.bf16.mxu0 %v536
      %1082 = vmatmul.mubr.bf16.gmra.mrb[0].mxu0 %v535
      %v1083 = vpop.f32.mrb[0].mxu0
      %v1084 = vadd.f32 0.0, %v1083
      %v1085 = vpop.f32.mrb[0].mxu0
      %v1086 = vadd.f32 0.0, %v1085
      %v1087 = vpop.f32.mrb[0].mxu0
      %v1088 = vadd.f32 0.0, %v1087
      %v1089 = vpop.f32.mrb[0].mxu0
      %v1090 = vadd.f32 0.0, %v1089
      %1091 = vmatprep.mubr.bf16.mxu0 %v540
      %1092 = vmatmul.mubr.bf16.gmra.mrb[0].mxu0 %v539
      %v1093 = vpop.f32.mrb[0].mxu0
      %v1094 = vadd.f32 0.0, %v1093
      %v1095 = vpop.f32.mrb[0].mxu0
      %v1096 = vadd.f32 0.0, %v1095
      %v1097 = vpop.f32.mrb[0].mxu0
      %v1098 = vadd.f32 0.0, %v1097
      %v1099 = vpop.f32.mrb[0].mxu0
      %v1100 = vadd.f32 0.0, %v1099
      %1101 = vmatprep.mubr.bf16.mxu0 %v544
      %1102 = vmatmul.mubr.bf16.gmra.mrb[0].mxu0 %v543
      %v1103 = vpop.f32.mrb[0].mxu0
      %v1104 = vadd.f32 0.0, %v1103
      %v1105 = vpop.f32.mrb[0].mxu0
      %v1106 = vadd.f32 0.0, %v1105
      %v1107 = vpop.f32.mrb[0].mxu0
      %v1108 = vadd.f32 0.0, %v1107
      %v1109 = vpop.f32.mrb[0].mxu0
      %v1110 = vadd.f32 0.0, %v1109
      %1111 = vmatprep.mubr.bf16.mxu0 %v548
      %1112 = vmatmul.mubr.bf16.gmra.mrb[0].mxu0 %v547
      %v1113 = vpop.f32.mrb[0].mxu0
      %v1114 = vadd.f32 0.0, %v1113
      %v1115 = vpop.f32.mrb[0].mxu0
      %v1116 = vadd.f32 0.0, %v1115
      %v1117 = vpop.f32.mrb[0].mxu0
      %v1118 = vadd.f32 0.0, %v1117
      %v1119 = vpop.f32.mrb[0].mxu0
      %v1120 = vadd.f32 0.0, %v1119
      %1121 = vmatprep.mubr.bf16.mxu0 %v552
      %1122 = vmatmul.mubr.bf16.gmra.mrb[0].mxu0 %v551
      %v1123 = vpop.f32.mrb[0].mxu0
      %v1124 = vadd.f32 0.0, %v1123
      %v1125 = vpop.f32.mrb[0].mxu0
      %v1126 = vadd.f32 0.0, %v1125
      %v1127 = vpop.f32.mrb[0].mxu0
      %v1128 = vadd.f32 0.0, %v1127
      %v1129 = vpop.f32.mrb[0].mxu0
      %v1130 = vadd.f32 0.0, %v1129
      %1131 = vdwg.mxu0
      %1132 = vmatprep.subr.bf16.mxu0 %v844
      %1133 = vmatpush1.bf16.msra.mxu0 %v843
      %1134 = vmatprep.subr.bf16.mxu0 %v846
      %1135 = vmatpush1.bf16.msra.mxu0 %v845
      %1136 = vmatprep.subr.bf16.mxu0 %v848
      %1137 = vmatpush1.bf16.msra.mxu0 %v847
      %1138 = vmatprep.subr.bf16.mxu0 %v850
      %1139 = vmatpush1.bf16.msra.mxu0 %v849
      %1140 = vmatprep.subr.bf16.mxu0 %v852
      %1141 = vmatpush1.bf16.msra.mxu0 %v851
      %1142 = vmatprep.subr.bf16.mxu0 %v854
      %1143 = vmatpush1.bf16.msra.mxu0 %v853
      %1144 = vmatprep.subr.bf16.mxu0 %v856
      %1145 = vmatpush1.bf16.msra.mxu0 %v855
      %1146 = vmatprep.subr.bf16.mxu0 %v858
      %1147 = vmatpush1.bf16.msra.mxu0 %v857
      %1148 = vmatprep.subr.bf16.mxu0 %v860
      %1149 = vmatpush1.bf16.msra.mxu0 %v859
      %1150 = vmatprep.subr.bf16.mxu0 %v862
      %1151 = vmatpush1.bf16.msra.mxu0 %v861
      %1152 = vmatprep.subr.bf16.mxu0 %v864
      %1153 = vmatpush1.bf16.msra.mxu0 %v863
      %1154 = vmatprep.subr.bf16.mxu0 %v866
      %1155 = vmatpush1.bf16.msra.mxu0 %v865
      %1156 = vmatprep.subr.bf16.mxu0 %v868
      %1157 = vmatpush1.bf16.msra.mxu0 %v867
      %1158 = vmatprep.subr.bf16.mxu0 %v870
      %1159 = vmatpush1.bf16.msra.mxu0 %v869
      %1160 = vmatprep.subr.bf16.mxu0 %v872
      %1161 = vmatpush1.bf16.msra.mxu0 %v871
      %1162 = vmatprep.subr.bf16.mxu0 %v874
      %1163 = vmatpush1.bf16.msra.mxu0 %v873
      %1164 = vmatprep.mubr.bf16.mxu0 %v494
      %1165 = vmatmul.mubr.bf16.gmra.mrb[0].mxu0 %v493
      %v1166 = vpop.f32.mrb[0].mxu0
      %v1167 = vadd.f32 %v974, %v1166
      %v1168 = vpop.f32.mrb[0].mxu0
      %v1169 = vadd.f32 %v976, %v1168
      %v1170 = vpop.f32.mrb[0].mxu0
      %v1171 = vadd.f32 %v978, %v1170
      %v1172 = vpop.f32.mrb[0].mxu0
      %v1173 = vadd.f32 %v980, %v1172
      %1174 = vmatprep.mubr.bf16.mxu0 %v498
      %1175 = vmatmul.mubr.bf16.gmra.mrb[0].mxu0 %v497
      %v1176 = vpop.f32.mrb[0].mxu0
      %v1177 = vadd.f32 %v984, %v1176
      %v1178 = vpop.f32.mrb[0].mxu0
      %v1179 = vadd.f32 %v986, %v1178
      %v1180 = vpop.f32.mrb[0].mxu0
      %v1181 = vadd.f32 %v988, %v1180
      %v1182 = vpop.f32.mrb[0].mxu0
      %v1183 = vadd.f32 %v990, %v1182
      %1184 = vmatprep.mubr.bf16.mxu0 %v502
      %1185 = vmatmul.mubr.bf16.gmra.mrb[0].mxu0 %v501
      %v1186 = vpop.f32.mrb[0].mxu0
      %v1187 = vadd.f32 %v994, %v1186
      %v1188 = vpop.f32.mrb[0].mxu0
      %v1189 = vadd.f32 %v996, %v1188
      %v1190 = vpop.f32.mrb[0].mxu0
      %v1191 = vadd.f32 %v998, %v1190
      %v1192 = vpop.f32.mrb[0].mxu0
      %v1193 = vadd.f32 %v1000, %v1192
      %1194 = vmatprep.mubr.bf16.mxu0 %v506
      %1195 = vmatmul.mubr.bf16.gmra.mrb[0].mxu0 %v505
      %v1196 = vpop.f32.mrb[0].mxu0
      %v1197 = vadd.f32 %v1004, %v1196
      %v1198 = vpop.f32.mrb[0].mxu0
      %v1199 = vadd.f32 %v1006, %v1198
      %v1200 = vpop.f32.mrb[0].mxu0
      %v1201 = vadd.f32 %v1008, %v1200
      %v1202 = vpop.f32.mrb[0].mxu0
      %v1203 = vadd.f32 %v1010, %v1202
      %1204 = vmatprep.mubr.bf16.mxu0 %v510
      %1205 = vmatmul.mubr.bf16.gmra.mrb[0].mxu0 %v509
      %v1206 = vpop.f32.mrb[0].mxu0
      %v1207 = vadd.f32 %v1014, %v1206
      %v1208 = vpop.f32.mrb[0].mxu0
      %v1209 = vadd.f32 %v1016, %v1208
      %v1210 = vpop.f32.mrb[0].mxu0
      %v1211 = vadd.f32 %v1018, %v1210
      %v1212 = vpop.f32.mrb[0].mxu0
      %v1213 = vadd.f32 %v1020, %v1212
      %1214 = vmatprep.mubr.bf16.mxu0 %v514
      %1215 = vmatmul.mubr.bf16.gmra.mrb[0].mxu0 %v513
      %v1216 = vpop.f32.mrb[0].mxu0
      %v1217 = vadd.f32 %v1024, %v1216
      %v1218 = vpop.f32.mrb[0].mxu0
      %v1219 = vadd.f32 %v1026, %v1218
      %v1220 = vpop.f32.mrb[0].mxu0
      %v1221 = vadd.f32 %v1028, %v1220
      %v1222 = vpop.f32.mrb[0].mxu0
      %v1223 = vadd.f32 %v1030, %v1222
      %1224 = vmatprep.mubr.bf16.mxu0 %v518
      %1225 = vmatmul.mubr.bf16.gmra.mrb[0].mxu0 %v517
      %v1226 = vpop.f32.mrb[0].mxu0
      %v1227 = vadd.f32 %v1034, %v1226
      %v1228 = vpop.f32.mrb[0].mxu0
      %v1229 = vadd.f32 %v1036, %v1228
      %v1230 = vpop.f32.mrb[0].mxu0
      %v1231 = vadd.f32 %v1038, %v1230
      %v1232 = vpop.f32.mrb[0].mxu0
      %v1233 = vadd.f32 %v1040, %v1232
      %1234 = vmatprep.mubr.bf16.mxu0 %v522
      %1235 = vmatmul.mubr.bf16.gmra.mrb[0].mxu0 %v521
      %v1236 = vpop.f32.mrb[0].mxu0
      %v1237 = vadd.f32 %v1044, %v1236
      %v1238 = vpop.f32.mrb[0].mxu0
      %v1239 = vadd.f32 %v1046, %v1238
      %v1240 = vpop.f32.mrb[0].mxu0
      %v1241 = vadd.f32 %v1048, %v1240
      %v1242 = vpop.f32.mrb[0].mxu0
      %v1243 = vadd.f32 %v1050, %v1242
      %1244 = vmatprep.mubr.bf16.mxu0 %v526
      %1245 = vmatmul.mubr.bf16.gmra.mrb[0].mxu0 %v525
      %v1246 = vpop.f32.mrb[0].mxu0
      %v1247 = vadd.f32 %v1054, %v1246
      %v1248 = vpop.f32.mrb[0].mxu0
      %v1249 = vadd.f32 %v1056, %v1248
      %v1250 = vpop.f32.mrb[0].mxu0
      %v1251 = vadd.f32 %v1058, %v1250
      %v1252 = vpop.f32.mrb[0].mxu0
      %v1253 = vadd.f32 %v1060, %v1252
      %1254 = vmatprep.mubr.bf16.mxu0 %v530
      %1255 = vmatmul.mubr.bf16.gmra.mrb[0].mxu0 %v529
      %v1256 = vpop.f32.mrb[0].mxu0
      %v1257 = vadd.f32 %v1064, %v1256
      %v1258 = vpop.f32.mrb[0].mxu0
      %v1259 = vadd.f32 %v1066, %v1258
      %v1260 = vpop.f32.mrb[0].mxu0
      %v1261 = vadd.f32 %v1068, %v1260
      %v1262 = vpop.f32.mrb[0].mxu0
      %v1263 = vadd.f32 %v1070, %v1262
      %1264 = vmatprep.mubr.bf16.mxu0 %v534
      %1265 = vmatmul.mubr.bf16.gmra.mrb[0].mxu0 %v533
      %v1266 = vpop.f32.mrb[0].mxu0
      %v1267 = vadd.f32 %v1074, %v1266
      %v1268 = vpop.f32.mrb[0].mxu0
      %v1269 = vadd.f32 %v1076, %v1268
      %v1270 = vpop.f32.mrb[0].mxu0
      %v1271 = vadd.f32 %v1078, %v1270
      %v1272 = vpop.f32.mrb[0].mxu0
      %v1273 = vadd.f32 %v1080, %v1272
      %1274 = vmatprep.mubr.bf16.mxu0 %v538
      %1275 = vmatmul.mubr.bf16.gmra.mrb[0].mxu0 %v537
      %v1276 = vpop.f32.mrb[0].mxu0
      %v1277 = vadd.f32 %v1084, %v1276
      %v1278 = vpop.f32.mrb[0].mxu0
      %v1279 = vadd.f32 %v1086, %v1278
      %v1280 = vpop.f32.mrb[0].mxu0
      %v1281 = vadd.f32 %v1088, %v1280
      %v1282 = vpop.f32.mrb[0].mxu0
      %v1283 = vadd.f32 %v1090, %v1282
      %1284 = vmatprep.mubr.bf16.mxu0 %v542
      %1285 = vmatmul.mubr.bf16.gmra.mrb[0].mxu0 %v541
      %v1286 = vpop.f32.mrb[0].mxu0
      %v1287 = vadd.f32 %v1094, %v1286
      %v1288 = vpop.f32.mrb[0].mxu0
      %v1289 = vadd.f32 %v1096, %v1288
      %v1290 = vpop.f32.mrb[0].mxu0
      %v1291 = vadd.f32 %v1098, %v1290
      %v1292 = vpop.f32.mrb[0].mxu0
      %v1293 = vadd.f32 %v1100, %v1292
      %1294 = vmatprep.mubr.bf16.mxu0 %v546
      %1295 = vmatmul.mubr.bf16.gmra.mrb[0].mxu0 %v545
      %v1296 = vpop.f32.mrb[0].mxu0
      %v1297 = vadd.f32 %v1104, %v1296
      %v1298 = vpop.f32.mrb[0].mxu0
      %v1299 = vadd.f32 %v1106, %v1298
      %v1300 = vpop.f32.mrb[0].mxu0
      %v1301 = vadd.f32 %v1108, %v1300
      %v1302 = vpop.f32.mrb[0].mxu0
      %v1303 = vadd.f32 %v1110, %v1302
      %1304 = vmatprep.mubr.bf16.mxu0 %v550
      %1305 = vmatmul.mubr.bf16.gmra.mrb[0].mxu0 %v549
      %v1306 = vpop.f32.mrb[0].mxu0
      %v1307 = vadd.f32 %v1114, %v1306
      %v1308 = vpop.f32.mrb[0].mxu0
      %v1309 = vadd.f32 %v1116, %v1308
      %v1310 = vpop.f32.mrb[0].mxu0
      %v1311 = vadd.f32 %v1118, %v1310
      %v1312 = vpop.f32.mrb[0].mxu0
      %v1313 = vadd.f32 %v1120, %v1312
      %1314 = vmatprep.mubr.bf16.mxu0 %v554
      %1315 = vmatmul.mubr.bf16.gmra.mrb[0].mxu0 %v553
      %v1316 = vpop.f32.mrb[0].mxu0
      %v1317 = vadd.f32 %v1124, %v1316
      %v1318 = vpop.f32.mrb[0].mxu0
      %v1319 = vadd.f32 %v1126, %v1318
      %v1320 = vpop.f32.mrb[0].mxu0
      %v1321 = vadd.f32 %v1128, %v1320
      %v1322 = vpop.f32.mrb[0].mxu0
      %v1323 = vadd.f32 %v1130, %v1322
      %1324 = vdwg.mxu0
      %1341 = vrot.lane.b32.xlu0 %v1207, 127
      %v1342 = vpop.permute.xlu0 %1341
      %1343 = vrot.lane.b32.xlu0 %v1209, 127
      %v1344 = vpop.permute.xlu0 %1343
      %1345 = vrot.lane.b32.xlu0 %v1211, 127
      %v1346 = vpop.permute.xlu0 %1345
      %1347 = vrot.lane.b32.xlu0 %v1213, 127
      %v1348 = vpop.permute.xlu0 %1347
      %1349 = vrot.lane.b32.xlu0 %v1217, 127
      %v1350 = vpop.permute.xlu0 %1349
      %1351 = vrot.lane.b32.xlu0 %v1219, 127
      %v1352 = vpop.permute.xlu0 %1351
      %1353 = vrot.lane.b32.xlu0 %v1221, 127
      %v1354 = vpop.permute.xlu0 %1353
      %1355 = vrot.lane.b32.xlu0 %v1223, 127
      %v1356 = vpop.permute.xlu0 %1355
      %1357 = vrot.lane.b32.xlu0 %v1227, 127
      %v1358 = vpop.permute.xlu0 %1357
      %1359 = vrot.lane.b32.xlu0 %v1229, 127
      %v1360 = vpop.permute.xlu0 %1359
      %1361 = vrot.lane.b32.xlu0 %v1231, 127
      %v1362 = vpop.permute.xlu0 %1361
      %1363 = vrot.lane.b32.xlu0 %v1233, 127
      %v1364 = vpop.permute.xlu0 %1363
      %1365 = vrot.lane.b32.xlu0 %v1237, 127
      %v1366 = vpop.permute.xlu0 %1365
      %1367 = vrot.lane.b32.xlu0 %v1239, 127
      %v1368 = vpop.permute.xlu0 %1367
      %1369 = vrot.lane.b32.xlu0 %v1241, 127
      %v1370 = vpop.permute.xlu0 %1369
      %1371 = vrot.lane.b32.xlu0 %v1243, 127
      %v1372 = vpop.permute.xlu0 %1371
      %vm1373 = vcmask 1039360
      %v1374 = vsel %vm1373, %v1342, %v1344
      %v1375 = vsel %vm1373, %v1346, %v1348
      %v1376 = vsel %vm1373, %v1350, %v1352
      %v1377 = vsel %vm1373, %v1354, %v1356
      %v1378 = vsel %vm1373, %v1358, %v1360
      %v1379 = vsel %vm1373, %v1362, %v1364
      %v1380 = vsel %vm1373, %v1366, %v1368
      %v1381 = vsel %vm1373, %v1370, %v1372
      %v1398 = vadd.f32 %v1167, %v1374
      %v1399 = vadd.f32 %v1169, %v1344
      %v1400 = vadd.f32 %v1171, %v1375
      %v1401 = vadd.f32 %v1173, %v1348
      %v1402 = vadd.f32 %v1177, %v1376
      %v1403 = vadd.f32 %v1179, %v1352
      %v1404 = vadd.f32 %v1181, %v1377
      %v1405 = vadd.f32 %v1183, %v1356
      %v1406 = vadd.f32 %v1187, %v1378
      %v1407 = vadd.f32 %v1189, %v1360
      %v1408 = vadd.f32 %v1191, %v1379
      %v1409 = vadd.f32 %v1193, %v1364
      %v1410 = vadd.f32 %v1197, %v1380
      %v1411 = vadd.f32 %v1199, %v1368
      %v1412 = vadd.f32 %v1201, %v1381
      %v1413 = vadd.f32 %v1203, %v1372
      %1430 = vrot.lane.b32.xlu0 %v1247, 112
      %v1431 = vpop.permute.xlu0 %1430
      %1432 = vrot.lane.b32.xlu0 %v1249, 112
      %v1433 = vpop.permute.xlu0 %1432
      %1434 = vrot.lane.b32.xlu0 %v1251, 112
      %v1435 = vpop.permute.xlu0 %1434
      %1436 = vrot.lane.b32.xlu0 %v1253, 112
      %v1437 = vpop.permute.xlu0 %1436
      %1438 = vrot.lane.b32.xlu0 %v1257, 112
      %v1439 = vpop.permute.xlu0 %1438
      %1440 = vrot.lane.b32.xlu0 %v1259, 112
      %v1441 = vpop.permute.xlu0 %1440
      %1442 = vrot.lane.b32.xlu0 %v1261, 112
      %v1443 = vpop.permute.xlu0 %1442
      %1444 = vrot.lane.b32.xlu0 %v1263, 112
      %v1445 = vpop.permute.xlu0 %1444
      %1446 = vrot.lane.b32.xlu0 %v1267, 112
      %v1447 = vpop.permute.xlu0 %1446
      %1448 = vrot.lane.b32.xlu0 %v1269, 112
      %v1449 = vpop.permute.xlu0 %1448
      %1450 = vrot.lane.b32.xlu0 %v1271, 112
      %v1451 = vpop.permute.xlu0 %1450
      %1452 = vrot.lane.b32.xlu0 %v1273, 112
      %v1453 = vpop.permute.xlu0 %1452
      %1454 = vrot.lane.b32.xlu0 %v1277, 112
      %v1455 = vpop.permute.xlu0 %1454
      %1456 = vrot.lane.b32.xlu0 %v1279, 112
      %v1457 = vpop.permute.xlu0 %1456
      %1458 = vrot.lane.b32.xlu0 %v1281, 112
      %v1459 = vpop.permute.xlu0 %1458
      %1460 = vrot.lane.b32.xlu0 %v1283, 112
      %v1461 = vpop.permute.xlu0 %1460
      %vm1462 = vcmask 916480
      %v1463 = vsel %vm1462, %v1431, %v1433
      %v1464 = vsel %vm1462, %v1435, %v1437
      %v1465 = vsel %vm1462, %v1439, %v1441
      %v1466 = vsel %vm1462, %v1443, %v1445
      %v1467 = vsel %vm1462, %v1447, %v1449
      %v1468 = vsel %vm1462, %v1451, %v1453
      %v1469 = vsel %vm1462, %v1455, %v1457
      %v1470 = vsel %vm1462, %v1459, %v1461
      %v1487 = vadd.f32 %v1398, %v1463
      %v1488 = vadd.f32 %v1399, %v1433
      %v1489 = vadd.f32 %v1400, %v1464
      %v1490 = vadd.f32 %v1401, %v1437
      %v1491 = vadd.f32 %v1402, %v1465
      %v1492 = vadd.f32 %v1403, %v1441
      %v1493 = vadd.f32 %v1404, %v1466
      %v1494 = vadd.f32 %v1405, %v1445
      %v1495 = vadd.f32 %v1406, %v1467
      %v1496 = vadd.f32 %v1407, %v1449
      %v1497 = vadd.f32 %v1408, %v1468
      %v1498 = vadd.f32 %v1409, %v1453
      %v1499 = vadd.f32 %v1410, %v1469
      %v1500 = vadd.f32 %v1411, %v1457
      %v1501 = vadd.f32 %v1412, %v1470
      %v1502 = vadd.f32 %v1413, %v1461
      %1519 = vrot.lane.b32.xlu0 %v1287, 111
      %v1520 = vpop.permute.xlu0 %1519
      %1521 = vrot.lane.b32.xlu0 %v1289, 111
      %v1522 = vpop.permute.xlu0 %1521
      %1523 = vrot.lane.b32.xlu0 %v1291, 111
      %v1524 = vpop.permute.xlu0 %1523
      %1525 = vrot.lane.b32.xlu0 %v1293, 111
      %v1526 = vpop.permute.xlu0 %1525
      %1527 = vrot.lane.b32.xlu0 %v1297, 111
      %v1528 = vpop.permute.xlu0 %1527
      %1529 = vrot.lane.b32.xlu0 %v1299, 111
      %v1530 = vpop.permute.xlu0 %1529
      %1531 = vrot.lane.b32.xlu0 %v1301, 111
      %v1532 = vpop.permute.xlu0 %1531
      %1533 = vrot.lane.b32.xlu0 %v1303, 111
      %v1534 = vpop.permute.xlu0 %1533
      %1535 = vrot.lane.b32.xlu0 %v1307, 111
      %v1536 = vpop.permute.xlu0 %1535
      %1537 = vrot.lane.b32.xlu0 %v1309, 111
      %v1538 = vpop.permute.xlu0 %1537
      %1539 = vrot.lane.b32.xlu0 %v1311, 111
      %v1540 = vpop.permute.xlu0 %1539
      %1541 = vrot.lane.b32.xlu0 %v1313, 111
      %v1542 = vpop.permute.xlu0 %1541
      %1543 = vrot.lane.b32.xlu0 %v1317, 111
      %v1544 = vpop.permute.xlu0 %1543
      %1545 = vrot.lane.b32.xlu0 %v1319, 111
      %v1546 = vpop.permute.xlu0 %1545
      %1547 = vrot.lane.b32.xlu0 %v1321, 111
      %v1548 = vpop.permute.xlu0 %1547
      %1549 = vrot.lane.b32.xlu0 %v1323, 111
      %v1550 = vpop.permute.xlu0 %1549
      %vm1551 = vcmask 908288
      %v1552 = vsel %vm1551, %v1520, %v1522
      %v1553 = vsel %vm1551, %v1524, %v1526
      %v1554 = vsel %vm1551, %v1528, %v1530
      %v1555 = vsel %vm1551, %v1532, %v1534
      %v1556 = vsel %vm1551, %v1536, %v1538
      %v1557 = vsel %vm1551, %v1540, %v1542
      %v1558 = vsel %vm1551, %v1544, %v1546
      %v1559 = vsel %vm1551, %v1548, %v1550
      %v1576 = vadd.f32 %v1487, %v1552
      %v1577 = vadd.f32 %v1488, %v1522
      %v1578 = vadd.f32 %v1489, %v1553
      %v1579 = vadd.f32 %v1490, %v1526
      %v1580 = vadd.f32 %v1491, %v1554
      %v1581 = vadd.f32 %v1492, %v1530
      %v1582 = vadd.f32 %v1493, %v1555
      %v1583 = vadd.f32 %v1494, %v1534
      %v1584 = vadd.f32 %v1495, %v1556
      %v1585 = vadd.f32 %v1496, %v1538
      %v1586 = vadd.f32 %v1497, %v1557
      %v1587 = vadd.f32 %v1498, %v1542
      %v1588 = vadd.f32 %v1499, %v1558
      %v1589 = vadd.f32 %v1500, %v1546
      %v1590 = vadd.f32 %v1501, %v1559
      %v1591 = vadd.f32 %v1502, %v1550
      %v1592 = vld [vmem:[%s2] sm:$0xff]
      %v1593 = vld [vmem:[%s2 + $0x8] sm:$0xff]
      %v1594 = vld [vmem:[%s2 + $0x10] sm:$0xff]
      %v1595 = vld [vmem:[%s2 + $0x18] sm:$0xff]
      %v1596 = vld [vmem:[%s2 + $0x20] sm:$0xff]
      %v1597 = vld [vmem:[%s2 + $0x28] sm:$0xff]
      %v1598 = vld [vmem:[%s2 + $0x30] sm:$0xff]
      %v1599 = vld [vmem:[%s2 + $0x38] sm:$0xff]
      %1601 = vset.pattern.permute.xlu0 0
      %1602 = vperm.xlu0 %1601, %v1592
      %v1603 = vpop.permute.xlu0 %1602
      %1606 = vset.pattern.permute.xlu0 0
      %1607 = vperm.xlu0 %1606, %v1593
      %v1608 = vpop.permute.xlu0 %1607
      %1611 = vset.pattern.permute.xlu0 0
      %1612 = vperm.xlu0 %1611, %v1594
      %v1613 = vpop.permute.xlu0 %1612
      %1616 = vset.pattern.permute.xlu0 0
      %1617 = vperm.xlu0 %1616, %v1595
      %v1618 = vpop.permute.xlu0 %1617
      %1621 = vset.pattern.permute.xlu0 0
      %1622 = vperm.xlu0 %1621, %v1596
      %v1623 = vpop.permute.xlu0 %1622
      %1626 = vset.pattern.permute.xlu0 0
      %1627 = vperm.xlu0 %1626, %v1597
      %v1628 = vpop.permute.xlu0 %1627
      %1631 = vset.pattern.permute.xlu0 0
      %1632 = vperm.xlu0 %1631, %v1598
      %v1633 = vpop.permute.xlu0 %1632
      %1636 = vset.pattern.permute.xlu0 0
      %1637 = vperm.xlu0 %1636, %v1599
      %v1638 = vpop.permute.xlu0 %1637
      %v1640 = vadd.f32 %v1576, %v1603
      %v1641 = vadd.f32 %v1577, %v1603
      %v1642 = vadd.f32 %v1578, %v1608
      %v1643 = vadd.f32 %v1579, %v1608
      %v1644 = vadd.f32 %v1580, %v1613
      %v1645 = vadd.f32 %v1581, %v1613
      %v1646 = vadd.f32 %v1582, %v1618
      %v1647 = vadd.f32 %v1583, %v1618
      %v1648 = vadd.f32 %v1584, %v1623
      %v1649 = vadd.f32 %v1585, %v1623
      %v1650 = vadd.f32 %v1586, %v1628
      %v1651 = vadd.f32 %v1587, %v1628
      %v1652 = vadd.f32 %v1588, %v1633
      %v1653 = vadd.f32 %v1589, %v1633
      %v1654 = vadd.f32 %v1590, %v1638
      %v1655 = vadd.f32 %v1591, %v1638
      %vm1656 = vcmp.gt.f32.partialorder %v1640, 0.0
      %vm1657 = vcmp.gt.f32.partialorder %v1641, 0.0
      %vm1658 = vcmp.gt.f32.partialorder %v1642, 0.0
      %vm1659 = vcmp.gt.f32.partialorder %v1643, 0.0
      %vm1660 = vcmp.gt.f32.partialorder %v1644, 0.0
      %vm1661 = vcmp.gt.f32.partialorder %v1645, 0.0
      %vm1662 = vcmp.gt.f32.partialorder %v1646, 0.0
      %vm1663 = vcmp.gt.f32.partialorder %v1647, 0.0
      %vm1664 = vcmp.gt.f32.partialorder %v1648, 0.0
      %vm1665 = vcmp.gt.f32.partialorder %v1649, 0.0
      %vm1666 = vcmp.gt.f32.partialorder %v1650, 0.0
      %vm1667 = vcmp.gt.f32.partialorder %v1651, 0.0
      %vm1668 = vcmp.gt.f32.partialorder %v1652, 0.0
      %vm1669 = vcmp.gt.f32.partialorder %v1653, 0.0
      %vm1670 = vcmp.gt.f32.partialorder %v1654, 0.0
      %vm1671 = vcmp.gt.f32.partialorder %v1655, 0.0
      %v1672 = vmul.f32 %v1640, 0.01
      %v1673 = vmul.f32 %v1641, 0.01
      %v1674 = vmul.f32 %v1642, 0.01
      %v1675 = vmul.f32 %v1643, 0.01
      %v1676 = vmul.f32 %v1644, 0.01
      %v1677 = vmul.f32 %v1645, 0.01
      %v1678 = vmul.f32 %v1646, 0.01
      %v1679 = vmul.f32 %v1647, 0.01
      %v1680 = vmul.f32 %v1648, 0.01
      %v1681 = vmul.f32 %v1649, 0.01
      %v1682 = vmul.f32 %v1650, 0.01
      %v1683 = vmul.f32 %v1651, 0.01
      %v1684 = vmul.f32 %v1652, 0.01
      %v1685 = vmul.f32 %v1653, 0.01
      %v1686 = vmul.f32 %v1654, 0.01
      %v1687 = vmul.f32 %v1655, 0.01
      %v1688 = vsel %vm1656, %v1640, %v1672
      %v1689 = vsel %vm1657, %v1641, %v1673
      %v1690 = vsel %vm1658, %v1642, %v1674
      %v1691 = vsel %vm1659, %v1643, %v1675
      %v1692 = vsel %vm1660, %v1644, %v1676
      %v1693 = vsel %vm1661, %v1645, %v1677
      %v1694 = vsel %vm1662, %v1646, %v1678
      %v1695 = vsel %vm1663, %v1647, %v1679
      %v1696 = vsel %vm1664, %v1648, %v1680
      %v1697 = vsel %vm1665, %v1649, %v1681
      %v1698 = vsel %vm1666, %v1650, %v1682
      %v1699 = vsel %vm1667, %v1651, %v1683
      %v1700 = vsel %vm1668, %v1652, %v1684
      %v1701 = vsel %vm1669, %v1653, %v1685
      %v1702 = vsel %vm1670, %v1654, %v1686
      %v1703 = vsel %vm1671, %v1655, %v1687
      %v1704 = vpack.c.bf16 %v1690, %v1688
      %v1705 = vpack.c.bf16 %v1691, %v1689
      %v1706 = vpack.c.bf16 %v1694, %v1692
      %v1707 = vpack.c.bf16 %v1695, %v1693
      %v1708 = vpack.c.bf16 %v1698, %v1696
      %v1709 = vpack.c.bf16 %v1699, %v1697
      %v1710 = vpack.c.bf16 %v1702, %v1700
      %v1711 = vpack.c.bf16 %v1703, %v1701
      %v1720 = vunpack.c.l.b16 %v1704
      %v1721 = vunpack.c.l.b16 %v1705
      %v1722 = vunpack.c.h.b16 %v1704
      %v1723 = vunpack.c.h.b16 %v1705
      %v1724 = vunpack.c.l.b16 %v1706
      %v1725 = vunpack.c.l.b16 %v1707
      %v1726 = vunpack.c.h.b16 %v1706
      %v1727 = vunpack.c.h.b16 %v1707
      %v1728 = vunpack.c.l.b16 %v1708
      %v1729 = vunpack.c.l.b16 %v1709
      %v1730 = vunpack.c.h.b16 %v1708
      %v1731 = vunpack.c.h.b16 %v1709
      %v1732 = vunpack.c.l.b16 %v1710
      %v1733 = vunpack.c.l.b16 %v1711
      %v1734 = vunpack.c.h.b16 %v1710
      %v1735 = vunpack.c.h.b16 %v1711
      %v1736 = vpack.c.b16 %v1721, %v1720
      %v1737 = vpack.c.b16 %v1723, %v1722
      %v1738 = vpack.c.b16 %v1725, %v1724
      %v1739 = vpack.c.b16 %v1727, %v1726
      %v1740 = vpack.c.b16 %v1729, %v1728
      %v1741 = vpack.c.b16 %v1731, %v1730
      %v1742 = vpack.c.b16 %v1733, %v1732
      %v1743 = vpack.c.b16 %v1735, %v1734
      %vm1752 = vcmask 1043456
      %vm1753 = vcmask 392196
      %vm1754 = vmor %vm1753, %vm1752
      %1755 = vst.msk [vmem:[%s170] sm:$0xff] %vm1754, %v1736
      %1756 = vst.msk [vmem:[%s170 + $0x8] sm:$0xff] %vm1754, %v1737
      %1757 = vst.msk [vmem:[%s170 + $0x10] sm:$0xff] %vm1754, %v1738
      %1758 = vst.msk [vmem:[%s170 + $0x18] sm:$0xff] %vm1754, %v1739
      %1759 = vst.msk [vmem:[%s170 + $0x20] sm:$0xff] %vm1754, %v1740
      %1760 = vst.msk [vmem:[%s170 + $0x28] sm:$0xff] %vm1754, %v1741
      %1761 = vst.msk [vmem:[%s170 + $0x30] sm:$0xff] %vm1754, %v1742
      %1762 = vst.msk [vmem:[%s170 + $0x38] sm:$0xff] %vm1754, %v1743
      %p1763 = scmp.lt.s32.totalorder %s14, 1
      %s1764 = scalar_select %p1763, %s14, 1
      %s1765 = smul.addr %s1764, 16
      %s1766 = smul.addr %s1765, 4
      %s1767 = scalar_lea.vmem %s3, %s1766
      // Predicated region
      $region33: #{dqn_forward.5} parent=31 // pred_check
        %p1768 = pneg %p100
      $region34: #{dqn_forward.5} parent=31 // pred_check_branch
        %1770 = sbr.rel (%p1768) target = $region36
      $region35: #{dqn_forward.5} parent=31 // pred_region
        _
      $region36: #{dqn_forward.5} parent=31 // pred_fallthru
        _
    $region32: #{dqn_forward.5} parent=5 // pred_fallthru
      _
    %p1771 = scmp.le.s32.totalorder 2, %s9
    // Predicated region
    $region37: #{dqn_forward.5} parent=5 // pred_check
      %p1772 = pneg %p1771
    $region38: #{dqn_forward.5} parent=5 // pred_check_branch
      %1774 = sbr.rel (%p1772) target = $region40
    $region39: #{dqn_forward.5} parent=5 // pred_region
      %s1775 = ssub.s32 %s9, 2
      // Predicated region
      $region41: #{dqn_forward.5} parent=39 // pred_check
        %p1776 = pneg %p106
      $region42: #{dqn_forward.5} parent=39 // pred_check_branch
        %1778 = sbr.rel (%p1776) target = $region44
      $region43: #{dqn_forward.5} parent=39 // pred_region
        %p1779 = scmp.lt.s32.totalorder %s15, 1
        %s1780 = scalar_select %p1779, %s15, 1
        %s1781 = smul.addr %s1780, 16
        %s1782 = smul.addr %s1781, 4
        %s1783 = scalar_lea.vmem %s3, %s1782
      $region44: #{dqn_forward.5} parent=39 // pred_fallthru
        _
    $region40: #{dqn_forward.5} parent=5 // pred_fallthru
      _
  $region6: #{dqn_forward.5} parent=0 // loop_footer
    %s13 = sadd.s32 1, %s9
  $region7: #{dqn_forward.5} parent=0 // loop_footer_branch
    %8 = sbr.rel target = $region3
  $region8: #{dqn_forward.5} parent=0 // loop_exit
    _

// kernel: dqn_forward.6
$region0: #{dqn_forward.6}
  #allocation0 [shape = 'u32[]', space=smem, size = 0x4, offset = 0x4, fixed_abs, tag = 'smem constant byte address 0x4 - core index']
  #allocation1 [shape = 'u32[144,128]{1,0:T(1,128)}', space=vmem, size = 0x12000, scoped, tag = 'internal scratch']
  %s0 = inlined_call_operand.vmem [shape: bf16[2,256,128], index: 0, kind: input, shape index: {}]
  %s1 = inlined_call_operand.vmem [shape: bf16[128,256], index: 1, kind: input, shape index: {}]
  %s2 = inlined_call_operand.vmem [shape: f32[32,1], index: 2, kind: input, shape index: {}]
  %s3 = inlined_call_operand.vmem [shape: bf16[2,32,40], index: 3, kind: output, shape index: {}]
  %s4 = sld [smem:[#allocation0]]
  $region45: #{dqn_forward.6} parent=0
    _
  %s6 = ssub.s32 1, %s4
  %s7 = scalar_select 0, %s6, %s4
  loop: start=0, step=1, limit=4
  $region2: #{dqn_forward.6} parent=0 // loop_pre_header
    _
  $region3: #{dqn_forward.6} parent=0 // loop_header
    %s9 = sphi 0, %s13
    %p10 = scmp.ge.s32.totalorder %s9, 4
    %s19 = sphi 0, %s21
    %s22 = sphi 0, %s19
    %s23 = sphi 0, %s22
    %s39 = sphi 0, %s23
    %s43 = sphi 0, %s43
    %s45 = sphi 0, %s43
    %s46 = sphi 0, %s45
    %s60 = sphi 0, %s46
    %s64 = sphi 0, %s64
    %s66 = sphi 0, %s64
    %s67 = sphi 0, %s66
    %s81 = sphi 0, %s67
    %s87 = sphi 0, %s89
    %s90 = sphi 0, %s87
    %s91 = sphi 0, %s90
    %s107 = sphi 0, %s91
  $region4: #{dqn_forward.6} parent=0 // loop_header_branch
    %12 = sbr.rel (%p10) target = $region8
  $region5: #{dqn_forward.6} parent=0 // loop_body
    %s14 = ssub.s32 %s9, 1
    %s15 = ssub.s32 %s9, 2
    %s16 = sadd.s32 %s9, 1
    %s17 = ssub.s32 %s9, %s16
    %p18 = scmp.eq.s32.totalorder %s17, 0
    %s20 = sadd.s32 %s19, 1
    %s21 = scalar_select %p18, %s19, %s20
    %p24 = pneg %p18
    %p25 = scmp.eq.s32.totalorder %s9, 1
    %p26 = por %p24, %p25
    %p27 = scmp.ne.s32.totalorder %s19, %s22
    %p28 = scmp.eq.s32.totalorder %s9, 0
    %p29 = por %p27, %p28
    %p30 = scmp.ne.s32.totalorder %s19, %s22
    %p31 = scmp.eq.s32.totalorder %s14, 1
    %p32 = por %p30, %p31
    %p33 = scmp.ne.s32.totalorder %s22, %s23
    %p34 = scmp.eq.s32.totalorder %s14, 0
    %p35 = por %p33, %p34
    %p36 = scmp.ne.s32.totalorder %s22, %s23
    %p37 = scmp.eq.s32.totalorder %s15, 1
    %p38 = por %p36, %p37
    %p40 = scmp.ne.s32.totalorder %s23, %s39
    %p41 = scmp.eq.s32.totalorder %s15, 0
    %p42 = por %p40, %p41
    %s44 = sadd.s32 %s43, 1
    %p47 = scmp.eq.s32.totalorder %s9, 1
    %p48 = scmp.ne.s32.totalorder %s43, %s45
    %p49 = scmp.eq.s32.totalorder %s9, 0
    %p50 = por %p48, %p49
    %p51 = scmp.ne.s32.totalorder %s43, %s45
    %p52 = scmp.eq.s32.totalorder %s14, 1
    %p53 = por %p51, %p52
    %p54 = scmp.ne.s32.totalorder %s45, %s46
    %p55 = scmp.eq.s32.totalorder %s14, 0
    %p56 = por %p54, %p55
    %p57 = scmp.ne.s32.totalorder %s45, %s46
    %p58 = scmp.eq.s32.totalorder %s15, 1
    %p59 = por %p57, %p58
    %p61 = scmp.ne.s32.totalorder %s46, %s60
    %p62 = scmp.eq.s32.totalorder %s15, 0
    %p63 = por %p61, %p62
    %s65 = sadd.s32 %s64, 1
    %p68 = scmp.eq.s32.totalorder %s9, 1
    %p69 = scmp.ne.s32.totalorder %s64, %s66
    %p70 = scmp.eq.s32.totalorder %s9, 0
    %p71 = por %p69, %p70
    %p72 = scmp.ne.s32.totalorder %s64, %s66
    %p73 = scmp.eq.s32.totalorder %s14, 1
    %p74 = por %p72, %p73
    %p75 = scmp.ne.s32.totalorder %s66, %s67
    %p76 = scmp.eq.s32.totalorder %s14, 0
    %p77 = por %p75, %p76
    %p78 = scmp.ne.s32.totalorder %s66, %s67
    %p79 = scmp.eq.s32.totalorder %s15, 1
    %p80 = por %p78, %p79
    %p82 = scmp.ne.s32.totalorder %s67, %s81
    %p83 = scmp.eq.s32.totalorder %s15, 0
    %p84 = por %p82, %p83
    %s85 = ssub.s32 %s9, %s16
    %p86 = scmp.eq.s32.totalorder %s85, 0
    %s88 = sadd.s32 %s87, 1
    %s89 = scalar_select %p86, %s87, %s88
    %p92 = pneg %p86
    %p93 = scmp.eq.s32.totalorder %s9, 1
    %p94 = por %p92, %p93
    %p95 = scmp.ne.s32.totalorder %s87, %s90
    %p96 = scmp.eq.s32.totalorder %s9, 0
    %p97 = por %p95, %p96
    %p98 = scmp.ne.s32.totalorder %s87, %s90
    %p99 = scmp.eq.s32.totalorder %s14, 1
    %p100 = por %p98, %p99
    %p101 = scmp.ne.s32.totalorder %s90, %s91
    %p102 = scmp.eq.s32.totalorder %s14, 0
    %p103 = por %p101, %p102
    %p104 = scmp.ne.s32.totalorder %s90, %s91
    %p105 = scmp.eq.s32.totalorder %s15, 1
    %p106 = por %p104, %p105
    %p108 = scmp.ne.s32.totalorder %s91, %s107
    %p109 = scmp.eq.s32.totalorder %s15, 0
    %p110 = por %p108, %p109
    %p111 = scmp.le.s32.totalorder 1, %s9
    %p112 = scmp.lt.s32.totalorder %s9, 3
    %p113 = pnand %p111, %p112
    %p114 = pneg %p113
    // Predicated region
    $region9: #{dqn_forward.6} parent=5 // pred_check
      _
    $region10: #{dqn_forward.6} parent=5 // pred_check_branch
      %116 = sbr.rel (%p113) target = $region12
    $region11: #{dqn_forward.6} parent=5 // pred_region
      %s117 = ssub.s32 %s9, 1
      // Predicated region
      $region13: #{dqn_forward.6} parent=11 // pred_check
        %p118 = pneg %p56
      $region14: #{dqn_forward.6} parent=11 // pred_check_branch
        %120 = sbr.rel (%p118) target = $region16
      $region15: #{dqn_forward.6} parent=11 // pred_region
        _
      $region16: #{dqn_forward.6} parent=11 // pred_fallthru
        _
      // Predicated region
      $region17: #{dqn_forward.6} parent=11 // pred_check
        %p121 = pneg %p77
      $region18: #{dqn_forward.6} parent=11 // pred_check_branch
        %123 = sbr.rel (%p121) target = $region20
      $region19: #{dqn_forward.6} parent=11 // pred_region
        _
      $region20: #{dqn_forward.6} parent=11 // pred_fallthru
        _
    $region12: #{dqn_forward.6} parent=5 // pred_fallthru
      _
    %p124 = scmp.lt.s32.totalorder %s9, 2
    // Predicated region
    $region21: #{dqn_forward.6} parent=5 // pred_check
      %p125 = pneg %p124
    $region22: #{dqn_forward.6} parent=5 // pred_check_branch
      %127 = sbr.rel (%p125) target = $region24
    $region23: #{dqn_forward.6} parent=5 // pred_region
      // Predicated region
      $region25: #{dqn_forward.6} parent=23 // pred_check
        %p128 = pneg %p29
      $region26: #{dqn_forward.6} parent=23 // pred_check_branch
        %130 = sbr.rel (%p128) target = $region28
      $region27: #{dqn_forward.6} parent=23 // pred_region
        %p131 = scmp.lt.s32.totalorder %s9, 1
        %s132 = scalar_select %p131, %s9, 1
        %s133 = smul.addr %s132, 32
        %s134 = smul.addr %s133, 4
        %s135 = scalar_lea.vmem %s0, %s134
      $region28: #{dqn_forward.6} parent=23 // pred_fallthru
        _
    $region24: #{dqn_forward.6} parent=5 // pred_fallthru
      _
    %p136 = scmp.le.s32.totalorder 1, %s9
    %p137 = scmp.lt.s32.totalorder %s9, 3
    %p138 = pnand %p136, %p137
    %p139 = pneg %p138
    // Predicated region
    $region29: #{dqn_forward.6} parent=5 // pred_check
      _
    $region30: #{dqn_forward.6} parent=5 // pred_check_branch
      %141 = sbr.rel (%p138) target = $region32
    $region31: #{dqn_forward.6} parent=5 // pred_region
      %s142 = ssub.s32 %s9, 1
      %p143 = scmp.lt.s32.totalorder %s14, 1
      %s144 = scalar_select %p143, %s14, 1
      %s145 = smul.addr %s144, 32
      %s146 = smul.addr %s145, 4
      %s147 = scalar_lea.vmem %s0, %s146
      %p148 = pneg %p35
      %p149 = pneg %p32
      %p150 = pneg %p56
      %p151 = pneg %p53
      %p152 = pneg %p77
      %p153 = pneg %p74
      %p154 = pneg %p103
      %p155 = pneg %p100
      %p156 = scmp.lt.s32.totalorder %s14, 1
      %s157 = scalar_select %p156, %s14, 1
      %s158 = smul.addr %s157, 4
      %s159 = smul.addr %s158, 4
      %s160 = scalar_lea.vmem %s3, %s159
      %p161 = scmp.lt.s32.totalorder %s14, 1
      %s162 = scalar_select %p161, %s14, 1
      %s163 = smul.addr %s162, 32
      %s164 = smul.addr %s163, 4
      %s165 = scalar_lea.vmem %s0, %s164
      %p166 = scmp.lt.s32.totalorder %s14, 1
      %s167 = scalar_select %p166, %s14, 1
      %s168 = smul.addr %s167, 4
      %s169 = smul.addr %s168, 4
      %s170 = scalar_lea.vmem %s3, %s169
      %v172 = vld [vmem:[%s1] sm:$0xff]
      %v173 = vld [vmem:[%s1 + $0x8] sm:$0xff]
      %v174 = vld [vmem:[%s1 + $0x10] sm:$0xff]
      %v175 = vld [vmem:[%s1 + $0x18] sm:$0xff]
      %v176 = vld [vmem:[%s1 + $0x20] sm:$0xff]
      %v177 = vld [vmem:[%s1 + $0x28] sm:$0xff]
      %v178 = vld [vmem:[%s1 + $0x30] sm:$0xff]
      %v179 = vld [vmem:[%s1 + $0x38] sm:$0xff]
      %v180 = vld [vmem:[%s1 + $0x40] sm:$0xff]
      %v181 = vld [vmem:[%s1 + $0x48] sm:$0xff]
      %v182 = vld [vmem:[%s1 + $0x50] sm:$0xff]
      %v183 = vld [vmem:[%s1 + $0x58] sm:$0xff]
      %v184 = vld [vmem:[%s1 + $0x60] sm:$0xff]
      %v185 = vld [vmem:[%s1 + $0x68] sm:$0xff]
      %v186 = vld [vmem:[%s1 + $0x70] sm:$0xff]
      %v187 = vld [vmem:[%s1 + $0x78] sm:$0xff]
      %v188 = vld [vmem:[%s165] sm:$0xf]
      %v189 = vld [vmem:[%s165 + $0x4] sm:$0xf]
      %v190 = vld [vmem:[%s165 + $0x8] sm:$0xf]
      %v191 = vld [vmem:[%s165 + $0xc] sm:$0xf]
      %v192 = vld [vmem:[%s165 + $0x10] sm:$0xf]
      %v193 = vld [vmem:[%s165 + $0x14] sm:$0xf]
      %v194 = vld [vmem:[%s165 + $0x18] sm:$0xf]
      %v195 = vld [vmem:[%s165 + $0x1c] sm:$0xf]
      %v196 = vld [vmem:[%s165 + $0x20] sm:$0xf]
      %v197 = vld [vmem:[%s165 + $0x24] sm:$0xf]
      %v198 = vld [vmem:[%s165 + $0x28] sm:$0xf]
      %v199 = vld [vmem:[%s165 + $0x2c] sm:$0xf]
      %v200 = vld [vmem:[%s165 + $0x30] sm:$0xf]
      %v201 = vld [vmem:[%s165 + $0x34] sm:$0xf]
      %v202 = vld [vmem:[%s165 + $0x38] sm:$0xf]
      %v203 = vld [vmem:[%s165 + $0x3c] sm:$0xf]
      %v204 = vld [vmem:[%s165 + $0x40] sm:$0xf]
      %v205 = vld [vmem:[%s165 + $0x44] sm:$0xf]
      %v206 = vld [vmem:[%s165 + $0x48] sm:$0xf]
      %v207 = vld [vmem:[%s165 + $0x4c] sm:$0xf]
      %v208 = vld [vmem:[%s165 + $0x50] sm:$0xf]
      %v209 = vld [vmem:[%s165 + $0x54] sm:$0xf]
      %v210 = vld [vmem:[%s165 + $0x58] sm:$0xf]
      %v211 = vld [vmem:[%s165 + $0x5c] sm:$0xf]
      %v212 = vld [vmem:[%s165 + $0x60] sm:$0xf]
      %v213 = vld [vmem:[%s165 + $0x64] sm:$0xf]
      %v214 = vld [vmem:[%s165 + $0x68] sm:$0xf]
      %v215 = vld [vmem:[%s165 + $0x6c] sm:$0xf]
      %v216 = vld [vmem:[%s165 + $0x70] sm:$0xf]
      %v217 = vld [vmem:[%s165 + $0x74] sm:$0xf]
      %v218 = vld [vmem:[%s165 + $0x78] sm:$0xf]
      %v219 = vld [vmem:[%s165 + $0x7c] sm:$0xf]
      %v236 = vunpack.c.l.b16 %v172
      %v237 = vunpack.c.h.b16 %v172
      %v238 = vunpack.c.l.b16 %v173
      %v239 = vunpack.c.h.b16 %v173
      %v240 = vunpack.c.l.b16 %v174
      %v241 = vunpack.c.h.b16 %v174
      %v242 = vunpack.c.l.b16 %v175
      %v243 = vunpack.c.h.b16 %v175
      %v244 = vunpack.c.l.b16 %v176
      %v245 = vunpack.c.h.b16 %v176
      %v246 = vunpack.c.l.b16 %v177
      %v247 = vunpack.c.h.b16 %v177
      %v248 = vunpack.c.l.b16 %v178
      %v249 = vunpack.c.h.b16 %v178
      %v250 = vunpack.c.l.b16 %v179
      %v251 = vunpack.c.h.b16 %v179
      %v252 = vunpack.c.l.b16 %v180
      %v253 = vunpack.c.h.b16 %v180
      %v254 = vunpack.c.l.b16 %v181
      %v255 = vunpack.c.h.b16 %v181
      %v256 = vunpack.c.l.b16 %v182
      %v257 = vunpack.c.h.b16 %v182
      %v258 = vunpack.c.l.b16 %v183
      %v259 = vunpack.c.h.b16 %v183
      %v260 = vunpack.c.l.b16 %v184
      %v261 = vunpack.c.h.b16 %v184
      %v262 = vunpack.c.l.b16 %v185
      %v263 = vunpack.c.h.b16 %v185
      %v264 = vunpack.c.l.b16 %v186
      %v265 = vunpack.c.h.b16 %v186
      %v266 = vunpack.c.l.b16 %v187
      %v267 = vunpack.c.h.b16 %v187
      %v268 = vpack.c.b16 %v238, %v236
      %v269 = vpack.c.b16 %v239, %v237
      %v270 = vpack.c.b16 %v242, %v240
      %v271 = vpack.c.b16 %v243, %v241
      %v272 = vpack.c.b16 %v246, %v244
      %v273 = vpack.c.b16 %v247, %v245
      %v274 = vpack.c.b16 %v250, %v248
      %v275 = vpack.c.b16 %v251, %v249
      %v276 = vpack.c.b16 %v254, %v252
      %v277 = vpack.c.b16 %v255, %v253
      %v278 = vpack.c.b16 %v258, %v256
      %v279 = vpack.c.b16 %v259, %v257
      %v280 = vpack.c.b16 %v262, %v260
      %v281 = vpack.c.b16 %v263, %v261
      %v282 = vpack.c.b16 %v266, %v264
      %v283 = vpack.c.b16 %v267, %v265
      %v332 = vunpack.c.l.b16 %v188
      %v333 = vunpack.c.l.b16 %v189
      %v334 = vunpack.c.l.b16 %v190
      %v335 = vunpack.c.l.b16 %v191
      %v336 = vunpack.c.l.b16 %v192
      %v337 = vunpack.c.l.b16 %v193
      %v338 = vunpack.c.l.b16 %v194
      %v339 = vunpack.c.l.b16 %v195
      %v340 = vunpack.c.l.b16 %v196
      %v341 = vunpack.c.l.b16 %v197
      %v342 = vunpack.c.l.b16 %v198
      %v343 = vunpack.c.l.b16 %v199
      %v344 = vunpack.c.l.b16 %v200
      %v345 = vunpack.c.l.b16 %v201
      %v346 = vunpack.c.l.b16 %v202
      %v347 = vunpack.c.l.b16 %v203
      %v348 = vunpack.c.l.b16 %v204
      %v349 = vunpack.c.l.b16 %v205
      %v350 = vunpack.c.l.b16 %v206
      %v351 = vunpack.c.l.b16 %v207
      %v352 = vunpack.c.l.b16 %v208
      %v353 = vunpack.c.l.b16 %v209
      %v354 = vunpack.c.l.b16 %v210
      %v355 = vunpack.c.l.b16 %v211
      %v356 = vunpack.c.l.b16 %v212
      %v357 = vunpack.c.l.b16 %v213
      %v358 = vunpack.c.l.b16 %v214
      %v359 = vunpack.c.l.b16 %v215
      %v360 = vunpack.c.l.b16 %v216
      %v361 = vunpack.c.l.b16 %v217
      %v362 = vunpack.c.l.b16 %v218
      %v363 = vunpack.c.l.b16 %v219
      %v364 = vpack.c.b16 %v333, %v332
      %v365 = vpack.c.b16 %v335, %v334
      %v366 = vpack.c.b16 %v337, %v336
      %v367 = vpack.c.b16 %v339, %v338
      %v368 = vpack.c.b16 %v341, %v340
      %v369 = vpack.c.b16 %v343, %v342
      %v370 = vpack.c.b16 %v345, %v344
      %v371 = vpack.c.b16 %v347, %v346
      %v372 = vpack.c.b16 %v349, %v348
      %v373 = vpack.c.b16 %v351, %v350
      %v374 = vpack.c.b16 %v353, %v352
      %v375 = vpack.c.b16 %v355, %v354
      %v376 = vpack.c.b16 %v357, %v356
      %v377 = vpack.c.b16 %v359, %v358
      %v378 = vpack.c.b16 %v361, %v360
      %v379 = vpack.c.b16 %v363, %v362
      %396 = vmatprep.subr.bf16.mxu0 0
      %397 = vmatpush1.bf16.msra.mxu0 %v364
      %398 = vmatprep.subr.bf16.mxu0 0
      %399 = vmatpush1.bf16.msra.mxu0 %v365
      %400 = vmatprep.subr.bf16.mxu0 0
      %401 = vmatpush1.bf16.msra.mxu0 %v366
      %402 = vmatprep.subr.bf16.mxu0 0
      %403 = vmatpush1.bf16.msra.mxu0 %v367
      %404 = vmatprep.subr.bf16.mxu0 0
      %405 = vmatpush1.bf16.msra.mxu0 %v368
      %406 = vmatprep.subr.bf16.mxu0 0
      %407 = vmatpush1.bf16.msra.mxu0 %v369
      %408 = vmatprep.subr.bf16.mxu0 0
      %409 = vmatpush1.bf16.msra.mxu0 %v370
      %410 = vmatprep.subr.bf16.mxu0 0
      %411 = vmatpush1.bf16.msra.mxu0 %v371
      %412 = vmatprep.subr.bf16.mxu0 0
      %413 = vmatpush1.bf16.msra.mxu0 %v372
      %414 = vmatprep.subr.bf16.mxu0 0
      %415 = vmatpush1.bf16.msra.mxu0 %v373
      %416 = vmatprep.subr.bf16.mxu0 0
      %417 = vmatpush1.bf16.msra.mxu0 %v374
      %418 = vmatprep.subr.bf16.mxu0 0
      %419 = vmatpush1.bf16.msra.mxu0 %v375
      %420 = vmatprep.subr.bf16.mxu0 0
      %421 = vmatpush1.bf16.msra.mxu0 %v376
      %422 = vmatprep.subr.bf16.mxu0 0
      %423 = vmatpush1.bf16.msra.mxu0 %v377
      %424 = vmatprep.subr.bf16.mxu0 0
      %425 = vmatpush1.bf16.msra.mxu0 %v378
      %426 = vmatprep.subr.bf16.mxu0 0
      %427 = vmatpush1.bf16.msra.mxu0 %v379
      %428 = vmatprep.mubr.bf16.mxu0 %v269
      %429 = vmatmul.mubr.bf16.gmra.mrb[0].mxu0 %v268
      %v430 = vpop.f32.mrb[0].mxu0
      %v431 = vadd.f32 0.0, %v430
      %v432 = vpop.f32.mrb[0].mxu0
      %v433 = vpop.f32.mrb[0].mxu0
      %v434 = vadd.f32 0.0, %v433
      %v435 = vpop.f32.mrb[0].mxu0
      %436 = vmatprep.mubr.bf16.mxu0 %v271
      %437 = vmatmul.mubr.bf16.gmra.mrb[0].mxu0 %v270
      %v438 = vpop.f32.mrb[0].mxu0
      %v439 = vadd.f32 0.0, %v438
      %v440 = vpop.f32.mrb[0].mxu0
      %v441 = vpop.f32.mrb[0].mxu0
      %v442 = vadd.f32 0.0, %v441
      %v443 = vpop.f32.mrb[0].mxu0
      %444 = vmatprep.mubr.bf16.mxu0 %v273
      %445 = vmatmul.mubr.bf16.gmra.mrb[0].mxu0 %v272
      %v446 = vpop.f32.mrb[0].mxu0
      %v447 = vadd.f32 0.0, %v446
      %v448 = vpop.f32.mrb[0].mxu0
      %v449 = vpop.f32.mrb[0].mxu0
      %v450 = vadd.f32 0.0, %v449
      %v451 = vpop.f32.mrb[0].mxu0
      %452 = vmatprep.mubr.bf16.mxu0 %v275
      %453 = vmatmul.mubr.bf16.gmra.mrb[0].mxu0 %v274
      %v454 = vpop.f32.mrb[0].mxu0
      %v455 = vadd.f32 0.0, %v454
      %v456 = vpop.f32.mrb[0].mxu0
      %v457 = vpop.f32.mrb[0].mxu0
      %v458 = vadd.f32 0.0, %v457
      %v459 = vpop.f32.mrb[0].mxu0
      %460 = vmatprep.mubr.bf16.mxu0 %v277
      %461 = vmatmul.mubr.bf16.gmra.mrb[0].mxu0 %v276
      %v462 = vpop.f32.mrb[0].mxu0
      %v463 = vadd.f32 0.0, %v462
      %v464 = vpop.f32.mrb[0].mxu0
      %v465 = vpop.f32.mrb[0].mxu0
      %v466 = vadd.f32 0.0, %v465
      %v467 = vpop.f32.mrb[0].mxu0
      %468 = vmatprep.mubr.bf16.mxu0 %v279
      %469 = vmatmul.mubr.bf16.gmra.mrb[0].mxu0 %v278
      %v470 = vpop.f32.mrb[0].mxu0
      %v471 = vadd.f32 0.0, %v470
      %v472 = vpop.f32.mrb[0].mxu0
      %v473 = vpop.f32.mrb[0].mxu0
      %v474 = vadd.f32 0.0, %v473
      %v475 = vpop.f32.mrb[0].mxu0
      %476 = vmatprep.mubr.bf16.mxu0 %v281
      %477 = vmatmul.mubr.bf16.gmra.mrb[0].mxu0 %v280
      %v478 = vpop.f32.mrb[0].mxu0
      %v479 = vadd.f32 0.0, %v478
      %v480 = vpop.f32.mrb[0].mxu0
      %v481 = vpop.f32.mrb[0].mxu0
      %v482 = vadd.f32 0.0, %v481
      %v483 = vpop.f32.mrb[0].mxu0
      %484 = vmatprep.mubr.bf16.mxu0 %v283
      %485 = vmatmul.mubr.bf16.gmra.mrb[0].mxu0 %v282
      %v486 = vpop.f32.mrb[0].mxu0
      %v487 = vadd.f32 0.0, %v486
      %v488 = vpop.f32.mrb[0].mxu0
      %v489 = vpop.f32.mrb[0].mxu0
      %v490 = vadd.f32 0.0, %v489
      %v491 = vpop.f32.mrb[0].mxu0
      %492 = vdwg.mxu0
      %497 = vrot.lane.b32.xlu0 %v447, 127
      %v498 = vpop.permute.xlu0 %497
      %499 = vrot.lane.b32.xlu0 %v450, 127
      %v500 = vpop.permute.xlu0 %499
      %501 = vrot.lane.b32.xlu0 %v455, 127
      %v502 = vpop.permute.xlu0 %501
      %503 = vrot.lane.b32.xlu0 %v458, 127
      %v504 = vpop.permute.xlu0 %503
      %v509 = vadd.f32 %v431, %v498
      %v510 = vadd.f32 %v434, %v500
      %v511 = vadd.f32 %v439, %v502
      %v512 = vadd.f32 %v442, %v504
      %517 = vrot.lane.b32.xlu0 %v463, 120
      %v518 = vpop.permute.xlu0 %517
      %519 = vrot.lane.b32.xlu0 %v466, 120
      %v520 = vpop.permute.xlu0 %519
      %521 = vrot.lane.b32.xlu0 %v471, 120
      %v522 = vpop.permute.xlu0 %521
      %523 = vrot.lane.b32.xlu0 %v474, 120
      %v524 = vpop.permute.xlu0 %523
      %v529 = vadd.f32 %v509, %v518
      %v530 = vadd.f32 %v510, %v520
      %v531 = vadd.f32 %v511, %v522
      %v532 = vadd.f32 %v512, %v524
      %537 = vrot.lane.b32.xlu0 %v479, 119
      %v538 = vpop.permute.xlu0 %537
      %539 = vrot.lane.b32.xlu0 %v482, 119
      %v540 = vpop.permute.xlu0 %539
      %541 = vrot.lane.b32.xlu0 %v487, 119
      %v542 = vpop.permute.xlu0 %541
      %543 = vrot.lane.b32.xlu0 %v490, 119
      %v544 = vpop.permute.xlu0 %543
      %v549 = vadd.f32 %v529, %v538
      %v550 = vadd.f32 %v530, %v540
      %v551 = vadd.f32 %v531, %v542
      %v552 = vadd.f32 %v532, %v544
      %v553 = vld [vmem:[%s2] sm:$0xff]
      %v554 = vld [vmem:[%s2 + $0x8] sm:$0xff]
      %v555 = vld [vmem:[%s2 + $0x10] sm:$0xff]
      %v556 = vld [vmem:[%s2 + $0x18] sm:$0xff]
      %558 = vset.pattern.permute.xlu0 0
      %559 = vperm.xlu0 %558, %v553
      %v560 = vpop.permute.xlu0 %559
      %563 = vset.pattern.permute.xlu0 0
      %564 = vperm.xlu0 %563, %v554
      %v565 = vpop.permute.xlu0 %564
      %568 = vset.pattern.permute.xlu0 0
      %569 = vperm.xlu0 %568, %v555
      %v570 = vpop.permute.xlu0 %569
      %573 = vset.pattern.permute.xlu0 0
      %574 = vperm.xlu0 %573, %v556
      %v575 = vpop.permute.xlu0 %574
      %v577 = vadd.f32 %v549, %v560
      %v578 = vadd.f32 %v550, %v565
      %v579 = vadd.f32 %v551, %v570
      %v580 = vadd.f32 %v552, %v575
      %vm581 = vcmp.gt.f32.partialorder %v577, 0.0
      %vm582 = vcmp.gt.f32.partialorder %v578, 0.0
      %vm583 = vcmp.gt.f32.partialorder %v579, 0.0
      %vm584 = vcmp.gt.f32.partialorder %v580, 0.0
      %v585 = vmul.f32 %v577, 0.01
      %v586 = vmul.f32 %v578, 0.01
      %v587 = vmul.f32 %v579, 0.01
      %v588 = vmul.f32 %v580, 0.01
      %v589 = vsel %vm581, %v577, %v585
      %v590 = vsel %vm582, %v578, %v586
      %v591 = vsel %vm583, %v579, %v587
      %v592 = vsel %vm584, %v580, %v588
      %v593 = vpack.c.bf16 %v590, %v589
      %v594 = vpack.c.bf16 %v592, %v591
      %v597 = vunpack.c.l.b16 %v593
      %v598 = vunpack.c.h.b16 %v593
      %v599 = vunpack.c.l.b16 %v594
      %v600 = vunpack.c.h.b16 %v594
      %v601 = vpack.c.b16 %v597, %v597
      %v602 = vpack.c.b16 %v598, %v598
      %v603 = vpack.c.b16 %v599, %v599
      %v604 = vpack.c.b16 %v600, %v600
      %vm609 = vcmask 322560
      %610 = vst.msk [vmem:[%s170] sm:$0xf] %vm609, %v601
      %611 = vst.msk [vmem:[%s170 + $0x4] sm:$0xf] %vm609, %v602
      %612 = vst.msk [vmem:[%s170 + $0x8] sm:$0xf] %vm609, %v603
      %613 = vst.msk [vmem:[%s170 + $0xc] sm:$0xf] %vm609, %v604
      %p614 = scmp.lt.s32.totalorder %s14, 1
      %s615 = scalar_select %p614, %s14, 1
      %s616 = smul.addr %s615, 4
      %s617 = smul.addr %s616, 4
      %s618 = scalar_lea.vmem %s3, %s617
      // Predicated region
      $region33: #{dqn_forward.6} parent=31 // pred_check
        %p619 = pneg %p100
      $region34: #{dqn_forward.6} parent=31 // pred_check_branch
        %621 = sbr.rel (%p619) target = $region36
      $region35: #{dqn_forward.6} parent=31 // pred_region
        _
      $region36: #{dqn_forward.6} parent=31 // pred_fallthru
        _
    $region32: #{dqn_forward.6} parent=5 // pred_fallthru
      _
    %p622 = scmp.le.s32.totalorder 2, %s9
    // Predicated region
    $region37: #{dqn_forward.6} parent=5 // pred_check
      %p623 = pneg %p622
    $region38: #{dqn_forward.6} parent=5 // pred_check_branch
      %625 = sbr.rel (%p623) target = $region40
    $region39: #{dqn_forward.6} parent=5 // pred_region
      %s626 = ssub.s32 %s9, 2
      // Predicated region
      $region41: #{dqn_forward.6} parent=39 // pred_check
        %p627 = pneg %p106
      $region42: #{dqn_forward.6} parent=39 // pred_check_branch
        %629 = sbr.rel (%p627) target = $region44
      $region43: #{dqn_forward.6} parent=39 // pred_region
        %p630 = scmp.lt.s32.totalorder %s15, 1
        %s631 = scalar_select %p630, %s15, 1
        %s632 = smul.addr %s631, 4
        %s633 = smul.addr %s632, 4
        %s634 = scalar_lea.vmem %s3, %s633
      $region44: #{dqn_forward.6} parent=39 // pred_fallthru
        _
    $region40: #{dqn_forward.6} parent=5 // pred_fallthru
      _
  $region6: #{dqn_forward.6} parent=0 // loop_footer
    %s13 = sadd.s32 1, %s9
  $region7: #{dqn_forward.6} parent=0 // loop_footer_branch
    %8 = sbr.rel target = $region3
  $region8: #{dqn_forward.6} parent=0 // loop_exit
    _

// kernel: dqn_forward.7
$region0: #{dqn_forward.7}
  #allocation0 [shape = 'u32[]', space=smem, size = 0x4, offset = 0x4, fixed_abs, tag = 'smem constant byte address 0x4 - core index']
  #allocation1 [shape = 'u32[144,128]{1,0:T(1,128)}', space=vmem, size = 0x12000, scoped, tag = 'internal scratch']
  %s0 = inlined_call_operand.vmem [shape: bf16[2,1280], index: 0, kind: input, shape index: {}]
  %s1 = inlined_call_operand.vmem [shape: bf16[1280,100], index: 1, kind: input, shape index: {}]
  %s2 = inlined_call_operand.vmem [shape: f32[1,100], index: 2, kind: input, shape index: {}]
  %s3 = inlined_call_operand.vmem [shape: bf16[100,6], index: 3, kind: input, shape index: {}]
  %s4 = inlined_call_operand.vmem [shape: f32[1,6], index: 4, kind: input, shape index: {}]
  %s5 = inlined_call_operand.hbm [shape: f32[2,6], index: 5, kind: output, shape index: {}]
  %s6 = sld [smem:[#allocation0]]
  $region30: #{dqn_forward.7} parent=0
    _
  %s8 = ssub.s32 1, %s6
  %s9 = scalar_select 0, %s8, %s6
  $region1: #{dqn_forward.7} parent=0
    #allocation2 [shape = 'u8[1024]{0}', space=vmem, size = 0x400, scoped, tag = 'output window, operand 0, single buffered']
    #allocation3 [shape = 's32[1]{0}', space=sflag, size = 0x4, scoped, tag = 'scoped memory for dqn_forward.7']
    %10 = vsyncpa [#allocation3], 0
    // Predicated region
    $region2: #{dqn_forward.7} parent=1 // pred_check
      _
    $region3: #{dqn_forward.7} parent=1 // pred_check_branch
      %12 = sbr.rel (0) target = $region5
    $region4: #{dqn_forward.7} parent=1 // pred_region
      _
    $region5: #{dqn_forward.7} parent=1 // pred_fallthru
      _
    // Predicated region
    $region6: #{dqn_forward.7} parent=1 // pred_check
      _
    $region7: #{dqn_forward.7} parent=1 // pred_check_branch
      %14 = sbr.rel (0) target = $region9
    $region8: #{dqn_forward.7} parent=1 // pred_region
      _
    $region9: #{dqn_forward.7} parent=1 // pred_fallthru
      _
    // Predicated region
    $region10: #{dqn_forward.7} parent=1 // pred_check
      _
    $region11: #{dqn_forward.7} parent=1 // pred_check_branch
      %16 = sbr.rel (0) target = $region13
    $region12: #{dqn_forward.7} parent=1 // pred_region
      _
    $region13: #{dqn_forward.7} parent=1 // pred_fallthru
      _
    // Predicated region
    $region14: #{dqn_forward.7} parent=1 // pred_check
      _
    $region15: #{dqn_forward.7} parent=1 // pred_check_branch
      %18 = sbr.rel (0) target = $region17
    $region16: #{dqn_forward.7} parent=1 // pred_region
      _
    $region17: #{dqn_forward.7} parent=1 // pred_fallthru
      _
    // Predicated region
    $region18: #{dqn_forward.7} parent=1 // pred_check
      _
    $region19: #{dqn_forward.7} parent=1 // pred_check_branch
      %20 = sbr.rel (0) target = $region21
    $region20: #{dqn_forward.7} parent=1 // pred_region
      _
    $region21: #{dqn_forward.7} parent=1 // pred_fallthru
      _
    %v22 = vld [vmem:[%s0] sm:$0xff]
    %v23 = vld [vmem:[%s0 + $0x8] sm:$0x3]
    %v24 = vld [vmem:[%s1] sm:$0xf]
    %v25 = vld [vmem:[%s1 + $0x4] sm:$0xf]
    %v26 = vld [vmem:[%s1 + $0x8] sm:$0xf]
    %v27 = vld [vmem:[%s1 + $0xc] sm:$0xf]
    %v28 = vld [vmem:[%s1 + $0x10] sm:$0xf]
    %v29 = vld [vmem:[%s1 + $0x14] sm:$0xf]
    %v30 = vld [vmem:[%s1 + $0x18] sm:$0xf]
    %v31 = vld [vmem:[%s1 + $0x1c] sm:$0xf]
    %v32 = vld [vmem:[%s1 + $0x20] sm:$0xf]
    %v33 = vld [vmem:[%s1 + $0x24] sm:$0xf]
    %v34 = vld [vmem:[%s1 + $0x28] sm:$0xf]
    %v35 = vld [vmem:[%s1 + $0x2c] sm:$0xf]
    %v36 = vld [vmem:[%s1 + $0x30] sm:$0xf]
    %v37 = vld [vmem:[%s1 + $0x34] sm:$0xf]
    %v38 = vld [vmem:[%s1 + $0x38] sm:$0xf]
    %v39 = vld [vmem:[%s1 + $0x3c] sm:$0xf]
    %v40 = vld [vmem:[%s1 + $0x40] sm:$0xf]
    %v41 = vld [vmem:[%s1 + $0x44] sm:$0xf]
    %v42 = vld [vmem:[%s1 + $0x48] sm:$0xf]
    %v43 = vld [vmem:[%s1 + $0x4c] sm:$0xf]
    %v44 = vld [vmem:[%s1 + $0x50] sm:$0xf]
    %v45 = vld [vmem:[%s1 + $0x54] sm:$0xf]
    %v46 = vld [vmem:[%s1 + $0x58] sm:$0xf]
    %v47 = vld [vmem:[%s1 + $0x5c] sm:$0xf]
    %v48 = vld [vmem:[%s1 + $0x60] sm:$0xf]
    %v49 = vld [vmem:[%s1 + $0x64] sm:$0xf]
    %v50 = vld [vmem:[%s1 + $0x68] sm:$0xf]
    %v51 = vld [vmem:[%s1 + $0x6c] sm:$0xf]
    %v52 = vld [vmem:[%s1 + $0x70] sm:$0xf]
    %v53 = vld [vmem:[%s1 + $0x74] sm:$0xf]
    %v54 = vld [vmem:[%s1 + $0x78] sm:$0xf]
    %v55 = vld [vmem:[%s1 + $0x7c] sm:$0xf]
    %v56 = vld [vmem:[%s1 + $0x80] sm:$0xf]
    %v57 = vld [vmem:[%s1 + $0x84] sm:$0xf]
    %v58 = vld [vmem:[%s1 + $0x88] sm:$0xf]
    %v59 = vld [vmem:[%s1 + $0x8c] sm:$0xf]
    %v60 = vld [vmem:[%s1 + $0x90] sm:$0xf]
    %v61 = vld [vmem:[%s1 + $0x94] sm:$0xf]
    %v62 = vld [vmem:[%s1 + $0x98] sm:$0xf]
    %v63 = vld [vmem:[%s1 + $0x9c] sm:$0xf]
    %v64 = vld [vmem:[%s1 + $0xa0] sm:$0xf]
    %v65 = vld [vmem:[%s1 + $0xa4] sm:$0xf]
    %v66 = vld [vmem:[%s1 + $0xa8] sm:$0xf]
    %v67 = vld [vmem:[%s1 + $0xac] sm:$0xf]
    %v68 = vld [vmem:[%s1 + $0xb0] sm:$0xf]
    %v69 = vld [vmem:[%s1 + $0xb4] sm:$0xf]
    %v70 = vld [vmem:[%s1 + $0xb8] sm:$0xf]
    %v71 = vld [vmem:[%s1 + $0xbc] sm:$0xf]
    %v72 = vld [vmem:[%s1 + $0xc0] sm:$0xf]
    %v73 = vld [vmem:[%s1 + $0xc4] sm:$0xf]
    %v74 = vld [vmem:[%s1 + $0xc8] sm:$0xf]
    %v75 = vld [vmem:[%s1 + $0xcc] sm:$0xf]
    %v76 = vld [vmem:[%s1 + $0xd0] sm:$0xf]
    %v77 = vld [vmem:[%s1 + $0xd4] sm:$0xf]
    %v78 = vld [vmem:[%s1 + $0xd8] sm:$0xf]
    %v79 = vld [vmem:[%s1 + $0xdc] sm:$0xf]
    %v80 = vld [vmem:[%s1 + $0xe0] sm:$0xf]
    %v81 = vld [vmem:[%s1 + $0xe4] sm:$0xf]
    %v82 = vld [vmem:[%s1 + $0xe8] sm:$0xf]
    %v83 = vld [vmem:[%s1 + $0xec] sm:$0xf]
    %v84 = vld [vmem:[%s1 + $0xf0] sm:$0xf]
    %v85 = vld [vmem:[%s1 + $0xf4] sm:$0xf]
    %v86 = vld [vmem:[%s1 + $0xf8] sm:$0xf]
    %v87 = vld [vmem:[%s1 + $0xfc] sm:$0xf]
    %v88 = vld [vmem:[%s1 + $0x100] sm:$0xf]
    %v89 = vld [vmem:[%s1 + $0x104] sm:$0xf]
    %v90 = vld [vmem:[%s1 + $0x108] sm:$0xf]
    %v91 = vld [vmem:[%s1 + $0x10c] sm:$0xf]
    %v92 = vld [vmem:[%s1 + $0x110] sm:$0xf]
    %v93 = vld [vmem:[%s1 + $0x114] sm:$0xf]
    %v94 = vld [vmem:[%s1 + $0x118] sm:$0xf]
    %v95 = vld [vmem:[%s1 + $0x11c] sm:$0xf]
    %v96 = vld [vmem:[%s1 + $0x120] sm:$0xf]
    %v97 = vld [vmem:[%s1 + $0x124] sm:$0xf]
    %v98 = vld [vmem:[%s1 + $0x128] sm:$0xf]
    %v99 = vld [vmem:[%s1 + $0x12c] sm:$0xf]
    %v100 = vld [vmem:[%s1 + $0x130] sm:$0xf]
    %v101 = vld [vmem:[%s1 + $0x134] sm:$0xf]
    %v102 = vld [vmem:[%s1 + $0x138] sm:$0xf]
    %v103 = vld [vmem:[%s1 + $0x13c] sm:$0xf]
    %v104 = vld [vmem:[%s1 + $0x140] sm:$0xf]
    %v105 = vld [vmem:[%s1 + $0x144] sm:$0xf]
    %v106 = vld [vmem:[%s1 + $0x148] sm:$0xf]
    %v107 = vld [vmem:[%s1 + $0x14c] sm:$0xf]
    %v108 = vld [vmem:[%s1 + $0x150] sm:$0xf]
    %v109 = vld [vmem:[%s1 + $0x154] sm:$0xf]
    %v110 = vld [vmem:[%s1 + $0x158] sm:$0xf]
    %v111 = vld [vmem:[%s1 + $0x15c] sm:$0xf]
    %v112 = vld [vmem:[%s1 + $0x160] sm:$0xf]
    %v113 = vld [vmem:[%s1 + $0x164] sm:$0xf]
    %v114 = vld [vmem:[%s1 + $0x168] sm:$0xf]
    %v115 = vld [vmem:[%s1 + $0x16c] sm:$0xf]
    %v116 = vld [vmem:[%s1 + $0x170] sm:$0xf]
    %v117 = vld [vmem:[%s1 + $0x174] sm:$0xf]
    %v118 = vld [vmem:[%s1 + $0x178] sm:$0xf]
    %v119 = vld [vmem:[%s1 + $0x17c] sm:$0xf]
    %v120 = vld [vmem:[%s1 + $0x180] sm:$0xf]
    %v121 = vld [vmem:[%s1 + $0x184] sm:$0xf]
    %v122 = vld [vmem:[%s1 + $0x188] sm:$0xf]
    %v123 = vld [vmem:[%s1 + $0x18c] sm:$0xf]
    %v124 = vld [vmem:[%s1 + $0x190] sm:$0xf]
    %v125 = vld [vmem:[%s1 + $0x194] sm:$0xf]
    %v126 = vld [vmem:[%s1 + $0x198] sm:$0xf]
    %v127 = vld [vmem:[%s1 + $0x19c] sm:$0xf]
    %v128 = vld [vmem:[%s1 + $0x1a0] sm:$0xf]
    %v129 = vld [vmem:[%s1 + $0x1a4] sm:$0xf]
    %v130 = vld [vmem:[%s1 + $0x1a8] sm:$0xf]
    %v131 = vld [vmem:[%s1 + $0x1ac] sm:$0xf]
    %v132 = vld [vmem:[%s1 + $0x1b0] sm:$0xf]
    %v133 = vld [vmem:[%s1 + $0x1b4] sm:$0xf]
    %v134 = vld [vmem:[%s1 + $0x1b8] sm:$0xf]
    %v135 = vld [vmem:[%s1 + $0x1bc] sm:$0xf]
    %v136 = vld [vmem:[%s1 + $0x1c0] sm:$0xf]
    %v137 = vld [vmem:[%s1 + $0x1c4] sm:$0xf]
    %v138 = vld [vmem:[%s1 + $0x1c8] sm:$0xf]
    %v139 = vld [vmem:[%s1 + $0x1cc] sm:$0xf]
    %v140 = vld [vmem:[%s1 + $0x1d0] sm:$0xf]
    %v141 = vld [vmem:[%s1 + $0x1d4] sm:$0xf]
    %v142 = vld [vmem:[%s1 + $0x1d8] sm:$0xf]
    %v143 = vld [vmem:[%s1 + $0x1dc] sm:$0xf]
    %v144 = vld [vmem:[%s1 + $0x1e0] sm:$0xf]
    %v145 = vld [vmem:[%s1 + $0x1e4] sm:$0xf]
    %v146 = vld [vmem:[%s1 + $0x1e8] sm:$0xf]
    %v147 = vld [vmem:[%s1 + $0x1ec] sm:$0xf]
    %v148 = vld [vmem:[%s1 + $0x1f0] sm:$0xf]
    %v149 = vld [vmem:[%s1 + $0x1f4] sm:$0xf]
    %v150 = vld [vmem:[%s1 + $0x1f8] sm:$0xf]
    %v151 = vld [vmem:[%s1 + $0x1fc] sm:$0xf]
    %v152 = vld [vmem:[%s1 + $0x200] sm:$0xf]
    %v153 = vld [vmem:[%s1 + $0x204] sm:$0xf]
    %v154 = vld [vmem:[%s1 + $0x208] sm:$0xf]
    %v155 = vld [vmem:[%s1 + $0x20c] sm:$0xf]
    %v156 = vld [vmem:[%s1 + $0x210] sm:$0xf]
    %v157 = vld [vmem:[%s1 + $0x214] sm:$0xf]
    %v158 = vld [vmem:[%s1 + $0x218] sm:$0xf]
    %v159 = vld [vmem:[%s1 + $0x21c] sm:$0xf]
    %v160 = vld [vmem:[%s1 + $0x220] sm:$0xf]
    %v161 = vld [vmem:[%s1 + $0x224] sm:$0xf]
    %v162 = vld [vmem:[%s1 + $0x228] sm:$0xf]
    %v163 = vld [vmem:[%s1 + $0x22c] sm:$0xf]
    %v164 = vld [vmem:[%s1 + $0x230] sm:$0xf]
    %v165 = vld [vmem:[%s1 + $0x234] sm:$0xf]
    %v166 = vld [vmem:[%s1 + $0x238] sm:$0xf]
    %v167 = vld [vmem:[%s1 + $0x23c] sm:$0xf]
    %v168 = vld [vmem:[%s1 + $0x240] sm:$0xf]
    %v169 = vld [vmem:[%s1 + $0x244] sm:$0xf]
    %v170 = vld [vmem:[%s1 + $0x248] sm:$0xf]
    %v171 = vld [vmem:[%s1 + $0x24c] sm:$0xf]
    %v172 = vld [vmem:[%s1 + $0x250] sm:$0xf]
    %v173 = vld [vmem:[%s1 + $0x254] sm:$0xf]
    %v174 = vld [vmem:[%s1 + $0x258] sm:$0xf]
    %v175 = vld [vmem:[%s1 + $0x25c] sm:$0xf]
    %v176 = vld [vmem:[%s1 + $0x260] sm:$0xf]
    %v177 = vld [vmem:[%s1 + $0x264] sm:$0xf]
    %v178 = vld [vmem:[%s1 + $0x268] sm:$0xf]
    %v179 = vld [vmem:[%s1 + $0x26c] sm:$0xf]
    %v180 = vld [vmem:[%s1 + $0x270] sm:$0xf]
    %v181 = vld [vmem:[%s1 + $0x274] sm:$0xf]
    %v182 = vld [vmem:[%s1 + $0x278] sm:$0xf]
    %v183 = vld [vmem:[%s1 + $0x27c] sm:$0xf]
    %v184 = vld [vmem:[%s2] sm:$0x1]
    %v186 = vlaneseq
    %v187 = vshrl.u32 %v186, 7
    %v188 = vsub.s32 0, %v187
    %v189 = vrot.slane %v184, %v188
    %v193 = vcombine.high %v22, %v22
    %v195 = vunpack.c.l.s4 1966171168
    %v196 = vunpack.c.0.s8 %v195
    %v197 = vlaneseq
    %v198 = vshrl.u32 %v197, 7
    %v199 = vsub.s32 %v196, %v198
    %v200 = vrot.slane %v22, %v199
    %v202 = vunpack.c.l.s4 1966171168
    %v203 = vunpack.c.0.s8 %v202
    %v204 = vlaneseq
    %v205 = vshrl.u32 %v204, 7
    %v206 = vsub.s32 %v203, %v205
    %v207 = vrot.slane %v193, %v206
    %v208 = vcombine.high %v200, %v200
    %v209 = vcombine.high %v207, %v207
    %v211 = vunpack.c.l.s4 1966171168
    %v212 = vunpack.c.0.s8 %v211
    %v213 = vlaneseq
    %v214 = vshrl.u32 %v213, 7
    %v215 = vsub.s32 %v212, %v214
    %v216 = vrot.slane %v200, %v215
    %v218 = vunpack.c.l.s4 1966171168
    %v219 = vunpack.c.0.s8 %v218
    %v220 = vlaneseq
    %v221 = vshrl.u32 %v220, 7
    %v222 = vsub.s32 %v219, %v221
    %v223 = vrot.slane %v207, %v222
    %v225 = vunpack.c.l.s4 1966171168
    %v226 = vunpack.c.0.s8 %v225
    %v227 = vlaneseq
    %v228 = vshrl.u32 %v227, 7
    %v229 = vsub.s32 %v226, %v228
    %v230 = vrot.slane %v208, %v229
    %v232 = vunpack.c.l.s4 1966171168
    %v233 = vunpack.c.0.s8 %v232
    %v234 = vlaneseq
    %v235 = vshrl.u32 %v234, 7
    %v236 = vsub.s32 %v233, %v235
    %v237 = vrot.slane %v209, %v236
    %v238 = vcombine.high %v216, %v216
    %v239 = vcombine.high %v223, %v223
    %v240 = vcombine.high %v230, %v230
    %v241 = vcombine.high %v237, %v237
    %v243 = vunpack.c.l.s4 1966171168
    %v244 = vunpack.c.0.s8 %v243
    %v245 = vlaneseq
    %v246 = vshrl.u32 %v245, 7
    %v247 = vsub.s32 %v244, %v246
    %v248 = vrot.slane %v23, %v247
    %v249 = vcombine.high %v248, %v248
    %v251 = vunpack.c.l.s4 1966171168
    %v252 = vunpack.c.0.s8 %v251
    %v253 = vlaneseq
    %v254 = vshrl.u32 %v253, 7
    %v255 = vsub.s32 %v252, %v254
    %v256 = vrot.slane %v248, %v255
    %v258 = vunpack.c.l.s4 1966171168
    %v259 = vunpack.c.0.s8 %v258
    %v260 = vlaneseq
    %v261 = vshrl.u32 %v260, 7
    %v262 = vsub.s32 %v259, %v261
    %v263 = vrot.slane %v249, %v262
    %v434 = vunpack.c.l.b16 %v24
    %v435 = vunpack.c.l.b16 %v25
    %v436 = vunpack.c.l.b16 %v26
    %v437 = vunpack.c.l.b16 %v27
    %v438 = vunpack.c.l.b16 %v28
    %v439 = vunpack.c.l.b16 %v29
    %v440 = vunpack.c.l.b16 %v30
    %v441 = vunpack.c.l.b16 %v31
    %v442 = vunpack.c.l.b16 %v32
    %v443 = vunpack.c.l.b16 %v33
    %v444 = vunpack.c.l.b16 %v34
    %v445 = vunpack.c.l.b16 %v35
    %v446 = vunpack.c.l.b16 %v36
    %v447 = vunpack.c.l.b16 %v37
    %v448 = vunpack.c.l.b16 %v38
    %v449 = vunpack.c.l.b16 %v39
    %v450 = vunpack.c.l.b16 %v40
    %v451 = vunpack.c.l.b16 %v41
    %v452 = vunpack.c.l.b16 %v42
    %v453 = vunpack.c.l.b16 %v43
    %v454 = vunpack.c.l.b16 %v44
    %v455 = vunpack.c.l.b16 %v45
    %v456 = vunpack.c.l.b16 %v46
    %v457 = vunpack.c.l.b16 %v47
    %v458 = vunpack.c.l.b16 %v48
    %v459 = vunpack.c.l.b16 %v49
    %v460 = vunpack.c.l.b16 %v50
    %v461 = vunpack.c.l.b16 %v51
    %v462 = vunpack.c.l.b16 %v52
    %v463 = vunpack.c.l.b16 %v53
    %v464 = vunpack.c.l.b16 %v54
    %v465 = vunpack.c.l.b16 %v55
    %v466 = vunpack.c.l.b16 %v56
    %v467 = vunpack.c.l.b16 %v57
    %v468 = vunpack.c.l.b16 %v58
    %v469 = vunpack.c.l.b16 %v59
    %v470 = vunpack.c.l.b16 %v60
    %v471 = vunpack.c.l.b16 %v61
    %v472 = vunpack.c.l.b16 %v62
    %v473 = vunpack.c.l.b16 %v63
    %v474 = vunpack.c.l.b16 %v64
    %v475 = vunpack.c.l.b16 %v65
    %v476 = vunpack.c.l.b16 %v66
    %v477 = vunpack.c.l.b16 %v67
    %v478 = vunpack.c.l.b16 %v68
    %v479 = vunpack.c.l.b16 %v69
    %v480 = vunpack.c.l.b16 %v70
    %v481 = vunpack.c.l.b16 %v71
    %v482 = vunpack.c.l.b16 %v72
    %v483 = vunpack.c.l.b16 %v73
    %v484 = vunpack.c.l.b16 %v74
    %v485 = vunpack.c.l.b16 %v75
    %v486 = vunpack.c.l.b16 %v76
    %v487 = vunpack.c.l.b16 %v77
    %v488 = vunpack.c.l.b16 %v78
    %v489 = vunpack.c.l.b16 %v79
    %v490 = vunpack.c.l.b16 %v80
    %v491 = vunpack.c.l.b16 %v81
    %v492 = vunpack.c.l.b16 %v82
    %v493 = vunpack.c.l.b16 %v83
    %v494 = vunpack.c.l.b16 %v84
    %v495 = vunpack.c.l.b16 %v85
    %v496 = vunpack.c.l.b16 %v86
    %v497 = vunpack.c.l.b16 %v87
    %v498 = vunpack.c.l.b16 %v88
    %v499 = vunpack.c.l.b16 %v89
    %v500 = vunpack.c.l.b16 %v90
    %v501 = vunpack.c.l.b16 %v91
    %v502 = vunpack.c.l.b16 %v92
    %v503 = vunpack.c.l.b16 %v93
    %v504 = vunpack.c.l.b16 %v94
    %v505 = vunpack.c.l.b16 %v95
    %v506 = vunpack.c.l.b16 %v96
    %v507 = vunpack.c.l.b16 %v97
    %v508 = vunpack.c.l.b16 %v98
    %v509 = vunpack.c.l.b16 %v99
    %v510 = vunpack.c.l.b16 %v100
    %v511 = vunpack.c.l.b16 %v101
    %v512 = vunpack.c.l.b16 %v102
    %v513 = vunpack.c.l.b16 %v103
    %v514 = vunpack.c.l.b16 %v104
    %v515 = vunpack.c.l.b16 %v105
    %v516 = vunpack.c.l.b16 %v106
    %v517 = vunpack.c.l.b16 %v107
    %v518 = vunpack.c.l.b16 %v108
    %v519 = vunpack.c.l.b16 %v109
    %v520 = vunpack.c.l.b16 %v110
    %v521 = vunpack.c.l.b16 %v111
    %v522 = vunpack.c.l.b16 %v112
    %v523 = vunpack.c.l.b16 %v113
    %v524 = vunpack.c.l.b16 %v114
    %v525 = vunpack.c.l.b16 %v115
    %v526 = vunpack.c.l.b16 %v116
    %v527 = vunpack.c.l.b16 %v117
    %v528 = vunpack.c.l.b16 %v118
    %v529 = vunpack.c.l.b16 %v119
    %v530 = vunpack.c.l.b16 %v120
    %v531 = vunpack.c.l.b16 %v121
    %v532 = vunpack.c.l.b16 %v122
    %v533 = vunpack.c.l.b16 %v123
    %v534 = vunpack.c.l.b16 %v124
    %v535 = vunpack.c.l.b16 %v125
    %v536 = vunpack.c.l.b16 %v126
    %v537 = vunpack.c.l.b16 %v127
    %v538 = vunpack.c.l.b16 %v128
    %v539 = vunpack.c.l.b16 %v129
    %v540 = vunpack.c.l.b16 %v130
    %v541 = vunpack.c.l.b16 %v131
    %v542 = vunpack.c.l.b16 %v132
    %v543 = vunpack.c.l.b16 %v133
    %v544 = vunpack.c.l.b16 %v134
    %v545 = vunpack.c.l.b16 %v135
    %v546 = vunpack.c.l.b16 %v136
    %v547 = vunpack.c.l.b16 %v137
    %v548 = vunpack.c.l.b16 %v138
    %v549 = vunpack.c.l.b16 %v139
    %v550 = vunpack.c.l.b16 %v140
    %v551 = vunpack.c.l.b16 %v141
    %v552 = vunpack.c.l.b16 %v142
    %v553 = vunpack.c.l.b16 %v143
    %v554 = vunpack.c.l.b16 %v144
    %v555 = vunpack.c.l.b16 %v145
    %v556 = vunpack.c.l.b16 %v146
    %v557 = vunpack.c.l.b16 %v147
    %v558 = vunpack.c.l.b16 %v148
    %v559 = vunpack.c.l.b16 %v149
    %v560 = vunpack.c.l.b16 %v150
    %v561 = vunpack.c.l.b16 %v151
    %v562 = vunpack.c.l.b16 %v152
    %v563 = vunpack.c.l.b16 %v153
    %v564 = vunpack.c.l.b16 %v154
    %v565 = vunpack.c.l.b16 %v155
    %v566 = vunpack.c.l.b16 %v156
    %v567 = vunpack.c.l.b16 %v157
    %v568 = vunpack.c.l.b16 %v158
    %v569 = vunpack.c.l.b16 %v159
    %v570 = vunpack.c.l.b16 %v160
    %v571 = vunpack.c.l.b16 %v161
    %v572 = vunpack.c.l.b16 %v162
    %v573 = vunpack.c.l.b16 %v163
    %v574 = vunpack.c.l.b16 %v164
    %v575 = vunpack.c.l.b16 %v165
    %v576 = vunpack.c.l.b16 %v166
    %v577 = vunpack.c.l.b16 %v167
    %v578 = vunpack.c.l.b16 %v168
    %v579 = vunpack.c.l.b16 %v169
    %v580 = vunpack.c.l.b16 %v170
    %v581 = vunpack.c.l.b16 %v171
    %v582 = vunpack.c.l.b16 %v172
    %v583 = vunpack.c.l.b16 %v173
    %v584 = vunpack.c.l.b16 %v174
    %v585 = vunpack.c.l.b16 %v175
    %v586 = vunpack.c.l.b16 %v176
    %v587 = vunpack.c.l.b16 %v177
    %v588 = vunpack.c.l.b16 %v178
    %v589 = vunpack.c.l.b16 %v179
    %v590 = vunpack.c.l.b16 %v180
    %v591 = vunpack.c.l.b16 %v181
    %v592 = vunpack.c.l.b16 %v182
    %v593 = vunpack.c.l.b16 %v183
    %v594 = vpack.c.b16 %v435, %v434
    %v595 = vpack.c.b16 %v437, %v436
    %v596 = vpack.c.b16 %v439, %v438
    %v597 = vpack.c.b16 %v441, %v440
    %v598 = vpack.c.b16 %v443, %v442
    %v599 = vpack.c.b16 %v445, %v444
    %v600 = vpack.c.b16 %v447, %v446
    %v601 = vpack.c.b16 %v449, %v448
    %v602 = vpack.c.b16 %v451, %v450
    %v603 = vpack.c.b16 %v453, %v452
    %v604 = vpack.c.b16 %v455, %v454
    %v605 = vpack.c.b16 %v457, %v456
    %v606 = vpack.c.b16 %v459, %v458
    %v607 = vpack.c.b16 %v461, %v460
    %v608 = vpack.c.b16 %v463, %v462
    %v609 = vpack.c.b16 %v465, %v464
    %v610 = vpack.c.b16 %v467, %v466
    %v611 = vpack.c.b16 %v469, %v468
    %v612 = vpack.c.b16 %v471, %v470
    %v613 = vpack.c.b16 %v473, %v472
    %v614 = vpack.c.b16 %v475, %v474
    %v615 = vpack.c.b16 %v477, %v476
    %v616 = vpack.c.b16 %v479, %v478
    %v617 = vpack.c.b16 %v481, %v480
    %v618 = vpack.c.b16 %v483, %v482
    %v619 = vpack.c.b16 %v485, %v484
    %v620 = vpack.c.b16 %v487, %v486
    %v621 = vpack.c.b16 %v489, %v488
    %v622 = vpack.c.b16 %v491, %v490
    %v623 = vpack.c.b16 %v493, %v492
    %v624 = vpack.c.b16 %v495, %v494
    %v625 = vpack.c.b16 %v497, %v496
    %v626 = vpack.c.b16 %v499, %v498
    %v627 = vpack.c.b16 %v501, %v500
    %v628 = vpack.c.b16 %v503, %v502
    %v629 = vpack.c.b16 %v505, %v504
    %v630 = vpack.c.b16 %v507, %v506
    %v631 = vpack.c.b16 %v509, %v508
    %v632 = vpack.c.b16 %v511, %v510
    %v633 = vpack.c.b16 %v513, %v512
    %v634 = vpack.c.b16 %v515, %v514
    %v635 = vpack.c.b16 %v517, %v516
    %v636 = vpack.c.b16 %v519, %v518
    %v637 = vpack.c.b16 %v521, %v520
    %v638 = vpack.c.b16 %v523, %v522
    %v639 = vpack.c.b16 %v525, %v524
    %v640 = vpack.c.b16 %v527, %v526
    %v641 = vpack.c.b16 %v529, %v528
    %v642 = vpack.c.b16 %v531, %v530
    %v643 = vpack.c.b16 %v533, %v532
    %v644 = vpack.c.b16 %v535, %v534
    %v645 = vpack.c.b16 %v537, %v536
    %v646 = vpack.c.b16 %v539, %v538
    %v647 = vpack.c.b16 %v541, %v540
    %v648 = vpack.c.b16 %v543, %v542
    %v649 = vpack.c.b16 %v545, %v544
    %v650 = vpack.c.b16 %v547, %v546
    %v651 = vpack.c.b16 %v549, %v548
    %v652 = vpack.c.b16 %v551, %v550
    %v653 = vpack.c.b16 %v553, %v552
    %v654 = vpack.c.b16 %v555, %v554
    %v655 = vpack.c.b16 %v557, %v556
    %v656 = vpack.c.b16 %v559, %v558
    %v657 = vpack.c.b16 %v561, %v560
    %v658 = vpack.c.b16 %v563, %v562
    %v659 = vpack.c.b16 %v565, %v564
    %v660 = vpack.c.b16 %v567, %v566
    %v661 = vpack.c.b16 %v569, %v568
    %v662 = vpack.c.b16 %v571, %v570
    %v663 = vpack.c.b16 %v573, %v572
    %v664 = vpack.c.b16 %v575, %v574
    %v665 = vpack.c.b16 %v577, %v576
    %v666 = vpack.c.b16 %v579, %v578
    %v667 = vpack.c.b16 %v581, %v580
    %v668 = vpack.c.b16 %v583, %v582
    %v669 = vpack.c.b16 %v585, %v584
    %v670 = vpack.c.b16 %v587, %v586
    %v671 = vpack.c.b16 %v589, %v588
    %v672 = vpack.c.b16 %v591, %v590
    %v673 = vpack.c.b16 %v593, %v592
    %754 = vmatprep.subr.bf16.mxu0 0
    %755 = vmatpush1.bf16.msra.mxu0 %v594
    %756 = vmatprep.subr.bf16.mxu0 0
    %757 = vmatpush1.bf16.msra.mxu0 %v595
    %758 = vmatprep.subr.bf16.mxu0 0
    %759 = vmatpush1.bf16.msra.mxu0 %v596
    %760 = vmatprep.subr.bf16.mxu0 0
    %761 = vmatpush1.bf16.msra.mxu0 %v597
    %762 = vmatprep.subr.bf16.mxu0 0
    %763 = vmatpush1.bf16.msra.mxu0 %v598
    %764 = vmatprep.subr.bf16.mxu0 0
    %765 = vmatpush1.bf16.msra.mxu0 %v599
    %766 = vmatprep.subr.bf16.mxu0 0
    %767 = vmatpush1.bf16.msra.mxu0 %v600
    %768 = vmatprep.subr.bf16.mxu0 0
    %769 = vmatpush1.bf16.msra.mxu0 %v601
    %770 = vmatprep.subr.bf16.mxu0 0
    %771 = vmatpush1.bf16.msra.mxu0 %v602
    %772 = vmatprep.subr.bf16.mxu0 0
    %773 = vmatpush1.bf16.msra.mxu0 %v603
    %774 = vmatprep.subr.bf16.mxu0 0
    %775 = vmatpush1.bf16.msra.mxu0 %v604
    %776 = vmatprep.subr.bf16.mxu0 0
    %777 = vmatpush1.bf16.msra.mxu0 %v605
    %778 = vmatprep.subr.bf16.mxu0 0
    %779 = vmatpush1.bf16.msra.mxu0 %v606
    %780 = vmatprep.subr.bf16.mxu0 0
    %781 = vmatpush1.bf16.msra.mxu0 %v607
    %782 = vmatprep.subr.bf16.mxu0 0
    %783 = vmatpush1.bf16.msra.mxu0 %v608
    %784 = vmatprep.subr.bf16.mxu0 0
    %785 = vmatpush1.bf16.msra.mxu0 %v609
    %786 = vmatprep.mubr.bf16.mxu0 %v230
    %787 = vmatmul.mubr.bf16.gmra.mrb[0].mxu0 %v216
    %v788 = vpop.f32.mrb[0].mxu0
    %v789 = vadd.f32 %v189, %v788
    %v790 = vpop.f32.mrb[0].mxu0
    %v791 = vpop.f32.mrb[0].mxu0
    %v792 = vpop.f32.mrb[0].mxu0
    %793 = vdwg.mxu0
    %794 = vmatprep.subr.bf16.mxu0 0
    %795 = vmatpush1.bf16.msra.mxu0 %v610
    %796 = vmatprep.subr.bf16.mxu0 0
    %797 = vmatpush1.bf16.msra.mxu0 %v611
    %798 = vmatprep.subr.bf16.mxu0 0
    %799 = vmatpush1.bf16.msra.mxu0 %v612
    %800 = vmatprep.subr.bf16.mxu0 0
    %801 = vmatpush1.bf16.msra.mxu0 %v613
    %802 = vmatprep.subr.bf16.mxu0 0
    %803 = vmatpush1.bf16.msra.mxu0 %v614
    %804 = vmatprep.subr.bf16.mxu0 0
    %805 = vmatpush1.bf16.msra.mxu0 %v615
    %806 = vmatprep.subr.bf16.mxu0 0
    %807 = vmatpush1.bf16.msra.mxu0 %v616
    %808 = vmatprep.subr.bf16.mxu0 0
    %809 = vmatpush1.bf16.msra.mxu0 %v617
    %810 = vmatprep.subr.bf16.mxu0 0
    %811 = vmatpush1.bf16.msra.mxu0 %v618
    %812 = vmatprep.subr.bf16.mxu0 0
    %813 = vmatpush1.bf16.msra.mxu0 %v619
    %814 = vmatprep.subr.bf16.mxu0 0
    %815 = vmatpush1.bf16.msra.mxu0 %v620
    %816 = vmatprep.subr.bf16.mxu0 0
    %817 = vmatpush1.bf16.msra.mxu0 %v621
    %818 = vmatprep.subr.bf16.mxu0 0
    %819 = vmatpush1.bf16.msra.mxu0 %v622
    %820 = vmatprep.subr.bf16.mxu0 0
    %821 = vmatpush1.bf16.msra.mxu0 %v623
    %822 = vmatprep.subr.bf16.mxu0 0
    %823 = vmatpush1.bf16.msra.mxu0 %v624
    %824 = vmatprep.subr.bf16.mxu0 0
    %825 = vmatpush1.bf16.msra.mxu0 %v625
    %826 = vmatprep.mubr.bf16.mxu0 %v240
    %827 = vmatmul.mubr.bf16.gmra.mrb[0].mxu0 %v238
    %v828 = vpop.f32.mrb[0].mxu0
    %v829 = vadd.f32 %v789, %v828
    %v830 = vpop.f32.mrb[0].mxu0
    %v831 = vpop.f32.mrb[0].mxu0
    %v832 = vpop.f32.mrb[0].mxu0
    %833 = vdwg.mxu0
    %834 = vmatprep.subr.bf16.mxu0 0
    %835 = vmatpush1.bf16.msra.mxu0 %v626
    %836 = vmatprep.subr.bf16.mxu0 0
    %837 = vmatpush1.bf16.msra.mxu0 %v627
    %838 = vmatprep.subr.bf16.mxu0 0
    %839 = vmatpush1.bf16.msra.mxu0 %v628
    %840 = vmatprep.subr.bf16.mxu0 0
    %841 = vmatpush1.bf16.msra.mxu0 %v629
    %842 = vmatprep.subr.bf16.mxu0 0
    %843 = vmatpush1.bf16.msra.mxu0 %v630
    %844 = vmatprep.subr.bf16.mxu0 0
    %845 = vmatpush1.bf16.msra.mxu0 %v631
    %846 = vmatprep.subr.bf16.mxu0 0
    %847 = vmatpush1.bf16.msra.mxu0 %v632
    %848 = vmatprep.subr.bf16.mxu0 0
    %849 = vmatpush1.bf16.msra.mxu0 %v633
    %850 = vmatprep.subr.bf16.mxu0 0
    %851 = vmatpush1.bf16.msra.mxu0 %v634
    %852 = vmatprep.subr.bf16.mxu0 0
    %853 = vmatpush1.bf16.msra.mxu0 %v635
    %854 = vmatprep.subr.bf16.mxu0 0
    %855 = vmatpush1.bf16.msra.mxu0 %v636
    %856 = vmatprep.subr.bf16.mxu0 0
    %857 = vmatpush1.bf16.msra.mxu0 %v637
    %858 = vmatprep.subr.bf16.mxu0 0
    %859 = vmatpush1.bf16.msra.mxu0 %v638
    %860 = vmatprep.subr.bf16.mxu0 0
    %861 = vmatpush1.bf16.msra.mxu0 %v639
    %862 = vmatprep.subr.bf16.mxu0 0
    %863 = vmatpush1.bf16.msra.mxu0 %v640
    %864 = vmatprep.subr.bf16.mxu0 0
    %865 = vmatpush1.bf16.msra.mxu0 %v641
    %866 = vmatprep.mubr.bf16.mxu0 %v237
    %867 = vmatmul.mubr.bf16.gmra.mrb[0].mxu0 %v223
    %v868 = vpop.f32.mrb[0].mxu0
    %v869 = vadd.f32 %v829, %v868
    %v870 = vpop.f32.mrb[0].mxu0
    %v871 = vpop.f32.mrb[0].mxu0
    %v872 = vpop.f32.mrb[0].mxu0
    %873 = vdwg.mxu0
    %874 = vmatprep.subr.bf16.mxu0 0
    %875 = vmatpush1.bf16.msra.mxu0 %v642
    %876 = vmatprep.subr.bf16.mxu0 0
    %877 = vmatpush1.bf16.msra.mxu0 %v643
    %878 = vmatprep.subr.bf16.mxu0 0
    %879 = vmatpush1.bf16.msra.mxu0 %v644
    %880 = vmatprep.subr.bf16.mxu0 0
    %881 = vmatpush1.bf16.msra.mxu0 %v645
    %882 = vmatprep.subr.bf16.mxu0 0
    %883 = vmatpush1.bf16.msra.mxu0 %v646
    %884 = vmatprep.subr.bf16.mxu0 0
    %885 = vmatpush1.bf16.msra.mxu0 %v647
    %886 = vmatprep.subr.bf16.mxu0 0
    %887 = vmatpush1.bf16.msra.mxu0 %v648
    %888 = vmatprep.subr.bf16.mxu0 0
    %889 = vmatpush1.bf16.msra.mxu0 %v649
    %890 = vmatprep.subr.bf16.mxu0 0
    %891 = vmatpush1.bf16.msra.mxu0 %v650
    %892 = vmatprep.subr.bf16.mxu0 0
    %893 = vmatpush1.bf16.msra.mxu0 %v651
    %894 = vmatprep.subr.bf16.mxu0 0
    %895 = vmatpush1.bf16.msra.mxu0 %v652
    %896 = vmatprep.subr.bf16.mxu0 0
    %897 = vmatpush1.bf16.msra.mxu0 %v653
    %898 = vmatprep.subr.bf16.mxu0 0
    %899 = vmatpush1.bf16.msra.mxu0 %v654
    %900 = vmatprep.subr.bf16.mxu0 0
    %901 = vmatpush1.bf16.msra.mxu0 %v655
    %902 = vmatprep.subr.bf16.mxu0 0
    %903 = vmatpush1.bf16.msra.mxu0 %v656
    %904 = vmatprep.subr.bf16.mxu0 0
    %905 = vmatpush1.bf16.msra.mxu0 %v657
    %906 = vmatprep.mubr.bf16.mxu0 %v241
    %907 = vmatmul.mubr.bf16.gmra.mrb[0].mxu0 %v239
    %v908 = vpop.f32.mrb[0].mxu0
    %v909 = vadd.f32 %v869, %v908
    %v910 = vpop.f32.mrb[0].mxu0
    %v911 = vpop.f32.mrb[0].mxu0
    %v912 = vpop.f32.mrb[0].mxu0
    %913 = vdwg.mxu0
    %914 = vmatprep.subr.bf16.mxu0 0
    %915 = vmatpush1.bf16.msra.mxu0 %v658
    %916 = vmatprep.subr.bf16.mxu0 0
    %917 = vmatpush1.bf16.msra.mxu0 %v659
    %918 = vmatprep.subr.bf16.mxu0 0
    %919 = vmatpush1.bf16.msra.mxu0 %v660
    %920 = vmatprep.subr.bf16.mxu0 0
    %921 = vmatpush1.bf16.msra.mxu0 %v661
    %922 = vmatprep.subr.bf16.mxu0 0
    %923 = vmatpush1.bf16.msra.mxu0 %v662
    %924 = vmatprep.subr.bf16.mxu0 0
    %925 = vmatpush1.bf16.msra.mxu0 %v663
    %926 = vmatprep.subr.bf16.mxu0 0
    %927 = vmatpush1.bf16.msra.mxu0 %v664
    %928 = vmatprep.subr.bf16.mxu0 0
    %929 = vmatpush1.bf16.msra.mxu0 %v665
    %930 = vmatprep.subr.bf16.mxu0 0
    %931 = vmatpush1.bf16.msra.mxu0 %v666
    %932 = vmatprep.subr.bf16.mxu0 0
    %933 = vmatpush1.bf16.msra.mxu0 %v667
    %934 = vmatprep.subr.bf16.mxu0 0
    %935 = vmatpush1.bf16.msra.mxu0 %v668
    %936 = vmatprep.subr.bf16.mxu0 0
    %937 = vmatpush1.bf16.msra.mxu0 %v669
    %938 = vmatprep.subr.bf16.mxu0 0
    %939 = vmatpush1.bf16.msra.mxu0 %v670
    %940 = vmatprep.subr.bf16.mxu0 0
    %941 = vmatpush1.bf16.msra.mxu0 %v671
    %942 = vmatprep.subr.bf16.mxu0 0
    %943 = vmatpush1.bf16.msra.mxu0 %v672
    %944 = vmatprep.subr.bf16.mxu0 0
    %945 = vmatpush1.bf16.msra.mxu0 %v673
    %946 = vmatprep.mubr.bf16.mxu0 %v263
    %947 = vmatmul.mubr.bf16.gmra.mrb[0].mxu0 %v256
    %v948 = vpop.f32.mrb[0].mxu0
    %v949 = vadd.f32 %v909, %v948
    %v950 = vpop.f32.mrb[0].mxu0
    %v951 = vpop.f32.mrb[0].mxu0
    %v952 = vpop.f32.mrb[0].mxu0
    %953 = vdwg.mxu0
    %vm954 = vcmp.gt.f32.partialorder %v949, 0.0
    %v955 = vmul.f32 %v949, 0.01
    %v956 = vsel %vm954, %v949, %v955
    %v957 = vpack.c.bf16 %v956, %v956
    %v958 = vld [vmem:[%s3] sm:$0xf]
    %v959 = vld [vmem:[%s3 + $0x4] sm:$0xf]
    %v960 = vld [vmem:[%s3 + $0x8] sm:$0xf]
    %v961 = vld [vmem:[%s3 + $0xc] sm:$0xf]
    %v962 = vld [vmem:[%s3 + $0x10] sm:$0xf]
    %v963 = vld [vmem:[%s3 + $0x14] sm:$0xf]
    %v964 = vld [vmem:[%s3 + $0x18] sm:$0xf]
    %v965 = vld [vmem:[%s3 + $0x1c] sm:$0xf]
    %v966 = vld [vmem:[%s3 + $0x20] sm:$0xf]
    %v967 = vld [vmem:[%s3 + $0x24] sm:$0xf]
    %v968 = vld [vmem:[%s3 + $0x28] sm:$0xf]
    %v969 = vld [vmem:[%s3 + $0x2c] sm:$0xf]
    %v970 = vld [vmem:[%s3 + $0x30] sm:$0x3]
    %v971 = vld [vmem:[%s4] sm:$0x1]
    %v973 = vlaneseq
    %v974 = vshrl.u32 %v973, 7
    %v975 = vsub.s32 0, %v974
    %v976 = vrot.slane %v971, %v975
    %v991 = vunpack.c.l.b16 %v958
    %v992 = vunpack.c.l.b16 %v959
    %v993 = vunpack.c.l.b16 %v960
    %v994 = vunpack.c.l.b16 %v961
    %v995 = vunpack.c.l.b16 %v962
    %v996 = vunpack.c.l.b16 %v963
    %v997 = vunpack.c.l.b16 %v964
    %v998 = vunpack.c.l.b16 %v965
    %v999 = vunpack.c.l.b16 %v966
    %v1000 = vunpack.c.l.b16 %v967
    %v1001 = vunpack.c.l.b16 %v968
    %v1002 = vunpack.c.l.b16 %v969
    %v1003 = vunpack.c.l.b16 %v970
    %v1004 = vpack.c.b16 %v992, %v991
    %v1005 = vpack.c.b16 %v994, %v993
    %v1006 = vpack.c.b16 %v996, %v995
    %v1007 = vpack.c.b16 %v998, %v997
    %v1008 = vpack.c.b16 %v1000, %v999
    %v1009 = vpack.c.b16 %v1002, %v1001
    %v1010 = vpack.c.b16 %v1003, %v1003
    %vm1017 = vcmask 818176
    %v1019 = vsel %vm1017, %v957, 0
    %vm1021 = vcmask 1041408
    %v1023 = vsel %vm1021, %v1010, 0
    %1025 = vmatprep.subr.bf16.mxu0 0
    %1026 = vmatpush1.bf16.msra.mxu0 %v1004
    %1027 = vmatprep.subr.bf16.mxu0 0
    %1028 = vmatpush1.bf16.msra.mxu0 %v1005
    %1029 = vmatprep.subr.bf16.mxu0 0
    %1030 = vmatpush1.bf16.msra.mxu0 %v1006
    %1031 = vmatprep.subr.bf16.mxu0 0
    %1032 = vmatpush1.bf16.msra.mxu0 %v1007
    %1033 = vmatprep.subr.bf16.mxu0 0
    %1034 = vmatpush1.bf16.msra.mxu0 %v1008
    %1035 = vmatprep.subr.bf16.mxu0 0
    %1036 = vmatpush1.bf16.msra.mxu0 %v1009
    %1037 = vmatprep.subr.bf16.mxu0 0
    %1038 = vmatpush1.bf16.msra.mxu0 %v1023
    %1039 = vmatprep.subr.bf16.mxu0 0
    %1040 = vmatpush1.bf16.msra.mxu0 0
    %1041 = vmatprep.subr.bf16.mxu0 0
    %1042 = vmatpush1.bf16.msra.mxu0 0
    %1043 = vmatprep.subr.bf16.mxu0 0
    %1044 = vmatpush1.bf16.msra.mxu0 0
    %1045 = vmatprep.subr.bf16.mxu0 0
    %1046 = vmatpush1.bf16.msra.mxu0 0
    %1047 = vmatprep.subr.bf16.mxu0 0
    %1048 = vmatpush1.bf16.msra.mxu0 0
    %1049 = vmatprep.subr.bf16.mxu0 0
    %1050 = vmatpush1.bf16.msra.mxu0 0
    %1051 = vmatprep.subr.bf16.mxu0 0
    %1052 = vmatpush1.bf16.msra.mxu0 0
    %1053 = vmatprep.subr.bf16.mxu0 0
    %1054 = vmatpush1.bf16.msra.mxu0 0
    %1055 = vmatprep.subr.bf16.mxu0 0
    %1056 = vmatpush1.bf16.msra.mxu0 0
    %1057 = vmatprep.mubr.bf16.mxu0 0
    %1058 = vmatmul.mubr.bf16.gmra.mrb[0].mxu0 %v1019
    %v1059 = vpop.f32.mrb[0].mxu0
    %v1060 = vadd.f32 %v976, %v1059
    %v1061 = vpop.f32.mrb[0].mxu0
    %v1062 = vpop.f32.mrb[0].mxu0
    %v1063 = vpop.f32.mrb[0].mxu0
    %1064 = vdwg.mxu0
    %vm1065 = vcmask 41984
    %1066 = vst.msk [vmem:[#allocation2] sm:$0x3] %vm1065, %v1060
    // Predicated region
    $region22: #{dqn_forward.7} parent=1 // pred_check
      _
    $region23: #{dqn_forward.7} parent=1 // pred_check_branch
      %1068 = sbr.rel (0) target = $region25
    $region24: #{dqn_forward.7} parent=1 // pred_region
      %s1070 = ssub.s32 32, 32
      %1071 = vsyncadd [#allocation3], %s1070
      %s1073 = sshll.u32 [#allocation2], 4
      %s1074 = int_to_ptr.vmem [resolvable:$true] %s1073
      %1076 = dma.vmem_to_hbm [thread:$0]  %s1074, 32, %s5, [#allocation3]
    $region25: #{dqn_forward.7} parent=1 // pred_fallthru
      _
    // Predicated region
    $region26: #{dqn_forward.7} parent=1 // pred_check
      _
    $region27: #{dqn_forward.7} parent=1 // pred_check_branch
      %1078 = sbr.rel (0) target = $region29
    $region28: #{dqn_forward.7} parent=1 // pred_region
      %1079 = dma.done [#allocation3], 32
    $region29: #{dqn_forward.7} parent=1 // pred_fallthru
      _
    %1080 = vsyncpa [#allocation3], 1

</llo_original>
